<compile_context>
chip_gen: v7x
topology: tpu7x:2x2x1
jax: 0.10.0
libtpu: 0.0.40
codegen_flags: <defaults>
</compile_context>

<pallas_src>
import math

import jax
import jax.numpy as jnp
from jax import lax
from jax.experimental import pallas as pl
from jax.experimental.pallas import tpu as pltpu


# ----------------------------------------------------------------------------
# Fused forward kernel
# ----------------------------------------------------------------------------
def _make_kernel(treedef, n_params, seq, hidden):
    S, H = seq, hidden

    def linear(pr, x):
        w_ref, b_ref = pr  # (in, out), (1, out)
        return jnp.dot(x, w_ref[...], preferred_element_type=jnp.float32) + b_ref[...]

    def lstm_dir(pr, x, reverse):
        """One direction, one layer; fully unrolled recurrence on vreg-carried h/c."""
        wih_ref, whh_ref, b_ref = pr  # (in, 4H), (H, 4H), (1, 4H); cols = i|f|g|o
        # Hoisted input projection: one lane-dense matmul outside the serial chain.
        gx = jnp.dot(x, wih_ref[...], preferred_element_type=jnp.float32) + b_ref[...]
        whh = whh_ref[...]
        h = jnp.zeros((1, H), jnp.float32)
        c = jnp.zeros((1, H), jnp.float32)
        rows = [None] * S
        order = range(S - 1, -1, -1) if reverse else range(S)
        for t in order:  # S is static & small: full unroll for scheduler overlap
            g_all = gx[t:t + 1, :] + jnp.dot(h, whh, preferred_element_type=jnp.float32)
            i = jax.nn.sigmoid(g_all[:, 0:H])
            f = jax.nn.sigmoid(g_all[:, H:2 * H])
            g = jnp.tanh(g_all[:, 2 * H:3 * H])
            o = jax.nn.sigmoid(g_all[:, 3 * H:4 * H])
            c = f * c + i * g
            h = o * jnp.tanh(c)
            rows[t] = h
        return jnp.concatenate(rows, axis=0)  # (S, H), natural time order

    def run_lstm(layers, x, bidirectional):
        for layer in layers:
            if bidirectional:
                fwd, bwd = layer
                x = jnp.concatenate(
                    [lstm_dir(fwd, x, False), lstm_dir(bwd, x, True)], axis=1)
            else:
                x = lstm_dir(layer, x, False)
        return x

    def kernel(inputs_ref, edges_ref, memory_ref, *rest):
        param_refs = rest[:n_params]
        out_ref = rest[n_params]
        p = jax.tree_util.tree_unflatten(treedef, list(param_refs))

        inputs = inputs_ref[...]          # (S, input_size)
        memory = memory_ref[...]          # (S, memory_vector_dim)
        edges = edges_ref[...]            # (S, 2) int32

        # --- hierarchical encoders (bidirectional, in-kernel reverse) -------
        lower = run_lstm(p["lower"], inputs, True)      # (S, 2H)
        higher = run_lstm(p["higher"], lower, True)     # (S, 2H)

        # --- graph section ---------------------------------------------------
        # one-hot gather matrices replace nodes[edges[:, k]] (no XLA gather);
        # out-of-range indices produce zero rows instead of erroring.
        col = lax.broadcasted_iota(jnp.int32, (S, S), 1)
        oh_src = (col == edges[:, 0:1]).astype(jnp.float32)   # (S, S)
        oh_dst = (col == edges[:, 1:2]).astype(jnp.float32)   # (S, S)

        nodes = linear(p["input_layer"], inputs)              # (S, H)
        for edge_p, node_p in zip(p["edge"], p["node"]):
            src = jnp.dot(oh_src, nodes, preferred_element_type=jnp.float32)
            dst = jnp.dot(oh_dst, nodes, preferred_element_type=jnp.float32)
            edge_h = linear(edge_p, jnp.concatenate([src, dst], axis=1))   # (S, H)
            node_in = jnp.concatenate([inputs, edge_h], axis=1)            # (S, in+H)
            nodes = run_lstm(node_p, node_in, False)                       # (S, H)

        # --- memory projection (weight pre-sliced to first H input rows) -----
        memory_vector = linear(p["memory"], nodes)             # (S, memory_size)

        # --- controller + output head ----------------------------------------
        ctrl_in = jnp.concatenate([inputs, higher, memory], axis=1)
        ctrl_out = run_lstm(p["controller"], ctrl_in, False)   # (S, H)
        output = linear(p["output_layer"], ctrl_out)           # (S, out)

        # pack both results into one lane-contiguous store; split outside.
        out_ref[...] = jnp.concatenate([output, memory_vector], axis=1)

    return kernel


def forward(params, inputs, edges, memory):
    S = inputs.shape[0]
    hidden_size = params["input_layer"][0].shape[1]
    output_size = params["output_layer"][0].shape[1]
    memory_size = params["memory"][0].shape[1]

    flat, treedef = jax.tree_util.tree_flatten(params)
    kernel = _make_kernel(treedef, len(flat), S, hidden_size)

    packed = pl.pallas_call(
        kernel,
        out_shape=jax.ShapeDtypeStruct((S, output_size + memory_size), jnp.float32),
        in_specs=[pl.BlockSpec(memory_space=pltpu.MemorySpace.VMEM)] * (3 + len(flat)),
        out_specs=pl.BlockSpec(memory_space=pltpu.MemorySpace.VMEM),
    )(inputs, edges, memory, *flat)

    return packed[:, :output_size], packed[:, output_size:]


# ----------------------------------------------------------------------------
# Deterministic parameter init (same distributions/shapes as PyTorch __init__)
# ----------------------------------------------------------------------------
def init_linear(key, in_size, out_size):
    k = 1.0 / math.sqrt(in_size)
    key, k1, k2 = jax.random.split(key, 3)
    w = jax.random.uniform(k1, (out_size, in_size), jnp.float32, -k, k)
    b = jax.random.uniform(k2, (out_size,), jnp.float32, -k, k)
    return key, (w.T, b.reshape(1, out_size))


def init_lstm(key, in_size, hidden, num_layers, bidirectional):
    k = 1.0 / math.sqrt(hidden)
    num_dir = 2 if bidirectional else 1
    layers = []
    for layer_idx in range(num_layers):
        layer_in = in_size if layer_idx == 0 else hidden * num_dir
        dirs = []
        for _ in range(num_dir):
            key, k1, k2, k3, k4 = jax.random.split(key, 5)
            wih = jax.random.uniform(k1, (4 * hidden, layer_in), jnp.float32, -k, k)
            whh = jax.random.uniform(k2, (4 * hidden, hidden), jnp.float32, -k, k)
            bih = jax.random.uniform(k3, (4 * hidden,), jnp.float32, -k, k)
            bhh = jax.random.uniform(k4, (4 * hidden,), jnp.float32, -k, k)
            # fused gate layout: transpose keeps the PyTorch i|f|g|o row order
            # as column order, so the kernel slices gates at 0,H,2H,3H.
            dirs.append((wih.T, whh.T, (bih + bhh).reshape(1, 4 * hidden)))
        layers.append(tuple(dirs) if bidirectional else dirs[0])
    return key, layers


def init_params(key, input_size, output_size, hidden_size, num_layers,
                num_relations, memory_size, memory_vector_dim):
    params = {}
    key, params["lower"] = init_lstm(key, input_size, hidden_size, num_layers, True)
    key, params["higher"] = init_lstm(key, 2 * hidden_size, hidden_size, num_layers, True)
    key, params["input_layer"] = init_linear(key, input_size, hidden_size)
    key, params["output_layer"] = init_linear(key, hidden_size, output_size)
    params["edge"] = []
    params["node"] = []
    for _ in range(num_relations):
        key, p = init_linear(key, 2 * hidden_size, hidden_size)
        params["edge"].append(p)
        key, p = init_lstm(key, input_size + hidden_size, hidden_size, num_layers, False)
        params["node"].append(p)
    # TODO(synk): original self.memory expects 2*hidden input features but
    # `nodes` only has `hidden`; keep only the first `hidden` input rows of the
    # weight (mathematically identical to zero-padding nodes to 2*hidden).
    key, (w_mem_t, b_mem) = init_linear(key, 2 * hidden_size, memory_size)
    params["memory"] = (w_mem_t[:hidden_size, :], b_mem)
    key, params["controller"] = init_lstm(
        key, input_size + 2 * hidden_size + memory_vector_dim,
        hidden_size, num_layers, False)
    return key, params


# ----------------------------------------------------------------------------
if __name__ == "__main__":
    input_size = 16
    output_size = 8
    hidden_size = 16
    num_layers = 1
    num_relations = 2
    memory_size = 12
    memory_vector_dim = 10
    seq = 8  # number of graph edges must equal seq for the original cat to work

    key = jax.random.PRNGKey(0)
    key, params = init_params(key, input_size, output_size, hidden_size,
                              num_layers, num_relations, memory_size,
                              memory_vector_dim)

    key, k_in, k_edge, k_mem = jax.random.split(key, 4)
    inputs = jax.random.normal(k_in, (seq, input_size), jnp.float32)
    edges = jax.random.randint(k_edge, (seq, 2), 0, seq, jnp.int32)
    memory = jax.random.normal(k_mem, (seq, memory_vector_dim), jnp.float32)

    output, memory_vector = forward(params, inputs, edges, memory)
    jax.block_until_ready((output, memory_vector))

    assert output.shape == (seq, output_size)
    assert memory_vector.shape == (seq, memory_size)
    assert output.dtype == jnp.float32 and memory_vector.dtype == jnp.float32
    print("KERNEL_OK")
</pallas_src>

<mosaic_0001>
module attributes {stable_mosaic.version = 11 : i64} {
  func.func @kernel(%arg0: memref<8x16xf32, #tpu.memory_space<vmem>>, %arg1: memref<8x2xi32, #tpu.memory_space<vmem>>, %arg2: memref<8x10xf32, #tpu.memory_space<vmem>>, %arg3: memref<58x64xf32, #tpu.memory_space<vmem>>, %arg4: memref<16x64xf32, #tpu.memory_space<vmem>>, %arg5: memref<1x64xf32, #tpu.memory_space<vmem>>, %arg6: memref<32x16xf32, #tpu.memory_space<vmem>>, %arg7: memref<1x16xf32, #tpu.memory_space<vmem>>, %arg8: memref<32x16xf32, #tpu.memory_space<vmem>>, %arg9: memref<1x16xf32, #tpu.memory_space<vmem>>, %arg10: memref<32x64xf32, #tpu.memory_space<vmem>>, %arg11: memref<16x64xf32, #tpu.memory_space<vmem>>, %arg12: memref<1x64xf32, #tpu.memory_space<vmem>>, %arg13: memref<32x64xf32, #tpu.memory_space<vmem>>, %arg14: memref<16x64xf32, #tpu.memory_space<vmem>>, %arg15: memref<1x64xf32, #tpu.memory_space<vmem>>, %arg16: memref<16x16xf32, #tpu.memory_space<vmem>>, %arg17: memref<1x16xf32, #tpu.memory_space<vmem>>, %arg18: memref<16x64xf32, #tpu.memory_space<vmem>>, %arg19: memref<16x64xf32, #tpu.memory_space<vmem>>, %arg20: memref<1x64xf32, #tpu.memory_space<vmem>>, %arg21: memref<16x64xf32, #tpu.memory_space<vmem>>, %arg22: memref<16x64xf32, #tpu.memory_space<vmem>>, %arg23: memref<1x64xf32, #tpu.memory_space<vmem>>, %arg24: memref<16x12xf32, #tpu.memory_space<vmem>>, %arg25: memref<1x12xf32, #tpu.memory_space<vmem>>, %arg26: memref<32x64xf32, #tpu.memory_space<vmem>>, %arg27: memref<16x64xf32, #tpu.memory_space<vmem>>, %arg28: memref<1x64xf32, #tpu.memory_space<vmem>>, %arg29: memref<32x64xf32, #tpu.memory_space<vmem>>, %arg30: memref<16x64xf32, #tpu.memory_space<vmem>>, %arg31: memref<1x64xf32, #tpu.memory_space<vmem>>, %arg32: memref<16x8xf32, #tpu.memory_space<vmem>>, %arg33: memref<1x8xf32, #tpu.memory_space<vmem>>, %arg34: memref<8x20xf32, #tpu.memory_space<vmem>>) attributes {dimension_semantics = [], scalar_prefetch = 0 : i64, scratch_operands = 0 : i64, tpu.core_type = #tpu.core_type<tc>} {
    %c0 = arith.constant 0 : index
    %c0_0 = arith.constant 0 : index
    %0 = vector.load %arg0[%c0, %c0_0] : memref<8x16xf32, #tpu.memory_space<vmem>>, vector<8x16xf32>
    %c0_1 = arith.constant 0 : index
    %c0_2 = arith.constant 0 : index
    %1 = vector.load %arg2[%c0_1, %c0_2] : memref<8x10xf32, #tpu.memory_space<vmem>>, vector<8x10xf32>
    %c0_3 = arith.constant 0 : index
    %c0_4 = arith.constant 0 : index
    %2 = vector.load %arg1[%c0_3, %c0_4] : memref<8x2xi32, #tpu.memory_space<vmem>>, vector<8x2xi32>
    %c0_5 = arith.constant 0 : index
    %c0_6 = arith.constant 0 : index
    %3 = vector.load %arg18[%c0_5, %c0_6] : memref<16x64xf32, #tpu.memory_space<vmem>>, vector<16x64xf32>
    %cst = arith.constant dense<0.000000e+00> : vector<8x64xf32>
    %4 = tpu.matmul %0, %3, %cst {dimension_numbers = #tpu.dot_dimension_numbers<[1], [0], [0], [1], [0, 0, 1, 1], [], []>} : vector<8x16xf32>, vector<16x64xf32>, vector<8x64xf32> -> vector<8x64xf32>
    %c0_7 = arith.constant 0 : index
    %c0_8 = arith.constant 0 : index
    %5 = vector.load %arg20[%c0_7, %c0_8] : memref<1x64xf32, #tpu.memory_space<vmem>>, vector<1x64xf32>
    %6 = vector.broadcast %5 : vector<1x64xf32> to vector<8x64xf32>
    %7 = arith.addf %4, %6 : vector<8x64xf32>
    %c0_9 = arith.constant 0 : index
    %c0_10 = arith.constant 0 : index
    %8 = vector.load %arg19[%c0_9, %c0_10] : memref<16x64xf32, #tpu.memory_space<vmem>>, vector<16x64xf32>
    %cst_11 = arith.constant 0.000000e+00 : f32
    %9 = vector.broadcast %cst_11 : f32 to vector<1x16xf32>
    %cst_12 = arith.constant 0.000000e+00 : f32
    %10 = vector.broadcast %cst_12 : f32 to vector<1x16xf32>
    %11 = vector.extract_strided_slice %7 {offsets = [0, 0], sizes = [1, 64], strides = [1, 1]} : vector<8x64xf32> to vector<1x64xf32>
    %cst_13 = arith.constant dense<0.000000e+00> : vector<1x64xf32>
    %12 = tpu.matmul %9, %8, %cst_13 {dimension_numbers = #tpu.dot_dimension_numbers<[1], [0], [0], [1], [0, 0, 1, 1], [], []>} : vector<1x16xf32>, vector<16x64xf32>, vector<1x64xf32> -> vector<1x64xf32>
    %13 = arith.addf %11, %12 : vector<1x64xf32>
    %14 = vector.extract_strided_slice %13 {offsets = [0, 0], sizes = [1, 16], strides = [1, 1]} : vector<1x64xf32> to vector<1x16xf32>
    %15 = arith.negf %14 : vector<1x16xf32>
    %16 = math.exp %15 : vector<1x16xf32>
    %cst_14 = arith.constant 1.000000e+00 : f32
    %17 = vector.broadcast %cst_14 : f32 to vector<1x16xf32>
    %18 = arith.addf %17, %16 : vector<1x16xf32>
    %19 = arith.divf %17, %18 : vector<1x16xf32>
    %20 = vector.extract_strided_slice %13 {offsets = [0, 16], sizes = [1, 16], strides = [1, 1]} : vector<1x64xf32> to vector<1x16xf32>
    %21 = arith.negf %20 : vector<1x16xf32>
    %22 = math.exp %21 : vector<1x16xf32>
    %cst_15 = arith.constant 1.000000e+00 : f32
    %23 = vector.broadcast %cst_15 : f32 to vector<1x16xf32>
    %24 = arith.addf %23, %22 : vector<1x16xf32>
    %25 = arith.divf %23, %24 : vector<1x16xf32>
    %26 = vector.extract_strided_slice %13 {offsets = [0, 32], sizes = [1, 16], strides = [1, 1]} : vector<1x64xf32> to vector<1x16xf32>
    %27 = math.tanh %26 : vector<1x16xf32>
    %28 = vector.extract_strided_slice %13 {offsets = [0, 48], sizes = [1, 16], strides = [1, 1]} : vector<1x64xf32> to vector<1x16xf32>
    %29 = arith.negf %28 : vector<1x16xf32>
    %30 = math.exp %29 : vector<1x16xf32>
    %cst_16 = arith.constant 1.000000e+00 : f32
    %31 = vector.broadcast %cst_16 : f32 to vector<1x16xf32>
    %32 = arith.addf %31, %30 : vector<1x16xf32>
    %33 = arith.divf %31, %32 : vector<1x16xf32>
    %34 = arith.mulf %25, %10 : vector<1x16xf32>
    %35 = arith.mulf %19, %27 : vector<1x16xf32>
    %36 = arith.addf %34, %35 : vector<1x16xf32>
    %37 = math.tanh %36 : vector<1x16xf32>
    %38 = arith.mulf %33, %37 : vector<1x16xf32>
    %39 = vector.extract_strided_slice %7 {offsets = [1, 0], sizes = [1, 64], strides = [1, 1]} : vector<8x64xf32> to vector<1x64xf32>
    %cst_17 = arith.constant dense<0.000000e+00> : vector<1x64xf32>
    %40 = tpu.matmul %38, %8, %cst_17 {dimension_numbers = #tpu.dot_dimension_numbers<[1], [0], [0], [1], [0, 0, 1, 1], [], []>} : vector<1x16xf32>, vector<16x64xf32>, vector<1x64xf32> -> vector<1x64xf32>
    %41 = arith.addf %39, %40 : vector<1x64xf32>
    %42 = vector.extract_strided_slice %41 {offsets = [0, 0], sizes = [1, 16], strides = [1, 1]} : vector<1x64xf32> to vector<1x16xf32>
    %43 = arith.negf %42 : vector<1x16xf32>
    %44 = math.exp %43 : vector<1x16xf32>
    %cst_18 = arith.constant 1.000000e+00 : f32
    %45 = vector.broadcast %cst_18 : f32 to vector<1x16xf32>
    %46 = arith.addf %45, %44 : vector<1x16xf32>
    %47 = arith.divf %45, %46 : vector<1x16xf32>
    %48 = vector.extract_strided_slice %41 {offsets = [0, 16], sizes = [1, 16], strides = [1, 1]} : vector<1x64xf32> to vector<1x16xf32>
    %49 = arith.negf %48 : vector<1x16xf32>
    %50 = math.exp %49 : vector<1x16xf32>
    %cst_19 = arith.constant 1.000000e+00 : f32
    %51 = vector.broadcast %cst_19 : f32 to vector<1x16xf32>
    %52 = arith.addf %51, %50 : vector<1x16xf32>
    %53 = arith.divf %51, %52 : vector<1x16xf32>
    %54 = vector.extract_strided_slice %41 {offsets = [0, 32], sizes = [1, 16], strides = [1, 1]} : vector<1x64xf32> to vector<1x16xf32>
    %55 = math.tanh %54 : vector<1x16xf32>
    %56 = vector.extract_strided_slice %41 {offsets = [0, 48], sizes = [1, 16], strides = [1, 1]} : vector<1x64xf32> to vector<1x16xf32>
    %57 = arith.negf %56 : vector<1x16xf32>
    %58 = math.exp %57 : vector<1x16xf32>
    %cst_20 = arith.constant 1.000000e+00 : f32
    %59 = vector.broadcast %cst_20 : f32 to vector<1x16xf32>
    %60 = arith.addf %59, %58 : vector<1x16xf32>
    %61 = arith.divf %59, %60 : vector<1x16xf32>
    %62 = arith.mulf %53, %36 : vector<1x16xf32>
    %63 = arith.mulf %47, %55 : vector<1x16xf32>
    %64 = arith.addf %62, %63 : vector<1x16xf32>
    %65 = math.tanh %64 : vector<1x16xf32>
    %66 = arith.mulf %61, %65 : vector<1x16xf32>
    %67 = vector.extract_strided_slice %7 {offsets = [2, 0], sizes = [1, 64], strides = [1, 1]} : vector<8x64xf32> to vector<1x64xf32>
    %cst_21 = arith.constant dense<0.000000e+00> : vector<1x64xf32>
    %68 = tpu.matmul %66, %8, %cst_21 {dimension_numbers = #tpu.dot_dimension_numbers<[1], [0], [0], [1], [0, 0, 1, 1], [], []>} : vector<1x16xf32>, vector<16x64xf32>, vector<1x64xf32> -> vector<1x64xf32>
    %69 = arith.addf %67, %68 : vector<1x64xf32>
    %70 = vector.extract_strided_slice %69 {offsets = [0, 0], sizes = [1, 16], strides = [1, 1]} : vector<1x64xf32> to vector<1x16xf32>
    %71 = arith.negf %70 : vector<1x16xf32>
    %72 = math.exp %71 : vector<1x16xf32>
    %cst_22 = arith.constant 1.000000e+00 : f32
    %73 = vector.broadcast %cst_22 : f32 to vector<1x16xf32>
    %74 = arith.addf %73, %72 : vector<1x16xf32>
    %75 = arith.divf %73, %74 : vector<1x16xf32>
    %76 = vector.extract_strided_slice %69 {offsets = [0, 16], sizes = [1, 16], strides = [1, 1]} : vector<1x64xf32> to vector<1x16xf32>
    %77 = arith.negf %76 : vector<1x16xf32>
    %78 = math.exp %77 : vector<1x16xf32>
    %cst_23 = arith.constant 1.000000e+00 : f32
    %79 = vector.broadcast %cst_23 : f32 to vector<1x16xf32>
    %80 = arith.addf %79, %78 : vector<1x16xf32>
    %81 = arith.divf %79, %80 : vector<1x16xf32>
    %82 = vector.extract_strided_slice %69 {offsets = [0, 32], sizes = [1, 16], strides = [1, 1]} : vector<1x64xf32> to vector<1x16xf32>
    %83 = math.tanh %82 : vector<1x16xf32>
    %84 = vector.extract_strided_slice %69 {offsets = [0, 48], sizes = [1, 16], strides = [1, 1]} : vector<1x64xf32> to vector<1x16xf32>
    %85 = arith.negf %84 : vector<1x16xf32>
    %86 = math.exp %85 : vector<1x16xf32>
    %cst_24 = arith.constant 1.000000e+00 : f32
    %87 = vector.broadcast %cst_24 : f32 to vector<1x16xf32>
    %88 = arith.addf %87, %86 : vector<1x16xf32>
    %89 = arith.divf %87, %88 : vector<1x16xf32>
    %90 = arith.mulf %81, %64 : vector<1x16xf32>
    %91 = arith.mulf %75, %83 : vector<1x16xf32>
    %92 = arith.addf %90, %91 : vector<1x16xf32>
    %93 = math.tanh %92 : vector<1x16xf32>
    %94 = arith.mulf %89, %93 : vector<1x16xf32>
    %95 = vector.extract_strided_slice %7 {offsets = [3, 0], sizes = [1, 64], strides = [1, 1]} : vector<8x64xf32> to vector<1x64xf32>
    %cst_25 = arith.constant dense<0.000000e+00> : vector<1x64xf32>
    %96 = tpu.matmul %94, %8, %cst_25 {dimension_numbers = #tpu.dot_dimension_numbers<[1], [0], [0], [1], [0, 0, 1, 1], [], []>} : vector<1x16xf32>, vector<16x64xf32>, vector<1x64xf32> -> vector<1x64xf32>
    %97 = arith.addf %95, %96 : vector<1x64xf32>
    %98 = vector.extract_strided_slice %97 {offsets = [0, 0], sizes = [1, 16], strides = [1, 1]} : vector<1x64xf32> to vector<1x16xf32>
    %99 = arith.negf %98 : vector<1x16xf32>
    %100 = math.exp %99 : vector<1x16xf32>
    %cst_26 = arith.constant 1.000000e+00 : f32
    %101 = vector.broadcast %cst_26 : f32 to vector<1x16xf32>
    %102 = arith.addf %101, %100 : vector<1x16xf32>
    %103 = arith.divf %101, %102 : vector<1x16xf32>
    %104 = vector.extract_strided_slice %97 {offsets = [0, 16], sizes = [1, 16], strides = [1, 1]} : vector<1x64xf32> to vector<1x16xf32>
    %105 = arith.negf %104 : vector<1x16xf32>
    %106 = math.exp %105 : vector<1x16xf32>
    %cst_27 = arith.constant 1.000000e+00 : f32
    %107 = vector.broadcast %cst_27 : f32 to vector<1x16xf32>
    %108 = arith.addf %107, %106 : vector<1x16xf32>
    %109 = arith.divf %107, %108 : vector<1x16xf32>
    %110 = vector.extract_strided_slice %97 {offsets = [0, 32], sizes = [1, 16], strides = [1, 1]} : vector<1x64xf32> to vector<1x16xf32>
    %111 = math.tanh %110 : vector<1x16xf32>
    %112 = vector.extract_strided_slice %97 {offsets = [0, 48], sizes = [1, 16], strides = [1, 1]} : vector<1x64xf32> to vector<1x16xf32>
    %113 = arith.negf %112 : vector<1x16xf32>
    %114 = math.exp %113 : vector<1x16xf32>
    %cst_28 = arith.constant 1.000000e+00 : f32
    %115 = vector.broadcast %cst_28 : f32 to vector<1x16xf32>
    %116 = arith.addf %115, %114 : vector<1x16xf32>
    %117 = arith.divf %115, %116 : vector<1x16xf32>
    %118 = arith.mulf %109, %92 : vector<1x16xf32>
    %119 = arith.mulf %103, %111 : vector<1x16xf32>
    %120 = arith.addf %118, %119 : vector<1x16xf32>
    %121 = math.tanh %120 : vector<1x16xf32>
    %122 = arith.mulf %117, %121 : vector<1x16xf32>
    %123 = vector.extract_strided_slice %7 {offsets = [4, 0], sizes = [1, 64], strides = [1, 1]} : vector<8x64xf32> to vector<1x64xf32>
    %cst_29 = arith.constant dense<0.000000e+00> : vector<1x64xf32>
    %124 = tpu.matmul %122, %8, %cst_29 {dimension_numbers = #tpu.dot_dimension_numbers<[1], [0], [0], [1], [0, 0, 1, 1], [], []>} : vector<1x16xf32>, vector<16x64xf32>, vector<1x64xf32> -> vector<1x64xf32>
    %125 = arith.addf %123, %124 : vector<1x64xf32>
    %126 = vector.extract_strided_slice %125 {offsets = [0, 0], sizes = [1, 16], strides = [1, 1]} : vector<1x64xf32> to vector<1x16xf32>
    %127 = arith.negf %126 : vector<1x16xf32>
    %128 = math.exp %127 : vector<1x16xf32>
    %cst_30 = arith.constant 1.000000e+00 : f32
    %129 = vector.broadcast %cst_30 : f32 to vector<1x16xf32>
    %130 = arith.addf %129, %128 : vector<1x16xf32>
    %131 = arith.divf %129, %130 : vector<1x16xf32>
    %132 = vector.extract_strided_slice %125 {offsets = [0, 16], sizes = [1, 16], strides = [1, 1]} : vector<1x64xf32> to vector<1x16xf32>
    %133 = arith.negf %132 : vector<1x16xf32>
    %134 = math.exp %133 : vector<1x16xf32>
    %cst_31 = arith.constant 1.000000e+00 : f32
    %135 = vector.broadcast %cst_31 : f32 to vector<1x16xf32>
    %136 = arith.addf %135, %134 : vector<1x16xf32>
    %137 = arith.divf %135, %136 : vector<1x16xf32>
    %138 = vector.extract_strided_slice %125 {offsets = [0, 32], sizes = [1, 16], strides = [1, 1]} : vector<1x64xf32> to vector<1x16xf32>
    %139 = math.tanh %138 : vector<1x16xf32>
    %140 = vector.extract_strided_slice %125 {offsets = [0, 48], sizes = [1, 16], strides = [1, 1]} : vector<1x64xf32> to vector<1x16xf32>
    %141 = arith.negf %140 : vector<1x16xf32>
    %142 = math.exp %141 : vector<1x16xf32>
    %cst_32 = arith.constant 1.000000e+00 : f32
    %143 = vector.broadcast %cst_32 : f32 to vector<1x16xf32>
    %144 = arith.addf %143, %142 : vector<1x16xf32>
    %145 = arith.divf %143, %144 : vector<1x16xf32>
    %146 = arith.mulf %137, %120 : vector<1x16xf32>
    %147 = arith.mulf %131, %139 : vector<1x16xf32>
    %148 = arith.addf %146, %147 : vector<1x16xf32>
    %149 = math.tanh %148 : vector<1x16xf32>
    %150 = arith.mulf %145, %149 : vector<1x16xf32>
    %151 = vector.extract_strided_slice %7 {offsets = [5, 0], sizes = [1, 64], strides = [1, 1]} : vector<8x64xf32> to vector<1x64xf32>
    %cst_33 = arith.constant dense<0.000000e+00> : vector<1x64xf32>
    %152 = tpu.matmul %150, %8, %cst_33 {dimension_numbers = #tpu.dot_dimension_numbers<[1], [0], [0], [1], [0, 0, 1, 1], [], []>} : vector<1x16xf32>, vector<16x64xf32>, vector<1x64xf32> -> vector<1x64xf32>
    %153 = arith.addf %151, %152 : vector<1x64xf32>
    %154 = vector.extract_strided_slice %153 {offsets = [0, 0], sizes = [1, 16], strides = [1, 1]} : vector<1x64xf32> to vector<1x16xf32>
    %155 = arith.negf %154 : vector<1x16xf32>
    %156 = math.exp %155 : vector<1x16xf32>
    %cst_34 = arith.constant 1.000000e+00 : f32
    %157 = vector.broadcast %cst_34 : f32 to vector<1x16xf32>
    %158 = arith.addf %157, %156 : vector<1x16xf32>
    %159 = arith.divf %157, %158 : vector<1x16xf32>
    %160 = vector.extract_strided_slice %153 {offsets = [0, 16], sizes = [1, 16], strides = [1, 1]} : vector<1x64xf32> to vector<1x16xf32>
    %161 = arith.negf %160 : vector<1x16xf32>
    %162 = math.exp %161 : vector<1x16xf32>
    %cst_35 = arith.constant 1.000000e+00 : f32
    %163 = vector.broadcast %cst_35 : f32 to vector<1x16xf32>
    %164 = arith.addf %163, %162 : vector<1x16xf32>
    %165 = arith.divf %163, %164 : vector<1x16xf32>
    %166 = vector.extract_strided_slice %153 {offsets = [0, 32], sizes = [1, 16], strides = [1, 1]} : vector<1x64xf32> to vector<1x16xf32>
    %167 = math.tanh %166 : vector<1x16xf32>
    %168 = vector.extract_strided_slice %153 {offsets = [0, 48], sizes = [1, 16], strides = [1, 1]} : vector<1x64xf32> to vector<1x16xf32>
    %169 = arith.negf %168 : vector<1x16xf32>
    %170 = math.exp %169 : vector<1x16xf32>
    %cst_36 = arith.constant 1.000000e+00 : f32
    %171 = vector.broadcast %cst_36 : f32 to vector<1x16xf32>
    %172 = arith.addf %171, %170 : vector<1x16xf32>
    %173 = arith.divf %171, %172 : vector<1x16xf32>
    %174 = arith.mulf %165, %148 : vector<1x16xf32>
    %175 = arith.mulf %159, %167 : vector<1x16xf32>
    %176 = arith.addf %174, %175 : vector<1x16xf32>
    %177 = math.tanh %176 : vector<1x16xf32>
    %178 = arith.mulf %173, %177 : vector<1x16xf32>
    %179 = vector.extract_strided_slice %7 {offsets = [6, 0], sizes = [1, 64], strides = [1, 1]} : vector<8x64xf32> to vector<1x64xf32>
    %cst_37 = arith.constant dense<0.000000e+00> : vector<1x64xf32>
    %180 = tpu.matmul %178, %8, %cst_37 {dimension_numbers = #tpu.dot_dimension_numbers<[1], [0], [0], [1], [0, 0, 1, 1], [], []>} : vector<1x16xf32>, vector<16x64xf32>, vector<1x64xf32> -> vector<1x64xf32>
    %181 = arith.addf %179, %180 : vector<1x64xf32>
    %182 = vector.extract_strided_slice %181 {offsets = [0, 0], sizes = [1, 16], strides = [1, 1]} : vector<1x64xf32> to vector<1x16xf32>
    %183 = arith.negf %182 : vector<1x16xf32>
    %184 = math.exp %183 : vector<1x16xf32>
    %cst_38 = arith.constant 1.000000e+00 : f32
    %185 = vector.broadcast %cst_38 : f32 to vector<1x16xf32>
    %186 = arith.addf %185, %184 : vector<1x16xf32>
    %187 = arith.divf %185, %186 : vector<1x16xf32>
    %188 = vector.extract_strided_slice %181 {offsets = [0, 16], sizes = [1, 16], strides = [1, 1]} : vector<1x64xf32> to vector<1x16xf32>
    %189 = arith.negf %188 : vector<1x16xf32>
    %190 = math.exp %189 : vector<1x16xf32>
    %cst_39 = arith.constant 1.000000e+00 : f32
    %191 = vector.broadcast %cst_39 : f32 to vector<1x16xf32>
    %192 = arith.addf %191, %190 : vector<1x16xf32>
    %193 = arith.divf %191, %192 : vector<1x16xf32>
    %194 = vector.extract_strided_slice %181 {offsets = [0, 32], sizes = [1, 16], strides = [1, 1]} : vector<1x64xf32> to vector<1x16xf32>
    %195 = math.tanh %194 : vector<1x16xf32>
    %196 = vector.extract_strided_slice %181 {offsets = [0, 48], sizes = [1, 16], strides = [1, 1]} : vector<1x64xf32> to vector<1x16xf32>
    %197 = arith.negf %196 : vector<1x16xf32>
    %198 = math.exp %197 : vector<1x16xf32>
    %cst_40 = arith.constant 1.000000e+00 : f32
    %199 = vector.broadcast %cst_40 : f32 to vector<1x16xf32>
    %200 = arith.addf %199, %198 : vector<1x16xf32>
    %201 = arith.divf %199, %200 : vector<1x16xf32>
    %202 = arith.mulf %193, %176 : vector<1x16xf32>
    %203 = arith.mulf %187, %195 : vector<1x16xf32>
    %204 = arith.addf %202, %203 : vector<1x16xf32>
    %205 = math.tanh %204 : vector<1x16xf32>
    %206 = arith.mulf %201, %205 : vector<1x16xf32>
    %207 = vector.extract_strided_slice %7 {offsets = [7, 0], sizes = [1, 64], strides = [1, 1]} : vector<8x64xf32> to vector<1x64xf32>
    %cst_41 = arith.constant dense<0.000000e+00> : vector<1x64xf32>
    %208 = tpu.matmul %206, %8, %cst_41 {dimension_numbers = #tpu.dot_dimension_numbers<[1], [0], [0], [1], [0, 0, 1, 1], [], []>} : vector<1x16xf32>, vector<16x64xf32>, vector<1x64xf32> -> vector<1x64xf32>
    %209 = arith.addf %207, %208 : vector<1x64xf32>
    %210 = vector.extract_strided_slice %209 {offsets = [0, 0], sizes = [1, 16], strides = [1, 1]} : vector<1x64xf32> to vector<1x16xf32>
    %211 = arith.negf %210 : vector<1x16xf32>
    %212 = math.exp %211 : vector<1x16xf32>
    %cst_42 = arith.constant 1.000000e+00 : f32
    %213 = vector.broadcast %cst_42 : f32 to vector<1x16xf32>
    %214 = arith.addf %213, %212 : vector<1x16xf32>
    %215 = arith.divf %213, %214 : vector<1x16xf32>
    %216 = vector.extract_strided_slice %209 {offsets = [0, 16], sizes = [1, 16], strides = [1, 1]} : vector<1x64xf32> to vector<1x16xf32>
    %217 = arith.negf %216 : vector<1x16xf32>
    %218 = math.exp %217 : vector<1x16xf32>
    %cst_43 = arith.constant 1.000000e+00 : f32
    %219 = vector.broadcast %cst_43 : f32 to vector<1x16xf32>
    %220 = arith.addf %219, %218 : vector<1x16xf32>
    %221 = arith.divf %219, %220 : vector<1x16xf32>
    %222 = vector.extract_strided_slice %209 {offsets = [0, 32], sizes = [1, 16], strides = [1, 1]} : vector<1x64xf32> to vector<1x16xf32>
    %223 = math.tanh %222 : vector<1x16xf32>
    %224 = vector.extract_strided_slice %209 {offsets = [0, 48], sizes = [1, 16], strides = [1, 1]} : vector<1x64xf32> to vector<1x16xf32>
    %225 = arith.negf %224 : vector<1x16xf32>
    %226 = math.exp %225 : vector<1x16xf32>
    %cst_44 = arith.constant 1.000000e+00 : f32
    %227 = vector.broadcast %cst_44 : f32 to vector<1x16xf32>
    %228 = arith.addf %227, %226 : vector<1x16xf32>
    %229 = arith.divf %227, %228 : vector<1x16xf32>
    %230 = arith.mulf %221, %204 : vector<1x16xf32>
    %231 = arith.mulf %215, %223 : vector<1x16xf32>
    %232 = arith.addf %230, %231 : vector<1x16xf32>
    %233 = math.tanh %232 : vector<1x16xf32>
    %234 = arith.mulf %229, %233 : vector<1x16xf32>
    %235 = tpu.concatenate %38, %66, %94, %122, %150, %178, %206, %234 in 0 : vector<1x16xf32>, vector<1x16xf32>, vector<1x16xf32>, vector<1x16xf32>, vector<1x16xf32>, vector<1x16xf32>, vector<1x16xf32>, vector<1x16xf32> -> vector<8x16xf32>
    %c0_45 = arith.constant 0 : index
    %c0_46 = arith.constant 0 : index
    %236 = vector.load %arg21[%c0_45, %c0_46] : memref<16x64xf32, #tpu.memory_space<vmem>>, vector<16x64xf32>
    %cst_47 = arith.constant dense<0.000000e+00> : vector<8x64xf32>
    %237 = tpu.matmul %0, %236, %cst_47 {dimension_numbers = #tpu.dot_dimension_numbers<[1], [0], [0], [1], [0, 0, 1, 1], [], []>} : vector<8x16xf32>, vector<16x64xf32>, vector<8x64xf32> -> vector<8x64xf32>
    %c0_48 = arith.constant 0 : index
    %c0_49 = arith.constant 0 : index
    %238 = vector.load %arg23[%c0_48, %c0_49] : memref<1x64xf32, #tpu.memory_space<vmem>>, vector<1x64xf32>
    %239 = vector.broadcast %238 : vector<1x64xf32> to vector<8x64xf32>
    %240 = arith.addf %237, %239 : vector<8x64xf32>
    %c0_50 = arith.constant 0 : index
    %c0_51 = arith.constant 0 : index
    %241 = vector.load %arg22[%c0_50, %c0_51] : memref<16x64xf32, #tpu.memory_space<vmem>>, vector<16x64xf32>
    %cst_52 = arith.constant 0.000000e+00 : f32
    %242 = vector.broadcast %cst_52 : f32 to vector<1x16xf32>
    %cst_53 = arith.constant 0.000000e+00 : f32
    %243 = vector.broadcast %cst_53 : f32 to vector<1x16xf32>
    %244 = vector.extract_strided_slice %240 {offsets = [7, 0], sizes = [1, 64], strides = [1, 1]} : vector<8x64xf32> to vector<1x64xf32>
    %cst_54 = arith.constant dense<0.000000e+00> : vector<1x64xf32>
    %245 = tpu.matmul %242, %241, %cst_54 {dimension_numbers = #tpu.dot_dimension_numbers<[1], [0], [0], [1], [0, 0, 1, 1], [], []>} : vector<1x16xf32>, vector<16x64xf32>, vector<1x64xf32> -> vector<1x64xf32>
    %246 = arith.addf %244, %245 : vector<1x64xf32>
    %247 = vector.extract_strided_slice %246 {offsets = [0, 0], sizes = [1, 16], strides = [1, 1]} : vector<1x64xf32> to vector<1x16xf32>
    %248 = arith.negf %247 : vector<1x16xf32>
    %249 = math.exp %248 : vector<1x16xf32>
    %cst_55 = arith.constant 1.000000e+00 : f32
    %250 = vector.broadcast %cst_55 : f32 to vector<1x16xf32>
    %251 = arith.addf %250, %249 : vector<1x16xf32>
    %252 = arith.divf %250, %251 : vector<1x16xf32>
    %253 = vector.extract_strided_slice %246 {offsets = [0, 16], sizes = [1, 16], strides = [1, 1]} : vector<1x64xf32> to vector<1x16xf32>
    %254 = arith.negf %253 : vector<1x16xf32>
    %255 = math.exp %254 : vector<1x16xf32>
    %cst_56 = arith.constant 1.000000e+00 : f32
    %256 = vector.broadcast %cst_56 : f32 to vector<1x16xf32>
    %257 = arith.addf %256, %255 : vector<1x16xf32>
    %258 = arith.divf %256, %257 : vector<1x16xf32>
    %259 = vector.extract_strided_slice %246 {offsets = [0, 32], sizes = [1, 16], strides = [1, 1]} : vector<1x64xf32> to vector<1x16xf32>
    %260 = math.tanh %259 : vector<1x16xf32>
    %261 = vector.extract_strided_slice %246 {offsets = [0, 48], sizes = [1, 16], strides = [1, 1]} : vector<1x64xf32> to vector<1x16xf32>
    %262 = arith.negf %261 : vector<1x16xf32>
    %263 = math.exp %262 : vector<1x16xf32>
    %cst_57 = arith.constant 1.000000e+00 : f32
    %264 = vector.broadcast %cst_57 : f32 to vector<1x16xf32>
    %265 = arith.addf %264, %263 : vector<1x16xf32>
    %266 = arith.divf %264, %265 : vector<1x16xf32>
    %267 = arith.mulf %258, %243 : vector<1x16xf32>
    %268 = arith.mulf %252, %260 : vector<1x16xf32>
    %269 = arith.addf %267, %268 : vector<1x16xf32>
    %270 = math.tanh %269 : vector<1x16xf32>
    %271 = arith.mulf %266, %270 : vector<1x16xf32>
    %272 = vector.extract_strided_slice %240 {offsets = [6, 0], sizes = [1, 64], strides = [1, 1]} : vector<8x64xf32> to vector<1x64xf32>
    %cst_58 = arith.constant dense<0.000000e+00> : vector<1x64xf32>
    %273 = tpu.matmul %271, %241, %cst_58 {dimension_numbers = #tpu.dot_dimension_numbers<[1], [0], [0], [1], [0, 0, 1, 1], [], []>} : vector<1x16xf32>, vector<16x64xf32>, vector<1x64xf32> -> vector<1x64xf32>
    %274 = arith.addf %272, %273 : vector<1x64xf32>
    %275 = vector.extract_strided_slice %274 {offsets = [0, 0], sizes = [1, 16], strides = [1, 1]} : vector<1x64xf32> to vector<1x16xf32>
    %276 = arith.negf %275 : vector<1x16xf32>
    %277 = math.exp %276 : vector<1x16xf32>
    %cst_59 = arith.constant 1.000000e+00 : f32
    %278 = vector.broadcast %cst_59 : f32 to vector<1x16xf32>
    %279 = arith.addf %278, %277 : vector<1x16xf32>
    %280 = arith.divf %278, %279 : vector<1x16xf32>
    %281 = vector.extract_strided_slice %274 {offsets = [0, 16], sizes = [1, 16], strides = [1, 1]} : vector<1x64xf32> to vector<1x16xf32>
    %282 = arith.negf %281 : vector<1x16xf32>
    %283 = math.exp %282 : vector<1x16xf32>
    %cst_60 = arith.constant 1.000000e+00 : f32
    %284 = vector.broadcast %cst_60 : f32 to vector<1x16xf32>
    %285 = arith.addf %284, %283 : vector<1x16xf32>
    %286 = arith.divf %284, %285 : vector<1x16xf32>
    %287 = vector.extract_strided_slice %274 {offsets = [0, 32], sizes = [1, 16], strides = [1, 1]} : vector<1x64xf32> to vector<1x16xf32>
    %288 = math.tanh %287 : vector<1x16xf32>
    %289 = vector.extract_strided_slice %274 {offsets = [0, 48], sizes = [1, 16], strides = [1, 1]} : vector<1x64xf32> to vector<1x16xf32>
    %290 = arith.negf %289 : vector<1x16xf32>
    %291 = math.exp %290 : vector<1x16xf32>
    %cst_61 = arith.constant 1.000000e+00 : f32
    %292 = vector.broadcast %cst_61 : f32 to vector<1x16xf32>
    %293 = arith.addf %292, %291 : vector<1x16xf32>
    %294 = arith.divf %292, %293 : vector<1x16xf32>
    %295 = arith.mulf %286, %269 : vector<1x16xf32>
    %296 = arith.mulf %280, %288 : vector<1x16xf32>
    %297 = arith.addf %295, %296 : vector<1x16xf32>
    %298 = math.tanh %297 : vector<1x16xf32>
    %299 = arith.mulf %294, %298 : vector<1x16xf32>
    %300 = vector.extract_strided_slice %240 {offsets = [5, 0], sizes = [1, 64], strides = [1, 1]} : vector<8x64xf32> to vector<1x64xf32>
    %cst_62 = arith.constant dense<0.000000e+00> : vector<1x64xf32>
    %301 = tpu.matmul %299, %241, %cst_62 {dimension_numbers = #tpu.dot_dimension_numbers<[1], [0], [0], [1], [0, 0, 1, 1], [], []>} : vector<1x16xf32>, vector<16x64xf32>, vector<1x64xf32> -> vector<1x64xf32>
    %302 = arith.addf %300, %301 : vector<1x64xf32>
    %303 = vector.extract_strided_slice %302 {offsets = [0, 0], sizes = [1, 16], strides = [1, 1]} : vector<1x64xf32> to vector<1x16xf32>
    %304 = arith.negf %303 : vector<1x16xf32>
    %305 = math.exp %304 : vector<1x16xf32>
    %cst_63 = arith.constant 1.000000e+00 : f32
    %306 = vector.broadcast %cst_63 : f32 to vector<1x16xf32>
    %307 = arith.addf %306, %305 : vector<1x16xf32>
    %308 = arith.divf %306, %307 : vector<1x16xf32>
    %309 = vector.extract_strided_slice %302 {offsets = [0, 16], sizes = [1, 16], strides = [1, 1]} : vector<1x64xf32> to vector<1x16xf32>
    %310 = arith.negf %309 : vector<1x16xf32>
    %311 = math.exp %310 : vector<1x16xf32>
    %cst_64 = arith.constant 1.000000e+00 : f32
    %312 = vector.broadcast %cst_64 : f32 to vector<1x16xf32>
    %313 = arith.addf %312, %311 : vector<1x16xf32>
    %314 = arith.divf %312, %313 : vector<1x16xf32>
    %315 = vector.extract_strided_slice %302 {offsets = [0, 32], sizes = [1, 16], strides = [1, 1]} : vector<1x64xf32> to vector<1x16xf32>
    %316 = math.tanh %315 : vector<1x16xf32>
    %317 = vector.extract_strided_slice %302 {offsets = [0, 48], sizes = [1, 16], strides = [1, 1]} : vector<1x64xf32> to vector<1x16xf32>
    %318 = arith.negf %317 : vector<1x16xf32>
    %319 = math.exp %318 : vector<1x16xf32>
    %cst_65 = arith.constant 1.000000e+00 : f32
    %320 = vector.broadcast %cst_65 : f32 to vector<1x16xf32>
    %321 = arith.addf %320, %319 : vector<1x16xf32>
    %322 = arith.divf %320, %321 : vector<1x16xf32>
    %323 = arith.mulf %314, %297 : vector<1x16xf32>
    %324 = arith.mulf %308, %316 : vector<1x16xf32>
    %325 = arith.addf %323, %324 : vector<1x16xf32>
    %326 = math.tanh %325 : vector<1x16xf32>
    %327 = arith.mulf %322, %326 : vector<1x16xf32>
    %328 = vector.extract_strided_slice %240 {offsets = [4, 0], sizes = [1, 64], strides = [1, 1]} : vector<8x64xf32> to vector<1x64xf32>
    %cst_66 = arith.constant dense<0.000000e+00> : vector<1x64xf32>
    %329 = tpu.matmul %327, %241, %cst_66 {dimension_numbers = #tpu.dot_dimension_numbers<[1], [0], [0], [1], [0, 0, 1, 1], [], []>} : vector<1x16xf32>, vector<16x64xf32>, vector<1x64xf32> -> vector<1x64xf32>
    %330 = arith.addf %328, %329 : vector<1x64xf32>
    %331 = vector.extract_strided_slice %330 {offsets = [0, 0], sizes = [1, 16], strides = [1, 1]} : vector<1x64xf32> to vector<1x16xf32>
    %332 = arith.negf %331 : vector<1x16xf32>
    %333 = math.exp %332 : vector<1x16xf32>
    %cst_67 = arith.constant 1.000000e+00 : f32
    %334 = vector.broadcast %cst_67 : f32 to vector<1x16xf32>
    %335 = arith.addf %334, %333 : vector<1x16xf32>
    %336 = arith.divf %334, %335 : vector<1x16xf32>
    %337 = vector.extract_strided_slice %330 {offsets = [0, 16], sizes = [1, 16], strides = [1, 1]} : vector<1x64xf32> to vector<1x16xf32>
    %338 = arith.negf %337 : vector<1x16xf32>
    %339 = math.exp %338 : vector<1x16xf32>
    %cst_68 = arith.constant 1.000000e+00 : f32
    %340 = vector.broadcast %cst_68 : f32 to vector<1x16xf32>
    %341 = arith.addf %340, %339 : vector<1x16xf32>
    %342 = arith.divf %340, %341 : vector<1x16xf32>
    %343 = vector.extract_strided_slice %330 {offsets = [0, 32], sizes = [1, 16], strides = [1, 1]} : vector<1x64xf32> to vector<1x16xf32>
    %344 = math.tanh %343 : vector<1x16xf32>
    %345 = vector.extract_strided_slice %330 {offsets = [0, 48], sizes = [1, 16], strides = [1, 1]} : vector<1x64xf32> to vector<1x16xf32>
    %346 = arith.negf %345 : vector<1x16xf32>
    %347 = math.exp %346 : vector<1x16xf32>
    %cst_69 = arith.constant 1.000000e+00 : f32
    %348 = vector.broadcast %cst_69 : f32 to vector<1x16xf32>
    %349 = arith.addf %348, %347 : vector<1x16xf32>
    %350 = arith.divf %348, %349 : vector<1x16xf32>
    %351 = arith.mulf %342, %325 : vector<1x16xf32>
    %352 = arith.mulf %336, %344 : vector<1x16xf32>
    %353 = arith.addf %351, %352 : vector<1x16xf32>
    %354 = math.tanh %353 : vector<1x16xf32>
    %355 = arith.mulf %350, %354 : vector<1x16xf32>
    %356 = vector.extract_strided_slice %240 {offsets = [3, 0], sizes = [1, 64], strides = [1, 1]} : vector<8x64xf32> to vector<1x64xf32>
    %cst_70 = arith.constant dense<0.000000e+00> : vector<1x64xf32>
    %357 = tpu.matmul %355, %241, %cst_70 {dimension_numbers = #tpu.dot_dimension_numbers<[1], [0], [0], [1], [0, 0, 1, 1], [], []>} : vector<1x16xf32>, vector<16x64xf32>, vector<1x64xf32> -> vector<1x64xf32>
    %358 = arith.addf %356, %357 : vector<1x64xf32>
    %359 = vector.extract_strided_slice %358 {offsets = [0, 0], sizes = [1, 16], strides = [1, 1]} : vector<1x64xf32> to vector<1x16xf32>
    %360 = arith.negf %359 : vector<1x16xf32>
    %361 = math.exp %360 : vector<1x16xf32>
    %cst_71 = arith.constant 1.000000e+00 : f32
    %362 = vector.broadcast %cst_71 : f32 to vector<1x16xf32>
    %363 = arith.addf %362, %361 : vector<1x16xf32>
    %364 = arith.divf %362, %363 : vector<1x16xf32>
    %365 = vector.extract_strided_slice %358 {offsets = [0, 16], sizes = [1, 16], strides = [1, 1]} : vector<1x64xf32> to vector<1x16xf32>
    %366 = arith.negf %365 : vector<1x16xf32>
    %367 = math.exp %366 : vector<1x16xf32>
    %cst_72 = arith.constant 1.000000e+00 : f32
    %368 = vector.broadcast %cst_72 : f32 to vector<1x16xf32>
    %369 = arith.addf %368, %367 : vector<1x16xf32>
    %370 = arith.divf %368, %369 : vector<1x16xf32>
    %371 = vector.extract_strided_slice %358 {offsets = [0, 32], sizes = [1, 16], strides = [1, 1]} : vector<1x64xf32> to vector<1x16xf32>
    %372 = math.tanh %371 : vector<1x16xf32>
    %373 = vector.extract_strided_slice %358 {offsets = [0, 48], sizes = [1, 16], strides = [1, 1]} : vector<1x64xf32> to vector<1x16xf32>
    %374 = arith.negf %373 : vector<1x16xf32>
    %375 = math.exp %374 : vector<1x16xf32>
    %cst_73 = arith.constant 1.000000e+00 : f32
    %376 = vector.broadcast %cst_73 : f32 to vector<1x16xf32>
    %377 = arith.addf %376, %375 : vector<1x16xf32>
    %378 = arith.divf %376, %377 : vector<1x16xf32>
    %379 = arith.mulf %370, %353 : vector<1x16xf32>
    %380 = arith.mulf %364, %372 : vector<1x16xf32>
    %381 = arith.addf %379, %380 : vector<1x16xf32>
    %382 = math.tanh %381 : vector<1x16xf32>
    %383 = arith.mulf %378, %382 : vector<1x16xf32>
    %384 = vector.extract_strided_slice %240 {offsets = [2, 0], sizes = [1, 64], strides = [1, 1]} : vector<8x64xf32> to vector<1x64xf32>
    %cst_74 = arith.constant dense<0.000000e+00> : vector<1x64xf32>
    %385 = tpu.matmul %383, %241, %cst_74 {dimension_numbers = #tpu.dot_dimension_numbers<[1], [0], [0], [1], [0, 0, 1, 1], [], []>} : vector<1x16xf32>, vector<16x64xf32>, vector<1x64xf32> -> vector<1x64xf32>
    %386 = arith.addf %384, %385 : vector<1x64xf32>
    %387 = vector.extract_strided_slice %386 {offsets = [0, 0], sizes = [1, 16], strides = [1, 1]} : vector<1x64xf32> to vector<1x16xf32>
    %388 = arith.negf %387 : vector<1x16xf32>
    %389 = math.exp %388 : vector<1x16xf32>
    %cst_75 = arith.constant 1.000000e+00 : f32
    %390 = vector.broadcast %cst_75 : f32 to vector<1x16xf32>
    %391 = arith.addf %390, %389 : vector<1x16xf32>
    %392 = arith.divf %390, %391 : vector<1x16xf32>
    %393 = vector.extract_strided_slice %386 {offsets = [0, 16], sizes = [1, 16], strides = [1, 1]} : vector<1x64xf32> to vector<1x16xf32>
    %394 = arith.negf %393 : vector<1x16xf32>
    %395 = math.exp %394 : vector<1x16xf32>
    %cst_76 = arith.constant 1.000000e+00 : f32
    %396 = vector.broadcast %cst_76 : f32 to vector<1x16xf32>
    %397 = arith.addf %396, %395 : vector<1x16xf32>
    %398 = arith.divf %396, %397 : vector<1x16xf32>
    %399 = vector.extract_strided_slice %386 {offsets = [0, 32], sizes = [1, 16], strides = [1, 1]} : vector<1x64xf32> to vector<1x16xf32>
    %400 = math.tanh %399 : vector<1x16xf32>
    %401 = vector.extract_strided_slice %386 {offsets = [0, 48], sizes = [1, 16], strides = [1, 1]} : vector<1x64xf32> to vector<1x16xf32>
    %402 = arith.negf %401 : vector<1x16xf32>
    %403 = math.exp %402 : vector<1x16xf32>
    %cst_77 = arith.constant 1.000000e+00 : f32
    %404 = vector.broadcast %cst_77 : f32 to vector<1x16xf32>
    %405 = arith.addf %404, %403 : vector<1x16xf32>
    %406 = arith.divf %404, %405 : vector<1x16xf32>
    %407 = arith.mulf %398, %381 : vector<1x16xf32>
    %408 = arith.mulf %392, %400 : vector<1x16xf32>
    %409 = arith.addf %407, %408 : vector<1x16xf32>
    %410 = math.tanh %409 : vector<1x16xf32>
    %411 = arith.mulf %406, %410 : vector<1x16xf32>
    %412 = vector.extract_strided_slice %240 {offsets = [1, 0], sizes = [1, 64], strides = [1, 1]} : vector<8x64xf32> to vector<1x64xf32>
    %cst_78 = arith.constant dense<0.000000e+00> : vector<1x64xf32>
    %413 = tpu.matmul %411, %241, %cst_78 {dimension_numbers = #tpu.dot_dimension_numbers<[1], [0], [0], [1], [0, 0, 1, 1], [], []>} : vector<1x16xf32>, vector<16x64xf32>, vector<1x64xf32> -> vector<1x64xf32>
    %414 = arith.addf %412, %413 : vector<1x64xf32>
    %415 = vector.extract_strided_slice %414 {offsets = [0, 0], sizes = [1, 16], strides = [1, 1]} : vector<1x64xf32> to vector<1x16xf32>
    %416 = arith.negf %415 : vector<1x16xf32>
    %417 = math.exp %416 : vector<1x16xf32>
    %cst_79 = arith.constant 1.000000e+00 : f32
    %418 = vector.broadcast %cst_79 : f32 to vector<1x16xf32>
    %419 = arith.addf %418, %417 : vector<1x16xf32>
    %420 = arith.divf %418, %419 : vector<1x16xf32>
    %421 = vector.extract_strided_slice %414 {offsets = [0, 16], sizes = [1, 16], strides = [1, 1]} : vector<1x64xf32> to vector<1x16xf32>
    %422 = arith.negf %421 : vector<1x16xf32>
    %423 = math.exp %422 : vector<1x16xf32>
    %cst_80 = arith.constant 1.000000e+00 : f32
    %424 = vector.broadcast %cst_80 : f32 to vector<1x16xf32>
    %425 = arith.addf %424, %423 : vector<1x16xf32>
    %426 = arith.divf %424, %425 : vector<1x16xf32>
    %427 = vector.extract_strided_slice %414 {offsets = [0, 32], sizes = [1, 16], strides = [1, 1]} : vector<1x64xf32> to vector<1x16xf32>
    %428 = math.tanh %427 : vector<1x16xf32>
    %429 = vector.extract_strided_slice %414 {offsets = [0, 48], sizes = [1, 16], strides = [1, 1]} : vector<1x64xf32> to vector<1x16xf32>
    %430 = arith.negf %429 : vector<1x16xf32>
    %431 = math.exp %430 : vector<1x16xf32>
    %cst_81 = arith.constant 1.000000e+00 : f32
    %432 = vector.broadcast %cst_81 : f32 to vector<1x16xf32>
    %433 = arith.addf %432, %431 : vector<1x16xf32>
    %434 = arith.divf %432, %433 : vector<1x16xf32>
    %435 = arith.mulf %426, %409 : vector<1x16xf32>
    %436 = arith.mulf %420, %428 : vector<1x16xf32>
    %437 = arith.addf %435, %436 : vector<1x16xf32>
    %438 = math.tanh %437 : vector<1x16xf32>
    %439 = arith.mulf %434, %438 : vector<1x16xf32>
    %440 = vector.extract_strided_slice %240 {offsets = [0, 0], sizes = [1, 64], strides = [1, 1]} : vector<8x64xf32> to vector<1x64xf32>
    %cst_82 = arith.constant dense<0.000000e+00> : vector<1x64xf32>
    %441 = tpu.matmul %439, %241, %cst_82 {dimension_numbers = #tpu.dot_dimension_numbers<[1], [0], [0], [1], [0, 0, 1, 1], [], []>} : vector<1x16xf32>, vector<16x64xf32>, vector<1x64xf32> -> vector<1x64xf32>
    %442 = arith.addf %440, %441 : vector<1x64xf32>
    %443 = vector.extract_strided_slice %442 {offsets = [0, 0], sizes = [1, 16], strides = [1, 1]} : vector<1x64xf32> to vector<1x16xf32>
    %444 = arith.negf %443 : vector<1x16xf32>
    %445 = math.exp %444 : vector<1x16xf32>
    %cst_83 = arith.constant 1.000000e+00 : f32
    %446 = vector.broadcast %cst_83 : f32 to vector<1x16xf32>
    %447 = arith.addf %446, %445 : vector<1x16xf32>
    %448 = arith.divf %446, %447 : vector<1x16xf32>
    %449 = vector.extract_strided_slice %442 {offsets = [0, 16], sizes = [1, 16], strides = [1, 1]} : vector<1x64xf32> to vector<1x16xf32>
    %450 = arith.negf %449 : vector<1x16xf32>
    %451 = math.exp %450 : vector<1x16xf32>
    %cst_84 = arith.constant 1.000000e+00 : f32
    %452 = vector.broadcast %cst_84 : f32 to vector<1x16xf32>
    %453 = arith.addf %452, %451 : vector<1x16xf32>
    %454 = arith.divf %452, %453 : vector<1x16xf32>
    %455 = vector.extract_strided_slice %442 {offsets = [0, 32], sizes = [1, 16], strides = [1, 1]} : vector<1x64xf32> to vector<1x16xf32>
    %456 = math.tanh %455 : vector<1x16xf32>
    %457 = vector.extract_strided_slice %442 {offsets = [0, 48], sizes = [1, 16], strides = [1, 1]} : vector<1x64xf32> to vector<1x16xf32>
    %458 = arith.negf %457 : vector<1x16xf32>
    %459 = math.exp %458 : vector<1x16xf32>
    %cst_85 = arith.constant 1.000000e+00 : f32
    %460 = vector.broadcast %cst_85 : f32 to vector<1x16xf32>
    %461 = arith.addf %460, %459 : vector<1x16xf32>
    %462 = arith.divf %460, %461 : vector<1x16xf32>
    %463 = arith.mulf %454, %437 : vector<1x16xf32>
    %464 = arith.mulf %448, %456 : vector<1x16xf32>
    %465 = arith.addf %463, %464 : vector<1x16xf32>
    %466 = math.tanh %465 : vector<1x16xf32>
    %467 = arith.mulf %462, %466 : vector<1x16xf32>
    %468 = tpu.concatenate %467, %439, %411, %383, %355, %327, %299, %271 in 0 : vector<1x16xf32>, vector<1x16xf32>, vector<1x16xf32>, vector<1x16xf32>, vector<1x16xf32>, vector<1x16xf32>, vector<1x16xf32>, vector<1x16xf32> -> vector<8x16xf32>
    %469 = tpu.concatenate %235, %468 in 1 : vector<8x16xf32>, vector<8x16xf32> -> vector<8x32xf32>
    %c0_86 = arith.constant 0 : index
    %c0_87 = arith.constant 0 : index
    %470 = vector.load %arg10[%c0_86, %c0_87] : memref<32x64xf32, #tpu.memory_space<vmem>>, vector<32x64xf32>
    %cst_88 = arith.constant dense<0.000000e+00> : vector<8x64xf32>
    %471 = tpu.matmul %469, %470, %cst_88 {dimension_numbers = #tpu.dot_dimension_numbers<[1], [0], [0], [1], [0, 0, 1, 1], [], []>} : vector<8x32xf32>, vector<32x64xf32>, vector<8x64xf32> -> vector<8x64xf32>
    %c0_89 = arith.constant 0 : index
    %c0_90 = arith.constant 0 : index
    %472 = vector.load %arg12[%c0_89, %c0_90] : memref<1x64xf32, #tpu.memory_space<vmem>>, vector<1x64xf32>
    %473 = vector.broadcast %472 : vector<1x64xf32> to vector<8x64xf32>
    %474 = arith.addf %471, %473 : vector<8x64xf32>
    %c0_91 = arith.constant 0 : index
    %c0_92 = arith.constant 0 : index
    %475 = vector.load %arg11[%c0_91, %c0_92] : memref<16x64xf32, #tpu.memory_space<vmem>>, vector<16x64xf32>
    %cst_93 = arith.constant 0.000000e+00 : f32
    %476 = vector.broadcast %cst_93 : f32 to vector<1x16xf32>
    %cst_94 = arith.constant 0.000000e+00 : f32
    %477 = vector.broadcast %cst_94 : f32 to vector<1x16xf32>
    %478 = vector.extract_strided_slice %474 {offsets = [0, 0], sizes = [1, 64], strides = [1, 1]} : vector<8x64xf32> to vector<1x64xf32>
    %cst_95 = arith.constant dense<0.000000e+00> : vector<1x64xf32>
    %479 = tpu.matmul %476, %475, %cst_95 {dimension_numbers = #tpu.dot_dimension_numbers<[1], [0], [0], [1], [0, 0, 1, 1], [], []>} : vector<1x16xf32>, vector<16x64xf32>, vector<1x64xf32> -> vector<1x64xf32>
    %480 = arith.addf %478, %479 : vector<1x64xf32>
    %481 = vector.extract_strided_slice %480 {offsets = [0, 0], sizes = [1, 16], strides = [1, 1]} : vector<1x64xf32> to vector<1x16xf32>
    %482 = arith.negf %481 : vector<1x16xf32>
    %483 = math.exp %482 : vector<1x16xf32>
    %cst_96 = arith.constant 1.000000e+00 : f32
    %484 = vector.broadcast %cst_96 : f32 to vector<1x16xf32>
    %485 = arith.addf %484, %483 : vector<1x16xf32>
    %486 = arith.divf %484, %485 : vector<1x16xf32>
    %487 = vector.extract_strided_slice %480 {offsets = [0, 16], sizes = [1, 16], strides = [1, 1]} : vector<1x64xf32> to vector<1x16xf32>
    %488 = arith.negf %487 : vector<1x16xf32>
    %489 = math.exp %488 : vector<1x16xf32>
    %cst_97 = arith.constant 1.000000e+00 : f32
    %490 = vector.broadcast %cst_97 : f32 to vector<1x16xf32>
    %491 = arith.addf %490, %489 : vector<1x16xf32>
    %492 = arith.divf %490, %491 : vector<1x16xf32>
    %493 = vector.extract_strided_slice %480 {offsets = [0, 32], sizes = [1, 16], strides = [1, 1]} : vector<1x64xf32> to vector<1x16xf32>
    %494 = math.tanh %493 : vector<1x16xf32>
    %495 = vector.extract_strided_slice %480 {offsets = [0, 48], sizes = [1, 16], strides = [1, 1]} : vector<1x64xf32> to vector<1x16xf32>
    %496 = arith.negf %495 : vector<1x16xf32>
    %497 = math.exp %496 : vector<1x16xf32>
    %cst_98 = arith.constant 1.000000e+00 : f32
    %498 = vector.broadcast %cst_98 : f32 to vector<1x16xf32>
    %499 = arith.addf %498, %497 : vector<1x16xf32>
    %500 = arith.divf %498, %499 : vector<1x16xf32>
    %501 = arith.mulf %492, %477 : vector<1x16xf32>
    %502 = arith.mulf %486, %494 : vector<1x16xf32>
    %503 = arith.addf %501, %502 : vector<1x16xf32>
    %504 = math.tanh %503 : vector<1x16xf32>
    %505 = arith.mulf %500, %504 : vector<1x16xf32>
    %506 = vector.extract_strided_slice %474 {offsets = [1, 0], sizes = [1, 64], strides = [1, 1]} : vector<8x64xf32> to vector<1x64xf32>
    %cst_99 = arith.constant dense<0.000000e+00> : vector<1x64xf32>
    %507 = tpu.matmul %505, %475, %cst_99 {dimension_numbers = #tpu.dot_dimension_numbers<[1], [0], [0], [1], [0, 0, 1, 1], [], []>} : vector<1x16xf32>, vector<16x64xf32>, vector<1x64xf32> -> vector<1x64xf32>
    %508 = arith.addf %506, %507 : vector<1x64xf32>
    %509 = vector.extract_strided_slice %508 {offsets = [0, 0], sizes = [1, 16], strides = [1, 1]} : vector<1x64xf32> to vector<1x16xf32>
    %510 = arith.negf %509 : vector<1x16xf32>
    %511 = math.exp %510 : vector<1x16xf32>
    %cst_100 = arith.constant 1.000000e+00 : f32
    %512 = vector.broadcast %cst_100 : f32 to vector<1x16xf32>
    %513 = arith.addf %512, %511 : vector<1x16xf32>
    %514 = arith.divf %512, %513 : vector<1x16xf32>
    %515 = vector.extract_strided_slice %508 {offsets = [0, 16], sizes = [1, 16], strides = [1, 1]} : vector<1x64xf32> to vector<1x16xf32>
    %516 = arith.negf %515 : vector<1x16xf32>
    %517 = math.exp %516 : vector<1x16xf32>
    %cst_101 = arith.constant 1.000000e+00 : f32
    %518 = vector.broadcast %cst_101 : f32 to vector<1x16xf32>
    %519 = arith.addf %518, %517 : vector<1x16xf32>
    %520 = arith.divf %518, %519 : vector<1x16xf32>
    %521 = vector.extract_strided_slice %508 {offsets = [0, 32], sizes = [1, 16], strides = [1, 1]} : vector<1x64xf32> to vector<1x16xf32>
    %522 = math.tanh %521 : vector<1x16xf32>
    %523 = vector.extract_strided_slice %508 {offsets = [0, 48], sizes = [1, 16], strides = [1, 1]} : vector<1x64xf32> to vector<1x16xf32>
    %524 = arith.negf %523 : vector<1x16xf32>
    %525 = math.exp %524 : vector<1x16xf32>
    %cst_102 = arith.constant 1.000000e+00 : f32
    %526 = vector.broadcast %cst_102 : f32 to vector<1x16xf32>
    %527 = arith.addf %526, %525 : vector<1x16xf32>
    %528 = arith.divf %526, %527 : vector<1x16xf32>
    %529 = arith.mulf %520, %503 : vector<1x16xf32>
    %530 = arith.mulf %514, %522 : vector<1x16xf32>
    %531 = arith.addf %529, %530 : vector<1x16xf32>
    %532 = math.tanh %531 : vector<1x16xf32>
    %533 = arith.mulf %528, %532 : vector<1x16xf32>
    %534 = vector.extract_strided_slice %474 {offsets = [2, 0], sizes = [1, 64], strides = [1, 1]} : vector<8x64xf32> to vector<1x64xf32>
    %cst_103 = arith.constant dense<0.000000e+00> : vector<1x64xf32>
    %535 = tpu.matmul %533, %475, %cst_103 {dimension_numbers = #tpu.dot_dimension_numbers<[1], [0], [0], [1], [0, 0, 1, 1], [], []>} : vector<1x16xf32>, vector<16x64xf32>, vector<1x64xf32> -> vector<1x64xf32>
    %536 = arith.addf %534, %535 : vector<1x64xf32>
    %537 = vector.extract_strided_slice %536 {offsets = [0, 0], sizes = [1, 16], strides = [1, 1]} : vector<1x64xf32> to vector<1x16xf32>
    %538 = arith.negf %537 : vector<1x16xf32>
    %539 = math.exp %538 : vector<1x16xf32>
    %cst_104 = arith.constant 1.000000e+00 : f32
    %540 = vector.broadcast %cst_104 : f32 to vector<1x16xf32>
    %541 = arith.addf %540, %539 : vector<1x16xf32>
    %542 = arith.divf %540, %541 : vector<1x16xf32>
    %543 = vector.extract_strided_slice %536 {offsets = [0, 16], sizes = [1, 16], strides = [1, 1]} : vector<1x64xf32> to vector<1x16xf32>
    %544 = arith.negf %543 : vector<1x16xf32>
    %545 = math.exp %544 : vector<1x16xf32>
    %cst_105 = arith.constant 1.000000e+00 : f32
    %546 = vector.broadcast %cst_105 : f32 to vector<1x16xf32>
    %547 = arith.addf %546, %545 : vector<1x16xf32>
    %548 = arith.divf %546, %547 : vector<1x16xf32>
    %549 = vector.extract_strided_slice %536 {offsets = [0, 32], sizes = [1, 16], strides = [1, 1]} : vector<1x64xf32> to vector<1x16xf32>
    %550 = math.tanh %549 : vector<1x16xf32>
    %551 = vector.extract_strided_slice %536 {offsets = [0, 48], sizes = [1, 16], strides = [1, 1]} : vector<1x64xf32> to vector<1x16xf32>
    %552 = arith.negf %551 : vector<1x16xf32>
    %553 = math.exp %552 : vector<1x16xf32>
    %cst_106 = arith.constant 1.000000e+00 : f32
    %554 = vector.broadcast %cst_106 : f32 to vector<1x16xf32>
    %555 = arith.addf %554, %553 : vector<1x16xf32>
    %556 = arith.divf %554, %555 : vector<1x16xf32>
    %557 = arith.mulf %548, %531 : vector<1x16xf32>
    %558 = arith.mulf %542, %550 : vector<1x16xf32>
    %559 = arith.addf %557, %558 : vector<1x16xf32>
    %560 = math.tanh %559 : vector<1x16xf32>
    %561 = arith.mulf %556, %560 : vector<1x16xf32>
    %562 = vector.extract_strided_slice %474 {offsets = [3, 0], sizes = [1, 64], strides = [1, 1]} : vector<8x64xf32> to vector<1x64xf32>
    %cst_107 = arith.constant dense<0.000000e+00> : vector<1x64xf32>
    %563 = tpu.matmul %561, %475, %cst_107 {dimension_numbers = #tpu.dot_dimension_numbers<[1], [0], [0], [1], [0, 0, 1, 1], [], []>} : vector<1x16xf32>, vector<16x64xf32>, vector<1x64xf32> -> vector<1x64xf32>
    %564 = arith.addf %562, %563 : vector<1x64xf32>
    %565 = vector.extract_strided_slice %564 {offsets = [0, 0], sizes = [1, 16], strides = [1, 1]} : vector<1x64xf32> to vector<1x16xf32>
    %566 = arith.negf %565 : vector<1x16xf32>
    %567 = math.exp %566 : vector<1x16xf32>
    %cst_108 = arith.constant 1.000000e+00 : f32
    %568 = vector.broadcast %cst_108 : f32 to vector<1x16xf32>
    %569 = arith.addf %568, %567 : vector<1x16xf32>
    %570 = arith.divf %568, %569 : vector<1x16xf32>
    %571 = vector.extract_strided_slice %564 {offsets = [0, 16], sizes = [1, 16], strides = [1, 1]} : vector<1x64xf32> to vector<1x16xf32>
    %572 = arith.negf %571 : vector<1x16xf32>
    %573 = math.exp %572 : vector<1x16xf32>
    %cst_109 = arith.constant 1.000000e+00 : f32
    %574 = vector.broadcast %cst_109 : f32 to vector<1x16xf32>
    %575 = arith.addf %574, %573 : vector<1x16xf32>
    %576 = arith.divf %574, %575 : vector<1x16xf32>
    %577 = vector.extract_strided_slice %564 {offsets = [0, 32], sizes = [1, 16], strides = [1, 1]} : vector<1x64xf32> to vector<1x16xf32>
    %578 = math.tanh %577 : vector<1x16xf32>
    %579 = vector.extract_strided_slice %564 {offsets = [0, 48], sizes = [1, 16], strides = [1, 1]} : vector<1x64xf32> to vector<1x16xf32>
    %580 = arith.negf %579 : vector<1x16xf32>
    %581 = math.exp %580 : vector<1x16xf32>
    %cst_110 = arith.constant 1.000000e+00 : f32
    %582 = vector.broadcast %cst_110 : f32 to vector<1x16xf32>
    %583 = arith.addf %582, %581 : vector<1x16xf32>
    %584 = arith.divf %582, %583 : vector<1x16xf32>
    %585 = arith.mulf %576, %559 : vector<1x16xf32>
    %586 = arith.mulf %570, %578 : vector<1x16xf32>
    %587 = arith.addf %585, %586 : vector<1x16xf32>
    %588 = math.tanh %587 : vector<1x16xf32>
    %589 = arith.mulf %584, %588 : vector<1x16xf32>
    %590 = vector.extract_strided_slice %474 {offsets = [4, 0], sizes = [1, 64], strides = [1, 1]} : vector<8x64xf32> to vector<1x64xf32>
    %cst_111 = arith.constant dense<0.000000e+00> : vector<1x64xf32>
    %591 = tpu.matmul %589, %475, %cst_111 {dimension_numbers = #tpu.dot_dimension_numbers<[1], [0], [0], [1], [0, 0, 1, 1], [], []>} : vector<1x16xf32>, vector<16x64xf32>, vector<1x64xf32> -> vector<1x64xf32>
    %592 = arith.addf %590, %591 : vector<1x64xf32>
    %593 = vector.extract_strided_slice %592 {offsets = [0, 0], sizes = [1, 16], strides = [1, 1]} : vector<1x64xf32> to vector<1x16xf32>
    %594 = arith.negf %593 : vector<1x16xf32>
    %595 = math.exp %594 : vector<1x16xf32>
    %cst_112 = arith.constant 1.000000e+00 : f32
    %596 = vector.broadcast %cst_112 : f32 to vector<1x16xf32>
    %597 = arith.addf %596, %595 : vector<1x16xf32>
    %598 = arith.divf %596, %597 : vector<1x16xf32>
    %599 = vector.extract_strided_slice %592 {offsets = [0, 16], sizes = [1, 16], strides = [1, 1]} : vector<1x64xf32> to vector<1x16xf32>
    %600 = arith.negf %599 : vector<1x16xf32>
    %601 = math.exp %600 : vector<1x16xf32>
    %cst_113 = arith.constant 1.000000e+00 : f32
    %602 = vector.broadcast %cst_113 : f32 to vector<1x16xf32>
    %603 = arith.addf %602, %601 : vector<1x16xf32>
    %604 = arith.divf %602, %603 : vector<1x16xf32>
    %605 = vector.extract_strided_slice %592 {offsets = [0, 32], sizes = [1, 16], strides = [1, 1]} : vector<1x64xf32> to vector<1x16xf32>
    %606 = math.tanh %605 : vector<1x16xf32>
    %607 = vector.extract_strided_slice %592 {offsets = [0, 48], sizes = [1, 16], strides = [1, 1]} : vector<1x64xf32> to vector<1x16xf32>
    %608 = arith.negf %607 : vector<1x16xf32>
    %609 = math.exp %608 : vector<1x16xf32>
    %cst_114 = arith.constant 1.000000e+00 : f32
    %610 = vector.broadcast %cst_114 : f32 to vector<1x16xf32>
    %611 = arith.addf %610, %609 : vector<1x16xf32>
    %612 = arith.divf %610, %611 : vector<1x16xf32>
    %613 = arith.mulf %604, %587 : vector<1x16xf32>
    %614 = arith.mulf %598, %606 : vector<1x16xf32>
    %615 = arith.addf %613, %614 : vector<1x16xf32>
    %616 = math.tanh %615 : vector<1x16xf32>
    %617 = arith.mulf %612, %616 : vector<1x16xf32>
    %618 = vector.extract_strided_slice %474 {offsets = [5, 0], sizes = [1, 64], strides = [1, 1]} : vector<8x64xf32> to vector<1x64xf32>
    %cst_115 = arith.constant dense<0.000000e+00> : vector<1x64xf32>
    %619 = tpu.matmul %617, %475, %cst_115 {dimension_numbers = #tpu.dot_dimension_numbers<[1], [0], [0], [1], [0, 0, 1, 1], [], []>} : vector<1x16xf32>, vector<16x64xf32>, vector<1x64xf32> -> vector<1x64xf32>
    %620 = arith.addf %618, %619 : vector<1x64xf32>
    %621 = vector.extract_strided_slice %620 {offsets = [0, 0], sizes = [1, 16], strides = [1, 1]} : vector<1x64xf32> to vector<1x16xf32>
    %622 = arith.negf %621 : vector<1x16xf32>
    %623 = math.exp %622 : vector<1x16xf32>
    %cst_116 = arith.constant 1.000000e+00 : f32
    %624 = vector.broadcast %cst_116 : f32 to vector<1x16xf32>
    %625 = arith.addf %624, %623 : vector<1x16xf32>
    %626 = arith.divf %624, %625 : vector<1x16xf32>
    %627 = vector.extract_strided_slice %620 {offsets = [0, 16], sizes = [1, 16], strides = [1, 1]} : vector<1x64xf32> to vector<1x16xf32>
    %628 = arith.negf %627 : vector<1x16xf32>
    %629 = math.exp %628 : vector<1x16xf32>
    %cst_117 = arith.constant 1.000000e+00 : f32
    %630 = vector.broadcast %cst_117 : f32 to vector<1x16xf32>
    %631 = arith.addf %630, %629 : vector<1x16xf32>
    %632 = arith.divf %630, %631 : vector<1x16xf32>
    %633 = vector.extract_strided_slice %620 {offsets = [0, 32], sizes = [1, 16], strides = [1, 1]} : vector<1x64xf32> to vector<1x16xf32>
    %634 = math.tanh %633 : vector<1x16xf32>
    %635 = vector.extract_strided_slice %620 {offsets = [0, 48], sizes = [1, 16], strides = [1, 1]} : vector<1x64xf32> to vector<1x16xf32>
    %636 = arith.negf %635 : vector<1x16xf32>
    %637 = math.exp %636 : vector<1x16xf32>
    %cst_118 = arith.constant 1.000000e+00 : f32
    %638 = vector.broadcast %cst_118 : f32 to vector<1x16xf32>
    %639 = arith.addf %638, %637 : vector<1x16xf32>
    %640 = arith.divf %638, %639 : vector<1x16xf32>
    %641 = arith.mulf %632, %615 : vector<1x16xf32>
    %642 = arith.mulf %626, %634 : vector<1x16xf32>
    %643 = arith.addf %641, %642 : vector<1x16xf32>
    %644 = math.tanh %643 : vector<1x16xf32>
    %645 = arith.mulf %640, %644 : vector<1x16xf32>
    %646 = vector.extract_strided_slice %474 {offsets = [6, 0], sizes = [1, 64], strides = [1, 1]} : vector<8x64xf32> to vector<1x64xf32>
    %cst_119 = arith.constant dense<0.000000e+00> : vector<1x64xf32>
    %647 = tpu.matmul %645, %475, %cst_119 {dimension_numbers = #tpu.dot_dimension_numbers<[1], [0], [0], [1], [0, 0, 1, 1], [], []>} : vector<1x16xf32>, vector<16x64xf32>, vector<1x64xf32> -> vector<1x64xf32>
    %648 = arith.addf %646, %647 : vector<1x64xf32>
    %649 = vector.extract_strided_slice %648 {offsets = [0, 0], sizes = [1, 16], strides = [1, 1]} : vector<1x64xf32> to vector<1x16xf32>
    %650 = arith.negf %649 : vector<1x16xf32>
    %651 = math.exp %650 : vector<1x16xf32>
    %cst_120 = arith.constant 1.000000e+00 : f32
    %652 = vector.broadcast %cst_120 : f32 to vector<1x16xf32>
    %653 = arith.addf %652, %651 : vector<1x16xf32>
    %654 = arith.divf %652, %653 : vector<1x16xf32>
    %655 = vector.extract_strided_slice %648 {offsets = [0, 16], sizes = [1, 16], strides = [1, 1]} : vector<1x64xf32> to vector<1x16xf32>
    %656 = arith.negf %655 : vector<1x16xf32>
    %657 = math.exp %656 : vector<1x16xf32>
    %cst_121 = arith.constant 1.000000e+00 : f32
    %658 = vector.broadcast %cst_121 : f32 to vector<1x16xf32>
    %659 = arith.addf %658, %657 : vector<1x16xf32>
    %660 = arith.divf %658, %659 : vector<1x16xf32>
    %661 = vector.extract_strided_slice %648 {offsets = [0, 32], sizes = [1, 16], strides = [1, 1]} : vector<1x64xf32> to vector<1x16xf32>
    %662 = math.tanh %661 : vector<1x16xf32>
    %663 = vector.extract_strided_slice %648 {offsets = [0, 48], sizes = [1, 16], strides = [1, 1]} : vector<1x64xf32> to vector<1x16xf32>
    %664 = arith.negf %663 : vector<1x16xf32>
    %665 = math.exp %664 : vector<1x16xf32>
    %cst_122 = arith.constant 1.000000e+00 : f32
    %666 = vector.broadcast %cst_122 : f32 to vector<1x16xf32>
    %667 = arith.addf %666, %665 : vector<1x16xf32>
    %668 = arith.divf %666, %667 : vector<1x16xf32>
    %669 = arith.mulf %660, %643 : vector<1x16xf32>
    %670 = arith.mulf %654, %662 : vector<1x16xf32>
    %671 = arith.addf %669, %670 : vector<1x16xf32>
    %672 = math.tanh %671 : vector<1x16xf32>
    %673 = arith.mulf %668, %672 : vector<1x16xf32>
    %674 = vector.extract_strided_slice %474 {offsets = [7, 0], sizes = [1, 64], strides = [1, 1]} : vector<8x64xf32> to vector<1x64xf32>
    %cst_123 = arith.constant dense<0.000000e+00> : vector<1x64xf32>
    %675 = tpu.matmul %673, %475, %cst_123 {dimension_numbers = #tpu.dot_dimension_numbers<[1], [0], [0], [1], [0, 0, 1, 1], [], []>} : vector<1x16xf32>, vector<16x64xf32>, vector<1x64xf32> -> vector<1x64xf32>
    %676 = arith.addf %674, %675 : vector<1x64xf32>
    %677 = vector.extract_strided_slice %676 {offsets = [0, 0], sizes = [1, 16], strides = [1, 1]} : vector<1x64xf32> to vector<1x16xf32>
    %678 = arith.negf %677 : vector<1x16xf32>
    %679 = math.exp %678 : vector<1x16xf32>
    %cst_124 = arith.constant 1.000000e+00 : f32
    %680 = vector.broadcast %cst_124 : f32 to vector<1x16xf32>
    %681 = arith.addf %680, %679 : vector<1x16xf32>
    %682 = arith.divf %680, %681 : vector<1x16xf32>
    %683 = vector.extract_strided_slice %676 {offsets = [0, 16], sizes = [1, 16], strides = [1, 1]} : vector<1x64xf32> to vector<1x16xf32>
    %684 = arith.negf %683 : vector<1x16xf32>
    %685 = math.exp %684 : vector<1x16xf32>
    %cst_125 = arith.constant 1.000000e+00 : f32
    %686 = vector.broadcast %cst_125 : f32 to vector<1x16xf32>
    %687 = arith.addf %686, %685 : vector<1x16xf32>
    %688 = arith.divf %686, %687 : vector<1x16xf32>
    %689 = vector.extract_strided_slice %676 {offsets = [0, 32], sizes = [1, 16], strides = [1, 1]} : vector<1x64xf32> to vector<1x16xf32>
    %690 = math.tanh %689 : vector<1x16xf32>
    %691 = vector.extract_strided_slice %676 {offsets = [0, 48], sizes = [1, 16], strides = [1, 1]} : vector<1x64xf32> to vector<1x16xf32>
    %692 = arith.negf %691 : vector<1x16xf32>
    %693 = math.exp %692 : vector<1x16xf32>
    %cst_126 = arith.constant 1.000000e+00 : f32
    %694 = vector.broadcast %cst_126 : f32 to vector<1x16xf32>
    %695 = arith.addf %694, %693 : vector<1x16xf32>
    %696 = arith.divf %694, %695 : vector<1x16xf32>
    %697 = arith.mulf %688, %671 : vector<1x16xf32>
    %698 = arith.mulf %682, %690 : vector<1x16xf32>
    %699 = arith.addf %697, %698 : vector<1x16xf32>
    %700 = math.tanh %699 : vector<1x16xf32>
    %701 = arith.mulf %696, %700 : vector<1x16xf32>
    %702 = tpu.concatenate %505, %533, %561, %589, %617, %645, %673, %701 in 0 : vector<1x16xf32>, vector<1x16xf32>, vector<1x16xf32>, vector<1x16xf32>, vector<1x16xf32>, vector<1x16xf32>, vector<1x16xf32>, vector<1x16xf32> -> vector<8x16xf32>
    %c0_127 = arith.constant 0 : index
    %c0_128 = arith.constant 0 : index
    %703 = vector.load %arg13[%c0_127, %c0_128] : memref<32x64xf32, #tpu.memory_space<vmem>>, vector<32x64xf32>
    %cst_129 = arith.constant dense<0.000000e+00> : vector<8x64xf32>
    %704 = tpu.matmul %469, %703, %cst_129 {dimension_numbers = #tpu.dot_dimension_numbers<[1], [0], [0], [1], [0, 0, 1, 1], [], []>} : vector<8x32xf32>, vector<32x64xf32>, vector<8x64xf32> -> vector<8x64xf32>
    %c0_130 = arith.constant 0 : index
    %c0_131 = arith.constant 0 : index
    %705 = vector.load %arg15[%c0_130, %c0_131] : memref<1x64xf32, #tpu.memory_space<vmem>>, vector<1x64xf32>
    %706 = vector.broadcast %705 : vector<1x64xf32> to vector<8x64xf32>
    %707 = arith.addf %704, %706 : vector<8x64xf32>
    %c0_132 = arith.constant 0 : index
    %c0_133 = arith.constant 0 : index
    %708 = vector.load %arg14[%c0_132, %c0_133] : memref<16x64xf32, #tpu.memory_space<vmem>>, vector<16x64xf32>
    %cst_134 = arith.constant 0.000000e+00 : f32
    %709 = vector.broadcast %cst_134 : f32 to vector<1x16xf32>
    %cst_135 = arith.constant 0.000000e+00 : f32
    %710 = vector.broadcast %cst_135 : f32 to vector<1x16xf32>
    %711 = vector.extract_strided_slice %707 {offsets = [7, 0], sizes = [1, 64], strides = [1, 1]} : vector<8x64xf32> to vector<1x64xf32>
    %cst_136 = arith.constant dense<0.000000e+00> : vector<1x64xf32>
    %712 = tpu.matmul %709, %708, %cst_136 {dimension_numbers = #tpu.dot_dimension_numbers<[1], [0], [0], [1], [0, 0, 1, 1], [], []>} : vector<1x16xf32>, vector<16x64xf32>, vector<1x64xf32> -> vector<1x64xf32>
    %713 = arith.addf %711, %712 : vector<1x64xf32>
    %714 = vector.extract_strided_slice %713 {offsets = [0, 0], sizes = [1, 16], strides = [1, 1]} : vector<1x64xf32> to vector<1x16xf32>
    %715 = arith.negf %714 : vector<1x16xf32>
    %716 = math.exp %715 : vector<1x16xf32>
    %cst_137 = arith.constant 1.000000e+00 : f32
    %717 = vector.broadcast %cst_137 : f32 to vector<1x16xf32>
    %718 = arith.addf %717, %716 : vector<1x16xf32>
    %719 = arith.divf %717, %718 : vector<1x16xf32>
    %720 = vector.extract_strided_slice %713 {offsets = [0, 16], sizes = [1, 16], strides = [1, 1]} : vector<1x64xf32> to vector<1x16xf32>
    %721 = arith.negf %720 : vector<1x16xf32>
    %722 = math.exp %721 : vector<1x16xf32>
    %cst_138 = arith.constant 1.000000e+00 : f32
    %723 = vector.broadcast %cst_138 : f32 to vector<1x16xf32>
    %724 = arith.addf %723, %722 : vector<1x16xf32>
    %725 = arith.divf %723, %724 : vector<1x16xf32>
    %726 = vector.extract_strided_slice %713 {offsets = [0, 32], sizes = [1, 16], strides = [1, 1]} : vector<1x64xf32> to vector<1x16xf32>
    %727 = math.tanh %726 : vector<1x16xf32>
    %728 = vector.extract_strided_slice %713 {offsets = [0, 48], sizes = [1, 16], strides = [1, 1]} : vector<1x64xf32> to vector<1x16xf32>
    %729 = arith.negf %728 : vector<1x16xf32>
    %730 = math.exp %729 : vector<1x16xf32>
    %cst_139 = arith.constant 1.000000e+00 : f32
    %731 = vector.broadcast %cst_139 : f32 to vector<1x16xf32>
    %732 = arith.addf %731, %730 : vector<1x16xf32>
    %733 = arith.divf %731, %732 : vector<1x16xf32>
    %734 = arith.mulf %725, %710 : vector<1x16xf32>
    %735 = arith.mulf %719, %727 : vector<1x16xf32>
    %736 = arith.addf %734, %735 : vector<1x16xf32>
    %737 = math.tanh %736 : vector<1x16xf32>
    %738 = arith.mulf %733, %737 : vector<1x16xf32>
    %739 = vector.extract_strided_slice %707 {offsets = [6, 0], sizes = [1, 64], strides = [1, 1]} : vector<8x64xf32> to vector<1x64xf32>
    %cst_140 = arith.constant dense<0.000000e+00> : vector<1x64xf32>
    %740 = tpu.matmul %738, %708, %cst_140 {dimension_numbers = #tpu.dot_dimension_numbers<[1], [0], [0], [1], [0, 0, 1, 1], [], []>} : vector<1x16xf32>, vector<16x64xf32>, vector<1x64xf32> -> vector<1x64xf32>
    %741 = arith.addf %739, %740 : vector<1x64xf32>
    %742 = vector.extract_strided_slice %741 {offsets = [0, 0], sizes = [1, 16], strides = [1, 1]} : vector<1x64xf32> to vector<1x16xf32>
    %743 = arith.negf %742 : vector<1x16xf32>
    %744 = math.exp %743 : vector<1x16xf32>
    %cst_141 = arith.constant 1.000000e+00 : f32
    %745 = vector.broadcast %cst_141 : f32 to vector<1x16xf32>
    %746 = arith.addf %745, %744 : vector<1x16xf32>
    %747 = arith.divf %745, %746 : vector<1x16xf32>
    %748 = vector.extract_strided_slice %741 {offsets = [0, 16], sizes = [1, 16], strides = [1, 1]} : vector<1x64xf32> to vector<1x16xf32>
    %749 = arith.negf %748 : vector<1x16xf32>
    %750 = math.exp %749 : vector<1x16xf32>
    %cst_142 = arith.constant 1.000000e+00 : f32
    %751 = vector.broadcast %cst_142 : f32 to vector<1x16xf32>
    %752 = arith.addf %751, %750 : vector<1x16xf32>
    %753 = arith.divf %751, %752 : vector<1x16xf32>
    %754 = vector.extract_strided_slice %741 {offsets = [0, 32], sizes = [1, 16], strides = [1, 1]} : vector<1x64xf32> to vector<1x16xf32>
    %755 = math.tanh %754 : vector<1x16xf32>
    %756 = vector.extract_strided_slice %741 {offsets = [0, 48], sizes = [1, 16], strides = [1, 1]} : vector<1x64xf32> to vector<1x16xf32>
    %757 = arith.negf %756 : vector<1x16xf32>
    %758 = math.exp %757 : vector<1x16xf32>
    %cst_143 = arith.constant 1.000000e+00 : f32
    %759 = vector.broadcast %cst_143 : f32 to vector<1x16xf32>
    %760 = arith.addf %759, %758 : vector<1x16xf32>
    %761 = arith.divf %759, %760 : vector<1x16xf32>
    %762 = arith.mulf %753, %736 : vector<1x16xf32>
    %763 = arith.mulf %747, %755 : vector<1x16xf32>
    %764 = arith.addf %762, %763 : vector<1x16xf32>
    %765 = math.tanh %764 : vector<1x16xf32>
    %766 = arith.mulf %761, %765 : vector<1x16xf32>
    %767 = vector.extract_strided_slice %707 {offsets = [5, 0], sizes = [1, 64], strides = [1, 1]} : vector<8x64xf32> to vector<1x64xf32>
    %cst_144 = arith.constant dense<0.000000e+00> : vector<1x64xf32>
    %768 = tpu.matmul %766, %708, %cst_144 {dimension_numbers = #tpu.dot_dimension_numbers<[1], [0], [0], [1], [0, 0, 1, 1], [], []>} : vector<1x16xf32>, vector<16x64xf32>, vector<1x64xf32> -> vector<1x64xf32>
    %769 = arith.addf %767, %768 : vector<1x64xf32>
    %770 = vector.extract_strided_slice %769 {offsets = [0, 0], sizes = [1, 16], strides = [1, 1]} : vector<1x64xf32> to vector<1x16xf32>
    %771 = arith.negf %770 : vector<1x16xf32>
    %772 = math.exp %771 : vector<1x16xf32>
    %cst_145 = arith.constant 1.000000e+00 : f32
    %773 = vector.broadcast %cst_145 : f32 to vector<1x16xf32>
    %774 = arith.addf %773, %772 : vector<1x16xf32>
    %775 = arith.divf %773, %774 : vector<1x16xf32>
    %776 = vector.extract_strided_slice %769 {offsets = [0, 16], sizes = [1, 16], strides = [1, 1]} : vector<1x64xf32> to vector<1x16xf32>
    %777 = arith.negf %776 : vector<1x16xf32>
    %778 = math.exp %777 : vector<1x16xf32>
    %cst_146 = arith.constant 1.000000e+00 : f32
    %779 = vector.broadcast %cst_146 : f32 to vector<1x16xf32>
    %780 = arith.addf %779, %778 : vector<1x16xf32>
    %781 = arith.divf %779, %780 : vector<1x16xf32>
    %782 = vector.extract_strided_slice %769 {offsets = [0, 32], sizes = [1, 16], strides = [1, 1]} : vector<1x64xf32> to vector<1x16xf32>
    %783 = math.tanh %782 : vector<1x16xf32>
    %784 = vector.extract_strided_slice %769 {offsets = [0, 48], sizes = [1, 16], strides = [1, 1]} : vector<1x64xf32> to vector<1x16xf32>
    %785 = arith.negf %784 : vector<1x16xf32>
    %786 = math.exp %785 : vector<1x16xf32>
    %cst_147 = arith.constant 1.000000e+00 : f32
    %787 = vector.broadcast %cst_147 : f32 to vector<1x16xf32>
    %788 = arith.addf %787, %786 : vector<1x16xf32>
    %789 = arith.divf %787, %788 : vector<1x16xf32>
    %790 = arith.mulf %781, %764 : vector<1x16xf32>
    %791 = arith.mulf %775, %783 : vector<1x16xf32>
    %792 = arith.addf %790, %791 : vector<1x16xf32>
    %793 = math.tanh %792 : vector<1x16xf32>
    %794 = arith.mulf %789, %793 : vector<1x16xf32>
    %795 = vector.extract_strided_slice %707 {offsets = [4, 0], sizes = [1, 64], strides = [1, 1]} : vector<8x64xf32> to vector<1x64xf32>
    %cst_148 = arith.constant dense<0.000000e+00> : vector<1x64xf32>
    %796 = tpu.matmul %794, %708, %cst_148 {dimension_numbers = #tpu.dot_dimension_numbers<[1], [0], [0], [1], [0, 0, 1, 1], [], []>} : vector<1x16xf32>, vector<16x64xf32>, vector<1x64xf32> -> vector<1x64xf32>
    %797 = arith.addf %795, %796 : vector<1x64xf32>
    %798 = vector.extract_strided_slice %797 {offsets = [0, 0], sizes = [1, 16], strides = [1, 1]} : vector<1x64xf32> to vector<1x16xf32>
    %799 = arith.negf %798 : vector<1x16xf32>
    %800 = math.exp %799 : vector<1x16xf32>
    %cst_149 = arith.constant 1.000000e+00 : f32
    %801 = vector.broadcast %cst_149 : f32 to vector<1x16xf32>
    %802 = arith.addf %801, %800 : vector<1x16xf32>
    %803 = arith.divf %801, %802 : vector<1x16xf32>
    %804 = vector.extract_strided_slice %797 {offsets = [0, 16], sizes = [1, 16], strides = [1, 1]} : vector<1x64xf32> to vector<1x16xf32>
    %805 = arith.negf %804 : vector<1x16xf32>
    %806 = math.exp %805 : vector<1x16xf32>
    %cst_150 = arith.constant 1.000000e+00 : f32
    %807 = vector.broadcast %cst_150 : f32 to vector<1x16xf32>
    %808 = arith.addf %807, %806 : vector<1x16xf32>
    %809 = arith.divf %807, %808 : vector<1x16xf32>
    %810 = vector.extract_strided_slice %797 {offsets = [0, 32], sizes = [1, 16], strides = [1, 1]} : vector<1x64xf32> to vector<1x16xf32>
    %811 = math.tanh %810 : vector<1x16xf32>
    %812 = vector.extract_strided_slice %797 {offsets = [0, 48], sizes = [1, 16], strides = [1, 1]} : vector<1x64xf32> to vector<1x16xf32>
    %813 = arith.negf %812 : vector<1x16xf32>
    %814 = math.exp %813 : vector<1x16xf32>
    %cst_151 = arith.constant 1.000000e+00 : f32
    %815 = vector.broadcast %cst_151 : f32 to vector<1x16xf32>
    %816 = arith.addf %815, %814 : vector<1x16xf32>
    %817 = arith.divf %815, %816 : vector<1x16xf32>
    %818 = arith.mulf %809, %792 : vector<1x16xf32>
    %819 = arith.mulf %803, %811 : vector<1x16xf32>
    %820 = arith.addf %818, %819 : vector<1x16xf32>
    %821 = math.tanh %820 : vector<1x16xf32>
    %822 = arith.mulf %817, %821 : vector<1x16xf32>
    %823 = vector.extract_strided_slice %707 {offsets = [3, 0], sizes = [1, 64], strides = [1, 1]} : vector<8x64xf32> to vector<1x64xf32>
    %cst_152 = arith.constant dense<0.000000e+00> : vector<1x64xf32>
    %824 = tpu.matmul %822, %708, %cst_152 {dimension_numbers = #tpu.dot_dimension_numbers<[1], [0], [0], [1], [0, 0, 1, 1], [], []>} : vector<1x16xf32>, vector<16x64xf32>, vector<1x64xf32> -> vector<1x64xf32>
    %825 = arith.addf %823, %824 : vector<1x64xf32>
    %826 = vector.extract_strided_slice %825 {offsets = [0, 0], sizes = [1, 16], strides = [1, 1]} : vector<1x64xf32> to vector<1x16xf32>
    %827 = arith.negf %826 : vector<1x16xf32>
    %828 = math.exp %827 : vector<1x16xf32>
    %cst_153 = arith.constant 1.000000e+00 : f32
    %829 = vector.broadcast %cst_153 : f32 to vector<1x16xf32>
    %830 = arith.addf %829, %828 : vector<1x16xf32>
    %831 = arith.divf %829, %830 : vector<1x16xf32>
    %832 = vector.extract_strided_slice %825 {offsets = [0, 16], sizes = [1, 16], strides = [1, 1]} : vector<1x64xf32> to vector<1x16xf32>
    %833 = arith.negf %832 : vector<1x16xf32>
    %834 = math.exp %833 : vector<1x16xf32>
    %cst_154 = arith.constant 1.000000e+00 : f32
    %835 = vector.broadcast %cst_154 : f32 to vector<1x16xf32>
    %836 = arith.addf %835, %834 : vector<1x16xf32>
    %837 = arith.divf %835, %836 : vector<1x16xf32>
    %838 = vector.extract_strided_slice %825 {offsets = [0, 32], sizes = [1, 16], strides = [1, 1]} : vector<1x64xf32> to vector<1x16xf32>
    %839 = math.tanh %838 : vector<1x16xf32>
    %840 = vector.extract_strided_slice %825 {offsets = [0, 48], sizes = [1, 16], strides = [1, 1]} : vector<1x64xf32> to vector<1x16xf32>
    %841 = arith.negf %840 : vector<1x16xf32>
    %842 = math.exp %841 : vector<1x16xf32>
    %cst_155 = arith.constant 1.000000e+00 : f32
    %843 = vector.broadcast %cst_155 : f32 to vector<1x16xf32>
    %844 = arith.addf %843, %842 : vector<1x16xf32>
    %845 = arith.divf %843, %844 : vector<1x16xf32>
    %846 = arith.mulf %837, %820 : vector<1x16xf32>
    %847 = arith.mulf %831, %839 : vector<1x16xf32>
    %848 = arith.addf %846, %847 : vector<1x16xf32>
    %849 = math.tanh %848 : vector<1x16xf32>
    %850 = arith.mulf %845, %849 : vector<1x16xf32>
    %851 = vector.extract_strided_slice %707 {offsets = [2, 0], sizes = [1, 64], strides = [1, 1]} : vector<8x64xf32> to vector<1x64xf32>
    %cst_156 = arith.constant dense<0.000000e+00> : vector<1x64xf32>
    %852 = tpu.matmul %850, %708, %cst_156 {dimension_numbers = #tpu.dot_dimension_numbers<[1], [0], [0], [1], [0, 0, 1, 1], [], []>} : vector<1x16xf32>, vector<16x64xf32>, vector<1x64xf32> -> vector<1x64xf32>
    %853 = arith.addf %851, %852 : vector<1x64xf32>
    %854 = vector.extract_strided_slice %853 {offsets = [0, 0], sizes = [1, 16], strides = [1, 1]} : vector<1x64xf32> to vector<1x16xf32>
    %855 = arith.negf %854 : vector<1x16xf32>
    %856 = math.exp %855 : vector<1x16xf32>
    %cst_157 = arith.constant 1.000000e+00 : f32
    %857 = vector.broadcast %cst_157 : f32 to vector<1x16xf32>
    %858 = arith.addf %857, %856 : vector<1x16xf32>
    %859 = arith.divf %857, %858 : vector<1x16xf32>
    %860 = vector.extract_strided_slice %853 {offsets = [0, 16], sizes = [1, 16], strides = [1, 1]} : vector<1x64xf32> to vector<1x16xf32>
    %861 = arith.negf %860 : vector<1x16xf32>
    %862 = math.exp %861 : vector<1x16xf32>
    %cst_158 = arith.constant 1.000000e+00 : f32
    %863 = vector.broadcast %cst_158 : f32 to vector<1x16xf32>
    %864 = arith.addf %863, %862 : vector<1x16xf32>
    %865 = arith.divf %863, %864 : vector<1x16xf32>
    %866 = vector.extract_strided_slice %853 {offsets = [0, 32], sizes = [1, 16], strides = [1, 1]} : vector<1x64xf32> to vector<1x16xf32>
    %867 = math.tanh %866 : vector<1x16xf32>
    %868 = vector.extract_strided_slice %853 {offsets = [0, 48], sizes = [1, 16], strides = [1, 1]} : vector<1x64xf32> to vector<1x16xf32>
    %869 = arith.negf %868 : vector<1x16xf32>
    %870 = math.exp %869 : vector<1x16xf32>
    %cst_159 = arith.constant 1.000000e+00 : f32
    %871 = vector.broadcast %cst_159 : f32 to vector<1x16xf32>
    %872 = arith.addf %871, %870 : vector<1x16xf32>
    %873 = arith.divf %871, %872 : vector<1x16xf32>
    %874 = arith.mulf %865, %848 : vector<1x16xf32>
    %875 = arith.mulf %859, %867 : vector<1x16xf32>
    %876 = arith.addf %874, %875 : vector<1x16xf32>
    %877 = math.tanh %876 : vector<1x16xf32>
    %878 = arith.mulf %873, %877 : vector<1x16xf32>
    %879 = vector.extract_strided_slice %707 {offsets = [1, 0], sizes = [1, 64], strides = [1, 1]} : vector<8x64xf32> to vector<1x64xf32>
    %cst_160 = arith.constant dense<0.000000e+00> : vector<1x64xf32>
    %880 = tpu.matmul %878, %708, %cst_160 {dimension_numbers = #tpu.dot_dimension_numbers<[1], [0], [0], [1], [0, 0, 1, 1], [], []>} : vector<1x16xf32>, vector<16x64xf32>, vector<1x64xf32> -> vector<1x64xf32>
    %881 = arith.addf %879, %880 : vector<1x64xf32>
    %882 = vector.extract_strided_slice %881 {offsets = [0, 0], sizes = [1, 16], strides = [1, 1]} : vector<1x64xf32> to vector<1x16xf32>
    %883 = arith.negf %882 : vector<1x16xf32>
    %884 = math.exp %883 : vector<1x16xf32>
    %cst_161 = arith.constant 1.000000e+00 : f32
    %885 = vector.broadcast %cst_161 : f32 to vector<1x16xf32>
    %886 = arith.addf %885, %884 : vector<1x16xf32>
    %887 = arith.divf %885, %886 : vector<1x16xf32>
    %888 = vector.extract_strided_slice %881 {offsets = [0, 16], sizes = [1, 16], strides = [1, 1]} : vector<1x64xf32> to vector<1x16xf32>
    %889 = arith.negf %888 : vector<1x16xf32>
    %890 = math.exp %889 : vector<1x16xf32>
    %cst_162 = arith.constant 1.000000e+00 : f32
    %891 = vector.broadcast %cst_162 : f32 to vector<1x16xf32>
    %892 = arith.addf %891, %890 : vector<1x16xf32>
    %893 = arith.divf %891, %892 : vector<1x16xf32>
    %894 = vector.extract_strided_slice %881 {offsets = [0, 32], sizes = [1, 16], strides = [1, 1]} : vector<1x64xf32> to vector<1x16xf32>
    %895 = math.tanh %894 : vector<1x16xf32>
    %896 = vector.extract_strided_slice %881 {offsets = [0, 48], sizes = [1, 16], strides = [1, 1]} : vector<1x64xf32> to vector<1x16xf32>
    %897 = arith.negf %896 : vector<1x16xf32>
    %898 = math.exp %897 : vector<1x16xf32>
    %cst_163 = arith.constant 1.000000e+00 : f32
    %899 = vector.broadcast %cst_163 : f32 to vector<1x16xf32>
    %900 = arith.addf %899, %898 : vector<1x16xf32>
    %901 = arith.divf %899, %900 : vector<1x16xf32>
    %902 = arith.mulf %893, %876 : vector<1x16xf32>
    %903 = arith.mulf %887, %895 : vector<1x16xf32>
    %904 = arith.addf %902, %903 : vector<1x16xf32>
    %905 = math.tanh %904 : vector<1x16xf32>
    %906 = arith.mulf %901, %905 : vector<1x16xf32>
    %907 = vector.extract_strided_slice %707 {offsets = [0, 0], sizes = [1, 64], strides = [1, 1]} : vector<8x64xf32> to vector<1x64xf32>
    %cst_164 = arith.constant dense<0.000000e+00> : vector<1x64xf32>
    %908 = tpu.matmul %906, %708, %cst_164 {dimension_numbers = #tpu.dot_dimension_numbers<[1], [0], [0], [1], [0, 0, 1, 1], [], []>} : vector<1x16xf32>, vector<16x64xf32>, vector<1x64xf32> -> vector<1x64xf32>
    %909 = arith.addf %907, %908 : vector<1x64xf32>
    %910 = vector.extract_strided_slice %909 {offsets = [0, 0], sizes = [1, 16], strides = [1, 1]} : vector<1x64xf32> to vector<1x16xf32>
    %911 = arith.negf %910 : vector<1x16xf32>
    %912 = math.exp %911 : vector<1x16xf32>
    %cst_165 = arith.constant 1.000000e+00 : f32
    %913 = vector.broadcast %cst_165 : f32 to vector<1x16xf32>
    %914 = arith.addf %913, %912 : vector<1x16xf32>
    %915 = arith.divf %913, %914 : vector<1x16xf32>
    %916 = vector.extract_strided_slice %909 {offsets = [0, 16], sizes = [1, 16], strides = [1, 1]} : vector<1x64xf32> to vector<1x16xf32>
    %917 = arith.negf %916 : vector<1x16xf32>
    %918 = math.exp %917 : vector<1x16xf32>
    %cst_166 = arith.constant 1.000000e+00 : f32
    %919 = vector.broadcast %cst_166 : f32 to vector<1x16xf32>
    %920 = arith.addf %919, %918 : vector<1x16xf32>
    %921 = arith.divf %919, %920 : vector<1x16xf32>
    %922 = vector.extract_strided_slice %909 {offsets = [0, 32], sizes = [1, 16], strides = [1, 1]} : vector<1x64xf32> to vector<1x16xf32>
    %923 = math.tanh %922 : vector<1x16xf32>
    %924 = vector.extract_strided_slice %909 {offsets = [0, 48], sizes = [1, 16], strides = [1, 1]} : vector<1x64xf32> to vector<1x16xf32>
    %925 = arith.negf %924 : vector<1x16xf32>
    %926 = math.exp %925 : vector<1x16xf32>
    %cst_167 = arith.constant 1.000000e+00 : f32
    %927 = vector.broadcast %cst_167 : f32 to vector<1x16xf32>
    %928 = arith.addf %927, %926 : vector<1x16xf32>
    %929 = arith.divf %927, %928 : vector<1x16xf32>
    %930 = arith.mulf %921, %904 : vector<1x16xf32>
    %931 = arith.mulf %915, %923 : vector<1x16xf32>
    %932 = arith.addf %930, %931 : vector<1x16xf32>
    %933 = math.tanh %932 : vector<1x16xf32>
    %934 = arith.mulf %929, %933 : vector<1x16xf32>
    %935 = tpu.concatenate %934, %906, %878, %850, %822, %794, %766, %738 in 0 : vector<1x16xf32>, vector<1x16xf32>, vector<1x16xf32>, vector<1x16xf32>, vector<1x16xf32>, vector<1x16xf32>, vector<1x16xf32>, vector<1x16xf32> -> vector<8x16xf32>
    %936 = tpu.concatenate %702, %935 in 1 : vector<8x16xf32>, vector<8x16xf32> -> vector<8x32xf32>
    %937 = tpu.iota {dimensions = array<i32: 1>} : vector<8x8xi32>
    %938 = vector.extract_strided_slice %2 {offsets = [0, 0], sizes = [8, 1], strides = [1, 1]} : vector<8x2xi32> to vector<8x1xi32>
    %939 = vector.broadcast %938 : vector<8x1xi32> to vector<8x8xi32>
    %940 = arith.cmpi eq, %937, %939 : vector<8x8xi32>
    %941 = arith.extui %940 : vector<8x8xi1> to vector<8x8xi32>
    %942 = arith.sitofp %941 : vector<8x8xi32> to vector<8x8xf32>
    %943 = vector.extract_strided_slice %2 {offsets = [0, 1], sizes = [8, 1], strides = [1, 1]} : vector<8x2xi32> to vector<8x1xi32>
    %944 = vector.broadcast %943 : vector<8x1xi32> to vector<8x8xi32>
    %945 = arith.cmpi eq, %937, %944 : vector<8x8xi32>
    %946 = arith.extui %945 : vector<8x8xi1> to vector<8x8xi32>
    %947 = arith.sitofp %946 : vector<8x8xi32> to vector<8x8xf32>
    %c0_168 = arith.constant 0 : index
    %c0_169 = arith.constant 0 : index
    %948 = vector.load %arg16[%c0_168, %c0_169] : memref<16x16xf32, #tpu.memory_space<vmem>>, vector<16x16xf32>
    %cst_170 = arith.constant dense<0.000000e+00> : vector<8x16xf32>
    %949 = tpu.matmul %0, %948, %cst_170 {dimension_numbers = #tpu.dot_dimension_numbers<[1], [0], [0], [1], [0, 0, 1, 1], [], []>} : vector<8x16xf32>, vector<16x16xf32>, vector<8x16xf32> -> vector<8x16xf32>
    %c0_171 = arith.constant 0 : index
    %c0_172 = arith.constant 0 : index
    %950 = vector.load %arg17[%c0_171, %c0_172] : memref<1x16xf32, #tpu.memory_space<vmem>>, vector<1x16xf32>
    %951 = vector.broadcast %950 : vector<1x16xf32> to vector<8x16xf32>
    %952 = arith.addf %949, %951 : vector<8x16xf32>
    %cst_173 = arith.constant dense<0.000000e+00> : vector<8x16xf32>
    %953 = tpu.matmul %942, %952, %cst_173 {dimension_numbers = #tpu.dot_dimension_numbers<[1], [0], [0], [1], [0, 0, 1, 1], [], []>} : vector<8x8xf32>, vector<8x16xf32>, vector<8x16xf32> -> vector<8x16xf32>
    %cst_174 = arith.constant dense<0.000000e+00> : vector<8x16xf32>
    %954 = tpu.matmul %947, %952, %cst_174 {dimension_numbers = #tpu.dot_dimension_numbers<[1], [0], [0], [1], [0, 0, 1, 1], [], []>} : vector<8x8xf32>, vector<8x16xf32>, vector<8x16xf32> -> vector<8x16xf32>
    %955 = tpu.concatenate %953, %954 in 1 : vector<8x16xf32>, vector<8x16xf32> -> vector<8x32xf32>
    %c0_175 = arith.constant 0 : index
    %c0_176 = arith.constant 0 : index
    %956 = vector.load %arg6[%c0_175, %c0_176] : memref<32x16xf32, #tpu.memory_space<vmem>>, vector<32x16xf32>
    %cst_177 = arith.constant dense<0.000000e+00> : vector<8x16xf32>
    %957 = tpu.matmul %955, %956, %cst_177 {dimension_numbers = #tpu.dot_dimension_numbers<[1], [0], [0], [1], [0, 0, 1, 1], [], []>} : vector<8x32xf32>, vector<32x16xf32>, vector<8x16xf32> -> vector<8x16xf32>
    %c0_178 = arith.constant 0 : index
    %c0_179 = arith.constant 0 : index
    %958 = vector.load %arg7[%c0_178, %c0_179] : memref<1x16xf32, #tpu.memory_space<vmem>>, vector<1x16xf32>
    %959 = vector.broadcast %958 : vector<1x16xf32> to vector<8x16xf32>
    %960 = arith.addf %957, %959 : vector<8x16xf32>
    %961 = tpu.concatenate %0, %960 in 1 : vector<8x16xf32>, vector<8x16xf32> -> vector<8x32xf32>
    %c0_180 = arith.constant 0 : index
    %c0_181 = arith.constant 0 : index
    %962 = vector.load %arg26[%c0_180, %c0_181] : memref<32x64xf32, #tpu.memory_space<vmem>>, vector<32x64xf32>
    %cst_182 = arith.constant dense<0.000000e+00> : vector<8x64xf32>
    %963 = tpu.matmul %961, %962, %cst_182 {dimension_numbers = #tpu.dot_dimension_numbers<[1], [0], [0], [1], [0, 0, 1, 1], [], []>} : vector<8x32xf32>, vector<32x64xf32>, vector<8x64xf32> -> vector<8x64xf32>
    %c0_183 = arith.constant 0 : index
    %c0_184 = arith.constant 0 : index
    %964 = vector.load %arg28[%c0_183, %c0_184] : memref<1x64xf32, #tpu.memory_space<vmem>>, vector<1x64xf32>
    %965 = vector.broadcast %964 : vector<1x64xf32> to vector<8x64xf32>
    %966 = arith.addf %963, %965 : vector<8x64xf32>
    %c0_185 = arith.constant 0 : index
    %c0_186 = arith.constant 0 : index
    %967 = vector.load %arg27[%c0_185, %c0_186] : memref<16x64xf32, #tpu.memory_space<vmem>>, vector<16x64xf32>
    %cst_187 = arith.constant 0.000000e+00 : f32
    %968 = vector.broadcast %cst_187 : f32 to vector<1x16xf32>
    %cst_188 = arith.constant 0.000000e+00 : f32
    %969 = vector.broadcast %cst_188 : f32 to vector<1x16xf32>
    %970 = vector.extract_strided_slice %966 {offsets = [0, 0], sizes = [1, 64], strides = [1, 1]} : vector<8x64xf32> to vector<1x64xf32>
    %cst_189 = arith.constant dense<0.000000e+00> : vector<1x64xf32>
    %971 = tpu.matmul %968, %967, %cst_189 {dimension_numbers = #tpu.dot_dimension_numbers<[1], [0], [0], [1], [0, 0, 1, 1], [], []>} : vector<1x16xf32>, vector<16x64xf32>, vector<1x64xf32> -> vector<1x64xf32>
    %972 = arith.addf %970, %971 : vector<1x64xf32>
    %973 = vector.extract_strided_slice %972 {offsets = [0, 0], sizes = [1, 16], strides = [1, 1]} : vector<1x64xf32> to vector<1x16xf32>
    %974 = arith.negf %973 : vector<1x16xf32>
    %975 = math.exp %974 : vector<1x16xf32>
    %cst_190 = arith.constant 1.000000e+00 : f32
    %976 = vector.broadcast %cst_190 : f32 to vector<1x16xf32>
    %977 = arith.addf %976, %975 : vector<1x16xf32>
    %978 = arith.divf %976, %977 : vector<1x16xf32>
    %979 = vector.extract_strided_slice %972 {offsets = [0, 16], sizes = [1, 16], strides = [1, 1]} : vector<1x64xf32> to vector<1x16xf32>
    %980 = arith.negf %979 : vector<1x16xf32>
    %981 = math.exp %980 : vector<1x16xf32>
    %cst_191 = arith.constant 1.000000e+00 : f32
    %982 = vector.broadcast %cst_191 : f32 to vector<1x16xf32>
    %983 = arith.addf %982, %981 : vector<1x16xf32>
    %984 = arith.divf %982, %983 : vector<1x16xf32>
    %985 = vector.extract_strided_slice %972 {offsets = [0, 32], sizes = [1, 16], strides = [1, 1]} : vector<1x64xf32> to vector<1x16xf32>
    %986 = math.tanh %985 : vector<1x16xf32>
    %987 = vector.extract_strided_slice %972 {offsets = [0, 48], sizes = [1, 16], strides = [1, 1]} : vector<1x64xf32> to vector<1x16xf32>
    %988 = arith.negf %987 : vector<1x16xf32>
    %989 = math.exp %988 : vector<1x16xf32>
    %cst_192 = arith.constant 1.000000e+00 : f32
    %990 = vector.broadcast %cst_192 : f32 to vector<1x16xf32>
    %991 = arith.addf %990, %989 : vector<1x16xf32>
    %992 = arith.divf %990, %991 : vector<1x16xf32>
    %993 = arith.mulf %984, %969 : vector<1x16xf32>
    %994 = arith.mulf %978, %986 : vector<1x16xf32>
    %995 = arith.addf %993, %994 : vector<1x16xf32>
    %996 = math.tanh %995 : vector<1x16xf32>
    %997 = arith.mulf %992, %996 : vector<1x16xf32>
    %998 = vector.extract_strided_slice %966 {offsets = [1, 0], sizes = [1, 64], strides = [1, 1]} : vector<8x64xf32> to vector<1x64xf32>
    %cst_193 = arith.constant dense<0.000000e+00> : vector<1x64xf32>
    %999 = tpu.matmul %997, %967, %cst_193 {dimension_numbers = #tpu.dot_dimension_numbers<[1], [0], [0], [1], [0, 0, 1, 1], [], []>} : vector<1x16xf32>, vector<16x64xf32>, vector<1x64xf32> -> vector<1x64xf32>
    %1000 = arith.addf %998, %999 : vector<1x64xf32>
    %1001 = vector.extract_strided_slice %1000 {offsets = [0, 0], sizes = [1, 16], strides = [1, 1]} : vector<1x64xf32> to vector<1x16xf32>
    %1002 = arith.negf %1001 : vector<1x16xf32>
    %1003 = math.exp %1002 : vector<1x16xf32>
    %cst_194 = arith.constant 1.000000e+00 : f32
    %1004 = vector.broadcast %cst_194 : f32 to vector<1x16xf32>
    %1005 = arith.addf %1004, %1003 : vector<1x16xf32>
    %1006 = arith.divf %1004, %1005 : vector<1x16xf32>
    %1007 = vector.extract_strided_slice %1000 {offsets = [0, 16], sizes = [1, 16], strides = [1, 1]} : vector<1x64xf32> to vector<1x16xf32>
    %1008 = arith.negf %1007 : vector<1x16xf32>
    %1009 = math.exp %1008 : vector<1x16xf32>
    %cst_195 = arith.constant 1.000000e+00 : f32
    %1010 = vector.broadcast %cst_195 : f32 to vector<1x16xf32>
    %1011 = arith.addf %1010, %1009 : vector<1x16xf32>
    %1012 = arith.divf %1010, %1011 : vector<1x16xf32>
    %1013 = vector.extract_strided_slice %1000 {offsets = [0, 32], sizes = [1, 16], strides = [1, 1]} : vector<1x64xf32> to vector<1x16xf32>
    %1014 = math.tanh %1013 : vector<1x16xf32>
    %1015 = vector.extract_strided_slice %1000 {offsets = [0, 48], sizes = [1, 16], strides = [1, 1]} : vector<1x64xf32> to vector<1x16xf32>
    %1016 = arith.negf %1015 : vector<1x16xf32>
    %1017 = math.exp %1016 : vector<1x16xf32>
    %cst_196 = arith.constant 1.000000e+00 : f32
    %1018 = vector.broadcast %cst_196 : f32 to vector<1x16xf32>
    %1019 = arith.addf %1018, %1017 : vector<1x16xf32>
    %1020 = arith.divf %1018, %1019 : vector<1x16xf32>
    %1021 = arith.mulf %1012, %995 : vector<1x16xf32>
    %1022 = arith.mulf %1006, %1014 : vector<1x16xf32>
    %1023 = arith.addf %1021, %1022 : vector<1x16xf32>
    %1024 = math.tanh %1023 : vector<1x16xf32>
    %1025 = arith.mulf %1020, %1024 : vector<1x16xf32>
    %1026 = vector.extract_strided_slice %966 {offsets = [2, 0], sizes = [1, 64], strides = [1, 1]} : vector<8x64xf32> to vector<1x64xf32>
    %cst_197 = arith.constant dense<0.000000e+00> : vector<1x64xf32>
    %1027 = tpu.matmul %1025, %967, %cst_197 {dimension_numbers = #tpu.dot_dimension_numbers<[1], [0], [0], [1], [0, 0, 1, 1], [], []>} : vector<1x16xf32>, vector<16x64xf32>, vector<1x64xf32> -> vector<1x64xf32>
    %1028 = arith.addf %1026, %1027 : vector<1x64xf32>
    %1029 = vector.extract_strided_slice %1028 {offsets = [0, 0], sizes = [1, 16], strides = [1, 1]} : vector<1x64xf32> to vector<1x16xf32>
    %1030 = arith.negf %1029 : vector<1x16xf32>
    %1031 = math.exp %1030 : vector<1x16xf32>
    %cst_198 = arith.constant 1.000000e+00 : f32
    %1032 = vector.broadcast %cst_198 : f32 to vector<1x16xf32>
    %1033 = arith.addf %1032, %1031 : vector<1x16xf32>
    %1034 = arith.divf %1032, %1033 : vector<1x16xf32>
    %1035 = vector.extract_strided_slice %1028 {offsets = [0, 16], sizes = [1, 16], strides = [1, 1]} : vector<1x64xf32> to vector<1x16xf32>
    %1036 = arith.negf %1035 : vector<1x16xf32>
    %1037 = math.exp %1036 : vector<1x16xf32>
    %cst_199 = arith.constant 1.000000e+00 : f32
    %1038 = vector.broadcast %cst_199 : f32 to vector<1x16xf32>
    %1039 = arith.addf %1038, %1037 : vector<1x16xf32>
    %1040 = arith.divf %1038, %1039 : vector<1x16xf32>
    %1041 = vector.extract_strided_slice %1028 {offsets = [0, 32], sizes = [1, 16], strides = [1, 1]} : vector<1x64xf32> to vector<1x16xf32>
    %1042 = math.tanh %1041 : vector<1x16xf32>
    %1043 = vector.extract_strided_slice %1028 {offsets = [0, 48], sizes = [1, 16], strides = [1, 1]} : vector<1x64xf32> to vector<1x16xf32>
    %1044 = arith.negf %1043 : vector<1x16xf32>
    %1045 = math.exp %1044 : vector<1x16xf32>
    %cst_200 = arith.constant 1.000000e+00 : f32
    %1046 = vector.broadcast %cst_200 : f32 to vector<1x16xf32>
    %1047 = arith.addf %1046, %1045 : vector<1x16xf32>
    %1048 = arith.divf %1046, %1047 : vector<1x16xf32>
    %1049 = arith.mulf %1040, %1023 : vector<1x16xf32>
    %1050 = arith.mulf %1034, %1042 : vector<1x16xf32>
    %1051 = arith.addf %1049, %1050 : vector<1x16xf32>
    %1052 = math.tanh %1051 : vector<1x16xf32>
    %1053 = arith.mulf %1048, %1052 : vector<1x16xf32>
    %1054 = vector.extract_strided_slice %966 {offsets = [3, 0], sizes = [1, 64], strides = [1, 1]} : vector<8x64xf32> to vector<1x64xf32>
    %cst_201 = arith.constant dense<0.000000e+00> : vector<1x64xf32>
    %1055 = tpu.matmul %1053, %967, %cst_201 {dimension_numbers = #tpu.dot_dimension_numbers<[1], [0], [0], [1], [0, 0, 1, 1], [], []>} : vector<1x16xf32>, vector<16x64xf32>, vector<1x64xf32> -> vector<1x64xf32>
    %1056 = arith.addf %1054, %1055 : vector<1x64xf32>
    %1057 = vector.extract_strided_slice %1056 {offsets = [0, 0], sizes = [1, 16], strides = [1, 1]} : vector<1x64xf32> to vector<1x16xf32>
    %1058 = arith.negf %1057 : vector<1x16xf32>
    %1059 = math.exp %1058 : vector<1x16xf32>
    %cst_202 = arith.constant 1.000000e+00 : f32
    %1060 = vector.broadcast %cst_202 : f32 to vector<1x16xf32>
    %1061 = arith.addf %1060, %1059 : vector<1x16xf32>
    %1062 = arith.divf %1060, %1061 : vector<1x16xf32>
    %1063 = vector.extract_strided_slice %1056 {offsets = [0, 16], sizes = [1, 16], strides = [1, 1]} : vector<1x64xf32> to vector<1x16xf32>
    %1064 = arith.negf %1063 : vector<1x16xf32>
    %1065 = math.exp %1064 : vector<1x16xf32>
    %cst_203 = arith.constant 1.000000e+00 : f32
    %1066 = vector.broadcast %cst_203 : f32 to vector<1x16xf32>
    %1067 = arith.addf %1066, %1065 : vector<1x16xf32>
    %1068 = arith.divf %1066, %1067 : vector<1x16xf32>
    %1069 = vector.extract_strided_slice %1056 {offsets = [0, 32], sizes = [1, 16], strides = [1, 1]} : vector<1x64xf32> to vector<1x16xf32>
    %1070 = math.tanh %1069 : vector<1x16xf32>
    %1071 = vector.extract_strided_slice %1056 {offsets = [0, 48], sizes = [1, 16], strides = [1, 1]} : vector<1x64xf32> to vector<1x16xf32>
    %1072 = arith.negf %1071 : vector<1x16xf32>
    %1073 = math.exp %1072 : vector<1x16xf32>
    %cst_204 = arith.constant 1.000000e+00 : f32
    %1074 = vector.broadcast %cst_204 : f32 to vector<1x16xf32>
    %1075 = arith.addf %1074, %1073 : vector<1x16xf32>
    %1076 = arith.divf %1074, %1075 : vector<1x16xf32>
    %1077 = arith.mulf %1068, %1051 : vector<1x16xf32>
    %1078 = arith.mulf %1062, %1070 : vector<1x16xf32>
    %1079 = arith.addf %1077, %1078 : vector<1x16xf32>
    %1080 = math.tanh %1079 : vector<1x16xf32>
    %1081 = arith.mulf %1076, %1080 : vector<1x16xf32>
    %1082 = vector.extract_strided_slice %966 {offsets = [4, 0], sizes = [1, 64], strides = [1, 1]} : vector<8x64xf32> to vector<1x64xf32>
    %cst_205 = arith.constant dense<0.000000e+00> : vector<1x64xf32>
    %1083 = tpu.matmul %1081, %967, %cst_205 {dimension_numbers = #tpu.dot_dimension_numbers<[1], [0], [0], [1], [0, 0, 1, 1], [], []>} : vector<1x16xf32>, vector<16x64xf32>, vector<1x64xf32> -> vector<1x64xf32>
    %1084 = arith.addf %1082, %1083 : vector<1x64xf32>
    %1085 = vector.extract_strided_slice %1084 {offsets = [0, 0], sizes = [1, 16], strides = [1, 1]} : vector<1x64xf32> to vector<1x16xf32>
    %1086 = arith.negf %1085 : vector<1x16xf32>
    %1087 = math.exp %1086 : vector<1x16xf32>
    %cst_206 = arith.constant 1.000000e+00 : f32
    %1088 = vector.broadcast %cst_206 : f32 to vector<1x16xf32>
    %1089 = arith.addf %1088, %1087 : vector<1x16xf32>
    %1090 = arith.divf %1088, %1089 : vector<1x16xf32>
    %1091 = vector.extract_strided_slice %1084 {offsets = [0, 16], sizes = [1, 16], strides = [1, 1]} : vector<1x64xf32> to vector<1x16xf32>
    %1092 = arith.negf %1091 : vector<1x16xf32>
    %1093 = math.exp %1092 : vector<1x16xf32>
    %cst_207 = arith.constant 1.000000e+00 : f32
    %1094 = vector.broadcast %cst_207 : f32 to vector<1x16xf32>
    %1095 = arith.addf %1094, %1093 : vector<1x16xf32>
    %1096 = arith.divf %1094, %1095 : vector<1x16xf32>
    %1097 = vector.extract_strided_slice %1084 {offsets = [0, 32], sizes = [1, 16], strides = [1, 1]} : vector<1x64xf32> to vector<1x16xf32>
    %1098 = math.tanh %1097 : vector<1x16xf32>
    %1099 = vector.extract_strided_slice %1084 {offsets = [0, 48], sizes = [1, 16], strides = [1, 1]} : vector<1x64xf32> to vector<1x16xf32>
    %1100 = arith.negf %1099 : vector<1x16xf32>
    %1101 = math.exp %1100 : vector<1x16xf32>
    %cst_208 = arith.constant 1.000000e+00 : f32
    %1102 = vector.broadcast %cst_208 : f32 to vector<1x16xf32>
    %1103 = arith.addf %1102, %1101 : vector<1x16xf32>
    %1104 = arith.divf %1102, %1103 : vector<1x16xf32>
    %1105 = arith.mulf %1096, %1079 : vector<1x16xf32>
    %1106 = arith.mulf %1090, %1098 : vector<1x16xf32>
    %1107 = arith.addf %1105, %1106 : vector<1x16xf32>
    %1108 = math.tanh %1107 : vector<1x16xf32>
    %1109 = arith.mulf %1104, %1108 : vector<1x16xf32>
    %1110 = vector.extract_strided_slice %966 {offsets = [5, 0], sizes = [1, 64], strides = [1, 1]} : vector<8x64xf32> to vector<1x64xf32>
    %cst_209 = arith.constant dense<0.000000e+00> : vector<1x64xf32>
    %1111 = tpu.matmul %1109, %967, %cst_209 {dimension_numbers = #tpu.dot_dimension_numbers<[1], [0], [0], [1], [0, 0, 1, 1], [], []>} : vector<1x16xf32>, vector<16x64xf32>, vector<1x64xf32> -> vector<1x64xf32>
    %1112 = arith.addf %1110, %1111 : vector<1x64xf32>
    %1113 = vector.extract_strided_slice %1112 {offsets = [0, 0], sizes = [1, 16], strides = [1, 1]} : vector<1x64xf32> to vector<1x16xf32>
    %1114 = arith.negf %1113 : vector<1x16xf32>
    %1115 = math.exp %1114 : vector<1x16xf32>
    %cst_210 = arith.constant 1.000000e+00 : f32
    %1116 = vector.broadcast %cst_210 : f32 to vector<1x16xf32>
    %1117 = arith.addf %1116, %1115 : vector<1x16xf32>
    %1118 = arith.divf %1116, %1117 : vector<1x16xf32>
    %1119 = vector.extract_strided_slice %1112 {offsets = [0, 16], sizes = [1, 16], strides = [1, 1]} : vector<1x64xf32> to vector<1x16xf32>
    %1120 = arith.negf %1119 : vector<1x16xf32>
    %1121 = math.exp %1120 : vector<1x16xf32>
    %cst_211 = arith.constant 1.000000e+00 : f32
    %1122 = vector.broadcast %cst_211 : f32 to vector<1x16xf32>
    %1123 = arith.addf %1122, %1121 : vector<1x16xf32>
    %1124 = arith.divf %1122, %1123 : vector<1x16xf32>
    %1125 = vector.extract_strided_slice %1112 {offsets = [0, 32], sizes = [1, 16], strides = [1, 1]} : vector<1x64xf32> to vector<1x16xf32>
    %1126 = math.tanh %1125 : vector<1x16xf32>
    %1127 = vector.extract_strided_slice %1112 {offsets = [0, 48], sizes = [1, 16], strides = [1, 1]} : vector<1x64xf32> to vector<1x16xf32>
    %1128 = arith.negf %1127 : vector<1x16xf32>
    %1129 = math.exp %1128 : vector<1x16xf32>
    %cst_212 = arith.constant 1.000000e+00 : f32
    %1130 = vector.broadcast %cst_212 : f32 to vector<1x16xf32>
    %1131 = arith.addf %1130, %1129 : vector<1x16xf32>
    %1132 = arith.divf %1130, %1131 : vector<1x16xf32>
    %1133 = arith.mulf %1124, %1107 : vector<1x16xf32>
    %1134 = arith.mulf %1118, %1126 : vector<1x16xf32>
    %1135 = arith.addf %1133, %1134 : vector<1x16xf32>
    %1136 = math.tanh %1135 : vector<1x16xf32>
    %1137 = arith.mulf %1132, %1136 : vector<1x16xf32>
    %1138 = vector.extract_strided_slice %966 {offsets = [6, 0], sizes = [1, 64], strides = [1, 1]} : vector<8x64xf32> to vector<1x64xf32>
    %cst_213 = arith.constant dense<0.000000e+00> : vector<1x64xf32>
    %1139 = tpu.matmul %1137, %967, %cst_213 {dimension_numbers = #tpu.dot_dimension_numbers<[1], [0], [0], [1], [0, 0, 1, 1], [], []>} : vector<1x16xf32>, vector<16x64xf32>, vector<1x64xf32> -> vector<1x64xf32>
    %1140 = arith.addf %1138, %1139 : vector<1x64xf32>
    %1141 = vector.extract_strided_slice %1140 {offsets = [0, 0], sizes = [1, 16], strides = [1, 1]} : vector<1x64xf32> to vector<1x16xf32>
    %1142 = arith.negf %1141 : vector<1x16xf32>
    %1143 = math.exp %1142 : vector<1x16xf32>
    %cst_214 = arith.constant 1.000000e+00 : f32
    %1144 = vector.broadcast %cst_214 : f32 to vector<1x16xf32>
    %1145 = arith.addf %1144, %1143 : vector<1x16xf32>
    %1146 = arith.divf %1144, %1145 : vector<1x16xf32>
    %1147 = vector.extract_strided_slice %1140 {offsets = [0, 16], sizes = [1, 16], strides = [1, 1]} : vector<1x64xf32> to vector<1x16xf32>
    %1148 = arith.negf %1147 : vector<1x16xf32>
    %1149 = math.exp %1148 : vector<1x16xf32>
    %cst_215 = arith.constant 1.000000e+00 : f32
    %1150 = vector.broadcast %cst_215 : f32 to vector<1x16xf32>
    %1151 = arith.addf %1150, %1149 : vector<1x16xf32>
    %1152 = arith.divf %1150, %1151 : vector<1x16xf32>
    %1153 = vector.extract_strided_slice %1140 {offsets = [0, 32], sizes = [1, 16], strides = [1, 1]} : vector<1x64xf32> to vector<1x16xf32>
    %1154 = math.tanh %1153 : vector<1x16xf32>
    %1155 = vector.extract_strided_slice %1140 {offsets = [0, 48], sizes = [1, 16], strides = [1, 1]} : vector<1x64xf32> to vector<1x16xf32>
    %1156 = arith.negf %1155 : vector<1x16xf32>
    %1157 = math.exp %1156 : vector<1x16xf32>
    %cst_216 = arith.constant 1.000000e+00 : f32
    %1158 = vector.broadcast %cst_216 : f32 to vector<1x16xf32>
    %1159 = arith.addf %1158, %1157 : vector<1x16xf32>
    %1160 = arith.divf %1158, %1159 : vector<1x16xf32>
    %1161 = arith.mulf %1152, %1135 : vector<1x16xf32>
    %1162 = arith.mulf %1146, %1154 : vector<1x16xf32>
    %1163 = arith.addf %1161, %1162 : vector<1x16xf32>
    %1164 = math.tanh %1163 : vector<1x16xf32>
    %1165 = arith.mulf %1160, %1164 : vector<1x16xf32>
    %1166 = vector.extract_strided_slice %966 {offsets = [7, 0], sizes = [1, 64], strides = [1, 1]} : vector<8x64xf32> to vector<1x64xf32>
    %cst_217 = arith.constant dense<0.000000e+00> : vector<1x64xf32>
    %1167 = tpu.matmul %1165, %967, %cst_217 {dimension_numbers = #tpu.dot_dimension_numbers<[1], [0], [0], [1], [0, 0, 1, 1], [], []>} : vector<1x16xf32>, vector<16x64xf32>, vector<1x64xf32> -> vector<1x64xf32>
    %1168 = arith.addf %1166, %1167 : vector<1x64xf32>
    %1169 = vector.extract_strided_slice %1168 {offsets = [0, 0], sizes = [1, 16], strides = [1, 1]} : vector<1x64xf32> to vector<1x16xf32>
    %1170 = arith.negf %1169 : vector<1x16xf32>
    %1171 = math.exp %1170 : vector<1x16xf32>
    %cst_218 = arith.constant 1.000000e+00 : f32
    %1172 = vector.broadcast %cst_218 : f32 to vector<1x16xf32>
    %1173 = arith.addf %1172, %1171 : vector<1x16xf32>
    %1174 = arith.divf %1172, %1173 : vector<1x16xf32>
    %1175 = vector.extract_strided_slice %1168 {offsets = [0, 16], sizes = [1, 16], strides = [1, 1]} : vector<1x64xf32> to vector<1x16xf32>
    %1176 = arith.negf %1175 : vector<1x16xf32>
    %1177 = math.exp %1176 : vector<1x16xf32>
    %cst_219 = arith.constant 1.000000e+00 : f32
    %1178 = vector.broadcast %cst_219 : f32 to vector<1x16xf32>
    %1179 = arith.addf %1178, %1177 : vector<1x16xf32>
    %1180 = arith.divf %1178, %1179 : vector<1x16xf32>
    %1181 = vector.extract_strided_slice %1168 {offsets = [0, 32], sizes = [1, 16], strides = [1, 1]} : vector<1x64xf32> to vector<1x16xf32>
    %1182 = math.tanh %1181 : vector<1x16xf32>
    %1183 = vector.extract_strided_slice %1168 {offsets = [0, 48], sizes = [1, 16], strides = [1, 1]} : vector<1x64xf32> to vector<1x16xf32>
    %1184 = arith.negf %1183 : vector<1x16xf32>
    %1185 = math.exp %1184 : vector<1x16xf32>
    %cst_220 = arith.constant 1.000000e+00 : f32
    %1186 = vector.broadcast %cst_220 : f32 to vector<1x16xf32>
    %1187 = arith.addf %1186, %1185 : vector<1x16xf32>
    %1188 = arith.divf %1186, %1187 : vector<1x16xf32>
    %1189 = arith.mulf %1180, %1163 : vector<1x16xf32>
    %1190 = arith.mulf %1174, %1182 : vector<1x16xf32>
    %1191 = arith.addf %1189, %1190 : vector<1x16xf32>
    %1192 = math.tanh %1191 : vector<1x16xf32>
    %1193 = arith.mulf %1188, %1192 : vector<1x16xf32>
    %1194 = tpu.concatenate %997, %1025, %1053, %1081, %1109, %1137, %1165, %1193 in 0 : vector<1x16xf32>, vector<1x16xf32>, vector<1x16xf32>, vector<1x16xf32>, vector<1x16xf32>, vector<1x16xf32>, vector<1x16xf32>, vector<1x16xf32> -> vector<8x16xf32>
    %cst_221 = arith.constant dense<0.000000e+00> : vector<8x16xf32>
    %1195 = tpu.matmul %942, %1194, %cst_221 {dimension_numbers = #tpu.dot_dimension_numbers<[1], [0], [0], [1], [0, 0, 1, 1], [], []>} : vector<8x8xf32>, vector<8x16xf32>, vector<8x16xf32> -> vector<8x16xf32>
    %cst_222 = arith.constant dense<0.000000e+00> : vector<8x16xf32>
    %1196 = tpu.matmul %947, %1194, %cst_222 {dimension_numbers = #tpu.dot_dimension_numbers<[1], [0], [0], [1], [0, 0, 1, 1], [], []>} : vector<8x8xf32>, vector<8x16xf32>, vector<8x16xf32> -> vector<8x16xf32>
    %1197 = tpu.concatenate %1195, %1196 in 1 : vector<8x16xf32>, vector<8x16xf32> -> vector<8x32xf32>
    %c0_223 = arith.constant 0 : index
    %c0_224 = arith.constant 0 : index
    %1198 = vector.load %arg8[%c0_223, %c0_224] : memref<32x16xf32, #tpu.memory_space<vmem>>, vector<32x16xf32>
    %cst_225 = arith.constant dense<0.000000e+00> : vector<8x16xf32>
    %1199 = tpu.matmul %1197, %1198, %cst_225 {dimension_numbers = #tpu.dot_dimension_numbers<[1], [0], [0], [1], [0, 0, 1, 1], [], []>} : vector<8x32xf32>, vector<32x16xf32>, vector<8x16xf32> -> vector<8x16xf32>
    %c0_226 = arith.constant 0 : index
    %c0_227 = arith.constant 0 : index
    %1200 = vector.load %arg9[%c0_226, %c0_227] : memref<1x16xf32, #tpu.memory_space<vmem>>, vector<1x16xf32>
    %1201 = vector.broadcast %1200 : vector<1x16xf32> to vector<8x16xf32>
    %1202 = arith.addf %1199, %1201 : vector<8x16xf32>
    %1203 = tpu.concatenate %0, %1202 in 1 : vector<8x16xf32>, vector<8x16xf32> -> vector<8x32xf32>
    %c0_228 = arith.constant 0 : index
    %c0_229 = arith.constant 0 : index
    %1204 = vector.load %arg29[%c0_228, %c0_229] : memref<32x64xf32, #tpu.memory_space<vmem>>, vector<32x64xf32>
    %cst_230 = arith.constant dense<0.000000e+00> : vector<8x64xf32>
    %1205 = tpu.matmul %1203, %1204, %cst_230 {dimension_numbers = #tpu.dot_dimension_numbers<[1], [0], [0], [1], [0, 0, 1, 1], [], []>} : vector<8x32xf32>, vector<32x64xf32>, vector<8x64xf32> -> vector<8x64xf32>
    %c0_231 = arith.constant 0 : index
    %c0_232 = arith.constant 0 : index
    %1206 = vector.load %arg31[%c0_231, %c0_232] : memref<1x64xf32, #tpu.memory_space<vmem>>, vector<1x64xf32>
    %1207 = vector.broadcast %1206 : vector<1x64xf32> to vector<8x64xf32>
    %1208 = arith.addf %1205, %1207 : vector<8x64xf32>
    %c0_233 = arith.constant 0 : index
    %c0_234 = arith.constant 0 : index
    %1209 = vector.load %arg30[%c0_233, %c0_234] : memref<16x64xf32, #tpu.memory_space<vmem>>, vector<16x64xf32>
    %cst_235 = arith.constant 0.000000e+00 : f32
    %1210 = vector.broadcast %cst_235 : f32 to vector<1x16xf32>
    %cst_236 = arith.constant 0.000000e+00 : f32
    %1211 = vector.broadcast %cst_236 : f32 to vector<1x16xf32>
    %1212 = vector.extract_strided_slice %1208 {offsets = [0, 0], sizes = [1, 64], strides = [1, 1]} : vector<8x64xf32> to vector<1x64xf32>
    %cst_237 = arith.constant dense<0.000000e+00> : vector<1x64xf32>
    %1213 = tpu.matmul %1210, %1209, %cst_237 {dimension_numbers = #tpu.dot_dimension_numbers<[1], [0], [0], [1], [0, 0, 1, 1], [], []>} : vector<1x16xf32>, vector<16x64xf32>, vector<1x64xf32> -> vector<1x64xf32>
    %1214 = arith.addf %1212, %1213 : vector<1x64xf32>
    %1215 = vector.extract_strided_slice %1214 {offsets = [0, 0], sizes = [1, 16], strides = [1, 1]} : vector<1x64xf32> to vector<1x16xf32>
    %1216 = arith.negf %1215 : vector<1x16xf32>
    %1217 = math.exp %1216 : vector<1x16xf32>
    %cst_238 = arith.constant 1.000000e+00 : f32
    %1218 = vector.broadcast %cst_238 : f32 to vector<1x16xf32>
    %1219 = arith.addf %1218, %1217 : vector<1x16xf32>
    %1220 = arith.divf %1218, %1219 : vector<1x16xf32>
    %1221 = vector.extract_strided_slice %1214 {offsets = [0, 16], sizes = [1, 16], strides = [1, 1]} : vector<1x64xf32> to vector<1x16xf32>
    %1222 = arith.negf %1221 : vector<1x16xf32>
    %1223 = math.exp %1222 : vector<1x16xf32>
    %cst_239 = arith.constant 1.000000e+00 : f32
    %1224 = vector.broadcast %cst_239 : f32 to vector<1x16xf32>
    %1225 = arith.addf %1224, %1223 : vector<1x16xf32>
    %1226 = arith.divf %1224, %1225 : vector<1x16xf32>
    %1227 = vector.extract_strided_slice %1214 {offsets = [0, 32], sizes = [1, 16], strides = [1, 1]} : vector<1x64xf32> to vector<1x16xf32>
    %1228 = math.tanh %1227 : vector<1x16xf32>
    %1229 = vector.extract_strided_slice %1214 {offsets = [0, 48], sizes = [1, 16], strides = [1, 1]} : vector<1x64xf32> to vector<1x16xf32>
    %1230 = arith.negf %1229 : vector<1x16xf32>
    %1231 = math.exp %1230 : vector<1x16xf32>
    %cst_240 = arith.constant 1.000000e+00 : f32
    %1232 = vector.broadcast %cst_240 : f32 to vector<1x16xf32>
    %1233 = arith.addf %1232, %1231 : vector<1x16xf32>
    %1234 = arith.divf %1232, %1233 : vector<1x16xf32>
    %1235 = arith.mulf %1226, %1211 : vector<1x16xf32>
    %1236 = arith.mulf %1220, %1228 : vector<1x16xf32>
    %1237 = arith.addf %1235, %1236 : vector<1x16xf32>
    %1238 = math.tanh %1237 : vector<1x16xf32>
    %1239 = arith.mulf %1234, %1238 : vector<1x16xf32>
    %1240 = vector.extract_strided_slice %1208 {offsets = [1, 0], sizes = [1, 64], strides = [1, 1]} : vector<8x64xf32> to vector<1x64xf32>
    %cst_241 = arith.constant dense<0.000000e+00> : vector<1x64xf32>
    %1241 = tpu.matmul %1239, %1209, %cst_241 {dimension_numbers = #tpu.dot_dimension_numbers<[1], [0], [0], [1], [0, 0, 1, 1], [], []>} : vector<1x16xf32>, vector<16x64xf32>, vector<1x64xf32> -> vector<1x64xf32>
    %1242 = arith.addf %1240, %1241 : vector<1x64xf32>
    %1243 = vector.extract_strided_slice %1242 {offsets = [0, 0], sizes = [1, 16], strides = [1, 1]} : vector<1x64xf32> to vector<1x16xf32>
    %1244 = arith.negf %1243 : vector<1x16xf32>
    %1245 = math.exp %1244 : vector<1x16xf32>
    %cst_242 = arith.constant 1.000000e+00 : f32
    %1246 = vector.broadcast %cst_242 : f32 to vector<1x16xf32>
    %1247 = arith.addf %1246, %1245 : vector<1x16xf32>
    %1248 = arith.divf %1246, %1247 : vector<1x16xf32>
    %1249 = vector.extract_strided_slice %1242 {offsets = [0, 16], sizes = [1, 16], strides = [1, 1]} : vector<1x64xf32> to vector<1x16xf32>
    %1250 = arith.negf %1249 : vector<1x16xf32>
    %1251 = math.exp %1250 : vector<1x16xf32>
    %cst_243 = arith.constant 1.000000e+00 : f32
    %1252 = vector.broadcast %cst_243 : f32 to vector<1x16xf32>
    %1253 = arith.addf %1252, %1251 : vector<1x16xf32>
    %1254 = arith.divf %1252, %1253 : vector<1x16xf32>
    %1255 = vector.extract_strided_slice %1242 {offsets = [0, 32], sizes = [1, 16], strides = [1, 1]} : vector<1x64xf32> to vector<1x16xf32>
    %1256 = math.tanh %1255 : vector<1x16xf32>
    %1257 = vector.extract_strided_slice %1242 {offsets = [0, 48], sizes = [1, 16], strides = [1, 1]} : vector<1x64xf32> to vector<1x16xf32>
    %1258 = arith.negf %1257 : vector<1x16xf32>
    %1259 = math.exp %1258 : vector<1x16xf32>
    %cst_244 = arith.constant 1.000000e+00 : f32
    %1260 = vector.broadcast %cst_244 : f32 to vector<1x16xf32>
    %1261 = arith.addf %1260, %1259 : vector<1x16xf32>
    %1262 = arith.divf %1260, %1261 : vector<1x16xf32>
    %1263 = arith.mulf %1254, %1237 : vector<1x16xf32>
    %1264 = arith.mulf %1248, %1256 : vector<1x16xf32>
    %1265 = arith.addf %1263, %1264 : vector<1x16xf32>
    %1266 = math.tanh %1265 : vector<1x16xf32>
    %1267 = arith.mulf %1262, %1266 : vector<1x16xf32>
    %1268 = vector.extract_strided_slice %1208 {offsets = [2, 0], sizes = [1, 64], strides = [1, 1]} : vector<8x64xf32> to vector<1x64xf32>
    %cst_245 = arith.constant dense<0.000000e+00> : vector<1x64xf32>
    %1269 = tpu.matmul %1267, %1209, %cst_245 {dimension_numbers = #tpu.dot_dimension_numbers<[1], [0], [0], [1], [0, 0, 1, 1], [], []>} : vector<1x16xf32>, vector<16x64xf32>, vector<1x64xf32> -> vector<1x64xf32>
    %1270 = arith.addf %1268, %1269 : vector<1x64xf32>
    %1271 = vector.extract_strided_slice %1270 {offsets = [0, 0], sizes = [1, 16], strides = [1, 1]} : vector<1x64xf32> to vector<1x16xf32>
    %1272 = arith.negf %1271 : vector<1x16xf32>
    %1273 = math.exp %1272 : vector<1x16xf32>
    %cst_246 = arith.constant 1.000000e+00 : f32
    %1274 = vector.broadcast %cst_246 : f32 to vector<1x16xf32>
    %1275 = arith.addf %1274, %1273 : vector<1x16xf32>
    %1276 = arith.divf %1274, %1275 : vector<1x16xf32>
    %1277 = vector.extract_strided_slice %1270 {offsets = [0, 16], sizes = [1, 16], strides = [1, 1]} : vector<1x64xf32> to vector<1x16xf32>
    %1278 = arith.negf %1277 : vector<1x16xf32>
    %1279 = math.exp %1278 : vector<1x16xf32>
    %cst_247 = arith.constant 1.000000e+00 : f32
    %1280 = vector.broadcast %cst_247 : f32 to vector<1x16xf32>
    %1281 = arith.addf %1280, %1279 : vector<1x16xf32>
    %1282 = arith.divf %1280, %1281 : vector<1x16xf32>
    %1283 = vector.extract_strided_slice %1270 {offsets = [0, 32], sizes = [1, 16], strides = [1, 1]} : vector<1x64xf32> to vector<1x16xf32>
    %1284 = math.tanh %1283 : vector<1x16xf32>
    %1285 = vector.extract_strided_slice %1270 {offsets = [0, 48], sizes = [1, 16], strides = [1, 1]} : vector<1x64xf32> to vector<1x16xf32>
    %1286 = arith.negf %1285 : vector<1x16xf32>
    %1287 = math.exp %1286 : vector<1x16xf32>
    %cst_248 = arith.constant 1.000000e+00 : f32
    %1288 = vector.broadcast %cst_248 : f32 to vector<1x16xf32>
    %1289 = arith.addf %1288, %1287 : vector<1x16xf32>
    %1290 = arith.divf %1288, %1289 : vector<1x16xf32>
    %1291 = arith.mulf %1282, %1265 : vector<1x16xf32>
    %1292 = arith.mulf %1276, %1284 : vector<1x16xf32>
    %1293 = arith.addf %1291, %1292 : vector<1x16xf32>
    %1294 = math.tanh %1293 : vector<1x16xf32>
    %1295 = arith.mulf %1290, %1294 : vector<1x16xf32>
    %1296 = vector.extract_strided_slice %1208 {offsets = [3, 0], sizes = [1, 64], strides = [1, 1]} : vector<8x64xf32> to vector<1x64xf32>
    %cst_249 = arith.constant dense<0.000000e+00> : vector<1x64xf32>
    %1297 = tpu.matmul %1295, %1209, %cst_249 {dimension_numbers = #tpu.dot_dimension_numbers<[1], [0], [0], [1], [0, 0, 1, 1], [], []>} : vector<1x16xf32>, vector<16x64xf32>, vector<1x64xf32> -> vector<1x64xf32>
    %1298 = arith.addf %1296, %1297 : vector<1x64xf32>
    %1299 = vector.extract_strided_slice %1298 {offsets = [0, 0], sizes = [1, 16], strides = [1, 1]} : vector<1x64xf32> to vector<1x16xf32>
    %1300 = arith.negf %1299 : vector<1x16xf32>
    %1301 = math.exp %1300 : vector<1x16xf32>
    %cst_250 = arith.constant 1.000000e+00 : f32
    %1302 = vector.broadcast %cst_250 : f32 to vector<1x16xf32>
    %1303 = arith.addf %1302, %1301 : vector<1x16xf32>
    %1304 = arith.divf %1302, %1303 : vector<1x16xf32>
    %1305 = vector.extract_strided_slice %1298 {offsets = [0, 16], sizes = [1, 16], strides = [1, 1]} : vector<1x64xf32> to vector<1x16xf32>
    %1306 = arith.negf %1305 : vector<1x16xf32>
    %1307 = math.exp %1306 : vector<1x16xf32>
    %cst_251 = arith.constant 1.000000e+00 : f32
    %1308 = vector.broadcast %cst_251 : f32 to vector<1x16xf32>
    %1309 = arith.addf %1308, %1307 : vector<1x16xf32>
    %1310 = arith.divf %1308, %1309 : vector<1x16xf32>
    %1311 = vector.extract_strided_slice %1298 {offsets = [0, 32], sizes = [1, 16], strides = [1, 1]} : vector<1x64xf32> to vector<1x16xf32>
    %1312 = math.tanh %1311 : vector<1x16xf32>
    %1313 = vector.extract_strided_slice %1298 {offsets = [0, 48], sizes = [1, 16], strides = [1, 1]} : vector<1x64xf32> to vector<1x16xf32>
    %1314 = arith.negf %1313 : vector<1x16xf32>
    %1315 = math.exp %1314 : vector<1x16xf32>
    %cst_252 = arith.constant 1.000000e+00 : f32
    %1316 = vector.broadcast %cst_252 : f32 to vector<1x16xf32>
    %1317 = arith.addf %1316, %1315 : vector<1x16xf32>
    %1318 = arith.divf %1316, %1317 : vector<1x16xf32>
    %1319 = arith.mulf %1310, %1293 : vector<1x16xf32>
    %1320 = arith.mulf %1304, %1312 : vector<1x16xf32>
    %1321 = arith.addf %1319, %1320 : vector<1x16xf32>
    %1322 = math.tanh %1321 : vector<1x16xf32>
    %1323 = arith.mulf %1318, %1322 : vector<1x16xf32>
    %1324 = vector.extract_strided_slice %1208 {offsets = [4, 0], sizes = [1, 64], strides = [1, 1]} : vector<8x64xf32> to vector<1x64xf32>
    %cst_253 = arith.constant dense<0.000000e+00> : vector<1x64xf32>
    %1325 = tpu.matmul %1323, %1209, %cst_253 {dimension_numbers = #tpu.dot_dimension_numbers<[1], [0], [0], [1], [0, 0, 1, 1], [], []>} : vector<1x16xf32>, vector<16x64xf32>, vector<1x64xf32> -> vector<1x64xf32>
    %1326 = arith.addf %1324, %1325 : vector<1x64xf32>
    %1327 = vector.extract_strided_slice %1326 {offsets = [0, 0], sizes = [1, 16], strides = [1, 1]} : vector<1x64xf32> to vector<1x16xf32>
    %1328 = arith.negf %1327 : vector<1x16xf32>
    %1329 = math.exp %1328 : vector<1x16xf32>
    %cst_254 = arith.constant 1.000000e+00 : f32
    %1330 = vector.broadcast %cst_254 : f32 to vector<1x16xf32>
    %1331 = arith.addf %1330, %1329 : vector<1x16xf32>
    %1332 = arith.divf %1330, %1331 : vector<1x16xf32>
    %1333 = vector.extract_strided_slice %1326 {offsets = [0, 16], sizes = [1, 16], strides = [1, 1]} : vector<1x64xf32> to vector<1x16xf32>
    %1334 = arith.negf %1333 : vector<1x16xf32>
    %1335 = math.exp %1334 : vector<1x16xf32>
    %cst_255 = arith.constant 1.000000e+00 : f32
    %1336 = vector.broadcast %cst_255 : f32 to vector<1x16xf32>
    %1337 = arith.addf %1336, %1335 : vector<1x16xf32>
    %1338 = arith.divf %1336, %1337 : vector<1x16xf32>
    %1339 = vector.extract_strided_slice %1326 {offsets = [0, 32], sizes = [1, 16], strides = [1, 1]} : vector<1x64xf32> to vector<1x16xf32>
    %1340 = math.tanh %1339 : vector<1x16xf32>
    %1341 = vector.extract_strided_slice %1326 {offsets = [0, 48], sizes = [1, 16], strides = [1, 1]} : vector<1x64xf32> to vector<1x16xf32>
    %1342 = arith.negf %1341 : vector<1x16xf32>
    %1343 = math.exp %1342 : vector<1x16xf32>
    %cst_256 = arith.constant 1.000000e+00 : f32
    %1344 = vector.broadcast %cst_256 : f32 to vector<1x16xf32>
    %1345 = arith.addf %1344, %1343 : vector<1x16xf32>
    %1346 = arith.divf %1344, %1345 : vector<1x16xf32>
    %1347 = arith.mulf %1338, %1321 : vector<1x16xf32>
    %1348 = arith.mulf %1332, %1340 : vector<1x16xf32>
    %1349 = arith.addf %1347, %1348 : vector<1x16xf32>
    %1350 = math.tanh %1349 : vector<1x16xf32>
    %1351 = arith.mulf %1346, %1350 : vector<1x16xf32>
    %1352 = vector.extract_strided_slice %1208 {offsets = [5, 0], sizes = [1, 64], strides = [1, 1]} : vector<8x64xf32> to vector<1x64xf32>
    %cst_257 = arith.constant dense<0.000000e+00> : vector<1x64xf32>
    %1353 = tpu.matmul %1351, %1209, %cst_257 {dimension_numbers = #tpu.dot_dimension_numbers<[1], [0], [0], [1], [0, 0, 1, 1], [], []>} : vector<1x16xf32>, vector<16x64xf32>, vector<1x64xf32> -> vector<1x64xf32>
    %1354 = arith.addf %1352, %1353 : vector<1x64xf32>
    %1355 = vector.extract_strided_slice %1354 {offsets = [0, 0], sizes = [1, 16], strides = [1, 1]} : vector<1x64xf32> to vector<1x16xf32>
    %1356 = arith.negf %1355 : vector<1x16xf32>
    %1357 = math.exp %1356 : vector<1x16xf32>
    %cst_258 = arith.constant 1.000000e+00 : f32
    %1358 = vector.broadcast %cst_258 : f32 to vector<1x16xf32>
    %1359 = arith.addf %1358, %1357 : vector<1x16xf32>
    %1360 = arith.divf %1358, %1359 : vector<1x16xf32>
    %1361 = vector.extract_strided_slice %1354 {offsets = [0, 16], sizes = [1, 16], strides = [1, 1]} : vector<1x64xf32> to vector<1x16xf32>
    %1362 = arith.negf %1361 : vector<1x16xf32>
    %1363 = math.exp %1362 : vector<1x16xf32>
    %cst_259 = arith.constant 1.000000e+00 : f32
    %1364 = vector.broadcast %cst_259 : f32 to vector<1x16xf32>
    %1365 = arith.addf %1364, %1363 : vector<1x16xf32>
    %1366 = arith.divf %1364, %1365 : vector<1x16xf32>
    %1367 = vector.extract_strided_slice %1354 {offsets = [0, 32], sizes = [1, 16], strides = [1, 1]} : vector<1x64xf32> to vector<1x16xf32>
    %1368 = math.tanh %1367 : vector<1x16xf32>
    %1369 = vector.extract_strided_slice %1354 {offsets = [0, 48], sizes = [1, 16], strides = [1, 1]} : vector<1x64xf32> to vector<1x16xf32>
    %1370 = arith.negf %1369 : vector<1x16xf32>
    %1371 = math.exp %1370 : vector<1x16xf32>
    %cst_260 = arith.constant 1.000000e+00 : f32
    %1372 = vector.broadcast %cst_260 : f32 to vector<1x16xf32>
    %1373 = arith.addf %1372, %1371 : vector<1x16xf32>
    %1374 = arith.divf %1372, %1373 : vector<1x16xf32>
    %1375 = arith.mulf %1366, %1349 : vector<1x16xf32>
    %1376 = arith.mulf %1360, %1368 : vector<1x16xf32>
    %1377 = arith.addf %1375, %1376 : vector<1x16xf32>
    %1378 = math.tanh %1377 : vector<1x16xf32>
    %1379 = arith.mulf %1374, %1378 : vector<1x16xf32>
    %1380 = vector.extract_strided_slice %1208 {offsets = [6, 0], sizes = [1, 64], strides = [1, 1]} : vector<8x64xf32> to vector<1x64xf32>
    %cst_261 = arith.constant dense<0.000000e+00> : vector<1x64xf32>
    %1381 = tpu.matmul %1379, %1209, %cst_261 {dimension_numbers = #tpu.dot_dimension_numbers<[1], [0], [0], [1], [0, 0, 1, 1], [], []>} : vector<1x16xf32>, vector<16x64xf32>, vector<1x64xf32> -> vector<1x64xf32>
    %1382 = arith.addf %1380, %1381 : vector<1x64xf32>
    %1383 = vector.extract_strided_slice %1382 {offsets = [0, 0], sizes = [1, 16], strides = [1, 1]} : vector<1x64xf32> to vector<1x16xf32>
    %1384 = arith.negf %1383 : vector<1x16xf32>
    %1385 = math.exp %1384 : vector<1x16xf32>
    %cst_262 = arith.constant 1.000000e+00 : f32
    %1386 = vector.broadcast %cst_262 : f32 to vector<1x16xf32>
    %1387 = arith.addf %1386, %1385 : vector<1x16xf32>
    %1388 = arith.divf %1386, %1387 : vector<1x16xf32>
    %1389 = vector.extract_strided_slice %1382 {offsets = [0, 16], sizes = [1, 16], strides = [1, 1]} : vector<1x64xf32> to vector<1x16xf32>
    %1390 = arith.negf %1389 : vector<1x16xf32>
    %1391 = math.exp %1390 : vector<1x16xf32>
    %cst_263 = arith.constant 1.000000e+00 : f32
    %1392 = vector.broadcast %cst_263 : f32 to vector<1x16xf32>
    %1393 = arith.addf %1392, %1391 : vector<1x16xf32>
    %1394 = arith.divf %1392, %1393 : vector<1x16xf32>
    %1395 = vector.extract_strided_slice %1382 {offsets = [0, 32], sizes = [1, 16], strides = [1, 1]} : vector<1x64xf32> to vector<1x16xf32>
    %1396 = math.tanh %1395 : vector<1x16xf32>
    %1397 = vector.extract_strided_slice %1382 {offsets = [0, 48], sizes = [1, 16], strides = [1, 1]} : vector<1x64xf32> to vector<1x16xf32>
    %1398 = arith.negf %1397 : vector<1x16xf32>
    %1399 = math.exp %1398 : vector<1x16xf32>
    %cst_264 = arith.constant 1.000000e+00 : f32
    %1400 = vector.broadcast %cst_264 : f32 to vector<1x16xf32>
    %1401 = arith.addf %1400, %1399 : vector<1x16xf32>
    %1402 = arith.divf %1400, %1401 : vector<1x16xf32>
    %1403 = arith.mulf %1394, %1377 : vector<1x16xf32>
    %1404 = arith.mulf %1388, %1396 : vector<1x16xf32>
    %1405 = arith.addf %1403, %1404 : vector<1x16xf32>
    %1406 = math.tanh %1405 : vector<1x16xf32>
    %1407 = arith.mulf %1402, %1406 : vector<1x16xf32>
    %1408 = vector.extract_strided_slice %1208 {offsets = [7, 0], sizes = [1, 64], strides = [1, 1]} : vector<8x64xf32> to vector<1x64xf32>
    %cst_265 = arith.constant dense<0.000000e+00> : vector<1x64xf32>
    %1409 = tpu.matmul %1407, %1209, %cst_265 {dimension_numbers = #tpu.dot_dimension_numbers<[1], [0], [0], [1], [0, 0, 1, 1], [], []>} : vector<1x16xf32>, vector<16x64xf32>, vector<1x64xf32> -> vector<1x64xf32>
    %1410 = arith.addf %1408, %1409 : vector<1x64xf32>
    %1411 = vector.extract_strided_slice %1410 {offsets = [0, 0], sizes = [1, 16], strides = [1, 1]} : vector<1x64xf32> to vector<1x16xf32>
    %1412 = arith.negf %1411 : vector<1x16xf32>
    %1413 = math.exp %1412 : vector<1x16xf32>
    %cst_266 = arith.constant 1.000000e+00 : f32
    %1414 = vector.broadcast %cst_266 : f32 to vector<1x16xf32>
    %1415 = arith.addf %1414, %1413 : vector<1x16xf32>
    %1416 = arith.divf %1414, %1415 : vector<1x16xf32>
    %1417 = vector.extract_strided_slice %1410 {offsets = [0, 16], sizes = [1, 16], strides = [1, 1]} : vector<1x64xf32> to vector<1x16xf32>
    %1418 = arith.negf %1417 : vector<1x16xf32>
    %1419 = math.exp %1418 : vector<1x16xf32>
    %cst_267 = arith.constant 1.000000e+00 : f32
    %1420 = vector.broadcast %cst_267 : f32 to vector<1x16xf32>
    %1421 = arith.addf %1420, %1419 : vector<1x16xf32>
    %1422 = arith.divf %1420, %1421 : vector<1x16xf32>
    %1423 = vector.extract_strided_slice %1410 {offsets = [0, 32], sizes = [1, 16], strides = [1, 1]} : vector<1x64xf32> to vector<1x16xf32>
    %1424 = math.tanh %1423 : vector<1x16xf32>
    %1425 = vector.extract_strided_slice %1410 {offsets = [0, 48], sizes = [1, 16], strides = [1, 1]} : vector<1x64xf32> to vector<1x16xf32>
    %1426 = arith.negf %1425 : vector<1x16xf32>
    %1427 = math.exp %1426 : vector<1x16xf32>
    %cst_268 = arith.constant 1.000000e+00 : f32
    %1428 = vector.broadcast %cst_268 : f32 to vector<1x16xf32>
    %1429 = arith.addf %1428, %1427 : vector<1x16xf32>
    %1430 = arith.divf %1428, %1429 : vector<1x16xf32>
    %1431 = arith.mulf %1422, %1405 : vector<1x16xf32>
    %1432 = arith.mulf %1416, %1424 : vector<1x16xf32>
    %1433 = arith.addf %1431, %1432 : vector<1x16xf32>
    %1434 = math.tanh %1433 : vector<1x16xf32>
    %1435 = arith.mulf %1430, %1434 : vector<1x16xf32>
    %1436 = tpu.concatenate %1239, %1267, %1295, %1323, %1351, %1379, %1407, %1435 in 0 : vector<1x16xf32>, vector<1x16xf32>, vector<1x16xf32>, vector<1x16xf32>, vector<1x16xf32>, vector<1x16xf32>, vector<1x16xf32>, vector<1x16xf32> -> vector<8x16xf32>
    %c0_269 = arith.constant 0 : index
    %c0_270 = arith.constant 0 : index
    %1437 = vector.load %arg24[%c0_269, %c0_270] : memref<16x12xf32, #tpu.memory_space<vmem>>, vector<16x12xf32>
    %cst_271 = arith.constant dense<0.000000e+00> : vector<8x12xf32>
    %1438 = tpu.matmul %1436, %1437, %cst_271 {dimension_numbers = #tpu.dot_dimension_numbers<[1], [0], [0], [1], [0, 0, 1, 1], [], []>} : vector<8x16xf32>, vector<16x12xf32>, vector<8x12xf32> -> vector<8x12xf32>
    %c0_272 = arith.constant 0 : index
    %c0_273 = arith.constant 0 : index
    %1439 = vector.load %arg25[%c0_272, %c0_273] : memref<1x12xf32, #tpu.memory_space<vmem>>, vector<1x12xf32>
    %1440 = vector.broadcast %1439 : vector<1x12xf32> to vector<8x12xf32>
    %1441 = arith.addf %1438, %1440 : vector<8x12xf32>
    %1442 = tpu.concatenate %0, %936, %1 in 1 : vector<8x16xf32>, vector<8x32xf32>, vector<8x10xf32> -> vector<8x58xf32>
    %c0_274 = arith.constant 0 : index
    %c0_275 = arith.constant 0 : index
    %1443 = vector.load %arg3[%c0_274, %c0_275] : memref<58x64xf32, #tpu.memory_space<vmem>>, vector<58x64xf32>
    %cst_276 = arith.constant dense<0.000000e+00> : vector<8x64xf32>
    %1444 = tpu.matmul %1442, %1443, %cst_276 {dimension_numbers = #tpu.dot_dimension_numbers<[1], [0], [0], [1], [0, 0, 1, 1], [], []>} : vector<8x58xf32>, vector<58x64xf32>, vector<8x64xf32> -> vector<8x64xf32>
    %c0_277 = arith.constant 0 : index
    %c0_278 = arith.constant 0 : index
    %1445 = vector.load %arg5[%c0_277, %c0_278] : memref<1x64xf32, #tpu.memory_space<vmem>>, vector<1x64xf32>
    %1446 = vector.broadcast %1445 : vector<1x64xf32> to vector<8x64xf32>
    %1447 = arith.addf %1444, %1446 : vector<8x64xf32>
    %c0_279 = arith.constant 0 : index
    %c0_280 = arith.constant 0 : index
    %1448 = vector.load %arg4[%c0_279, %c0_280] : memref<16x64xf32, #tpu.memory_space<vmem>>, vector<16x64xf32>
    %cst_281 = arith.constant 0.000000e+00 : f32
    %1449 = vector.broadcast %cst_281 : f32 to vector<1x16xf32>
    %cst_282 = arith.constant 0.000000e+00 : f32
    %1450 = vector.broadcast %cst_282 : f32 to vector<1x16xf32>
    %1451 = vector.extract_strided_slice %1447 {offsets = [0, 0], sizes = [1, 64], strides = [1, 1]} : vector<8x64xf32> to vector<1x64xf32>
    %cst_283 = arith.constant dense<0.000000e+00> : vector<1x64xf32>
    %1452 = tpu.matmul %1449, %1448, %cst_283 {dimension_numbers = #tpu.dot_dimension_numbers<[1], [0], [0], [1], [0, 0, 1, 1], [], []>} : vector<1x16xf32>, vector<16x64xf32>, vector<1x64xf32> -> vector<1x64xf32>
    %1453 = arith.addf %1451, %1452 : vector<1x64xf32>
    %1454 = vector.extract_strided_slice %1453 {offsets = [0, 0], sizes = [1, 16], strides = [1, 1]} : vector<1x64xf32> to vector<1x16xf32>
    %1455 = arith.negf %1454 : vector<1x16xf32>
    %1456 = math.exp %1455 : vector<1x16xf32>
    %cst_284 = arith.constant 1.000000e+00 : f32
    %1457 = vector.broadcast %cst_284 : f32 to vector<1x16xf32>
    %1458 = arith.addf %1457, %1456 : vector<1x16xf32>
    %1459 = arith.divf %1457, %1458 : vector<1x16xf32>
    %1460 = vector.extract_strided_slice %1453 {offsets = [0, 16], sizes = [1, 16], strides = [1, 1]} : vector<1x64xf32> to vector<1x16xf32>
    %1461 = arith.negf %1460 : vector<1x16xf32>
    %1462 = math.exp %1461 : vector<1x16xf32>
    %cst_285 = arith.constant 1.000000e+00 : f32
    %1463 = vector.broadcast %cst_285 : f32 to vector<1x16xf32>
    %1464 = arith.addf %1463, %1462 : vector<1x16xf32>
    %1465 = arith.divf %1463, %1464 : vector<1x16xf32>
    %1466 = vector.extract_strided_slice %1453 {offsets = [0, 32], sizes = [1, 16], strides = [1, 1]} : vector<1x64xf32> to vector<1x16xf32>
    %1467 = math.tanh %1466 : vector<1x16xf32>
    %1468 = vector.extract_strided_slice %1453 {offsets = [0, 48], sizes = [1, 16], strides = [1, 1]} : vector<1x64xf32> to vector<1x16xf32>
    %1469 = arith.negf %1468 : vector<1x16xf32>
    %1470 = math.exp %1469 : vector<1x16xf32>
    %cst_286 = arith.constant 1.000000e+00 : f32
    %1471 = vector.broadcast %cst_286 : f32 to vector<1x16xf32>
    %1472 = arith.addf %1471, %1470 : vector<1x16xf32>
    %1473 = arith.divf %1471, %1472 : vector<1x16xf32>
    %1474 = arith.mulf %1465, %1450 : vector<1x16xf32>
    %1475 = arith.mulf %1459, %1467 : vector<1x16xf32>
    %1476 = arith.addf %1474, %1475 : vector<1x16xf32>
    %1477 = math.tanh %1476 : vector<1x16xf32>
    %1478 = arith.mulf %1473, %1477 : vector<1x16xf32>
    %1479 = vector.extract_strided_slice %1447 {offsets = [1, 0], sizes = [1, 64], strides = [1, 1]} : vector<8x64xf32> to vector<1x64xf32>
    %cst_287 = arith.constant dense<0.000000e+00> : vector<1x64xf32>
    %1480 = tpu.matmul %1478, %1448, %cst_287 {dimension_numbers = #tpu.dot_dimension_numbers<[1], [0], [0], [1], [0, 0, 1, 1], [], []>} : vector<1x16xf32>, vector<16x64xf32>, vector<1x64xf32> -> vector<1x64xf32>
    %1481 = arith.addf %1479, %1480 : vector<1x64xf32>
    %1482 = vector.extract_strided_slice %1481 {offsets = [0, 0], sizes = [1, 16], strides = [1, 1]} : vector<1x64xf32> to vector<1x16xf32>
    %1483 = arith.negf %1482 : vector<1x16xf32>
    %1484 = math.exp %1483 : vector<1x16xf32>
    %cst_288 = arith.constant 1.000000e+00 : f32
    %1485 = vector.broadcast %cst_288 : f32 to vector<1x16xf32>
    %1486 = arith.addf %1485, %1484 : vector<1x16xf32>
    %1487 = arith.divf %1485, %1486 : vector<1x16xf32>
    %1488 = vector.extract_strided_slice %1481 {offsets = [0, 16], sizes = [1, 16], strides = [1, 1]} : vector<1x64xf32> to vector<1x16xf32>
    %1489 = arith.negf %1488 : vector<1x16xf32>
    %1490 = math.exp %1489 : vector<1x16xf32>
    %cst_289 = arith.constant 1.000000e+00 : f32
    %1491 = vector.broadcast %cst_289 : f32 to vector<1x16xf32>
    %1492 = arith.addf %1491, %1490 : vector<1x16xf32>
    %1493 = arith.divf %1491, %1492 : vector<1x16xf32>
    %1494 = vector.extract_strided_slice %1481 {offsets = [0, 32], sizes = [1, 16], strides = [1, 1]} : vector<1x64xf32> to vector<1x16xf32>
    %1495 = math.tanh %1494 : vector<1x16xf32>
    %1496 = vector.extract_strided_slice %1481 {offsets = [0, 48], sizes = [1, 16], strides = [1, 1]} : vector<1x64xf32> to vector<1x16xf32>
    %1497 = arith.negf %1496 : vector<1x16xf32>
    %1498 = math.exp %1497 : vector<1x16xf32>
    %cst_290 = arith.constant 1.000000e+00 : f32
    %1499 = vector.broadcast %cst_290 : f32 to vector<1x16xf32>
    %1500 = arith.addf %1499, %1498 : vector<1x16xf32>
    %1501 = arith.divf %1499, %1500 : vector<1x16xf32>
    %1502 = arith.mulf %1493, %1476 : vector<1x16xf32>
    %1503 = arith.mulf %1487, %1495 : vector<1x16xf32>
    %1504 = arith.addf %1502, %1503 : vector<1x16xf32>
    %1505 = math.tanh %1504 : vector<1x16xf32>
    %1506 = arith.mulf %1501, %1505 : vector<1x16xf32>
    %1507 = vector.extract_strided_slice %1447 {offsets = [2, 0], sizes = [1, 64], strides = [1, 1]} : vector<8x64xf32> to vector<1x64xf32>
    %cst_291 = arith.constant dense<0.000000e+00> : vector<1x64xf32>
    %1508 = tpu.matmul %1506, %1448, %cst_291 {dimension_numbers = #tpu.dot_dimension_numbers<[1], [0], [0], [1], [0, 0, 1, 1], [], []>} : vector<1x16xf32>, vector<16x64xf32>, vector<1x64xf32> -> vector<1x64xf32>
    %1509 = arith.addf %1507, %1508 : vector<1x64xf32>
    %1510 = vector.extract_strided_slice %1509 {offsets = [0, 0], sizes = [1, 16], strides = [1, 1]} : vector<1x64xf32> to vector<1x16xf32>
    %1511 = arith.negf %1510 : vector<1x16xf32>
    %1512 = math.exp %1511 : vector<1x16xf32>
    %cst_292 = arith.constant 1.000000e+00 : f32
    %1513 = vector.broadcast %cst_292 : f32 to vector<1x16xf32>
    %1514 = arith.addf %1513, %1512 : vector<1x16xf32>
    %1515 = arith.divf %1513, %1514 : vector<1x16xf32>
    %1516 = vector.extract_strided_slice %1509 {offsets = [0, 16], sizes = [1, 16], strides = [1, 1]} : vector<1x64xf32> to vector<1x16xf32>
    %1517 = arith.negf %1516 : vector<1x16xf32>
    %1518 = math.exp %1517 : vector<1x16xf32>
    %cst_293 = arith.constant 1.000000e+00 : f32
    %1519 = vector.broadcast %cst_293 : f32 to vector<1x16xf32>
    %1520 = arith.addf %1519, %1518 : vector<1x16xf32>
    %1521 = arith.divf %1519, %1520 : vector<1x16xf32>
    %1522 = vector.extract_strided_slice %1509 {offsets = [0, 32], sizes = [1, 16], strides = [1, 1]} : vector<1x64xf32> to vector<1x16xf32>
    %1523 = math.tanh %1522 : vector<1x16xf32>
    %1524 = vector.extract_strided_slice %1509 {offsets = [0, 48], sizes = [1, 16], strides = [1, 1]} : vector<1x64xf32> to vector<1x16xf32>
    %1525 = arith.negf %1524 : vector<1x16xf32>
    %1526 = math.exp %1525 : vector<1x16xf32>
    %cst_294 = arith.constant 1.000000e+00 : f32
    %1527 = vector.broadcast %cst_294 : f32 to vector<1x16xf32>
    %1528 = arith.addf %1527, %1526 : vector<1x16xf32>
    %1529 = arith.divf %1527, %1528 : vector<1x16xf32>
    %1530 = arith.mulf %1521, %1504 : vector<1x16xf32>
    %1531 = arith.mulf %1515, %1523 : vector<1x16xf32>
    %1532 = arith.addf %1530, %1531 : vector<1x16xf32>
    %1533 = math.tanh %1532 : vector<1x16xf32>
    %1534 = arith.mulf %1529, %1533 : vector<1x16xf32>
    %1535 = vector.extract_strided_slice %1447 {offsets = [3, 0], sizes = [1, 64], strides = [1, 1]} : vector<8x64xf32> to vector<1x64xf32>
    %cst_295 = arith.constant dense<0.000000e+00> : vector<1x64xf32>
    %1536 = tpu.matmul %1534, %1448, %cst_295 {dimension_numbers = #tpu.dot_dimension_numbers<[1], [0], [0], [1], [0, 0, 1, 1], [], []>} : vector<1x16xf32>, vector<16x64xf32>, vector<1x64xf32> -> vector<1x64xf32>
    %1537 = arith.addf %1535, %1536 : vector<1x64xf32>
    %1538 = vector.extract_strided_slice %1537 {offsets = [0, 0], sizes = [1, 16], strides = [1, 1]} : vector<1x64xf32> to vector<1x16xf32>
    %1539 = arith.negf %1538 : vector<1x16xf32>
    %1540 = math.exp %1539 : vector<1x16xf32>
    %cst_296 = arith.constant 1.000000e+00 : f32
    %1541 = vector.broadcast %cst_296 : f32 to vector<1x16xf32>
    %1542 = arith.addf %1541, %1540 : vector<1x16xf32>
    %1543 = arith.divf %1541, %1542 : vector<1x16xf32>
    %1544 = vector.extract_strided_slice %1537 {offsets = [0, 16], sizes = [1, 16], strides = [1, 1]} : vector<1x64xf32> to vector<1x16xf32>
    %1545 = arith.negf %1544 : vector<1x16xf32>
    %1546 = math.exp %1545 : vector<1x16xf32>
    %cst_297 = arith.constant 1.000000e+00 : f32
    %1547 = vector.broadcast %cst_297 : f32 to vector<1x16xf32>
    %1548 = arith.addf %1547, %1546 : vector<1x16xf32>
    %1549 = arith.divf %1547, %1548 : vector<1x16xf32>
    %1550 = vector.extract_strided_slice %1537 {offsets = [0, 32], sizes = [1, 16], strides = [1, 1]} : vector<1x64xf32> to vector<1x16xf32>
    %1551 = math.tanh %1550 : vector<1x16xf32>
    %1552 = vector.extract_strided_slice %1537 {offsets = [0, 48], sizes = [1, 16], strides = [1, 1]} : vector<1x64xf32> to vector<1x16xf32>
    %1553 = arith.negf %1552 : vector<1x16xf32>
    %1554 = math.exp %1553 : vector<1x16xf32>
    %cst_298 = arith.constant 1.000000e+00 : f32
    %1555 = vector.broadcast %cst_298 : f32 to vector<1x16xf32>
    %1556 = arith.addf %1555, %1554 : vector<1x16xf32>
    %1557 = arith.divf %1555, %1556 : vector<1x16xf32>
    %1558 = arith.mulf %1549, %1532 : vector<1x16xf32>
    %1559 = arith.mulf %1543, %1551 : vector<1x16xf32>
    %1560 = arith.addf %1558, %1559 : vector<1x16xf32>
    %1561 = math.tanh %1560 : vector<1x16xf32>
    %1562 = arith.mulf %1557, %1561 : vector<1x16xf32>
    %1563 = vector.extract_strided_slice %1447 {offsets = [4, 0], sizes = [1, 64], strides = [1, 1]} : vector<8x64xf32> to vector<1x64xf32>
    %cst_299 = arith.constant dense<0.000000e+00> : vector<1x64xf32>
    %1564 = tpu.matmul %1562, %1448, %cst_299 {dimension_numbers = #tpu.dot_dimension_numbers<[1], [0], [0], [1], [0, 0, 1, 1], [], []>} : vector<1x16xf32>, vector<16x64xf32>, vector<1x64xf32> -> vector<1x64xf32>
    %1565 = arith.addf %1563, %1564 : vector<1x64xf32>
    %1566 = vector.extract_strided_slice %1565 {offsets = [0, 0], sizes = [1, 16], strides = [1, 1]} : vector<1x64xf32> to vector<1x16xf32>
    %1567 = arith.negf %1566 : vector<1x16xf32>
    %1568 = math.exp %1567 : vector<1x16xf32>
    %cst_300 = arith.constant 1.000000e+00 : f32
    %1569 = vector.broadcast %cst_300 : f32 to vector<1x16xf32>
    %1570 = arith.addf %1569, %1568 : vector<1x16xf32>
    %1571 = arith.divf %1569, %1570 : vector<1x16xf32>
    %1572 = vector.extract_strided_slice %1565 {offsets = [0, 16], sizes = [1, 16], strides = [1, 1]} : vector<1x64xf32> to vector<1x16xf32>
    %1573 = arith.negf %1572 : vector<1x16xf32>
    %1574 = math.exp %1573 : vector<1x16xf32>
    %cst_301 = arith.constant 1.000000e+00 : f32
    %1575 = vector.broadcast %cst_301 : f32 to vector<1x16xf32>
    %1576 = arith.addf %1575, %1574 : vector<1x16xf32>
    %1577 = arith.divf %1575, %1576 : vector<1x16xf32>
    %1578 = vector.extract_strided_slice %1565 {offsets = [0, 32], sizes = [1, 16], strides = [1, 1]} : vector<1x64xf32> to vector<1x16xf32>
    %1579 = math.tanh %1578 : vector<1x16xf32>
    %1580 = vector.extract_strided_slice %1565 {offsets = [0, 48], sizes = [1, 16], strides = [1, 1]} : vector<1x64xf32> to vector<1x16xf32>
    %1581 = arith.negf %1580 : vector<1x16xf32>
    %1582 = math.exp %1581 : vector<1x16xf32>
    %cst_302 = arith.constant 1.000000e+00 : f32
    %1583 = vector.broadcast %cst_302 : f32 to vector<1x16xf32>
    %1584 = arith.addf %1583, %1582 : vector<1x16xf32>
    %1585 = arith.divf %1583, %1584 : vector<1x16xf32>
    %1586 = arith.mulf %1577, %1560 : vector<1x16xf32>
    %1587 = arith.mulf %1571, %1579 : vector<1x16xf32>
    %1588 = arith.addf %1586, %1587 : vector<1x16xf32>
    %1589 = math.tanh %1588 : vector<1x16xf32>
    %1590 = arith.mulf %1585, %1589 : vector<1x16xf32>
    %1591 = vector.extract_strided_slice %1447 {offsets = [5, 0], sizes = [1, 64], strides = [1, 1]} : vector<8x64xf32> to vector<1x64xf32>
    %cst_303 = arith.constant dense<0.000000e+00> : vector<1x64xf32>
    %1592 = tpu.matmul %1590, %1448, %cst_303 {dimension_numbers = #tpu.dot_dimension_numbers<[1], [0], [0], [1], [0, 0, 1, 1], [], []>} : vector<1x16xf32>, vector<16x64xf32>, vector<1x64xf32> -> vector<1x64xf32>
    %1593 = arith.addf %1591, %1592 : vector<1x64xf32>
    %1594 = vector.extract_strided_slice %1593 {offsets = [0, 0], sizes = [1, 16], strides = [1, 1]} : vector<1x64xf32> to vector<1x16xf32>
    %1595 = arith.negf %1594 : vector<1x16xf32>
    %1596 = math.exp %1595 : vector<1x16xf32>
    %cst_304 = arith.constant 1.000000e+00 : f32
    %1597 = vector.broadcast %cst_304 : f32 to vector<1x16xf32>
    %1598 = arith.addf %1597, %1596 : vector<1x16xf32>
    %1599 = arith.divf %1597, %1598 : vector<1x16xf32>
    %1600 = vector.extract_strided_slice %1593 {offsets = [0, 16], sizes = [1, 16], strides = [1, 1]} : vector<1x64xf32> to vector<1x16xf32>
    %1601 = arith.negf %1600 : vector<1x16xf32>
    %1602 = math.exp %1601 : vector<1x16xf32>
    %cst_305 = arith.constant 1.000000e+00 : f32
    %1603 = vector.broadcast %cst_305 : f32 to vector<1x16xf32>
    %1604 = arith.addf %1603, %1602 : vector<1x16xf32>
    %1605 = arith.divf %1603, %1604 : vector<1x16xf32>
    %1606 = vector.extract_strided_slice %1593 {offsets = [0, 32], sizes = [1, 16], strides = [1, 1]} : vector<1x64xf32> to vector<1x16xf32>
    %1607 = math.tanh %1606 : vector<1x16xf32>
    %1608 = vector.extract_strided_slice %1593 {offsets = [0, 48], sizes = [1, 16], strides = [1, 1]} : vector<1x64xf32> to vector<1x16xf32>
    %1609 = arith.negf %1608 : vector<1x16xf32>
    %1610 = math.exp %1609 : vector<1x16xf32>
    %cst_306 = arith.constant 1.000000e+00 : f32
    %1611 = vector.broadcast %cst_306 : f32 to vector<1x16xf32>
    %1612 = arith.addf %1611, %1610 : vector<1x16xf32>
    %1613 = arith.divf %1611, %1612 : vector<1x16xf32>
    %1614 = arith.mulf %1605, %1588 : vector<1x16xf32>
    %1615 = arith.mulf %1599, %1607 : vector<1x16xf32>
    %1616 = arith.addf %1614, %1615 : vector<1x16xf32>
    %1617 = math.tanh %1616 : vector<1x16xf32>
    %1618 = arith.mulf %1613, %1617 : vector<1x16xf32>
    %1619 = vector.extract_strided_slice %1447 {offsets = [6, 0], sizes = [1, 64], strides = [1, 1]} : vector<8x64xf32> to vector<1x64xf32>
    %cst_307 = arith.constant dense<0.000000e+00> : vector<1x64xf32>
    %1620 = tpu.matmul %1618, %1448, %cst_307 {dimension_numbers = #tpu.dot_dimension_numbers<[1], [0], [0], [1], [0, 0, 1, 1], [], []>} : vector<1x16xf32>, vector<16x64xf32>, vector<1x64xf32> -> vector<1x64xf32>
    %1621 = arith.addf %1619, %1620 : vector<1x64xf32>
    %1622 = vector.extract_strided_slice %1621 {offsets = [0, 0], sizes = [1, 16], strides = [1, 1]} : vector<1x64xf32> to vector<1x16xf32>
    %1623 = arith.negf %1622 : vector<1x16xf32>
    %1624 = math.exp %1623 : vector<1x16xf32>
    %cst_308 = arith.constant 1.000000e+00 : f32
    %1625 = vector.broadcast %cst_308 : f32 to vector<1x16xf32>
    %1626 = arith.addf %1625, %1624 : vector<1x16xf32>
    %1627 = arith.divf %1625, %1626 : vector<1x16xf32>
    %1628 = vector.extract_strided_slice %1621 {offsets = [0, 16], sizes = [1, 16], strides = [1, 1]} : vector<1x64xf32> to vector<1x16xf32>
    %1629 = arith.negf %1628 : vector<1x16xf32>
    %1630 = math.exp %1629 : vector<1x16xf32>
    %cst_309 = arith.constant 1.000000e+00 : f32
    %1631 = vector.broadcast %cst_309 : f32 to vector<1x16xf32>
    %1632 = arith.addf %1631, %1630 : vector<1x16xf32>
    %1633 = arith.divf %1631, %1632 : vector<1x16xf32>
    %1634 = vector.extract_strided_slice %1621 {offsets = [0, 32], sizes = [1, 16], strides = [1, 1]} : vector<1x64xf32> to vector<1x16xf32>
    %1635 = math.tanh %1634 : vector<1x16xf32>
    %1636 = vector.extract_strided_slice %1621 {offsets = [0, 48], sizes = [1, 16], strides = [1, 1]} : vector<1x64xf32> to vector<1x16xf32>
    %1637 = arith.negf %1636 : vector<1x16xf32>
    %1638 = math.exp %1637 : vector<1x16xf32>
    %cst_310 = arith.constant 1.000000e+00 : f32
    %1639 = vector.broadcast %cst_310 : f32 to vector<1x16xf32>
    %1640 = arith.addf %1639, %1638 : vector<1x16xf32>
    %1641 = arith.divf %1639, %1640 : vector<1x16xf32>
    %1642 = arith.mulf %1633, %1616 : vector<1x16xf32>
    %1643 = arith.mulf %1627, %1635 : vector<1x16xf32>
    %1644 = arith.addf %1642, %1643 : vector<1x16xf32>
    %1645 = math.tanh %1644 : vector<1x16xf32>
    %1646 = arith.mulf %1641, %1645 : vector<1x16xf32>
    %1647 = vector.extract_strided_slice %1447 {offsets = [7, 0], sizes = [1, 64], strides = [1, 1]} : vector<8x64xf32> to vector<1x64xf32>
    %cst_311 = arith.constant dense<0.000000e+00> : vector<1x64xf32>
    %1648 = tpu.matmul %1646, %1448, %cst_311 {dimension_numbers = #tpu.dot_dimension_numbers<[1], [0], [0], [1], [0, 0, 1, 1], [], []>} : vector<1x16xf32>, vector<16x64xf32>, vector<1x64xf32> -> vector<1x64xf32>
    %1649 = arith.addf %1647, %1648 : vector<1x64xf32>
    %1650 = vector.extract_strided_slice %1649 {offsets = [0, 0], sizes = [1, 16], strides = [1, 1]} : vector<1x64xf32> to vector<1x16xf32>
    %1651 = arith.negf %1650 : vector<1x16xf32>
    %1652 = math.exp %1651 : vector<1x16xf32>
    %cst_312 = arith.constant 1.000000e+00 : f32
    %1653 = vector.broadcast %cst_312 : f32 to vector<1x16xf32>
    %1654 = arith.addf %1653, %1652 : vector<1x16xf32>
    %1655 = arith.divf %1653, %1654 : vector<1x16xf32>
    %1656 = vector.extract_strided_slice %1649 {offsets = [0, 16], sizes = [1, 16], strides = [1, 1]} : vector<1x64xf32> to vector<1x16xf32>
    %1657 = arith.negf %1656 : vector<1x16xf32>
    %1658 = math.exp %1657 : vector<1x16xf32>
    %cst_313 = arith.constant 1.000000e+00 : f32
    %1659 = vector.broadcast %cst_313 : f32 to vector<1x16xf32>
    %1660 = arith.addf %1659, %1658 : vector<1x16xf32>
    %1661 = arith.divf %1659, %1660 : vector<1x16xf32>
    %1662 = vector.extract_strided_slice %1649 {offsets = [0, 32], sizes = [1, 16], strides = [1, 1]} : vector<1x64xf32> to vector<1x16xf32>
    %1663 = math.tanh %1662 : vector<1x16xf32>
    %1664 = vector.extract_strided_slice %1649 {offsets = [0, 48], sizes = [1, 16], strides = [1, 1]} : vector<1x64xf32> to vector<1x16xf32>
    %1665 = arith.negf %1664 : vector<1x16xf32>
    %1666 = math.exp %1665 : vector<1x16xf32>
    %cst_314 = arith.constant 1.000000e+00 : f32
    %1667 = vector.broadcast %cst_314 : f32 to vector<1x16xf32>
    %1668 = arith.addf %1667, %1666 : vector<1x16xf32>
    %1669 = arith.divf %1667, %1668 : vector<1x16xf32>
    %1670 = arith.mulf %1661, %1644 : vector<1x16xf32>
    %1671 = arith.mulf %1655, %1663 : vector<1x16xf32>
    %1672 = arith.addf %1670, %1671 : vector<1x16xf32>
    %1673 = math.tanh %1672 : vector<1x16xf32>
    %1674 = arith.mulf %1669, %1673 : vector<1x16xf32>
    %1675 = tpu.concatenate %1478, %1506, %1534, %1562, %1590, %1618, %1646, %1674 in 0 : vector<1x16xf32>, vector<1x16xf32>, vector<1x16xf32>, vector<1x16xf32>, vector<1x16xf32>, vector<1x16xf32>, vector<1x16xf32>, vector<1x16xf32> -> vector<8x16xf32>
    %c0_315 = arith.constant 0 : index
    %c0_316 = arith.constant 0 : index
    %1676 = vector.load %arg32[%c0_315, %c0_316] : memref<16x8xf32, #tpu.memory_space<vmem>>, vector<16x8xf32>
    %cst_317 = arith.constant dense<0.000000e+00> : vector<8x8xf32>
    %1677 = tpu.matmul %1675, %1676, %cst_317 {dimension_numbers = #tpu.dot_dimension_numbers<[1], [0], [0], [1], [0, 0, 1, 1], [], []>} : vector<8x16xf32>, vector<16x8xf32>, vector<8x8xf32> -> vector<8x8xf32>
    %c0_318 = arith.constant 0 : index
    %c0_319 = arith.constant 0 : index
    %1678 = vector.load %arg33[%c0_318, %c0_319] : memref<1x8xf32, #tpu.memory_space<vmem>>, vector<1x8xf32>
    %1679 = vector.broadcast %1678 : vector<1x8xf32> to vector<8x8xf32>
    %1680 = arith.addf %1677, %1679 : vector<8x8xf32>
    %1681 = tpu.concatenate %1680, %1441 in 1 : vector<8x8xf32>, vector<8x12xf32> -> vector<8x20xf32>
    %c0_320 = arith.constant 0 : index
    %c0_321 = arith.constant 0 : index
    %1682 = vector.load %arg34[%c0_320, %c0_321] : memref<8x20xf32, #tpu.memory_space<vmem>>, vector<8x20xf32>
    tpu.vector_store %arg34[%c0_320, %c0_321], %1681 {strides = array<i32>} : memref<8x20xf32, #tpu.memory_space<vmem>>, vector<8x20xf32>,
    return
  }
}

</mosaic_0001>

<llo_original>
// kernel: tpu_custom_call.1
$region0: #{tpu_custom_call.1}
  #allocation0 [shape = 'u32[]', space=smem, size = 0x4, offset = 0x4, fixed_abs, tag = 'smem constant byte address 0x4 - core index']
  #allocation1 [shape = 'u32[144,128]{1,0:T(1,128)}', space=vmem, size = 0x12000, scoped, tag = 'internal scratch']
  %s0 = inlined_call_operand.smem [shape: u32[35], index: -1, kind: input, shape index: {}]
  %s1 = sld [smem:[%s0]]
  %s2 = scalar_lea.smem %s0, 1
  %s3 = sld [smem:[%s2]]
  %s4 = scalar_lea.smem %s0, 2
  %s5 = sld [smem:[%s4]]
  %s6 = scalar_lea.smem %s0, 3
  %s7 = sld [smem:[%s6]]
  %s8 = scalar_lea.smem %s0, 4
  %s9 = sld [smem:[%s8]]
  %s10 = scalar_lea.smem %s0, 5
  %s11 = sld [smem:[%s10]]
  %s12 = scalar_lea.smem %s0, 6
  %s13 = sld [smem:[%s12]]
  %s14 = scalar_lea.smem %s0, 7
  %s15 = sld [smem:[%s14]]
  %s16 = scalar_lea.smem %s0, 8
  %s17 = sld [smem:[%s16]]
  %s18 = scalar_lea.smem %s0, 9
  %s19 = sld [smem:[%s18]]
  %s20 = scalar_lea.smem %s0, 10
  %s21 = sld [smem:[%s20]]
  %s22 = scalar_lea.smem %s0, 11
  %s23 = sld [smem:[%s22]]
  %s24 = scalar_lea.smem %s0, 12
  %s25 = sld [smem:[%s24]]
  %s26 = scalar_lea.smem %s0, 13
  %s27 = sld [smem:[%s26]]
  %s28 = scalar_lea.smem %s0, 14
  %s29 = sld [smem:[%s28]]
  %s30 = scalar_lea.smem %s0, 15
  %s31 = sld [smem:[%s30]]
  %s32 = scalar_lea.smem %s0, 16
  %s33 = sld [smem:[%s32]]
  %s34 = scalar_lea.smem %s0, 17
  %s35 = sld [smem:[%s34]]
  %s36 = scalar_lea.smem %s0, 18
  %s37 = sld [smem:[%s36]]
  %s38 = scalar_lea.smem %s0, 19
  %s39 = sld [smem:[%s38]]
  %s40 = scalar_lea.smem %s0, 20
  %s41 = sld [smem:[%s40]]
  %s42 = scalar_lea.smem %s0, 21
  %s43 = sld [smem:[%s42]]
  %s44 = scalar_lea.smem %s0, 22
  %s45 = sld [smem:[%s44]]
  %s46 = scalar_lea.smem %s0, 23
  %s47 = sld [smem:[%s46]]
  %s48 = scalar_lea.smem %s0, 24
  %s49 = sld [smem:[%s48]]
  %s50 = scalar_lea.smem %s0, 25
  %s51 = sld [smem:[%s50]]
  %s52 = scalar_lea.smem %s0, 26
  %s53 = sld [smem:[%s52]]
  %s54 = scalar_lea.smem %s0, 27
  %s55 = sld [smem:[%s54]]
  %s56 = scalar_lea.smem %s0, 28
  %s57 = sld [smem:[%s56]]
  %s58 = scalar_lea.smem %s0, 29
  %s59 = sld [smem:[%s58]]
  %s60 = scalar_lea.smem %s0, 30
  %s61 = sld [smem:[%s60]]
  %s62 = scalar_lea.smem %s0, 31
  %s63 = sld [smem:[%s62]]
  %s64 = scalar_lea.smem %s0, 32
  %s65 = sld [smem:[%s64]]
  %s66 = scalar_lea.smem %s0, 33
  %s67 = sld [smem:[%s66]]
  %s68 = scalar_lea.smem %s0, 34
  %s69 = sld [smem:[%s68]]
  %s70 = sld [smem:[#allocation0]]
  $region222: #{tpu_custom_call.1} parent=0
    _
  %s72 = ssub.s32 1, %s70
  %s73 = scalar_select 0, %s72, %s70
  $region1: #{tpu_custom_call.1} parent=0
    #allocation2 [shape = 'u8[4096]{0}', space=vmem, size = 0x1000, scoped, tag = 'input window, operand 0, single buffered']
    #allocation3 [shape = 's32[1]{0}', space=sflag, size = 0x4, scoped, tag = 'scoped memory for tpu_custom_call.1']
    #allocation4 [shape = 's32[1]{0}', space=sflag, size = 0x4, scoped, tag = 'scoped memory for tpu_custom_call.1']
    #allocation5 [shape = 'u8[4096]{0}', space=vmem, size = 0x1000, scoped, tag = 'input window, operand 2, single buffered']
    #allocation6 [shape = 's32[1]{0}', space=sflag, size = 0x4, scoped, tag = 'scoped memory for tpu_custom_call.1']
    #allocation7 [shape = 'u8[8192]{0}', space=vmem, size = 0x2000, scoped, tag = 'input window, operand 4, single buffered']
    #allocation8 [shape = 'u8[512]{0}', space=vmem, size = 0x400, scoped, tag = 'input window, operand 5, single buffered']
    #allocation9 [shape = 's32[1]{0}', space=sflag, size = 0x4, scoped, tag = 'scoped memory for tpu_custom_call.1']
    #allocation10 [shape = 'u8[512]{0}', space=vmem, size = 0x400, scoped, tag = 'input window, operand 7, single buffered']
    #allocation11 [shape = 'u8[512]{0}', space=vmem, size = 0x400, scoped, tag = 'input window, operand 9, single buffered']
    #allocation12 [shape = 's32[1]{0}', space=sflag, size = 0x4, scoped, tag = 'scoped memory for tpu_custom_call.1']
    #allocation13 [shape = 'u8[8192]{0}', space=vmem, size = 0x2000, scoped, tag = 'input window, operand 11, single buffered']
    #allocation14 [shape = 'u8[512]{0}', space=vmem, size = 0x400, scoped, tag = 'input window, operand 12, single buffered']
    #allocation15 [shape = 's32[1]{0}', space=sflag, size = 0x4, scoped, tag = 'scoped memory for tpu_custom_call.1']
    #allocation16 [shape = 'u8[8192]{0}', space=vmem, size = 0x2000, scoped, tag = 'input window, operand 14, single buffered']
    #allocation17 [shape = 'u8[512]{0}', space=vmem, size = 0x400, scoped, tag = 'input window, operand 15, single buffered']
    #allocation18 [shape = 's32[1]{0}', space=sflag, size = 0x4, scoped, tag = 'scoped memory for tpu_custom_call.1']
    #allocation19 [shape = 'u8[8192]{0}', space=vmem, size = 0x2000, scoped, tag = 'input window, operand 16, single buffered']
    #allocation20 [shape = 'u8[512]{0}', space=vmem, size = 0x400, scoped, tag = 'input window, operand 17, single buffered']
    #allocation21 [shape = 's32[1]{0}', space=sflag, size = 0x4, scoped, tag = 'scoped memory for tpu_custom_call.1']
    #allocation22 [shape = 'u8[8192]{0}', space=vmem, size = 0x2000, scoped, tag = 'input window, operand 18, single buffered']
    #allocation23 [shape = 'u8[8192]{0}', space=vmem, size = 0x2000, scoped, tag = 'input window, operand 19, single buffered']
    #allocation24 [shape = 's32[1]{0}', space=sflag, size = 0x4, scoped, tag = 'scoped memory for tpu_custom_call.1']
    #allocation25 [shape = 'u8[512]{0}', space=vmem, size = 0x400, scoped, tag = 'input window, operand 20, single buffered']
    #allocation26 [shape = 'u8[8192]{0}', space=vmem, size = 0x2000, scoped, tag = 'input window, operand 22, single buffered']
    #allocation27 [shape = 's32[1]{0}', space=sflag, size = 0x4, scoped, tag = 'scoped memory for tpu_custom_call.1']
    #allocation28 [shape = 'u8[512]{0}', space=vmem, size = 0x400, scoped, tag = 'input window, operand 23, single buffered']
    #allocation29 [shape = 'u8[8192]{0}', space=vmem, size = 0x2000, scoped, tag = 'input window, operand 24, single buffered']
    #allocation30 [shape = 's32[1]{0}', space=sflag, size = 0x4, scoped, tag = 'scoped memory for tpu_custom_call.1']
    #allocation31 [shape = 'u8[512]{0}', space=vmem, size = 0x400, scoped, tag = 'input window, operand 25, single buffered']
    #allocation32 [shape = 'u8[4096]{0}', space=vmem, size = 0x1000, scoped, tag = 'output window, operand 0, single buffered']
    %74 = vsyncpa [#allocation3], 0
    %75 = vsyncpa [#allocation6], 0
    %76 = vsyncpa [#allocation9], 0
    %77 = vsyncpa [#allocation12], 0
    %78 = vsyncpa [#allocation15], 0
    %79 = vsyncpa [#allocation18], 0
    %80 = vsyncpa [#allocation21], 0
    %81 = vsyncpa [#allocation24], 0
    %82 = vsyncpa [#allocation27], 0
    %83 = vsyncpa [#allocation30], 0
    %84 = vsyncpa [#allocation4], 0
    // Predicated region
    $region2: #{tpu_custom_call.1} parent=1 // pred_check
      _
    $region3: #{tpu_custom_call.1} parent=1 // pred_check_branch
      %86 = sbr.rel (0) target = $region5
    $region4: #{tpu_custom_call.1} parent=1 // pred_region
      %s88 = ssub.s32 128, 128
      %89 = vsyncadd [#allocation3], %s88
      %s91 = sshll.u32 [#allocation2], 4
      %s92 = int_to_ptr.vmem [resolvable:$true] %s91
      %94 = dma.hbm_to_vmem [thread:$0]  %s1, 128, %s92, [#allocation3]
    $region5: #{tpu_custom_call.1} parent=1 // pred_fallthru
      _
    // Predicated region
    $region6: #{tpu_custom_call.1} parent=1 // pred_check
      _
    $region7: #{tpu_custom_call.1} parent=1 // pred_check_branch
      %96 = sbr.rel (0) target = $region9
    $region8: #{tpu_custom_call.1} parent=1 // pred_region
      _
    $region9: #{tpu_custom_call.1} parent=1 // pred_fallthru
      _
    // Predicated region
    $region10: #{tpu_custom_call.1} parent=1 // pred_check
      _
    $region11: #{tpu_custom_call.1} parent=1 // pred_check_branch
      %98 = sbr.rel (0) target = $region13
    $region12: #{tpu_custom_call.1} parent=1 // pred_region
      %s100 = ssub.s32 128, 128
      %101 = vsyncadd [#allocation6], %s100
      %s103 = sshll.u32 [#allocation5], 4
      %s104 = int_to_ptr.vmem [resolvable:$true] %s103
      %106 = dma.hbm_to_vmem [thread:$0]  %s5, 128, %s104, [#allocation6]
    $region13: #{tpu_custom_call.1} parent=1 // pred_fallthru
      _
    // Predicated region
    $region14: #{tpu_custom_call.1} parent=1 // pred_check
      _
    $region15: #{tpu_custom_call.1} parent=1 // pred_check_branch
      %108 = sbr.rel (0) target = $region17
    $region16: #{tpu_custom_call.1} parent=1 // pred_region
      _
    $region17: #{tpu_custom_call.1} parent=1 // pred_fallthru
      _
    // Predicated region
    $region18: #{tpu_custom_call.1} parent=1 // pred_check
      _
    $region19: #{tpu_custom_call.1} parent=1 // pred_check_branch
      %110 = sbr.rel (0) target = $region21
    $region20: #{tpu_custom_call.1} parent=1 // pred_region
      %s112 = ssub.s32 256, 256
      %113 = vsyncadd [#allocation6], %s112
      %s114 = sshll.u32 [#allocation7], 4
      %s115 = int_to_ptr.vmem [resolvable:$true] %s114
      %120 = dma.hbm_to_vmem [thread:$0]  %s9, 256, %s115, [#allocation6], 128, 128, 8
    $region21: #{tpu_custom_call.1} parent=1 // pred_fallthru
      _
    // Predicated region
    $region22: #{tpu_custom_call.1} parent=1 // pred_check
      _
    $region23: #{tpu_custom_call.1} parent=1 // pred_check_branch
      %122 = sbr.rel (0) target = $region25
    $region24: #{tpu_custom_call.1} parent=1 // pred_region
      %s124 = ssub.s32 16, 16
      %125 = vsyncadd [#allocation9], %s124
      %s127 = sshll.u32 [#allocation8], 4
      %s128 = int_to_ptr.vmem [resolvable:$true] %s127
      %130 = dma.hbm_to_vmem [thread:$0]  %s11, 16, %s128, [#allocation9]
    $region25: #{tpu_custom_call.1} parent=1 // pred_fallthru
      _
    // Predicated region
    $region26: #{tpu_custom_call.1} parent=1 // pred_check
      _
    $region27: #{tpu_custom_call.1} parent=1 // pred_check_branch
      %132 = sbr.rel (0) target = $region29
    $region28: #{tpu_custom_call.1} parent=1 // pred_region
      _
    $region29: #{tpu_custom_call.1} parent=1 // pred_fallthru
      _
    // Predicated region
    $region30: #{tpu_custom_call.1} parent=1 // pred_check
      _
    $region31: #{tpu_custom_call.1} parent=1 // pred_check_branch
      %134 = sbr.rel (0) target = $region33
    $region32: #{tpu_custom_call.1} parent=1 // pred_region
      %s136 = ssub.s32 16, 16
      %137 = vsyncadd [#allocation9], %s136
      %s139 = sshll.u32 [#allocation10], 4
      %s140 = int_to_ptr.vmem [resolvable:$true] %s139
      %142 = dma.hbm_to_vmem [thread:$0]  %s15, 16, %s140, [#allocation9]
    $region33: #{tpu_custom_call.1} parent=1 // pred_fallthru
      _
    // Predicated region
    $region34: #{tpu_custom_call.1} parent=1 // pred_check
      _
    $region35: #{tpu_custom_call.1} parent=1 // pred_check_branch
      %144 = sbr.rel (0) target = $region37
    $region36: #{tpu_custom_call.1} parent=1 // pred_region
      _
    $region37: #{tpu_custom_call.1} parent=1 // pred_fallthru
      _
    // Predicated region
    $region38: #{tpu_custom_call.1} parent=1 // pred_check
      _
    $region39: #{tpu_custom_call.1} parent=1 // pred_check_branch
      %146 = sbr.rel (0) target = $region41
    $region40: #{tpu_custom_call.1} parent=1 // pred_region
      %s148 = ssub.s32 16, 16
      %149 = vsyncadd [#allocation12], %s148
      %s151 = sshll.u32 [#allocation11], 4
      %s152 = int_to_ptr.vmem [resolvable:$true] %s151
      %154 = dma.hbm_to_vmem [thread:$0]  %s19, 16, %s152, [#allocation12]
    $region41: #{tpu_custom_call.1} parent=1 // pred_fallthru
      _
    // Predicated region
    $region42: #{tpu_custom_call.1} parent=1 // pred_check
      _
    $region43: #{tpu_custom_call.1} parent=1 // pred_check_branch
      %156 = sbr.rel (0) target = $region45
    $region44: #{tpu_custom_call.1} parent=1 // pred_region
      _
    $region45: #{tpu_custom_call.1} parent=1 // pred_fallthru
      _
    // Predicated region
    $region46: #{tpu_custom_call.1} parent=1 // pred_check
      _
    $region47: #{tpu_custom_call.1} parent=1 // pred_check_branch
      %158 = sbr.rel (0) target = $region49
    $region48: #{tpu_custom_call.1} parent=1 // pred_region
      %s160 = ssub.s32 256, 256
      %161 = vsyncadd [#allocation12], %s160
      %s162 = sshll.u32 [#allocation13], 4
      %s163 = int_to_ptr.vmem [resolvable:$true] %s162
      %168 = dma.hbm_to_vmem [thread:$0]  %s23, 256, %s163, [#allocation12], 128, 128, 8
    $region49: #{tpu_custom_call.1} parent=1 // pred_fallthru
      _
    // Predicated region
    $region50: #{tpu_custom_call.1} parent=1 // pred_check
      _
    $region51: #{tpu_custom_call.1} parent=1 // pred_check_branch
      %170 = sbr.rel (0) target = $region53
    $region52: #{tpu_custom_call.1} parent=1 // pred_region
      %s172 = ssub.s32 16, 16
      %173 = vsyncadd [#allocation15], %s172
      %s175 = sshll.u32 [#allocation14], 4
      %s176 = int_to_ptr.vmem [resolvable:$true] %s175
      %178 = dma.hbm_to_vmem [thread:$0]  %s25, 16, %s176, [#allocation15]
    $region53: #{tpu_custom_call.1} parent=1 // pred_fallthru
      _
    // Predicated region
    $region54: #{tpu_custom_call.1} parent=1 // pred_check
      _
    $region55: #{tpu_custom_call.1} parent=1 // pred_check_branch
      %180 = sbr.rel (0) target = $region57
    $region56: #{tpu_custom_call.1} parent=1 // pred_region
      _
    $region57: #{tpu_custom_call.1} parent=1 // pred_fallthru
      _
    // Predicated region
    $region58: #{tpu_custom_call.1} parent=1 // pred_check
      _
    $region59: #{tpu_custom_call.1} parent=1 // pred_check_branch
      %182 = sbr.rel (0) target = $region61
    $region60: #{tpu_custom_call.1} parent=1 // pred_region
      %s184 = ssub.s32 256, 256
      %185 = vsyncadd [#allocation15], %s184
      %s186 = sshll.u32 [#allocation16], 4
      %s187 = int_to_ptr.vmem [resolvable:$true] %s186
      %192 = dma.hbm_to_vmem [thread:$0]  %s29, 256, %s187, [#allocation15], 128, 128, 8
    $region61: #{tpu_custom_call.1} parent=1 // pred_fallthru
      _
    // Predicated region
    $region62: #{tpu_custom_call.1} parent=1 // pred_check
      _
    $region63: #{tpu_custom_call.1} parent=1 // pred_check_branch
      %194 = sbr.rel (0) target = $region65
    $region64: #{tpu_custom_call.1} parent=1 // pred_region
      %s196 = ssub.s32 16, 16
      %197 = vsyncadd [#allocation18], %s196
      %s199 = sshll.u32 [#allocation17], 4
      %s200 = int_to_ptr.vmem [resolvable:$true] %s199
      %202 = dma.hbm_to_vmem [thread:$0]  %s31, 16, %s200, [#allocation18]
    $region65: #{tpu_custom_call.1} parent=1 // pred_fallthru
      _
    // Predicated region
    $region66: #{tpu_custom_call.1} parent=1 // pred_check
      _
    $region67: #{tpu_custom_call.1} parent=1 // pred_check_branch
      %204 = sbr.rel (0) target = $region69
    $region68: #{tpu_custom_call.1} parent=1 // pred_region
      %s206 = ssub.s32 256, 256
      %207 = vsyncadd [#allocation18], %s206
      %s208 = sshll.u32 [#allocation19], 4
      %s209 = int_to_ptr.vmem [resolvable:$true] %s208
      %214 = dma.hbm_to_vmem [thread:$0]  %s33, 256, %s209, [#allocation18], 128, 128, 8
    $region69: #{tpu_custom_call.1} parent=1 // pred_fallthru
      _
    // Predicated region
    $region70: #{tpu_custom_call.1} parent=1 // pred_check
      _
    $region71: #{tpu_custom_call.1} parent=1 // pred_check_branch
      %216 = sbr.rel (0) target = $region73
    $region72: #{tpu_custom_call.1} parent=1 // pred_region
      %s218 = ssub.s32 16, 16
      %219 = vsyncadd [#allocation21], %s218
      %s221 = sshll.u32 [#allocation20], 4
      %s222 = int_to_ptr.vmem [resolvable:$true] %s221
      %224 = dma.hbm_to_vmem [thread:$0]  %s35, 16, %s222, [#allocation21]
    $region73: #{tpu_custom_call.1} parent=1 // pred_fallthru
      _
    // Predicated region
    $region74: #{tpu_custom_call.1} parent=1 // pred_check
      _
    $region75: #{tpu_custom_call.1} parent=1 // pred_check_branch
      %226 = sbr.rel (0) target = $region77
    $region76: #{tpu_custom_call.1} parent=1 // pred_region
      %s228 = ssub.s32 256, 256
      %229 = vsyncadd [#allocation21], %s228
      %s230 = sshll.u32 [#allocation22], 4
      %s231 = int_to_ptr.vmem [resolvable:$true] %s230
      %236 = dma.hbm_to_vmem [thread:$0]  %s37, 256, %s231, [#allocation21], 128, 128, 8
    $region77: #{tpu_custom_call.1} parent=1 // pred_fallthru
      _
    // Predicated region
    $region78: #{tpu_custom_call.1} parent=1 // pred_check
      _
    $region79: #{tpu_custom_call.1} parent=1 // pred_check_branch
      %238 = sbr.rel (0) target = $region81
    $region80: #{tpu_custom_call.1} parent=1 // pred_region
      %s240 = ssub.s32 256, 256
      %241 = vsyncadd [#allocation24], %s240
      %s242 = sshll.u32 [#allocation23], 4
      %s243 = int_to_ptr.vmem [resolvable:$true] %s242
      %248 = dma.hbm_to_vmem [thread:$0]  %s39, 256, %s243, [#allocation24], 128, 128, 8
    $region81: #{tpu_custom_call.1} parent=1 // pred_fallthru
      _
    // Predicated region
    $region82: #{tpu_custom_call.1} parent=1 // pred_check
      _
    $region83: #{tpu_custom_call.1} parent=1 // pred_check_branch
      %250 = sbr.rel (0) target = $region85
    $region84: #{tpu_custom_call.1} parent=1 // pred_region
      %s252 = ssub.s32 16, 16
      %253 = vsyncadd [#allocation24], %s252
      %s255 = sshll.u32 [#allocation25], 4
      %s256 = int_to_ptr.vmem [resolvable:$true] %s255
      %258 = dma.hbm_to_vmem [thread:$0]  %s41, 16, %s256, [#allocation24]
    $region85: #{tpu_custom_call.1} parent=1 // pred_fallthru
      _
    // Predicated region
    $region86: #{tpu_custom_call.1} parent=1 // pred_check
      _
    $region87: #{tpu_custom_call.1} parent=1 // pred_check_branch
      %260 = sbr.rel (0) target = $region89
    $region88: #{tpu_custom_call.1} parent=1 // pred_region
      _
    $region89: #{tpu_custom_call.1} parent=1 // pred_fallthru
      _
    // Predicated region
    $region90: #{tpu_custom_call.1} parent=1 // pred_check
      _
    $region91: #{tpu_custom_call.1} parent=1 // pred_check_branch
      %262 = sbr.rel (0) target = $region93
    $region92: #{tpu_custom_call.1} parent=1 // pred_region
      %s264 = ssub.s32 256, 256
      %265 = vsyncadd [#allocation27], %s264
      %s266 = sshll.u32 [#allocation26], 4
      %s267 = int_to_ptr.vmem [resolvable:$true] %s266
      %272 = dma.hbm_to_vmem [thread:$0]  %s45, 256, %s267, [#allocation27], 128, 128, 8
    $region93: #{tpu_custom_call.1} parent=1 // pred_fallthru
      _
    // Predicated region
    $region94: #{tpu_custom_call.1} parent=1 // pred_check
      _
    $region95: #{tpu_custom_call.1} parent=1 // pred_check_branch
      %274 = sbr.rel (0) target = $region97
    $region96: #{tpu_custom_call.1} parent=1 // pred_region
      %s276 = ssub.s32 16, 16
      %277 = vsyncadd [#allocation27], %s276
      %s279 = sshll.u32 [#allocation28], 4
      %s280 = int_to_ptr.vmem [resolvable:$true] %s279
      %282 = dma.hbm_to_vmem [thread:$0]  %s47, 16, %s280, [#allocation27]
    $region97: #{tpu_custom_call.1} parent=1 // pred_fallthru
      _
    // Predicated region
    $region98: #{tpu_custom_call.1} parent=1 // pred_check
      _
    $region99: #{tpu_custom_call.1} parent=1 // pred_check_branch
      %284 = sbr.rel (0) target = $region101
    $region100: #{tpu_custom_call.1} parent=1 // pred_region
      %s286 = ssub.s32 256, 256
      %287 = vsyncadd [#allocation30], %s286
      %s288 = sshll.u32 [#allocation29], 4
      %s289 = int_to_ptr.vmem [resolvable:$true] %s288
      %294 = dma.hbm_to_vmem [thread:$0]  %s49, 256, %s289, [#allocation30], 128, 128, 8
    $region101: #{tpu_custom_call.1} parent=1 // pred_fallthru
      _
    // Predicated region
    $region102: #{tpu_custom_call.1} parent=1 // pred_check
      _
    $region103: #{tpu_custom_call.1} parent=1 // pred_check_branch
      %296 = sbr.rel (0) target = $region105
    $region104: #{tpu_custom_call.1} parent=1 // pred_region
      %s298 = ssub.s32 16, 16
      %299 = vsyncadd [#allocation30], %s298
      %s301 = sshll.u32 [#allocation31], 4
      %s302 = int_to_ptr.vmem [resolvable:$true] %s301
      %304 = dma.hbm_to_vmem [thread:$0]  %s51, 16, %s302, [#allocation30]
    $region105: #{tpu_custom_call.1} parent=1 // pred_fallthru
      _
    // Predicated region
    $region106: #{tpu_custom_call.1} parent=1 // pred_check
      _
    $region107: #{tpu_custom_call.1} parent=1 // pred_check_branch
      %306 = sbr.rel (0) target = $region109
    $region108: #{tpu_custom_call.1} parent=1 // pred_region
      _
    $region109: #{tpu_custom_call.1} parent=1 // pred_fallthru
      _
    // Predicated region
    $region110: #{tpu_custom_call.1} parent=1 // pred_check
      _
    $region111: #{tpu_custom_call.1} parent=1 // pred_check_branch
      %308 = sbr.rel (0) target = $region113
    $region112: #{tpu_custom_call.1} parent=1 // pred_region
      _
    $region113: #{tpu_custom_call.1} parent=1 // pred_fallthru
      _
    // Predicated region
    $region114: #{tpu_custom_call.1} parent=1 // pred_check
      _
    $region115: #{tpu_custom_call.1} parent=1 // pred_check_branch
      %310 = sbr.rel (0) target = $region117
    $region116: #{tpu_custom_call.1} parent=1 // pred_region
      _
    $region117: #{tpu_custom_call.1} parent=1 // pred_fallthru
      _
    // Predicated region
    $region118: #{tpu_custom_call.1} parent=1 // pred_check
      _
    $region119: #{tpu_custom_call.1} parent=1 // pred_check_branch
      %312 = sbr.rel (0) target = $region121
    $region120: #{tpu_custom_call.1} parent=1 // pred_region
      _
    $region121: #{tpu_custom_call.1} parent=1 // pred_fallthru
      _
    // Predicated region
    $region122: #{tpu_custom_call.1} parent=1 // pred_check
      _
    $region123: #{tpu_custom_call.1} parent=1 // pred_check_branch
      %314 = sbr.rel (0) target = $region125
    $region124: #{tpu_custom_call.1} parent=1 // pred_region
      _
    $region125: #{tpu_custom_call.1} parent=1 // pred_fallthru
      _
    // Predicated region
    $region126: #{tpu_custom_call.1} parent=1 // pred_check
      _
    $region127: #{tpu_custom_call.1} parent=1 // pred_check_branch
      %316 = sbr.rel (0) target = $region129
    $region128: #{tpu_custom_call.1} parent=1 // pred_region
      _
    $region129: #{tpu_custom_call.1} parent=1 // pred_fallthru
      _
    // Predicated region
    $region130: #{tpu_custom_call.1} parent=1 // pred_check
      _
    $region131: #{tpu_custom_call.1} parent=1 // pred_check_branch
      %318 = sbr.rel (0) target = $region133
    $region132: #{tpu_custom_call.1} parent=1 // pred_region
      _
    $region133: #{tpu_custom_call.1} parent=1 // pred_fallthru
      _
    // Predicated region
    $region134: #{tpu_custom_call.1} parent=1 // pred_check
      _
    $region135: #{tpu_custom_call.1} parent=1 // pred_check_branch
      %320 = sbr.rel (0) target = $region137
    $region136: #{tpu_custom_call.1} parent=1 // pred_region
      _
    $region137: #{tpu_custom_call.1} parent=1 // pred_fallthru
      _
    // Predicated region
    $region138: #{tpu_custom_call.1} parent=1 // pred_check
      _
    $region139: #{tpu_custom_call.1} parent=1 // pred_check_branch
      %322 = sbr.rel (0) target = $region141
    $region140: #{tpu_custom_call.1} parent=1 // pred_region
      %323 = dma.done [#allocation3], 128
    $region141: #{tpu_custom_call.1} parent=1 // pred_fallthru
      _
    // Predicated region
    $region142: #{tpu_custom_call.1} parent=1 // pred_check
      _
    $region143: #{tpu_custom_call.1} parent=1 // pred_check_branch
      %325 = sbr.rel (0) target = $region145
    $region144: #{tpu_custom_call.1} parent=1 // pred_region
      %326 = dma.done [#allocation6], 128
    $region145: #{tpu_custom_call.1} parent=1 // pred_fallthru
      _
    // Predicated region
    $region146: #{tpu_custom_call.1} parent=1 // pred_check
      _
    $region147: #{tpu_custom_call.1} parent=1 // pred_check_branch
      %328 = sbr.rel (0) target = $region149
    $region148: #{tpu_custom_call.1} parent=1 // pred_region
      %329 = dma.done [#allocation6], 256
    $region149: #{tpu_custom_call.1} parent=1 // pred_fallthru
      _
    // Predicated region
    $region150: #{tpu_custom_call.1} parent=1 // pred_check
      _
    $region151: #{tpu_custom_call.1} parent=1 // pred_check_branch
      %331 = sbr.rel (0) target = $region153
    $region152: #{tpu_custom_call.1} parent=1 // pred_region
      %332 = dma.done [#allocation9], 16
    $region153: #{tpu_custom_call.1} parent=1 // pred_fallthru
      _
    // Predicated region
    $region154: #{tpu_custom_call.1} parent=1 // pred_check
      _
    $region155: #{tpu_custom_call.1} parent=1 // pred_check_branch
      %334 = sbr.rel (0) target = $region157
    $region156: #{tpu_custom_call.1} parent=1 // pred_region
      %335 = dma.done [#allocation9], 16
    $region157: #{tpu_custom_call.1} parent=1 // pred_fallthru
      _
    // Predicated region
    $region158: #{tpu_custom_call.1} parent=1 // pred_check
      _
    $region159: #{tpu_custom_call.1} parent=1 // pred_check_branch
      %337 = sbr.rel (0) target = $region161
    $region160: #{tpu_custom_call.1} parent=1 // pred_region
      %338 = dma.done [#allocation12], 16
    $region161: #{tpu_custom_call.1} parent=1 // pred_fallthru
      _
    // Predicated region
    $region162: #{tpu_custom_call.1} parent=1 // pred_check
      _
    $region163: #{tpu_custom_call.1} parent=1 // pred_check_branch
      %340 = sbr.rel (0) target = $region165
    $region164: #{tpu_custom_call.1} parent=1 // pred_region
      %341 = dma.done [#allocation12], 256
    $region165: #{tpu_custom_call.1} parent=1 // pred_fallthru
      _
    // Predicated region
    $region166: #{tpu_custom_call.1} parent=1 // pred_check
      _
    $region167: #{tpu_custom_call.1} parent=1 // pred_check_branch
      %343 = sbr.rel (0) target = $region169
    $region168: #{tpu_custom_call.1} parent=1 // pred_region
      %344 = dma.done [#allocation15], 16
    $region169: #{tpu_custom_call.1} parent=1 // pred_fallthru
      _
    // Predicated region
    $region170: #{tpu_custom_call.1} parent=1 // pred_check
      _
    $region171: #{tpu_custom_call.1} parent=1 // pred_check_branch
      %346 = sbr.rel (0) target = $region173
    $region172: #{tpu_custom_call.1} parent=1 // pred_region
      %347 = dma.done [#allocation15], 256
    $region173: #{tpu_custom_call.1} parent=1 // pred_fallthru
      _
    // Predicated region
    $region174: #{tpu_custom_call.1} parent=1 // pred_check
      _
    $region175: #{tpu_custom_call.1} parent=1 // pred_check_branch
      %349 = sbr.rel (0) target = $region177
    $region176: #{tpu_custom_call.1} parent=1 // pred_region
      %350 = dma.done [#allocation18], 16
    $region177: #{tpu_custom_call.1} parent=1 // pred_fallthru
      _
    // Predicated region
    $region178: #{tpu_custom_call.1} parent=1 // pred_check
      _
    $region179: #{tpu_custom_call.1} parent=1 // pred_check_branch
      %352 = sbr.rel (0) target = $region181
    $region180: #{tpu_custom_call.1} parent=1 // pred_region
      %353 = dma.done [#allocation18], 256
    $region181: #{tpu_custom_call.1} parent=1 // pred_fallthru
      _
    // Predicated region
    $region182: #{tpu_custom_call.1} parent=1 // pred_check
      _
    $region183: #{tpu_custom_call.1} parent=1 // pred_check_branch
      %355 = sbr.rel (0) target = $region185
    $region184: #{tpu_custom_call.1} parent=1 // pred_region
      %356 = dma.done [#allocation21], 16
    $region185: #{tpu_custom_call.1} parent=1 // pred_fallthru
      _
    // Predicated region
    $region186: #{tpu_custom_call.1} parent=1 // pred_check
      _
    $region187: #{tpu_custom_call.1} parent=1 // pred_check_branch
      %358 = sbr.rel (0) target = $region189
    $region188: #{tpu_custom_call.1} parent=1 // pred_region
      %359 = dma.done [#allocation21], 256
    $region189: #{tpu_custom_call.1} parent=1 // pred_fallthru
      _
    // Predicated region
    $region190: #{tpu_custom_call.1} parent=1 // pred_check
      _
    $region191: #{tpu_custom_call.1} parent=1 // pred_check_branch
      %361 = sbr.rel (0) target = $region193
    $region192: #{tpu_custom_call.1} parent=1 // pred_region
      %362 = dma.done [#allocation24], 256
    $region193: #{tpu_custom_call.1} parent=1 // pred_fallthru
      _
    // Predicated region
    $region194: #{tpu_custom_call.1} parent=1 // pred_check
      _
    $region195: #{tpu_custom_call.1} parent=1 // pred_check_branch
      %364 = sbr.rel (0) target = $region197
    $region196: #{tpu_custom_call.1} parent=1 // pred_region
      %365 = dma.done [#allocation24], 16
    $region197: #{tpu_custom_call.1} parent=1 // pred_fallthru
      _
    // Predicated region
    $region198: #{tpu_custom_call.1} parent=1 // pred_check
      _
    $region199: #{tpu_custom_call.1} parent=1 // pred_check_branch
      %367 = sbr.rel (0) target = $region201
    $region200: #{tpu_custom_call.1} parent=1 // pred_region
      %368 = dma.done [#allocation27], 256
    $region201: #{tpu_custom_call.1} parent=1 // pred_fallthru
      _
    // Predicated region
    $region202: #{tpu_custom_call.1} parent=1 // pred_check
      _
    $region203: #{tpu_custom_call.1} parent=1 // pred_check_branch
      %370 = sbr.rel (0) target = $region205
    $region204: #{tpu_custom_call.1} parent=1 // pred_region
      %371 = dma.done [#allocation27], 16
    $region205: #{tpu_custom_call.1} parent=1 // pred_fallthru
      _
    // Predicated region
    $region206: #{tpu_custom_call.1} parent=1 // pred_check
      _
    $region207: #{tpu_custom_call.1} parent=1 // pred_check_branch
      %373 = sbr.rel (0) target = $region209
    $region208: #{tpu_custom_call.1} parent=1 // pred_region
      %374 = dma.done [#allocation30], 256
    $region209: #{tpu_custom_call.1} parent=1 // pred_fallthru
      _
    // Predicated region
    $region210: #{tpu_custom_call.1} parent=1 // pred_check
      _
    $region211: #{tpu_custom_call.1} parent=1 // pred_check_branch
      %376 = sbr.rel (0) target = $region213
    $region212: #{tpu_custom_call.1} parent=1 // pred_region
      %377 = dma.done [#allocation30], 16
    $region213: #{tpu_custom_call.1} parent=1 // pred_fallthru
      _
    %v378 = vld [vmem:[#allocation2] sm:$0xff]
    %v379 = vld [vmem:[#allocation5] sm:$0xff]
    %v380 = vld [vmem:[%s3] sm:$0xff]
    %v381 = vld [vmem:[#allocation22] sm:$0xff]
    %v382 = vld [vmem:[#allocation22 + $0x8] sm:$0xff]
    %v383 = vld [vmem:[#allocation25] sm:$0x1]
    %v385 = vlaneseq
    %v386 = vshrl.u32 %v385, 7
    %v387 = vsub.s32 0, %v386
    %v388 = vrot.slane %v383, %v387
    %vm390 = vcmask 130048
    %v392 = vsel %vm390, %v378, 0
    %394 = vmatprep.subr.mxu0 0.0
    %395 = vmatpush1.msra.mxu0 %v381
    %396 = vmatprep.subr.mxu0 0.0
    %397 = vmatpush1.msra.mxu0 %v382
    %398 = vmatprep.subr.mxu0 0.0
    %399 = vmatpush1.msra.mxu0 0.0
    %400 = vmatprep.subr.mxu0 0.0
    %401 = vmatpush1.msra.mxu0 0.0
    %402 = vmatprep.subr.mxu0 0.0
    %403 = vmatpush1.msra.mxu0 0.0
    %404 = vmatprep.subr.mxu0 0.0
    %405 = vmatpush1.msra.mxu0 0.0
    %406 = vmatprep.subr.mxu0 0.0
    %407 = vmatpush1.msra.mxu0 0.0
    %408 = vmatprep.subr.mxu0 0.0
    %409 = vmatpush1.msra.mxu0 0.0
    %410 = vmatprep.subr.mxu0 0.0
    %411 = vmatpush1.msra.mxu0 0.0
    %412 = vmatprep.subr.mxu0 0.0
    %413 = vmatpush1.msra.mxu0 0.0
    %414 = vmatprep.subr.mxu0 0.0
    %415 = vmatpush1.msra.mxu0 0.0
    %416 = vmatprep.subr.mxu0 0.0
    %417 = vmatpush1.msra.mxu0 0.0
    %418 = vmatprep.subr.mxu0 0.0
    %419 = vmatpush1.msra.mxu0 0.0
    %420 = vmatprep.subr.mxu0 0.0
    %421 = vmatpush1.msra.mxu0 0.0
    %422 = vmatprep.subr.mxu0 0.0
    %423 = vmatpush1.msra.mxu0 0.0
    %424 = vmatprep.subr.mxu0 0.0
    %425 = vmatpush1.msra.mxu0 0.0
    %426 = vmatprep.subr.mxu0 0.0
    %427 = vmatpush1.msra.mxu0 0.0
    %428 = vmatprep.subr.mxu0 0.0
    %429 = vmatpush1.msra.mxu0 0.0
    %430 = vmatprep.subr.mxu0 0.0
    %431 = vmatpush1.msra.mxu0 0.0
    %432 = vmatprep.subr.mxu0 0.0
    %433 = vmatpush1.msra.mxu0 0.0
    %434 = vmatprep.subr.mxu0 0.0
    %435 = vmatpush1.msra.mxu0 0.0
    %436 = vmatprep.subr.mxu0 0.0
    %437 = vmatpush1.msra.mxu0 0.0
    %438 = vmatprep.subr.mxu0 0.0
    %439 = vmatpush1.msra.mxu0 0.0
    %440 = vmatprep.subr.mxu0 0.0
    %441 = vmatpush1.msra.mxu0 0.0
    %442 = vmatprep.subr.mxu0 0.0
    %443 = vmatpush1.msra.mxu0 0.0
    %444 = vmatprep.subr.mxu0 0.0
    %445 = vmatpush1.msra.mxu0 0.0
    %446 = vmatprep.subr.mxu0 0.0
    %447 = vmatpush1.msra.mxu0 0.0
    %448 = vmatprep.subr.mxu0 0.0
    %449 = vmatpush1.msra.mxu0 0.0
    %450 = vmatprep.subr.mxu0 0.0
    %451 = vmatpush1.msra.mxu0 0.0
    %452 = vmatprep.subr.mxu0 0.0
    %453 = vmatpush1.msra.mxu0 0.0
    %454 = vmatprep.subr.mxu0 0.0
    %455 = vmatpush1.msra.mxu0 0.0
    %456 = vmatprep.subr.mxu0 0.0
    %457 = vmatpush1.msra.mxu0 0.0
    %458 = vmatprep.mubr.f32.mxu0 0.0
    %459 = vmatmul.mubr.f32.gmra.mrb[0].mxu0 %v392
    %v460 = vpop.f32.mrb[0].mxu0
    %v461 = vadd.f32 %v388, %v460
    %v462 = vpop.f32.mrb[0].mxu0
    %463 = vdwg.mxu0
    %v464 = vld [vmem:[#allocation23] sm:$0xff]
    %v465 = vld [vmem:[#allocation23 + $0x8] sm:$0xff]
    %v467 = vsel %vm390, 0.0, 0
    %469 = vmatprep.subr.mxu0 0.0
    %470 = vmatpush1.msra.mxu0 %v464
    %471 = vmatprep.subr.mxu0 0.0
    %472 = vmatpush1.msra.mxu0 %v465
    %473 = vmatprep.subr.mxu0 0.0
    %474 = vmatpush1.msra.mxu0 0.0
    %475 = vmatprep.subr.mxu0 0.0
    %476 = vmatpush1.msra.mxu0 0.0
    %477 = vmatprep.subr.mxu0 0.0
    %478 = vmatpush1.msra.mxu0 0.0
    %479 = vmatprep.subr.mxu0 0.0
    %480 = vmatpush1.msra.mxu0 0.0
    %481 = vmatprep.subr.mxu0 0.0
    %482 = vmatpush1.msra.mxu0 0.0
    %483 = vmatprep.subr.mxu0 0.0
    %484 = vmatpush1.msra.mxu0 0.0
    %485 = vmatprep.subr.mxu0 0.0
    %486 = vmatpush1.msra.mxu0 0.0
    %487 = vmatprep.subr.mxu0 0.0
    %488 = vmatpush1.msra.mxu0 0.0
    %489 = vmatprep.subr.mxu0 0.0
    %490 = vmatpush1.msra.mxu0 0.0
    %491 = vmatprep.subr.mxu0 0.0
    %492 = vmatpush1.msra.mxu0 0.0
    %493 = vmatprep.subr.mxu0 0.0
    %494 = vmatpush1.msra.mxu0 0.0
    %495 = vmatprep.subr.mxu0 0.0
    %496 = vmatpush1.msra.mxu0 0.0
    %497 = vmatprep.subr.mxu0 0.0
    %498 = vmatpush1.msra.mxu0 0.0
    %499 = vmatprep.subr.mxu0 0.0
    %500 = vmatpush1.msra.mxu0 0.0
    %501 = vmatprep.subr.mxu0 0.0
    %502 = vmatpush1.msra.mxu0 0.0
    %503 = vmatprep.subr.mxu0 0.0
    %504 = vmatpush1.msra.mxu0 0.0
    %505 = vmatprep.subr.mxu0 0.0
    %506 = vmatpush1.msra.mxu0 0.0
    %507 = vmatprep.subr.mxu0 0.0
    %508 = vmatpush1.msra.mxu0 0.0
    %509 = vmatprep.subr.mxu0 0.0
    %510 = vmatpush1.msra.mxu0 0.0
    %511 = vmatprep.subr.mxu0 0.0
    %512 = vmatpush1.msra.mxu0 0.0
    %513 = vmatprep.subr.mxu0 0.0
    %514 = vmatpush1.msra.mxu0 0.0
    %515 = vmatprep.subr.mxu0 0.0
    %516 = vmatpush1.msra.mxu0 0.0
    %517 = vmatprep.subr.mxu0 0.0
    %518 = vmatpush1.msra.mxu0 0.0
    %519 = vmatprep.subr.mxu0 0.0
    %520 = vmatpush1.msra.mxu0 0.0
    %521 = vmatprep.subr.mxu0 0.0
    %522 = vmatpush1.msra.mxu0 0.0
    %523 = vmatprep.subr.mxu0 0.0
    %524 = vmatpush1.msra.mxu0 0.0
    %525 = vmatprep.subr.mxu0 0.0
    %526 = vmatpush1.msra.mxu0 0.0
    %527 = vmatprep.subr.mxu0 0.0
    %528 = vmatpush1.msra.mxu0 0.0
    %529 = vmatprep.subr.mxu0 0.0
    %530 = vmatpush1.msra.mxu0 0.0
    %531 = vmatprep.subr.mxu0 0.0
    %532 = vmatpush1.msra.mxu0 0.0
    %533 = vmatprep.mubr.f32.mxu0 0.0
    %534 = vmatmul.mubr.f32.gmra.mrb[0].mxu0 %v467
    %v535 = vpop.f32.mrb[0].mxu0
    %v536 = vadd.f32 0.0, %v535
    %v537 = vpop.f32.mrb[0].mxu0
    %538 = vdwg.mxu0
    %v539 = vadd.f32 %v461, %v536
    %v540 = vxor.u32 %v539, 2147483648
    %v541 = vmul.f32 %v540, 1.442695
    %v542 = vpow.pop %v541
    %v543 = vadd.f32 %v542, 1.0
    %v544 = vrcp.pop %v543
    %v545 = vmul.f32 1.0, %v544
    %v546 = vtanh.pop %v539
    %v547 = vmul.f32 %v545, 0.0
    %549 = vrot.lane.b32.xlu0 %v546, 96
    %v550 = vpop.permute.xlu0 %549
    %v552 = vmul.f32 %v545, %v550
    %554 = vrot.lane.b32.xlu0 %v552, 16
    %v555 = vpop.permute.xlu0 %554
    %v557 = vadd.f32 %v547, %v555
    %v558 = vtanh.pop %v557
    %560 = vrot.lane.b32.xlu0 %v558, 32
    %v561 = vpop.permute.xlu0 %560
    %v563 = vmul.f32 %v545, %v561
    %565 = vrot.lane.b32.xlu0 %v563, 80
    %v566 = vpop.permute.xlu0 %565
    %v567 = vsel %vm390, %v566, 0
    %569 = vmatprep.subr.mxu0 0.0
    %570 = vmatpush1.msra.mxu0 %v464
    %571 = vmatprep.subr.mxu0 0.0
    %572 = vmatpush1.msra.mxu0 %v465
    %573 = vmatprep.subr.mxu0 0.0
    %574 = vmatpush1.msra.mxu0 0.0
    %575 = vmatprep.subr.mxu0 0.0
    %576 = vmatpush1.msra.mxu0 0.0
    %577 = vmatprep.subr.mxu0 0.0
    %578 = vmatpush1.msra.mxu0 0.0
    %579 = vmatprep.subr.mxu0 0.0
    %580 = vmatpush1.msra.mxu0 0.0
    %581 = vmatprep.subr.mxu0 0.0
    %582 = vmatpush1.msra.mxu0 0.0
    %583 = vmatprep.subr.mxu0 0.0
    %584 = vmatpush1.msra.mxu0 0.0
    %585 = vmatprep.subr.mxu0 0.0
    %586 = vmatpush1.msra.mxu0 0.0
    %587 = vmatprep.subr.mxu0 0.0
    %588 = vmatpush1.msra.mxu0 0.0
    %589 = vmatprep.subr.mxu0 0.0
    %590 = vmatpush1.msra.mxu0 0.0
    %591 = vmatprep.subr.mxu0 0.0
    %592 = vmatpush1.msra.mxu0 0.0
    %593 = vmatprep.subr.mxu0 0.0
    %594 = vmatpush1.msra.mxu0 0.0
    %595 = vmatprep.subr.mxu0 0.0
    %596 = vmatpush1.msra.mxu0 0.0
    %597 = vmatprep.subr.mxu0 0.0
    %598 = vmatpush1.msra.mxu0 0.0
    %599 = vmatprep.subr.mxu0 0.0
    %600 = vmatpush1.msra.mxu0 0.0
    %601 = vmatprep.subr.mxu0 0.0
    %602 = vmatpush1.msra.mxu0 0.0
    %603 = vmatprep.subr.mxu0 0.0
    %604 = vmatpush1.msra.mxu0 0.0
    %605 = vmatprep.subr.mxu0 0.0
    %606 = vmatpush1.msra.mxu0 0.0
    %607 = vmatprep.subr.mxu0 0.0
    %608 = vmatpush1.msra.mxu0 0.0
    %609 = vmatprep.subr.mxu0 0.0
    %610 = vmatpush1.msra.mxu0 0.0
    %611 = vmatprep.subr.mxu0 0.0
    %612 = vmatpush1.msra.mxu0 0.0
    %613 = vmatprep.subr.mxu0 0.0
    %614 = vmatpush1.msra.mxu0 0.0
    %615 = vmatprep.subr.mxu0 0.0
    %616 = vmatpush1.msra.mxu0 0.0
    %617 = vmatprep.subr.mxu0 0.0
    %618 = vmatpush1.msra.mxu0 0.0
    %619 = vmatprep.subr.mxu0 0.0
    %620 = vmatpush1.msra.mxu0 0.0
    %621 = vmatprep.subr.mxu0 0.0
    %622 = vmatpush1.msra.mxu0 0.0
    %623 = vmatprep.subr.mxu0 0.0
    %624 = vmatpush1.msra.mxu0 0.0
    %625 = vmatprep.subr.mxu0 0.0
    %626 = vmatpush1.msra.mxu0 0.0
    %627 = vmatprep.subr.mxu0 0.0
    %628 = vmatpush1.msra.mxu0 0.0
    %629 = vmatprep.subr.mxu0 0.0
    %630 = vmatpush1.msra.mxu0 0.0
    %631 = vmatprep.subr.mxu0 0.0
    %632 = vmatpush1.msra.mxu0 0.0
    %633 = vmatprep.mubr.f32.mxu0 0.0
    %634 = vmatmul.mubr.f32.gmra.mrb[0].mxu0 %v567
    %v635 = vpop.f32.mrb[0].mxu0
    %v636 = vadd.f32 0.0, %v635
    %v637 = vpop.f32.mrb[0].mxu0
    %638 = vdwg.mxu0
    %v640 = vrot.slane %v636, 7
    %v642 = vadd.f32 %v461, %v640
    %v643 = vxor.u32 %v642, 2147483648
    %v644 = vmul.f32 %v643, 1.442695
    %v645 = vpow.pop %v644
    %v646 = vadd.f32 %v645, 1.0
    %v647 = vrcp.pop %v646
    %v648 = vmul.f32 1.0, %v647
    %v649 = vtanh.pop %v642
    %v651 = vrot.slane %v557, 7
    %v653 = vmul.f32 %v648, %v651
    %655 = vrot.lane.b32.xlu0 %v649, 96
    %v656 = vpop.permute.xlu0 %655
    %v658 = vmul.f32 %v648, %v656
    %660 = vrot.lane.b32.xlu0 %v658, 16
    %v661 = vpop.permute.xlu0 %660
    %v663 = vadd.f32 %v653, %v661
    %v664 = vtanh.pop %v663
    %666 = vrot.lane.b32.xlu0 %v664, 32
    %v667 = vpop.permute.xlu0 %666
    %v669 = vmul.f32 %v648, %v667
    %v671 = vrot.slane %v669, 1
    %672 = vrot.lane.b32.xlu0 %v671, 80
    %v673 = vpop.permute.xlu0 %672
    %v674 = vsel %vm390, %v673, 0
    %676 = vmatprep.subr.mxu0 0.0
    %677 = vmatpush1.msra.mxu0 %v464
    %678 = vmatprep.subr.mxu0 0.0
    %679 = vmatpush1.msra.mxu0 %v465
    %680 = vmatprep.subr.mxu0 0.0
    %681 = vmatpush1.msra.mxu0 0.0
    %682 = vmatprep.subr.mxu0 0.0
    %683 = vmatpush1.msra.mxu0 0.0
    %684 = vmatprep.subr.mxu0 0.0
    %685 = vmatpush1.msra.mxu0 0.0
    %686 = vmatprep.subr.mxu0 0.0
    %687 = vmatpush1.msra.mxu0 0.0
    %688 = vmatprep.subr.mxu0 0.0
    %689 = vmatpush1.msra.mxu0 0.0
    %690 = vmatprep.subr.mxu0 0.0
    %691 = vmatpush1.msra.mxu0 0.0
    %692 = vmatprep.subr.mxu0 0.0
    %693 = vmatpush1.msra.mxu0 0.0
    %694 = vmatprep.subr.mxu0 0.0
    %695 = vmatpush1.msra.mxu0 0.0
    %696 = vmatprep.subr.mxu0 0.0
    %697 = vmatpush1.msra.mxu0 0.0
    %698 = vmatprep.subr.mxu0 0.0
    %699 = vmatpush1.msra.mxu0 0.0
    %700 = vmatprep.subr.mxu0 0.0
    %701 = vmatpush1.msra.mxu0 0.0
    %702 = vmatprep.subr.mxu0 0.0
    %703 = vmatpush1.msra.mxu0 0.0
    %704 = vmatprep.subr.mxu0 0.0
    %705 = vmatpush1.msra.mxu0 0.0
    %706 = vmatprep.subr.mxu0 0.0
    %707 = vmatpush1.msra.mxu0 0.0
    %708 = vmatprep.subr.mxu0 0.0
    %709 = vmatpush1.msra.mxu0 0.0
    %710 = vmatprep.subr.mxu0 0.0
    %711 = vmatpush1.msra.mxu0 0.0
    %712 = vmatprep.subr.mxu0 0.0
    %713 = vmatpush1.msra.mxu0 0.0
    %714 = vmatprep.subr.mxu0 0.0
    %715 = vmatpush1.msra.mxu0 0.0
    %716 = vmatprep.subr.mxu0 0.0
    %717 = vmatpush1.msra.mxu0 0.0
    %718 = vmatprep.subr.mxu0 0.0
    %719 = vmatpush1.msra.mxu0 0.0
    %720 = vmatprep.subr.mxu0 0.0
    %721 = vmatpush1.msra.mxu0 0.0
    %722 = vmatprep.subr.mxu0 0.0
    %723 = vmatpush1.msra.mxu0 0.0
    %724 = vmatprep.subr.mxu0 0.0
    %725 = vmatpush1.msra.mxu0 0.0
    %726 = vmatprep.subr.mxu0 0.0
    %727 = vmatpush1.msra.mxu0 0.0
    %728 = vmatprep.subr.mxu0 0.0
    %729 = vmatpush1.msra.mxu0 0.0
    %730 = vmatprep.subr.mxu0 0.0
    %731 = vmatpush1.msra.mxu0 0.0
    %732 = vmatprep.subr.mxu0 0.0
    %733 = vmatpush1.msra.mxu0 0.0
    %734 = vmatprep.subr.mxu0 0.0
    %735 = vmatpush1.msra.mxu0 0.0
    %736 = vmatprep.subr.mxu0 0.0
    %737 = vmatpush1.msra.mxu0 0.0
    %738 = vmatprep.subr.mxu0 0.0
    %739 = vmatpush1.msra.mxu0 0.0
    %740 = vmatprep.mubr.f32.mxu0 0.0
    %741 = vmatmul.mubr.f32.gmra.mrb[0].mxu0 %v674
    %v742 = vpop.f32.mrb[0].mxu0
    %v743 = vadd.f32 0.0, %v742
    %v744 = vpop.f32.mrb[0].mxu0
    %745 = vdwg.mxu0
    %v747 = vrot.slane %v743, 6
    %v749 = vadd.f32 %v461, %v747
    %v750 = vxor.u32 %v749, 2147483648
    %v751 = vmul.f32 %v750, 1.442695
    %v752 = vpow.pop %v751
    %v753 = vadd.f32 %v752, 1.0
    %v754 = vrcp.pop %v753
    %v755 = vmul.f32 1.0, %v754
    %v756 = vtanh.pop %v749
    %v758 = vrot.slane %v663, 7
    %v760 = vmul.f32 %v755, %v758
    %762 = vrot.lane.b32.xlu0 %v756, 96
    %v763 = vpop.permute.xlu0 %762
    %v765 = vmul.f32 %v755, %v763
    %767 = vrot.lane.b32.xlu0 %v765, 16
    %v768 = vpop.permute.xlu0 %767
    %v770 = vadd.f32 %v760, %v768
    %v771 = vtanh.pop %v770
    %773 = vrot.lane.b32.xlu0 %v771, 32
    %v774 = vpop.permute.xlu0 %773
    %v776 = vmul.f32 %v755, %v774
    %v778 = vrot.slane %v776, 2
    %779 = vrot.lane.b32.xlu0 %v778, 80
    %v780 = vpop.permute.xlu0 %779
    %v781 = vsel %vm390, %v780, 0
    %783 = vmatprep.subr.mxu0 0.0
    %784 = vmatpush1.msra.mxu0 %v464
    %785 = vmatprep.subr.mxu0 0.0
    %786 = vmatpush1.msra.mxu0 %v465
    %787 = vmatprep.subr.mxu0 0.0
    %788 = vmatpush1.msra.mxu0 0.0
    %789 = vmatprep.subr.mxu0 0.0
    %790 = vmatpush1.msra.mxu0 0.0
    %791 = vmatprep.subr.mxu0 0.0
    %792 = vmatpush1.msra.mxu0 0.0
    %793 = vmatprep.subr.mxu0 0.0
    %794 = vmatpush1.msra.mxu0 0.0
    %795 = vmatprep.subr.mxu0 0.0
    %796 = vmatpush1.msra.mxu0 0.0
    %797 = vmatprep.subr.mxu0 0.0
    %798 = vmatpush1.msra.mxu0 0.0
    %799 = vmatprep.subr.mxu0 0.0
    %800 = vmatpush1.msra.mxu0 0.0
    %801 = vmatprep.subr.mxu0 0.0
    %802 = vmatpush1.msra.mxu0 0.0
    %803 = vmatprep.subr.mxu0 0.0
    %804 = vmatpush1.msra.mxu0 0.0
    %805 = vmatprep.subr.mxu0 0.0
    %806 = vmatpush1.msra.mxu0 0.0
    %807 = vmatprep.subr.mxu0 0.0
    %808 = vmatpush1.msra.mxu0 0.0
    %809 = vmatprep.subr.mxu0 0.0
    %810 = vmatpush1.msra.mxu0 0.0
    %811 = vmatprep.subr.mxu0 0.0
    %812 = vmatpush1.msra.mxu0 0.0
    %813 = vmatprep.subr.mxu0 0.0
    %814 = vmatpush1.msra.mxu0 0.0
    %815 = vmatprep.subr.mxu0 0.0
    %816 = vmatpush1.msra.mxu0 0.0
    %817 = vmatprep.subr.mxu0 0.0
    %818 = vmatpush1.msra.mxu0 0.0
    %819 = vmatprep.subr.mxu0 0.0
    %820 = vmatpush1.msra.mxu0 0.0
    %821 = vmatprep.subr.mxu0 0.0
    %822 = vmatpush1.msra.mxu0 0.0
    %823 = vmatprep.subr.mxu0 0.0
    %824 = vmatpush1.msra.mxu0 0.0
    %825 = vmatprep.subr.mxu0 0.0
    %826 = vmatpush1.msra.mxu0 0.0
    %827 = vmatprep.subr.mxu0 0.0
    %828 = vmatpush1.msra.mxu0 0.0
    %829 = vmatprep.subr.mxu0 0.0
    %830 = vmatpush1.msra.mxu0 0.0
    %831 = vmatprep.subr.mxu0 0.0
    %832 = vmatpush1.msra.mxu0 0.0
    %833 = vmatprep.subr.mxu0 0.0
    %834 = vmatpush1.msra.mxu0 0.0
    %835 = vmatprep.subr.mxu0 0.0
    %836 = vmatpush1.msra.mxu0 0.0
    %837 = vmatprep.subr.mxu0 0.0
    %838 = vmatpush1.msra.mxu0 0.0
    %839 = vmatprep.subr.mxu0 0.0
    %840 = vmatpush1.msra.mxu0 0.0
    %841 = vmatprep.subr.mxu0 0.0
    %842 = vmatpush1.msra.mxu0 0.0
    %843 = vmatprep.subr.mxu0 0.0
    %844 = vmatpush1.msra.mxu0 0.0
    %845 = vmatprep.subr.mxu0 0.0
    %846 = vmatpush1.msra.mxu0 0.0
    %847 = vmatprep.mubr.f32.mxu0 0.0
    %848 = vmatmul.mubr.f32.gmra.mrb[0].mxu0 %v781
    %v849 = vpop.f32.mrb[0].mxu0
    %v850 = vadd.f32 0.0, %v849
    %v851 = vpop.f32.mrb[0].mxu0
    %852 = vdwg.mxu0
    %v854 = vrot.slane %v850, 5
    %v856 = vadd.f32 %v461, %v854
    %v857 = vxor.u32 %v856, 2147483648
    %v858 = vmul.f32 %v857, 1.442695
    %v859 = vpow.pop %v858
    %v860 = vadd.f32 %v859, 1.0
    %v861 = vrcp.pop %v860
    %v862 = vmul.f32 1.0, %v861
    %v863 = vtanh.pop %v856
    %v865 = vrot.slane %v770, 7
    %v867 = vmul.f32 %v862, %v865
    %869 = vrot.lane.b32.xlu0 %v863, 96
    %v870 = vpop.permute.xlu0 %869
    %v872 = vmul.f32 %v862, %v870
    %874 = vrot.lane.b32.xlu0 %v872, 16
    %v875 = vpop.permute.xlu0 %874
    %v877 = vadd.f32 %v867, %v875
    %v878 = vtanh.pop %v877
    %880 = vrot.lane.b32.xlu0 %v878, 32
    %v881 = vpop.permute.xlu0 %880
    %v883 = vmul.f32 %v862, %v881
    %v885 = vrot.slane %v883, 3
    %886 = vrot.lane.b32.xlu0 %v885, 80
    %v887 = vpop.permute.xlu0 %886
    %v888 = vsel %vm390, %v887, 0
    %890 = vmatprep.subr.mxu0 0.0
    %891 = vmatpush1.msra.mxu0 %v464
    %892 = vmatprep.subr.mxu0 0.0
    %893 = vmatpush1.msra.mxu0 %v465
    %894 = vmatprep.subr.mxu0 0.0
    %895 = vmatpush1.msra.mxu0 0.0
    %896 = vmatprep.subr.mxu0 0.0
    %897 = vmatpush1.msra.mxu0 0.0
    %898 = vmatprep.subr.mxu0 0.0
    %899 = vmatpush1.msra.mxu0 0.0
    %900 = vmatprep.subr.mxu0 0.0
    %901 = vmatpush1.msra.mxu0 0.0
    %902 = vmatprep.subr.mxu0 0.0
    %903 = vmatpush1.msra.mxu0 0.0
    %904 = vmatprep.subr.mxu0 0.0
    %905 = vmatpush1.msra.mxu0 0.0
    %906 = vmatprep.subr.mxu0 0.0
    %907 = vmatpush1.msra.mxu0 0.0
    %908 = vmatprep.subr.mxu0 0.0
    %909 = vmatpush1.msra.mxu0 0.0
    %910 = vmatprep.subr.mxu0 0.0
    %911 = vmatpush1.msra.mxu0 0.0
    %912 = vmatprep.subr.mxu0 0.0
    %913 = vmatpush1.msra.mxu0 0.0
    %914 = vmatprep.subr.mxu0 0.0
    %915 = vmatpush1.msra.mxu0 0.0
    %916 = vmatprep.subr.mxu0 0.0
    %917 = vmatpush1.msra.mxu0 0.0
    %918 = vmatprep.subr.mxu0 0.0
    %919 = vmatpush1.msra.mxu0 0.0
    %920 = vmatprep.subr.mxu0 0.0
    %921 = vmatpush1.msra.mxu0 0.0
    %922 = vmatprep.subr.mxu0 0.0
    %923 = vmatpush1.msra.mxu0 0.0
    %924 = vmatprep.subr.mxu0 0.0
    %925 = vmatpush1.msra.mxu0 0.0
    %926 = vmatprep.subr.mxu0 0.0
    %927 = vmatpush1.msra.mxu0 0.0
    %928 = vmatprep.subr.mxu0 0.0
    %929 = vmatpush1.msra.mxu0 0.0
    %930 = vmatprep.subr.mxu0 0.0
    %931 = vmatpush1.msra.mxu0 0.0
    %932 = vmatprep.subr.mxu0 0.0
    %933 = vmatpush1.msra.mxu0 0.0
    %934 = vmatprep.subr.mxu0 0.0
    %935 = vmatpush1.msra.mxu0 0.0
    %936 = vmatprep.subr.mxu0 0.0
    %937 = vmatpush1.msra.mxu0 0.0
    %938 = vmatprep.subr.mxu0 0.0
    %939 = vmatpush1.msra.mxu0 0.0
    %940 = vmatprep.subr.mxu0 0.0
    %941 = vmatpush1.msra.mxu0 0.0
    %942 = vmatprep.subr.mxu0 0.0
    %943 = vmatpush1.msra.mxu0 0.0
    %944 = vmatprep.subr.mxu0 0.0
    %945 = vmatpush1.msra.mxu0 0.0
    %946 = vmatprep.subr.mxu0 0.0
    %947 = vmatpush1.msra.mxu0 0.0
    %948 = vmatprep.subr.mxu0 0.0
    %949 = vmatpush1.msra.mxu0 0.0
    %950 = vmatprep.subr.mxu0 0.0
    %951 = vmatpush1.msra.mxu0 0.0
    %952 = vmatprep.subr.mxu0 0.0
    %953 = vmatpush1.msra.mxu0 0.0
    %954 = vmatprep.mubr.f32.mxu0 0.0
    %955 = vmatmul.mubr.f32.gmra.mrb[0].mxu0 %v888
    %v956 = vpop.f32.mrb[0].mxu0
    %v957 = vadd.f32 0.0, %v956
    %v958 = vpop.f32.mrb[0].mxu0
    %959 = vdwg.mxu0
    %v961 = vrot.slane %v957, 4
    %v963 = vadd.f32 %v461, %v961
    %v964 = vxor.u32 %v963, 2147483648
    %v965 = vmul.f32 %v964, 1.442695
    %v966 = vpow.pop %v965
    %v967 = vadd.f32 %v966, 1.0
    %v968 = vrcp.pop %v967
    %v969 = vmul.f32 1.0, %v968
    %v970 = vtanh.pop %v963
    %v972 = vrot.slane %v877, 7
    %v974 = vmul.f32 %v969, %v972
    %976 = vrot.lane.b32.xlu0 %v970, 96
    %v977 = vpop.permute.xlu0 %976
    %v979 = vmul.f32 %v969, %v977
    %981 = vrot.lane.b32.xlu0 %v979, 16
    %v982 = vpop.permute.xlu0 %981
    %v984 = vadd.f32 %v974, %v982
    %v985 = vtanh.pop %v984
    %987 = vrot.lane.b32.xlu0 %v985, 32
    %v988 = vpop.permute.xlu0 %987
    %v990 = vmul.f32 %v969, %v988
    %v992 = vrot.slane %v990, 4
    %993 = vrot.lane.b32.xlu0 %v992, 80
    %v994 = vpop.permute.xlu0 %993
    %v995 = vsel %vm390, %v994, 0
    %997 = vmatprep.subr.mxu0 0.0
    %998 = vmatpush1.msra.mxu0 %v464
    %999 = vmatprep.subr.mxu0 0.0
    %1000 = vmatpush1.msra.mxu0 %v465
    %1001 = vmatprep.subr.mxu0 0.0
    %1002 = vmatpush1.msra.mxu0 0.0
    %1003 = vmatprep.subr.mxu0 0.0
    %1004 = vmatpush1.msra.mxu0 0.0
    %1005 = vmatprep.subr.mxu0 0.0
    %1006 = vmatpush1.msra.mxu0 0.0
    %1007 = vmatprep.subr.mxu0 0.0
    %1008 = vmatpush1.msra.mxu0 0.0
    %1009 = vmatprep.subr.mxu0 0.0
    %1010 = vmatpush1.msra.mxu0 0.0
    %1011 = vmatprep.subr.mxu0 0.0
    %1012 = vmatpush1.msra.mxu0 0.0
    %1013 = vmatprep.subr.mxu0 0.0
    %1014 = vmatpush1.msra.mxu0 0.0
    %1015 = vmatprep.subr.mxu0 0.0
    %1016 = vmatpush1.msra.mxu0 0.0
    %1017 = vmatprep.subr.mxu0 0.0
    %1018 = vmatpush1.msra.mxu0 0.0
    %1019 = vmatprep.subr.mxu0 0.0
    %1020 = vmatpush1.msra.mxu0 0.0
    %1021 = vmatprep.subr.mxu0 0.0
    %1022 = vmatpush1.msra.mxu0 0.0
    %1023 = vmatprep.subr.mxu0 0.0
    %1024 = vmatpush1.msra.mxu0 0.0
    %1025 = vmatprep.subr.mxu0 0.0
    %1026 = vmatpush1.msra.mxu0 0.0
    %1027 = vmatprep.subr.mxu0 0.0
    %1028 = vmatpush1.msra.mxu0 0.0
    %1029 = vmatprep.subr.mxu0 0.0
    %1030 = vmatpush1.msra.mxu0 0.0
    %1031 = vmatprep.subr.mxu0 0.0
    %1032 = vmatpush1.msra.mxu0 0.0
    %1033 = vmatprep.subr.mxu0 0.0
    %1034 = vmatpush1.msra.mxu0 0.0
    %1035 = vmatprep.subr.mxu0 0.0
    %1036 = vmatpush1.msra.mxu0 0.0
    %1037 = vmatprep.subr.mxu0 0.0
    %1038 = vmatpush1.msra.mxu0 0.0
    %1039 = vmatprep.subr.mxu0 0.0
    %1040 = vmatpush1.msra.mxu0 0.0
    %1041 = vmatprep.subr.mxu0 0.0
    %1042 = vmatpush1.msra.mxu0 0.0
    %1043 = vmatprep.subr.mxu0 0.0
    %1044 = vmatpush1.msra.mxu0 0.0
    %1045 = vmatprep.subr.mxu0 0.0
    %1046 = vmatpush1.msra.mxu0 0.0
    %1047 = vmatprep.subr.mxu0 0.0
    %1048 = vmatpush1.msra.mxu0 0.0
    %1049 = vmatprep.subr.mxu0 0.0
    %1050 = vmatpush1.msra.mxu0 0.0
    %1051 = vmatprep.subr.mxu0 0.0
    %1052 = vmatpush1.msra.mxu0 0.0
    %1053 = vmatprep.subr.mxu0 0.0
    %1054 = vmatpush1.msra.mxu0 0.0
    %1055 = vmatprep.subr.mxu0 0.0
    %1056 = vmatpush1.msra.mxu0 0.0
    %1057 = vmatprep.subr.mxu0 0.0
    %1058 = vmatpush1.msra.mxu0 0.0
    %1059 = vmatprep.subr.mxu0 0.0
    %1060 = vmatpush1.msra.mxu0 0.0
    %1061 = vmatprep.mubr.f32.mxu0 0.0
    %1062 = vmatmul.mubr.f32.gmra.mrb[0].mxu0 %v995
    %v1063 = vpop.f32.mrb[0].mxu0
    %v1064 = vadd.f32 0.0, %v1063
    %v1065 = vpop.f32.mrb[0].mxu0
    %1066 = vdwg.mxu0
    %v1068 = vrot.slane %v1064, 3
    %v1070 = vadd.f32 %v461, %v1068
    %v1071 = vxor.u32 %v1070, 2147483648
    %v1072 = vmul.f32 %v1071, 1.442695
    %v1073 = vpow.pop %v1072
    %v1074 = vadd.f32 %v1073, 1.0
    %v1075 = vrcp.pop %v1074
    %v1076 = vmul.f32 1.0, %v1075
    %v1077 = vtanh.pop %v1070
    %v1079 = vrot.slane %v984, 7
    %v1081 = vmul.f32 %v1076, %v1079
    %1083 = vrot.lane.b32.xlu0 %v1077, 96
    %v1084 = vpop.permute.xlu0 %1083
    %v1086 = vmul.f32 %v1076, %v1084
    %1088 = vrot.lane.b32.xlu0 %v1086, 16
    %v1089 = vpop.permute.xlu0 %1088
    %v1091 = vadd.f32 %v1081, %v1089
    %v1092 = vtanh.pop %v1091
    %1094 = vrot.lane.b32.xlu0 %v1092, 32
    %v1095 = vpop.permute.xlu0 %1094
    %v1097 = vmul.f32 %v1076, %v1095
    %v1099 = vrot.slane %v1097, 5
    %1100 = vrot.lane.b32.xlu0 %v1099, 80
    %v1101 = vpop.permute.xlu0 %1100
    %v1102 = vsel %vm390, %v1101, 0
    %1104 = vmatprep.subr.mxu0 0.0
    %1105 = vmatpush1.msra.mxu0 %v464
    %1106 = vmatprep.subr.mxu0 0.0
    %1107 = vmatpush1.msra.mxu0 %v465
    %1108 = vmatprep.subr.mxu0 0.0
    %1109 = vmatpush1.msra.mxu0 0.0
    %1110 = vmatprep.subr.mxu0 0.0
    %1111 = vmatpush1.msra.mxu0 0.0
    %1112 = vmatprep.subr.mxu0 0.0
    %1113 = vmatpush1.msra.mxu0 0.0
    %1114 = vmatprep.subr.mxu0 0.0
    %1115 = vmatpush1.msra.mxu0 0.0
    %1116 = vmatprep.subr.mxu0 0.0
    %1117 = vmatpush1.msra.mxu0 0.0
    %1118 = vmatprep.subr.mxu0 0.0
    %1119 = vmatpush1.msra.mxu0 0.0
    %1120 = vmatprep.subr.mxu0 0.0
    %1121 = vmatpush1.msra.mxu0 0.0
    %1122 = vmatprep.subr.mxu0 0.0
    %1123 = vmatpush1.msra.mxu0 0.0
    %1124 = vmatprep.subr.mxu0 0.0
    %1125 = vmatpush1.msra.mxu0 0.0
    %1126 = vmatprep.subr.mxu0 0.0
    %1127 = vmatpush1.msra.mxu0 0.0
    %1128 = vmatprep.subr.mxu0 0.0
    %1129 = vmatpush1.msra.mxu0 0.0
    %1130 = vmatprep.subr.mxu0 0.0
    %1131 = vmatpush1.msra.mxu0 0.0
    %1132 = vmatprep.subr.mxu0 0.0
    %1133 = vmatpush1.msra.mxu0 0.0
    %1134 = vmatprep.subr.mxu0 0.0
    %1135 = vmatpush1.msra.mxu0 0.0
    %1136 = vmatprep.subr.mxu0 0.0
    %1137 = vmatpush1.msra.mxu0 0.0
    %1138 = vmatprep.subr.mxu0 0.0
    %1139 = vmatpush1.msra.mxu0 0.0
    %1140 = vmatprep.subr.mxu0 0.0
    %1141 = vmatpush1.msra.mxu0 0.0
    %1142 = vmatprep.subr.mxu0 0.0
    %1143 = vmatpush1.msra.mxu0 0.0
    %1144 = vmatprep.subr.mxu0 0.0
    %1145 = vmatpush1.msra.mxu0 0.0
    %1146 = vmatprep.subr.mxu0 0.0
    %1147 = vmatpush1.msra.mxu0 0.0
    %1148 = vmatprep.subr.mxu0 0.0
    %1149 = vmatpush1.msra.mxu0 0.0
    %1150 = vmatprep.subr.mxu0 0.0
    %1151 = vmatpush1.msra.mxu0 0.0
    %1152 = vmatprep.subr.mxu0 0.0
    %1153 = vmatpush1.msra.mxu0 0.0
    %1154 = vmatprep.subr.mxu0 0.0
    %1155 = vmatpush1.msra.mxu0 0.0
    %1156 = vmatprep.subr.mxu0 0.0
    %1157 = vmatpush1.msra.mxu0 0.0
    %1158 = vmatprep.subr.mxu0 0.0
    %1159 = vmatpush1.msra.mxu0 0.0
    %1160 = vmatprep.subr.mxu0 0.0
    %1161 = vmatpush1.msra.mxu0 0.0
    %1162 = vmatprep.subr.mxu0 0.0
    %1163 = vmatpush1.msra.mxu0 0.0
    %1164 = vmatprep.subr.mxu0 0.0
    %1165 = vmatpush1.msra.mxu0 0.0
    %1166 = vmatprep.subr.mxu0 0.0
    %1167 = vmatpush1.msra.mxu0 0.0
    %1168 = vmatprep.mubr.f32.mxu0 0.0
    %1169 = vmatmul.mubr.f32.gmra.mrb[0].mxu0 %v1102
    %v1170 = vpop.f32.mrb[0].mxu0
    %v1171 = vadd.f32 0.0, %v1170
    %v1172 = vpop.f32.mrb[0].mxu0
    %1173 = vdwg.mxu0
    %v1175 = vrot.slane %v1171, 2
    %v1177 = vadd.f32 %v461, %v1175
    %v1178 = vxor.u32 %v1177, 2147483648
    %v1179 = vmul.f32 %v1178, 1.442695
    %v1180 = vpow.pop %v1179
    %v1181 = vadd.f32 %v1180, 1.0
    %v1182 = vrcp.pop %v1181
    %v1183 = vmul.f32 1.0, %v1182
    %v1184 = vtanh.pop %v1177
    %v1186 = vrot.slane %v1091, 7
    %v1188 = vmul.f32 %v1183, %v1186
    %1190 = vrot.lane.b32.xlu0 %v1184, 96
    %v1191 = vpop.permute.xlu0 %1190
    %v1193 = vmul.f32 %v1183, %v1191
    %1195 = vrot.lane.b32.xlu0 %v1193, 16
    %v1196 = vpop.permute.xlu0 %1195
    %v1198 = vadd.f32 %v1188, %v1196
    %v1199 = vtanh.pop %v1198
    %1201 = vrot.lane.b32.xlu0 %v1199, 32
    %v1202 = vpop.permute.xlu0 %1201
    %v1204 = vmul.f32 %v1183, %v1202
    %v1206 = vrot.slane %v1204, 6
    %1207 = vrot.lane.b32.xlu0 %v1206, 80
    %v1208 = vpop.permute.xlu0 %1207
    %v1209 = vsel %vm390, %v1208, 0
    %1211 = vmatprep.subr.mxu0 0.0
    %1212 = vmatpush1.msra.mxu0 %v464
    %1213 = vmatprep.subr.mxu0 0.0
    %1214 = vmatpush1.msra.mxu0 %v465
    %1215 = vmatprep.subr.mxu0 0.0
    %1216 = vmatpush1.msra.mxu0 0.0
    %1217 = vmatprep.subr.mxu0 0.0
    %1218 = vmatpush1.msra.mxu0 0.0
    %1219 = vmatprep.subr.mxu0 0.0
    %1220 = vmatpush1.msra.mxu0 0.0
    %1221 = vmatprep.subr.mxu0 0.0
    %1222 = vmatpush1.msra.mxu0 0.0
    %1223 = vmatprep.subr.mxu0 0.0
    %1224 = vmatpush1.msra.mxu0 0.0
    %1225 = vmatprep.subr.mxu0 0.0
    %1226 = vmatpush1.msra.mxu0 0.0
    %1227 = vmatprep.subr.mxu0 0.0
    %1228 = vmatpush1.msra.mxu0 0.0
    %1229 = vmatprep.subr.mxu0 0.0
    %1230 = vmatpush1.msra.mxu0 0.0
    %1231 = vmatprep.subr.mxu0 0.0
    %1232 = vmatpush1.msra.mxu0 0.0
    %1233 = vmatprep.subr.mxu0 0.0
    %1234 = vmatpush1.msra.mxu0 0.0
    %1235 = vmatprep.subr.mxu0 0.0
    %1236 = vmatpush1.msra.mxu0 0.0
    %1237 = vmatprep.subr.mxu0 0.0
    %1238 = vmatpush1.msra.mxu0 0.0
    %1239 = vmatprep.subr.mxu0 0.0
    %1240 = vmatpush1.msra.mxu0 0.0
    %1241 = vmatprep.subr.mxu0 0.0
    %1242 = vmatpush1.msra.mxu0 0.0
    %1243 = vmatprep.subr.mxu0 0.0
    %1244 = vmatpush1.msra.mxu0 0.0
    %1245 = vmatprep.subr.mxu0 0.0
    %1246 = vmatpush1.msra.mxu0 0.0
    %1247 = vmatprep.subr.mxu0 0.0
    %1248 = vmatpush1.msra.mxu0 0.0
    %1249 = vmatprep.subr.mxu0 0.0
    %1250 = vmatpush1.msra.mxu0 0.0
    %1251 = vmatprep.subr.mxu0 0.0
    %1252 = vmatpush1.msra.mxu0 0.0
    %1253 = vmatprep.subr.mxu0 0.0
    %1254 = vmatpush1.msra.mxu0 0.0
    %1255 = vmatprep.subr.mxu0 0.0
    %1256 = vmatpush1.msra.mxu0 0.0
    %1257 = vmatprep.subr.mxu0 0.0
    %1258 = vmatpush1.msra.mxu0 0.0
    %1259 = vmatprep.subr.mxu0 0.0
    %1260 = vmatpush1.msra.mxu0 0.0
    %1261 = vmatprep.subr.mxu0 0.0
    %1262 = vmatpush1.msra.mxu0 0.0
    %1263 = vmatprep.subr.mxu0 0.0
    %1264 = vmatpush1.msra.mxu0 0.0
    %1265 = vmatprep.subr.mxu0 0.0
    %1266 = vmatpush1.msra.mxu0 0.0
    %1267 = vmatprep.subr.mxu0 0.0
    %1268 = vmatpush1.msra.mxu0 0.0
    %1269 = vmatprep.subr.mxu0 0.0
    %1270 = vmatpush1.msra.mxu0 0.0
    %1271 = vmatprep.subr.mxu0 0.0
    %1272 = vmatpush1.msra.mxu0 0.0
    %1273 = vmatprep.subr.mxu0 0.0
    %1274 = vmatpush1.msra.mxu0 0.0
    %1275 = vmatprep.mubr.f32.mxu0 0.0
    %1276 = vmatmul.mubr.f32.gmra.mrb[0].mxu0 %v1209
    %v1277 = vpop.f32.mrb[0].mxu0
    %v1278 = vadd.f32 0.0, %v1277
    %v1279 = vpop.f32.mrb[0].mxu0
    %1280 = vdwg.mxu0
    %v1282 = vrot.slane %v1278, 1
    %v1284 = vadd.f32 %v461, %v1282
    %v1285 = vxor.u32 %v1284, 2147483648
    %v1286 = vmul.f32 %v1285, 1.442695
    %v1287 = vpow.pop %v1286
    %v1288 = vadd.f32 %v1287, 1.0
    %v1289 = vrcp.pop %v1288
    %v1290 = vmul.f32 1.0, %v1289
    %v1291 = vtanh.pop %v1284
    %v1293 = vrot.slane %v1198, 7
    %v1295 = vmul.f32 %v1290, %v1293
    %1297 = vrot.lane.b32.xlu0 %v1291, 96
    %v1298 = vpop.permute.xlu0 %1297
    %v1300 = vmul.f32 %v1290, %v1298
    %1302 = vrot.lane.b32.xlu0 %v1300, 16
    %v1303 = vpop.permute.xlu0 %1302
    %v1305 = vadd.f32 %v1295, %v1303
    %v1306 = vtanh.pop %v1305
    %1308 = vrot.lane.b32.xlu0 %v1306, 32
    %v1309 = vpop.permute.xlu0 %1308
    %v1311 = vmul.f32 %v1290, %v1309
    %vm1312 = vcmask 1040384
    %v1313 = vsel %vm1312, %v563, %v669
    %vm1314 = vcmask 1041408
    %v1315 = vsel %vm1314, %v1313, %v776
    %vm1316 = vcmask 1042432
    %v1317 = vsel %vm1316, %v1315, %v883
    %vm1318 = vcmask 1043456
    %v1319 = vsel %vm1318, %v1317, %v990
    %vm1320 = vcmask 1044480
    %v1321 = vsel %vm1320, %v1319, %v1097
    %vm1322 = vcmask 1045504
    %v1323 = vsel %vm1322, %v1321, %v1204
    %vm1324 = vcmask 1046528
    %v1325 = vsel %vm1324, %v1323, %v1311
    %v1326 = vld [vmem:[%s43] sm:$0xff]
    %v1327 = vld [vmem:[%s43 + $0x8] sm:$0xff]
    %v1328 = vld [vmem:[#allocation28] sm:$0x1]
    %v1330 = vlaneseq
    %v1331 = vshrl.u32 %v1330, 7
    %v1332 = vsub.s32 0, %v1331
    %v1333 = vrot.slane %v1328, %v1332
    %1335 = vmatprep.subr.mxu0 0.0
    %1336 = vmatpush1.msra.mxu0 %v1326
    %1337 = vmatprep.subr.mxu0 0.0
    %1338 = vmatpush1.msra.mxu0 %v1327
    %1339 = vmatprep.subr.mxu0 0.0
    %1340 = vmatpush1.msra.mxu0 0.0
    %1341 = vmatprep.subr.mxu0 0.0
    %1342 = vmatpush1.msra.mxu0 0.0
    %1343 = vmatprep.subr.mxu0 0.0
    %1344 = vmatpush1.msra.mxu0 0.0
    %1345 = vmatprep.subr.mxu0 0.0
    %1346 = vmatpush1.msra.mxu0 0.0
    %1347 = vmatprep.subr.mxu0 0.0
    %1348 = vmatpush1.msra.mxu0 0.0
    %1349 = vmatprep.subr.mxu0 0.0
    %1350 = vmatpush1.msra.mxu0 0.0
    %1351 = vmatprep.subr.mxu0 0.0
    %1352 = vmatpush1.msra.mxu0 0.0
    %1353 = vmatprep.subr.mxu0 0.0
    %1354 = vmatpush1.msra.mxu0 0.0
    %1355 = vmatprep.subr.mxu0 0.0
    %1356 = vmatpush1.msra.mxu0 0.0
    %1357 = vmatprep.subr.mxu0 0.0
    %1358 = vmatpush1.msra.mxu0 0.0
    %1359 = vmatprep.subr.mxu0 0.0
    %1360 = vmatpush1.msra.mxu0 0.0
    %1361 = vmatprep.subr.mxu0 0.0
    %1362 = vmatpush1.msra.mxu0 0.0
    %1363 = vmatprep.subr.mxu0 0.0
    %1364 = vmatpush1.msra.mxu0 0.0
    %1365 = vmatprep.subr.mxu0 0.0
    %1366 = vmatpush1.msra.mxu0 0.0
    %1367 = vmatprep.subr.mxu0 0.0
    %1368 = vmatpush1.msra.mxu0 0.0
    %1369 = vmatprep.subr.mxu0 0.0
    %1370 = vmatpush1.msra.mxu0 0.0
    %1371 = vmatprep.subr.mxu0 0.0
    %1372 = vmatpush1.msra.mxu0 0.0
    %1373 = vmatprep.subr.mxu0 0.0
    %1374 = vmatpush1.msra.mxu0 0.0
    %1375 = vmatprep.subr.mxu0 0.0
    %1376 = vmatpush1.msra.mxu0 0.0
    %1377 = vmatprep.subr.mxu0 0.0
    %1378 = vmatpush1.msra.mxu0 0.0
    %1379 = vmatprep.subr.mxu0 0.0
    %1380 = vmatpush1.msra.mxu0 0.0
    %1381 = vmatprep.subr.mxu0 0.0
    %1382 = vmatpush1.msra.mxu0 0.0
    %1383 = vmatprep.subr.mxu0 0.0
    %1384 = vmatpush1.msra.mxu0 0.0
    %1385 = vmatprep.subr.mxu0 0.0
    %1386 = vmatpush1.msra.mxu0 0.0
    %1387 = vmatprep.subr.mxu0 0.0
    %1388 = vmatpush1.msra.mxu0 0.0
    %1389 = vmatprep.subr.mxu0 0.0
    %1390 = vmatpush1.msra.mxu0 0.0
    %1391 = vmatprep.subr.mxu0 0.0
    %1392 = vmatpush1.msra.mxu0 0.0
    %1393 = vmatprep.subr.mxu0 0.0
    %1394 = vmatpush1.msra.mxu0 0.0
    %1395 = vmatprep.subr.mxu0 0.0
    %1396 = vmatpush1.msra.mxu0 0.0
    %1397 = vmatprep.subr.mxu0 0.0
    %1398 = vmatpush1.msra.mxu0 0.0
    %1399 = vmatprep.mubr.f32.mxu0 0.0
    %1400 = vmatmul.mubr.f32.gmra.mrb[0].mxu0 %v392
    %v1401 = vpop.f32.mrb[0].mxu0
    %v1402 = vadd.f32 %v1333, %v1401
    %v1403 = vpop.f32.mrb[0].mxu0
    %1404 = vdwg.mxu0
    %v1405 = vld [vmem:[#allocation26] sm:$0xff]
    %v1406 = vld [vmem:[#allocation26 + $0x8] sm:$0xff]
    %1407 = vmatprep.subr.mxu0 0.0
    %1408 = vmatpush1.msra.mxu0 %v1405
    %1409 = vmatprep.subr.mxu0 0.0
    %1410 = vmatpush1.msra.mxu0 %v1406
    %1411 = vmatprep.subr.mxu0 0.0
    %1412 = vmatpush1.msra.mxu0 0.0
    %1413 = vmatprep.subr.mxu0 0.0
    %1414 = vmatpush1.msra.mxu0 0.0
    %1415 = vmatprep.subr.mxu0 0.0
    %1416 = vmatpush1.msra.mxu0 0.0
    %1417 = vmatprep.subr.mxu0 0.0
    %1418 = vmatpush1.msra.mxu0 0.0
    %1419 = vmatprep.subr.mxu0 0.0
    %1420 = vmatpush1.msra.mxu0 0.0
    %1421 = vmatprep.subr.mxu0 0.0
    %1422 = vmatpush1.msra.mxu0 0.0
    %1423 = vmatprep.subr.mxu0 0.0
    %1424 = vmatpush1.msra.mxu0 0.0
    %1425 = vmatprep.subr.mxu0 0.0
    %1426 = vmatpush1.msra.mxu0 0.0
    %1427 = vmatprep.subr.mxu0 0.0
    %1428 = vmatpush1.msra.mxu0 0.0
    %1429 = vmatprep.subr.mxu0 0.0
    %1430 = vmatpush1.msra.mxu0 0.0
    %1431 = vmatprep.subr.mxu0 0.0
    %1432 = vmatpush1.msra.mxu0 0.0
    %1433 = vmatprep.subr.mxu0 0.0
    %1434 = vmatpush1.msra.mxu0 0.0
    %1435 = vmatprep.subr.mxu0 0.0
    %1436 = vmatpush1.msra.mxu0 0.0
    %1437 = vmatprep.subr.mxu0 0.0
    %1438 = vmatpush1.msra.mxu0 0.0
    %1439 = vmatprep.subr.mxu0 0.0
    %1440 = vmatpush1.msra.mxu0 0.0
    %1441 = vmatprep.subr.mxu0 0.0
    %1442 = vmatpush1.msra.mxu0 0.0
    %1443 = vmatprep.subr.mxu0 0.0
    %1444 = vmatpush1.msra.mxu0 0.0
    %1445 = vmatprep.subr.mxu0 0.0
    %1446 = vmatpush1.msra.mxu0 0.0
    %1447 = vmatprep.subr.mxu0 0.0
    %1448 = vmatpush1.msra.mxu0 0.0
    %1449 = vmatprep.subr.mxu0 0.0
    %1450 = vmatpush1.msra.mxu0 0.0
    %1451 = vmatprep.subr.mxu0 0.0
    %1452 = vmatpush1.msra.mxu0 0.0
    %1453 = vmatprep.subr.mxu0 0.0
    %1454 = vmatpush1.msra.mxu0 0.0
    %1455 = vmatprep.subr.mxu0 0.0
    %1456 = vmatpush1.msra.mxu0 0.0
    %1457 = vmatprep.subr.mxu0 0.0
    %1458 = vmatpush1.msra.mxu0 0.0
    %1459 = vmatprep.subr.mxu0 0.0
    %1460 = vmatpush1.msra.mxu0 0.0
    %1461 = vmatprep.subr.mxu0 0.0
    %1462 = vmatpush1.msra.mxu0 0.0
    %1463 = vmatprep.subr.mxu0 0.0
    %1464 = vmatpush1.msra.mxu0 0.0
    %1465 = vmatprep.subr.mxu0 0.0
    %1466 = vmatpush1.msra.mxu0 0.0
    %1467 = vmatprep.subr.mxu0 0.0
    %1468 = vmatpush1.msra.mxu0 0.0
    %1469 = vmatprep.subr.mxu0 0.0
    %1470 = vmatpush1.msra.mxu0 0.0
    %1471 = vmatprep.mubr.f32.mxu0 0.0
    %1472 = vmatmul.mubr.f32.gmra.mrb[0].mxu0 %v467
    %v1473 = vpop.f32.mrb[0].mxu0
    %v1474 = vadd.f32 0.0, %v1473
    %v1475 = vpop.f32.mrb[0].mxu0
    %1476 = vdwg.mxu0
    %v1478 = vrot.slane %v1474, 1
    %v1480 = vadd.f32 %v1402, %v1478
    %v1481 = vxor.u32 %v1480, 2147483648
    %v1482 = vmul.f32 %v1481, 1.442695
    %v1483 = vpow.pop %v1482
    %v1484 = vadd.f32 %v1483, 1.0
    %v1485 = vrcp.pop %v1484
    %v1486 = vmul.f32 1.0, %v1485
    %v1487 = vtanh.pop %v1480
    %v1488 = vmul.f32 %v1486, 0.0
    %1490 = vrot.lane.b32.xlu0 %v1487, 96
    %v1491 = vpop.permute.xlu0 %1490
    %v1493 = vmul.f32 %v1486, %v1491
    %1495 = vrot.lane.b32.xlu0 %v1493, 16
    %v1496 = vpop.permute.xlu0 %1495
    %v1498 = vadd.f32 %v1488, %v1496
    %v1499 = vtanh.pop %v1498
    %1501 = vrot.lane.b32.xlu0 %v1499, 32
    %v1502 = vpop.permute.xlu0 %1501
    %v1504 = vmul.f32 %v1486, %v1502
    %v1506 = vrot.slane %v1504, 7
    %1507 = vrot.lane.b32.xlu0 %v1506, 80
    %v1508 = vpop.permute.xlu0 %1507
    %v1509 = vsel %vm390, %v1508, 0
    %1511 = vmatprep.subr.mxu0 0.0
    %1512 = vmatpush1.msra.mxu0 %v1405
    %1513 = vmatprep.subr.mxu0 0.0
    %1514 = vmatpush1.msra.mxu0 %v1406
    %1515 = vmatprep.subr.mxu0 0.0
    %1516 = vmatpush1.msra.mxu0 0.0
    %1517 = vmatprep.subr.mxu0 0.0
    %1518 = vmatpush1.msra.mxu0 0.0
    %1519 = vmatprep.subr.mxu0 0.0
    %1520 = vmatpush1.msra.mxu0 0.0
    %1521 = vmatprep.subr.mxu0 0.0
    %1522 = vmatpush1.msra.mxu0 0.0
    %1523 = vmatprep.subr.mxu0 0.0
    %1524 = vmatpush1.msra.mxu0 0.0
    %1525 = vmatprep.subr.mxu0 0.0
    %1526 = vmatpush1.msra.mxu0 0.0
    %1527 = vmatprep.subr.mxu0 0.0
    %1528 = vmatpush1.msra.mxu0 0.0
    %1529 = vmatprep.subr.mxu0 0.0
    %1530 = vmatpush1.msra.mxu0 0.0
    %1531 = vmatprep.subr.mxu0 0.0
    %1532 = vmatpush1.msra.mxu0 0.0
    %1533 = vmatprep.subr.mxu0 0.0
    %1534 = vmatpush1.msra.mxu0 0.0
    %1535 = vmatprep.subr.mxu0 0.0
    %1536 = vmatpush1.msra.mxu0 0.0
    %1537 = vmatprep.subr.mxu0 0.0
    %1538 = vmatpush1.msra.mxu0 0.0
    %1539 = vmatprep.subr.mxu0 0.0
    %1540 = vmatpush1.msra.mxu0 0.0
    %1541 = vmatprep.subr.mxu0 0.0
    %1542 = vmatpush1.msra.mxu0 0.0
    %1543 = vmatprep.subr.mxu0 0.0
    %1544 = vmatpush1.msra.mxu0 0.0
    %1545 = vmatprep.subr.mxu0 0.0
    %1546 = vmatpush1.msra.mxu0 0.0
    %1547 = vmatprep.subr.mxu0 0.0
    %1548 = vmatpush1.msra.mxu0 0.0
    %1549 = vmatprep.subr.mxu0 0.0
    %1550 = vmatpush1.msra.mxu0 0.0
    %1551 = vmatprep.subr.mxu0 0.0
    %1552 = vmatpush1.msra.mxu0 0.0
    %1553 = vmatprep.subr.mxu0 0.0
    %1554 = vmatpush1.msra.mxu0 0.0
    %1555 = vmatprep.subr.mxu0 0.0
    %1556 = vmatpush1.msra.mxu0 0.0
    %1557 = vmatprep.subr.mxu0 0.0
    %1558 = vmatpush1.msra.mxu0 0.0
    %1559 = vmatprep.subr.mxu0 0.0
    %1560 = vmatpush1.msra.mxu0 0.0
    %1561 = vmatprep.subr.mxu0 0.0
    %1562 = vmatpush1.msra.mxu0 0.0
    %1563 = vmatprep.subr.mxu0 0.0
    %1564 = vmatpush1.msra.mxu0 0.0
    %1565 = vmatprep.subr.mxu0 0.0
    %1566 = vmatpush1.msra.mxu0 0.0
    %1567 = vmatprep.subr.mxu0 0.0
    %1568 = vmatpush1.msra.mxu0 0.0
    %1569 = vmatprep.subr.mxu0 0.0
    %1570 = vmatpush1.msra.mxu0 0.0
    %1571 = vmatprep.subr.mxu0 0.0
    %1572 = vmatpush1.msra.mxu0 0.0
    %1573 = vmatprep.subr.mxu0 0.0
    %1574 = vmatpush1.msra.mxu0 0.0
    %1575 = vmatprep.mubr.f32.mxu0 0.0
    %1576 = vmatmul.mubr.f32.gmra.mrb[0].mxu0 %v1509
    %v1577 = vpop.f32.mrb[0].mxu0
    %v1578 = vadd.f32 0.0, %v1577
    %v1579 = vpop.f32.mrb[0].mxu0
    %1580 = vdwg.mxu0
    %v1582 = vrot.slane %v1578, 2
    %v1584 = vadd.f32 %v1402, %v1582
    %v1585 = vxor.u32 %v1584, 2147483648
    %v1586 = vmul.f32 %v1585, 1.442695
    %v1587 = vpow.pop %v1586
    %v1588 = vadd.f32 %v1587, 1.0
    %v1589 = vrcp.pop %v1588
    %v1590 = vmul.f32 1.0, %v1589
    %v1591 = vtanh.pop %v1584
    %v1593 = vrot.slane %v1498, 1
    %v1595 = vmul.f32 %v1590, %v1593
    %1597 = vrot.lane.b32.xlu0 %v1591, 96
    %v1598 = vpop.permute.xlu0 %1597
    %v1600 = vmul.f32 %v1590, %v1598
    %1602 = vrot.lane.b32.xlu0 %v1600, 16
    %v1603 = vpop.permute.xlu0 %1602
    %v1605 = vadd.f32 %v1595, %v1603
    %v1606 = vtanh.pop %v1605
    %1608 = vrot.lane.b32.xlu0 %v1606, 32
    %v1609 = vpop.permute.xlu0 %1608
    %v1611 = vmul.f32 %v1590, %v1609
    %v1613 = vrot.slane %v1611, 6
    %1614 = vrot.lane.b32.xlu0 %v1613, 80
    %v1615 = vpop.permute.xlu0 %1614
    %v1616 = vsel %vm390, %v1615, 0
    %1618 = vmatprep.subr.mxu0 0.0
    %1619 = vmatpush1.msra.mxu0 %v1405
    %1620 = vmatprep.subr.mxu0 0.0
    %1621 = vmatpush1.msra.mxu0 %v1406
    %1622 = vmatprep.subr.mxu0 0.0
    %1623 = vmatpush1.msra.mxu0 0.0
    %1624 = vmatprep.subr.mxu0 0.0
    %1625 = vmatpush1.msra.mxu0 0.0
    %1626 = vmatprep.subr.mxu0 0.0
    %1627 = vmatpush1.msra.mxu0 0.0
    %1628 = vmatprep.subr.mxu0 0.0
    %1629 = vmatpush1.msra.mxu0 0.0
    %1630 = vmatprep.subr.mxu0 0.0
    %1631 = vmatpush1.msra.mxu0 0.0
    %1632 = vmatprep.subr.mxu0 0.0
    %1633 = vmatpush1.msra.mxu0 0.0
    %1634 = vmatprep.subr.mxu0 0.0
    %1635 = vmatpush1.msra.mxu0 0.0
    %1636 = vmatprep.subr.mxu0 0.0
    %1637 = vmatpush1.msra.mxu0 0.0
    %1638 = vmatprep.subr.mxu0 0.0
    %1639 = vmatpush1.msra.mxu0 0.0
    %1640 = vmatprep.subr.mxu0 0.0
    %1641 = vmatpush1.msra.mxu0 0.0
    %1642 = vmatprep.subr.mxu0 0.0
    %1643 = vmatpush1.msra.mxu0 0.0
    %1644 = vmatprep.subr.mxu0 0.0
    %1645 = vmatpush1.msra.mxu0 0.0
    %1646 = vmatprep.subr.mxu0 0.0
    %1647 = vmatpush1.msra.mxu0 0.0
    %1648 = vmatprep.subr.mxu0 0.0
    %1649 = vmatpush1.msra.mxu0 0.0
    %1650 = vmatprep.subr.mxu0 0.0
    %1651 = vmatpush1.msra.mxu0 0.0
    %1652 = vmatprep.subr.mxu0 0.0
    %1653 = vmatpush1.msra.mxu0 0.0
    %1654 = vmatprep.subr.mxu0 0.0
    %1655 = vmatpush1.msra.mxu0 0.0
    %1656 = vmatprep.subr.mxu0 0.0
    %1657 = vmatpush1.msra.mxu0 0.0
    %1658 = vmatprep.subr.mxu0 0.0
    %1659 = vmatpush1.msra.mxu0 0.0
    %1660 = vmatprep.subr.mxu0 0.0
    %1661 = vmatpush1.msra.mxu0 0.0
    %1662 = vmatprep.subr.mxu0 0.0
    %1663 = vmatpush1.msra.mxu0 0.0
    %1664 = vmatprep.subr.mxu0 0.0
    %1665 = vmatpush1.msra.mxu0 0.0
    %1666 = vmatprep.subr.mxu0 0.0
    %1667 = vmatpush1.msra.mxu0 0.0
    %1668 = vmatprep.subr.mxu0 0.0
    %1669 = vmatpush1.msra.mxu0 0.0
    %1670 = vmatprep.subr.mxu0 0.0
    %1671 = vmatpush1.msra.mxu0 0.0
    %1672 = vmatprep.subr.mxu0 0.0
    %1673 = vmatpush1.msra.mxu0 0.0
    %1674 = vmatprep.subr.mxu0 0.0
    %1675 = vmatpush1.msra.mxu0 0.0
    %1676 = vmatprep.subr.mxu0 0.0
    %1677 = vmatpush1.msra.mxu0 0.0
    %1678 = vmatprep.subr.mxu0 0.0
    %1679 = vmatpush1.msra.mxu0 0.0
    %1680 = vmatprep.subr.mxu0 0.0
    %1681 = vmatpush1.msra.mxu0 0.0
    %1682 = vmatprep.mubr.f32.mxu0 0.0
    %1683 = vmatmul.mubr.f32.gmra.mrb[0].mxu0 %v1616
    %v1684 = vpop.f32.mrb[0].mxu0
    %v1685 = vadd.f32 0.0, %v1684
    %v1686 = vpop.f32.mrb[0].mxu0
    %1687 = vdwg.mxu0
    %v1689 = vrot.slane %v1685, 3
    %v1691 = vadd.f32 %v1402, %v1689
    %v1692 = vxor.u32 %v1691, 2147483648
    %v1693 = vmul.f32 %v1692, 1.442695
    %v1694 = vpow.pop %v1693
    %v1695 = vadd.f32 %v1694, 1.0
    %v1696 = vrcp.pop %v1695
    %v1697 = vmul.f32 1.0, %v1696
    %v1698 = vtanh.pop %v1691
    %v1700 = vrot.slane %v1605, 1
    %v1702 = vmul.f32 %v1697, %v1700
    %1704 = vrot.lane.b32.xlu0 %v1698, 96
    %v1705 = vpop.permute.xlu0 %1704
    %v1707 = vmul.f32 %v1697, %v1705
    %1709 = vrot.lane.b32.xlu0 %v1707, 16
    %v1710 = vpop.permute.xlu0 %1709
    %v1712 = vadd.f32 %v1702, %v1710
    %v1713 = vtanh.pop %v1712
    %1715 = vrot.lane.b32.xlu0 %v1713, 32
    %v1716 = vpop.permute.xlu0 %1715
    %v1718 = vmul.f32 %v1697, %v1716
    %v1720 = vrot.slane %v1718, 5
    %1721 = vrot.lane.b32.xlu0 %v1720, 80
    %v1722 = vpop.permute.xlu0 %1721
    %v1723 = vsel %vm390, %v1722, 0
    %1725 = vmatprep.subr.mxu0 0.0
    %1726 = vmatpush1.msra.mxu0 %v1405
    %1727 = vmatprep.subr.mxu0 0.0
    %1728 = vmatpush1.msra.mxu0 %v1406
    %1729 = vmatprep.subr.mxu0 0.0
    %1730 = vmatpush1.msra.mxu0 0.0
    %1731 = vmatprep.subr.mxu0 0.0
    %1732 = vmatpush1.msra.mxu0 0.0
    %1733 = vmatprep.subr.mxu0 0.0
    %1734 = vmatpush1.msra.mxu0 0.0
    %1735 = vmatprep.subr.mxu0 0.0
    %1736 = vmatpush1.msra.mxu0 0.0
    %1737 = vmatprep.subr.mxu0 0.0
    %1738 = vmatpush1.msra.mxu0 0.0
    %1739 = vmatprep.subr.mxu0 0.0
    %1740 = vmatpush1.msra.mxu0 0.0
    %1741 = vmatprep.subr.mxu0 0.0
    %1742 = vmatpush1.msra.mxu0 0.0
    %1743 = vmatprep.subr.mxu0 0.0
    %1744 = vmatpush1.msra.mxu0 0.0
    %1745 = vmatprep.subr.mxu0 0.0
    %1746 = vmatpush1.msra.mxu0 0.0
    %1747 = vmatprep.subr.mxu0 0.0
    %1748 = vmatpush1.msra.mxu0 0.0
    %1749 = vmatprep.subr.mxu0 0.0
    %1750 = vmatpush1.msra.mxu0 0.0
    %1751 = vmatprep.subr.mxu0 0.0
    %1752 = vmatpush1.msra.mxu0 0.0
    %1753 = vmatprep.subr.mxu0 0.0
    %1754 = vmatpush1.msra.mxu0 0.0
    %1755 = vmatprep.subr.mxu0 0.0
    %1756 = vmatpush1.msra.mxu0 0.0
    %1757 = vmatprep.subr.mxu0 0.0
    %1758 = vmatpush1.msra.mxu0 0.0
    %1759 = vmatprep.subr.mxu0 0.0
    %1760 = vmatpush1.msra.mxu0 0.0
    %1761 = vmatprep.subr.mxu0 0.0
    %1762 = vmatpush1.msra.mxu0 0.0
    %1763 = vmatprep.subr.mxu0 0.0
    %1764 = vmatpush1.msra.mxu0 0.0
    %1765 = vmatprep.subr.mxu0 0.0
    %1766 = vmatpush1.msra.mxu0 0.0
    %1767 = vmatprep.subr.mxu0 0.0
    %1768 = vmatpush1.msra.mxu0 0.0
    %1769 = vmatprep.subr.mxu0 0.0
    %1770 = vmatpush1.msra.mxu0 0.0
    %1771 = vmatprep.subr.mxu0 0.0
    %1772 = vmatpush1.msra.mxu0 0.0
    %1773 = vmatprep.subr.mxu0 0.0
    %1774 = vmatpush1.msra.mxu0 0.0
    %1775 = vmatprep.subr.mxu0 0.0
    %1776 = vmatpush1.msra.mxu0 0.0
    %1777 = vmatprep.subr.mxu0 0.0
    %1778 = vmatpush1.msra.mxu0 0.0
    %1779 = vmatprep.subr.mxu0 0.0
    %1780 = vmatpush1.msra.mxu0 0.0
    %1781 = vmatprep.subr.mxu0 0.0
    %1782 = vmatpush1.msra.mxu0 0.0
    %1783 = vmatprep.subr.mxu0 0.0
    %1784 = vmatpush1.msra.mxu0 0.0
    %1785 = vmatprep.subr.mxu0 0.0
    %1786 = vmatpush1.msra.mxu0 0.0
    %1787 = vmatprep.subr.mxu0 0.0
    %1788 = vmatpush1.msra.mxu0 0.0
    %1789 = vmatprep.mubr.f32.mxu0 0.0
    %1790 = vmatmul.mubr.f32.gmra.mrb[0].mxu0 %v1723
    %v1791 = vpop.f32.mrb[0].mxu0
    %v1792 = vadd.f32 0.0, %v1791
    %v1793 = vpop.f32.mrb[0].mxu0
    %1794 = vdwg.mxu0
    %v1796 = vrot.slane %v1792, 4
    %v1798 = vadd.f32 %v1402, %v1796
    %v1799 = vxor.u32 %v1798, 2147483648
    %v1800 = vmul.f32 %v1799, 1.442695
    %v1801 = vpow.pop %v1800
    %v1802 = vadd.f32 %v1801, 1.0
    %v1803 = vrcp.pop %v1802
    %v1804 = vmul.f32 1.0, %v1803
    %v1805 = vtanh.pop %v1798
    %v1807 = vrot.slane %v1712, 1
    %v1809 = vmul.f32 %v1804, %v1807
    %1811 = vrot.lane.b32.xlu0 %v1805, 96
    %v1812 = vpop.permute.xlu0 %1811
    %v1814 = vmul.f32 %v1804, %v1812
    %1816 = vrot.lane.b32.xlu0 %v1814, 16
    %v1817 = vpop.permute.xlu0 %1816
    %v1819 = vadd.f32 %v1809, %v1817
    %v1820 = vtanh.pop %v1819
    %1822 = vrot.lane.b32.xlu0 %v1820, 32
    %v1823 = vpop.permute.xlu0 %1822
    %v1825 = vmul.f32 %v1804, %v1823
    %v1827 = vrot.slane %v1825, 4
    %1828 = vrot.lane.b32.xlu0 %v1827, 80
    %v1829 = vpop.permute.xlu0 %1828
    %v1830 = vsel %vm390, %v1829, 0
    %1832 = vmatprep.subr.mxu0 0.0
    %1833 = vmatpush1.msra.mxu0 %v1405
    %1834 = vmatprep.subr.mxu0 0.0
    %1835 = vmatpush1.msra.mxu0 %v1406
    %1836 = vmatprep.subr.mxu0 0.0
    %1837 = vmatpush1.msra.mxu0 0.0
    %1838 = vmatprep.subr.mxu0 0.0
    %1839 = vmatpush1.msra.mxu0 0.0
    %1840 = vmatprep.subr.mxu0 0.0
    %1841 = vmatpush1.msra.mxu0 0.0
    %1842 = vmatprep.subr.mxu0 0.0
    %1843 = vmatpush1.msra.mxu0 0.0
    %1844 = vmatprep.subr.mxu0 0.0
    %1845 = vmatpush1.msra.mxu0 0.0
    %1846 = vmatprep.subr.mxu0 0.0
    %1847 = vmatpush1.msra.mxu0 0.0
    %1848 = vmatprep.subr.mxu0 0.0
    %1849 = vmatpush1.msra.mxu0 0.0
    %1850 = vmatprep.subr.mxu0 0.0
    %1851 = vmatpush1.msra.mxu0 0.0
    %1852 = vmatprep.subr.mxu0 0.0
    %1853 = vmatpush1.msra.mxu0 0.0
    %1854 = vmatprep.subr.mxu0 0.0
    %1855 = vmatpush1.msra.mxu0 0.0
    %1856 = vmatprep.subr.mxu0 0.0
    %1857 = vmatpush1.msra.mxu0 0.0
    %1858 = vmatprep.subr.mxu0 0.0
    %1859 = vmatpush1.msra.mxu0 0.0
    %1860 = vmatprep.subr.mxu0 0.0
    %1861 = vmatpush1.msra.mxu0 0.0
    %1862 = vmatprep.subr.mxu0 0.0
    %1863 = vmatpush1.msra.mxu0 0.0
    %1864 = vmatprep.subr.mxu0 0.0
    %1865 = vmatpush1.msra.mxu0 0.0
    %1866 = vmatprep.subr.mxu0 0.0
    %1867 = vmatpush1.msra.mxu0 0.0
    %1868 = vmatprep.subr.mxu0 0.0
    %1869 = vmatpush1.msra.mxu0 0.0
    %1870 = vmatprep.subr.mxu0 0.0
    %1871 = vmatpush1.msra.mxu0 0.0
    %1872 = vmatprep.subr.mxu0 0.0
    %1873 = vmatpush1.msra.mxu0 0.0
    %1874 = vmatprep.subr.mxu0 0.0
    %1875 = vmatpush1.msra.mxu0 0.0
    %1876 = vmatprep.subr.mxu0 0.0
    %1877 = vmatpush1.msra.mxu0 0.0
    %1878 = vmatprep.subr.mxu0 0.0
    %1879 = vmatpush1.msra.mxu0 0.0
    %1880 = vmatprep.subr.mxu0 0.0
    %1881 = vmatpush1.msra.mxu0 0.0
    %1882 = vmatprep.subr.mxu0 0.0
    %1883 = vmatpush1.msra.mxu0 0.0
    %1884 = vmatprep.subr.mxu0 0.0
    %1885 = vmatpush1.msra.mxu0 0.0
    %1886 = vmatprep.subr.mxu0 0.0
    %1887 = vmatpush1.msra.mxu0 0.0
    %1888 = vmatprep.subr.mxu0 0.0
    %1889 = vmatpush1.msra.mxu0 0.0
    %1890 = vmatprep.subr.mxu0 0.0
    %1891 = vmatpush1.msra.mxu0 0.0
    %1892 = vmatprep.subr.mxu0 0.0
    %1893 = vmatpush1.msra.mxu0 0.0
    %1894 = vmatprep.subr.mxu0 0.0
    %1895 = vmatpush1.msra.mxu0 0.0
    %1896 = vmatprep.mubr.f32.mxu0 0.0
    %1897 = vmatmul.mubr.f32.gmra.mrb[0].mxu0 %v1830
    %v1898 = vpop.f32.mrb[0].mxu0
    %v1899 = vadd.f32 0.0, %v1898
    %v1900 = vpop.f32.mrb[0].mxu0
    %1901 = vdwg.mxu0
    %v1903 = vrot.slane %v1899, 5
    %v1905 = vadd.f32 %v1402, %v1903
    %v1906 = vxor.u32 %v1905, 2147483648
    %v1907 = vmul.f32 %v1906, 1.442695
    %v1908 = vpow.pop %v1907
    %v1909 = vadd.f32 %v1908, 1.0
    %v1910 = vrcp.pop %v1909
    %v1911 = vmul.f32 1.0, %v1910
    %v1912 = vtanh.pop %v1905
    %v1914 = vrot.slane %v1819, 1
    %v1916 = vmul.f32 %v1911, %v1914
    %1918 = vrot.lane.b32.xlu0 %v1912, 96
    %v1919 = vpop.permute.xlu0 %1918
    %v1921 = vmul.f32 %v1911, %v1919
    %1923 = vrot.lane.b32.xlu0 %v1921, 16
    %v1924 = vpop.permute.xlu0 %1923
    %v1926 = vadd.f32 %v1916, %v1924
    %v1927 = vtanh.pop %v1926
    %1929 = vrot.lane.b32.xlu0 %v1927, 32
    %v1930 = vpop.permute.xlu0 %1929
    %v1932 = vmul.f32 %v1911, %v1930
    %v1934 = vrot.slane %v1932, 3
    %1935 = vrot.lane.b32.xlu0 %v1934, 80
    %v1936 = vpop.permute.xlu0 %1935
    %v1937 = vsel %vm390, %v1936, 0
    %1939 = vmatprep.subr.mxu0 0.0
    %1940 = vmatpush1.msra.mxu0 %v1405
    %1941 = vmatprep.subr.mxu0 0.0
    %1942 = vmatpush1.msra.mxu0 %v1406
    %1943 = vmatprep.subr.mxu0 0.0
    %1944 = vmatpush1.msra.mxu0 0.0
    %1945 = vmatprep.subr.mxu0 0.0
    %1946 = vmatpush1.msra.mxu0 0.0
    %1947 = vmatprep.subr.mxu0 0.0
    %1948 = vmatpush1.msra.mxu0 0.0
    %1949 = vmatprep.subr.mxu0 0.0
    %1950 = vmatpush1.msra.mxu0 0.0
    %1951 = vmatprep.subr.mxu0 0.0
    %1952 = vmatpush1.msra.mxu0 0.0
    %1953 = vmatprep.subr.mxu0 0.0
    %1954 = vmatpush1.msra.mxu0 0.0
    %1955 = vmatprep.subr.mxu0 0.0
    %1956 = vmatpush1.msra.mxu0 0.0
    %1957 = vmatprep.subr.mxu0 0.0
    %1958 = vmatpush1.msra.mxu0 0.0
    %1959 = vmatprep.subr.mxu0 0.0
    %1960 = vmatpush1.msra.mxu0 0.0
    %1961 = vmatprep.subr.mxu0 0.0
    %1962 = vmatpush1.msra.mxu0 0.0
    %1963 = vmatprep.subr.mxu0 0.0
    %1964 = vmatpush1.msra.mxu0 0.0
    %1965 = vmatprep.subr.mxu0 0.0
    %1966 = vmatpush1.msra.mxu0 0.0
    %1967 = vmatprep.subr.mxu0 0.0
    %1968 = vmatpush1.msra.mxu0 0.0
    %1969 = vmatprep.subr.mxu0 0.0
    %1970 = vmatpush1.msra.mxu0 0.0
    %1971 = vmatprep.subr.mxu0 0.0
    %1972 = vmatpush1.msra.mxu0 0.0
    %1973 = vmatprep.subr.mxu0 0.0
    %1974 = vmatpush1.msra.mxu0 0.0
    %1975 = vmatprep.subr.mxu0 0.0
    %1976 = vmatpush1.msra.mxu0 0.0
    %1977 = vmatprep.subr.mxu0 0.0
    %1978 = vmatpush1.msra.mxu0 0.0
    %1979 = vmatprep.subr.mxu0 0.0
    %1980 = vmatpush1.msra.mxu0 0.0
    %1981 = vmatprep.subr.mxu0 0.0
    %1982 = vmatpush1.msra.mxu0 0.0
    %1983 = vmatprep.subr.mxu0 0.0
    %1984 = vmatpush1.msra.mxu0 0.0
    %1985 = vmatprep.subr.mxu0 0.0
    %1986 = vmatpush1.msra.mxu0 0.0
    %1987 = vmatprep.subr.mxu0 0.0
    %1988 = vmatpush1.msra.mxu0 0.0
    %1989 = vmatprep.subr.mxu0 0.0
    %1990 = vmatpush1.msra.mxu0 0.0
    %1991 = vmatprep.subr.mxu0 0.0
    %1992 = vmatpush1.msra.mxu0 0.0
    %1993 = vmatprep.subr.mxu0 0.0
    %1994 = vmatpush1.msra.mxu0 0.0
    %1995 = vmatprep.subr.mxu0 0.0
    %1996 = vmatpush1.msra.mxu0 0.0
    %1997 = vmatprep.subr.mxu0 0.0
    %1998 = vmatpush1.msra.mxu0 0.0
    %1999 = vmatprep.subr.mxu0 0.0
    %2000 = vmatpush1.msra.mxu0 0.0
    %2001 = vmatprep.subr.mxu0 0.0
    %2002 = vmatpush1.msra.mxu0 0.0
    %2003 = vmatprep.mubr.f32.mxu0 0.0
    %2004 = vmatmul.mubr.f32.gmra.mrb[0].mxu0 %v1937
    %v2005 = vpop.f32.mrb[0].mxu0
    %v2006 = vadd.f32 0.0, %v2005
    %v2007 = vpop.f32.mrb[0].mxu0
    %2008 = vdwg.mxu0
    %v2010 = vrot.slane %v2006, 6
    %v2012 = vadd.f32 %v1402, %v2010
    %v2013 = vxor.u32 %v2012, 2147483648
    %v2014 = vmul.f32 %v2013, 1.442695
    %v2015 = vpow.pop %v2014
    %v2016 = vadd.f32 %v2015, 1.0
    %v2017 = vrcp.pop %v2016
    %v2018 = vmul.f32 1.0, %v2017
    %v2019 = vtanh.pop %v2012
    %v2021 = vrot.slane %v1926, 1
    %v2023 = vmul.f32 %v2018, %v2021
    %2025 = vrot.lane.b32.xlu0 %v2019, 96
    %v2026 = vpop.permute.xlu0 %2025
    %v2028 = vmul.f32 %v2018, %v2026
    %2030 = vrot.lane.b32.xlu0 %v2028, 16
    %v2031 = vpop.permute.xlu0 %2030
    %v2033 = vadd.f32 %v2023, %v2031
    %v2034 = vtanh.pop %v2033
    %2036 = vrot.lane.b32.xlu0 %v2034, 32
    %v2037 = vpop.permute.xlu0 %2036
    %v2039 = vmul.f32 %v2018, %v2037
    %v2041 = vrot.slane %v2039, 2
    %2042 = vrot.lane.b32.xlu0 %v2041, 80
    %v2043 = vpop.permute.xlu0 %2042
    %v2044 = vsel %vm390, %v2043, 0
    %2046 = vmatprep.subr.mxu0 0.0
    %2047 = vmatpush1.msra.mxu0 %v1405
    %2048 = vmatprep.subr.mxu0 0.0
    %2049 = vmatpush1.msra.mxu0 %v1406
    %2050 = vmatprep.subr.mxu0 0.0
    %2051 = vmatpush1.msra.mxu0 0.0
    %2052 = vmatprep.subr.mxu0 0.0
    %2053 = vmatpush1.msra.mxu0 0.0
    %2054 = vmatprep.subr.mxu0 0.0
    %2055 = vmatpush1.msra.mxu0 0.0
    %2056 = vmatprep.subr.mxu0 0.0
    %2057 = vmatpush1.msra.mxu0 0.0
    %2058 = vmatprep.subr.mxu0 0.0
    %2059 = vmatpush1.msra.mxu0 0.0
    %2060 = vmatprep.subr.mxu0 0.0
    %2061 = vmatpush1.msra.mxu0 0.0
    %2062 = vmatprep.subr.mxu0 0.0
    %2063 = vmatpush1.msra.mxu0 0.0
    %2064 = vmatprep.subr.mxu0 0.0
    %2065 = vmatpush1.msra.mxu0 0.0
    %2066 = vmatprep.subr.mxu0 0.0
    %2067 = vmatpush1.msra.mxu0 0.0
    %2068 = vmatprep.subr.mxu0 0.0
    %2069 = vmatpush1.msra.mxu0 0.0
    %2070 = vmatprep.subr.mxu0 0.0
    %2071 = vmatpush1.msra.mxu0 0.0
    %2072 = vmatprep.subr.mxu0 0.0
    %2073 = vmatpush1.msra.mxu0 0.0
    %2074 = vmatprep.subr.mxu0 0.0
    %2075 = vmatpush1.msra.mxu0 0.0
    %2076 = vmatprep.subr.mxu0 0.0
    %2077 = vmatpush1.msra.mxu0 0.0
    %2078 = vmatprep.subr.mxu0 0.0
    %2079 = vmatpush1.msra.mxu0 0.0
    %2080 = vmatprep.subr.mxu0 0.0
    %2081 = vmatpush1.msra.mxu0 0.0
    %2082 = vmatprep.subr.mxu0 0.0
    %2083 = vmatpush1.msra.mxu0 0.0
    %2084 = vmatprep.subr.mxu0 0.0
    %2085 = vmatpush1.msra.mxu0 0.0
    %2086 = vmatprep.subr.mxu0 0.0
    %2087 = vmatpush1.msra.mxu0 0.0
    %2088 = vmatprep.subr.mxu0 0.0
    %2089 = vmatpush1.msra.mxu0 0.0
    %2090 = vmatprep.subr.mxu0 0.0
    %2091 = vmatpush1.msra.mxu0 0.0
    %2092 = vmatprep.subr.mxu0 0.0
    %2093 = vmatpush1.msra.mxu0 0.0
    %2094 = vmatprep.subr.mxu0 0.0
    %2095 = vmatpush1.msra.mxu0 0.0
    %2096 = vmatprep.subr.mxu0 0.0
    %2097 = vmatpush1.msra.mxu0 0.0
    %2098 = vmatprep.subr.mxu0 0.0
    %2099 = vmatpush1.msra.mxu0 0.0
    %2100 = vmatprep.subr.mxu0 0.0
    %2101 = vmatpush1.msra.mxu0 0.0
    %2102 = vmatprep.subr.mxu0 0.0
    %2103 = vmatpush1.msra.mxu0 0.0
    %2104 = vmatprep.subr.mxu0 0.0
    %2105 = vmatpush1.msra.mxu0 0.0
    %2106 = vmatprep.subr.mxu0 0.0
    %2107 = vmatpush1.msra.mxu0 0.0
    %2108 = vmatprep.subr.mxu0 0.0
    %2109 = vmatpush1.msra.mxu0 0.0
    %2110 = vmatprep.mubr.f32.mxu0 0.0
    %2111 = vmatmul.mubr.f32.gmra.mrb[0].mxu0 %v2044
    %v2112 = vpop.f32.mrb[0].mxu0
    %v2113 = vadd.f32 0.0, %v2112
    %v2114 = vpop.f32.mrb[0].mxu0
    %2115 = vdwg.mxu0
    %v2117 = vrot.slane %v2113, 7
    %v2119 = vadd.f32 %v1402, %v2117
    %v2120 = vxor.u32 %v2119, 2147483648
    %v2121 = vmul.f32 %v2120, 1.442695
    %v2122 = vpow.pop %v2121
    %v2123 = vadd.f32 %v2122, 1.0
    %v2124 = vrcp.pop %v2123
    %v2125 = vmul.f32 1.0, %v2124
    %v2126 = vtanh.pop %v2119
    %v2128 = vrot.slane %v2033, 1
    %v2130 = vmul.f32 %v2125, %v2128
    %2132 = vrot.lane.b32.xlu0 %v2126, 96
    %v2133 = vpop.permute.xlu0 %2132
    %v2135 = vmul.f32 %v2125, %v2133
    %2137 = vrot.lane.b32.xlu0 %v2135, 16
    %v2138 = vpop.permute.xlu0 %2137
    %v2140 = vadd.f32 %v2130, %v2138
    %v2141 = vtanh.pop %v2140
    %2143 = vrot.lane.b32.xlu0 %v2141, 32
    %v2144 = vpop.permute.xlu0 %2143
    %v2146 = vmul.f32 %v2125, %v2144
    %v2148 = vrot.slane %v2146, 1
    %2149 = vrot.lane.b32.xlu0 %v2148, 80
    %v2150 = vpop.permute.xlu0 %2149
    %v2151 = vsel %vm390, %v2150, 0
    %2153 = vmatprep.subr.mxu0 0.0
    %2154 = vmatpush1.msra.mxu0 %v1405
    %2155 = vmatprep.subr.mxu0 0.0
    %2156 = vmatpush1.msra.mxu0 %v1406
    %2157 = vmatprep.subr.mxu0 0.0
    %2158 = vmatpush1.msra.mxu0 0.0
    %2159 = vmatprep.subr.mxu0 0.0
    %2160 = vmatpush1.msra.mxu0 0.0
    %2161 = vmatprep.subr.mxu0 0.0
    %2162 = vmatpush1.msra.mxu0 0.0
    %2163 = vmatprep.subr.mxu0 0.0
    %2164 = vmatpush1.msra.mxu0 0.0
    %2165 = vmatprep.subr.mxu0 0.0
    %2166 = vmatpush1.msra.mxu0 0.0
    %2167 = vmatprep.subr.mxu0 0.0
    %2168 = vmatpush1.msra.mxu0 0.0
    %2169 = vmatprep.subr.mxu0 0.0
    %2170 = vmatpush1.msra.mxu0 0.0
    %2171 = vmatprep.subr.mxu0 0.0
    %2172 = vmatpush1.msra.mxu0 0.0
    %2173 = vmatprep.subr.mxu0 0.0
    %2174 = vmatpush1.msra.mxu0 0.0
    %2175 = vmatprep.subr.mxu0 0.0
    %2176 = vmatpush1.msra.mxu0 0.0
    %2177 = vmatprep.subr.mxu0 0.0
    %2178 = vmatpush1.msra.mxu0 0.0
    %2179 = vmatprep.subr.mxu0 0.0
    %2180 = vmatpush1.msra.mxu0 0.0
    %2181 = vmatprep.subr.mxu0 0.0
    %2182 = vmatpush1.msra.mxu0 0.0
    %2183 = vmatprep.subr.mxu0 0.0
    %2184 = vmatpush1.msra.mxu0 0.0
    %2185 = vmatprep.subr.mxu0 0.0
    %2186 = vmatpush1.msra.mxu0 0.0
    %2187 = vmatprep.subr.mxu0 0.0
    %2188 = vmatpush1.msra.mxu0 0.0
    %2189 = vmatprep.subr.mxu0 0.0
    %2190 = vmatpush1.msra.mxu0 0.0
    %2191 = vmatprep.subr.mxu0 0.0
    %2192 = vmatpush1.msra.mxu0 0.0
    %2193 = vmatprep.subr.mxu0 0.0
    %2194 = vmatpush1.msra.mxu0 0.0
    %2195 = vmatprep.subr.mxu0 0.0
    %2196 = vmatpush1.msra.mxu0 0.0
    %2197 = vmatprep.subr.mxu0 0.0
    %2198 = vmatpush1.msra.mxu0 0.0
    %2199 = vmatprep.subr.mxu0 0.0
    %2200 = vmatpush1.msra.mxu0 0.0
    %2201 = vmatprep.subr.mxu0 0.0
    %2202 = vmatpush1.msra.mxu0 0.0
    %2203 = vmatprep.subr.mxu0 0.0
    %2204 = vmatpush1.msra.mxu0 0.0
    %2205 = vmatprep.subr.mxu0 0.0
    %2206 = vmatpush1.msra.mxu0 0.0
    %2207 = vmatprep.subr.mxu0 0.0
    %2208 = vmatpush1.msra.mxu0 0.0
    %2209 = vmatprep.subr.mxu0 0.0
    %2210 = vmatpush1.msra.mxu0 0.0
    %2211 = vmatprep.subr.mxu0 0.0
    %2212 = vmatpush1.msra.mxu0 0.0
    %2213 = vmatprep.subr.mxu0 0.0
    %2214 = vmatpush1.msra.mxu0 0.0
    %2215 = vmatprep.subr.mxu0 0.0
    %2216 = vmatpush1.msra.mxu0 0.0
    %2217 = vmatprep.mubr.f32.mxu0 0.0
    %2218 = vmatmul.mubr.f32.gmra.mrb[0].mxu0 %v2151
    %v2219 = vpop.f32.mrb[0].mxu0
    %v2220 = vadd.f32 0.0, %v2219
    %v2221 = vpop.f32.mrb[0].mxu0
    %2222 = vdwg.mxu0
    %v2223 = vadd.f32 %v1402, %v2220
    %v2224 = vxor.u32 %v2223, 2147483648
    %v2225 = vmul.f32 %v2224, 1.442695
    %v2226 = vpow.pop %v2225
    %v2227 = vadd.f32 %v2226, 1.0
    %v2228 = vrcp.pop %v2227
    %v2229 = vmul.f32 1.0, %v2228
    %v2230 = vtanh.pop %v2223
    %v2232 = vrot.slane %v2140, 1
    %v2234 = vmul.f32 %v2229, %v2232
    %2236 = vrot.lane.b32.xlu0 %v2230, 96
    %v2237 = vpop.permute.xlu0 %2236
    %v2239 = vmul.f32 %v2229, %v2237
    %2241 = vrot.lane.b32.xlu0 %v2239, 16
    %v2242 = vpop.permute.xlu0 %2241
    %v2244 = vadd.f32 %v2234, %v2242
    %v2245 = vtanh.pop %v2244
    %2247 = vrot.lane.b32.xlu0 %v2245, 32
    %v2248 = vpop.permute.xlu0 %2247
    %v2250 = vmul.f32 %v2229, %v2248
    %v2251 = vsel %vm1312, %v2250, %v2146
    %v2252 = vsel %vm1314, %v2251, %v2039
    %v2253 = vsel %vm1316, %v2252, %v1932
    %v2254 = vsel %vm1318, %v2253, %v1825
    %v2255 = vsel %vm1320, %v2254, %v1718
    %v2256 = vsel %vm1322, %v2255, %v1611
    %v2257 = vsel %vm1324, %v2256, %v1504
    %2259 = vrot.lane.b32.xlu0 %v1325, 80
    %v2260 = vpop.permute.xlu0 %2259
    %2263 = vrot.lane.b32.xlu0 %v2257, 96
    %v2264 = vpop.permute.xlu0 %2263
    %v2266 = vsel %vm390, %v2260, %v2264
    %v2267 = vld [vmem:[%s21] sm:$0xff]
    %v2268 = vld [vmem:[%s21 + $0x8] sm:$0xff]
    %v2269 = vld [vmem:[%s21 + $0x10] sm:$0xff]
    %v2270 = vld [vmem:[%s21 + $0x18] sm:$0xff]
    %v2271 = vld [vmem:[#allocation14] sm:$0x1]
    %v2273 = vlaneseq
    %v2274 = vshrl.u32 %v2273, 7
    %v2275 = vsub.s32 0, %v2274
    %v2276 = vrot.slane %v2271, %v2275
    %vm2278 = vcmask 261120
    %v2280 = vsel %vm2278, %v2266, 0
    %2282 = vmatprep.subr.mxu0 0.0
    %2283 = vmatpush1.msra.mxu0 %v2267
    %2284 = vmatprep.subr.mxu0 0.0
    %2285 = vmatpush1.msra.mxu0 %v2268
    %2286 = vmatprep.subr.mxu0 0.0
    %2287 = vmatpush1.msra.mxu0 %v2269
    %2288 = vmatprep.subr.mxu0 0.0
    %2289 = vmatpush1.msra.mxu0 %v2270
    %2290 = vmatprep.subr.mxu0 0.0
    %2291 = vmatpush1.msra.mxu0 0.0
    %2292 = vmatprep.subr.mxu0 0.0
    %2293 = vmatpush1.msra.mxu0 0.0
    %2294 = vmatprep.subr.mxu0 0.0
    %2295 = vmatpush1.msra.mxu0 0.0
    %2296 = vmatprep.subr.mxu0 0.0
    %2297 = vmatpush1.msra.mxu0 0.0
    %2298 = vmatprep.subr.mxu0 0.0
    %2299 = vmatpush1.msra.mxu0 0.0
    %2300 = vmatprep.subr.mxu0 0.0
    %2301 = vmatpush1.msra.mxu0 0.0
    %2302 = vmatprep.subr.mxu0 0.0
    %2303 = vmatpush1.msra.mxu0 0.0
    %2304 = vmatprep.subr.mxu0 0.0
    %2305 = vmatpush1.msra.mxu0 0.0
    %2306 = vmatprep.subr.mxu0 0.0
    %2307 = vmatpush1.msra.mxu0 0.0
    %2308 = vmatprep.subr.mxu0 0.0
    %2309 = vmatpush1.msra.mxu0 0.0
    %2310 = vmatprep.subr.mxu0 0.0
    %2311 = vmatpush1.msra.mxu0 0.0
    %2312 = vmatprep.subr.mxu0 0.0
    %2313 = vmatpush1.msra.mxu0 0.0
    %2314 = vmatprep.subr.mxu0 0.0
    %2315 = vmatpush1.msra.mxu0 0.0
    %2316 = vmatprep.subr.mxu0 0.0
    %2317 = vmatpush1.msra.mxu0 0.0
    %2318 = vmatprep.subr.mxu0 0.0
    %2319 = vmatpush1.msra.mxu0 0.0
    %2320 = vmatprep.subr.mxu0 0.0
    %2321 = vmatpush1.msra.mxu0 0.0
    %2322 = vmatprep.subr.mxu0 0.0
    %2323 = vmatpush1.msra.mxu0 0.0
    %2324 = vmatprep.subr.mxu0 0.0
    %2325 = vmatpush1.msra.mxu0 0.0
    %2326 = vmatprep.subr.mxu0 0.0
    %2327 = vmatpush1.msra.mxu0 0.0
    %2328 = vmatprep.subr.mxu0 0.0
    %2329 = vmatpush1.msra.mxu0 0.0
    %2330 = vmatprep.subr.mxu0 0.0
    %2331 = vmatpush1.msra.mxu0 0.0
    %2332 = vmatprep.subr.mxu0 0.0
    %2333 = vmatpush1.msra.mxu0 0.0
    %2334 = vmatprep.subr.mxu0 0.0
    %2335 = vmatpush1.msra.mxu0 0.0
    %2336 = vmatprep.subr.mxu0 0.0
    %2337 = vmatpush1.msra.mxu0 0.0
    %2338 = vmatprep.subr.mxu0 0.0
    %2339 = vmatpush1.msra.mxu0 0.0
    %2340 = vmatprep.subr.mxu0 0.0
    %2341 = vmatpush1.msra.mxu0 0.0
    %2342 = vmatprep.subr.mxu0 0.0
    %2343 = vmatpush1.msra.mxu0 0.0
    %2344 = vmatprep.subr.mxu0 0.0
    %2345 = vmatpush1.msra.mxu0 0.0
    %2346 = vmatprep.mubr.f32.mxu0 0.0
    %2347 = vmatmul.mubr.f32.gmra.mrb[0].mxu0 %v2280
    %v2348 = vpop.f32.mrb[0].mxu0
    %v2349 = vadd.f32 %v2276, %v2348
    %v2350 = vpop.f32.mrb[0].mxu0
    %2351 = vdwg.mxu0
    %v2352 = vld [vmem:[#allocation13] sm:$0xff]
    %v2353 = vld [vmem:[#allocation13 + $0x8] sm:$0xff]
    %2354 = vmatprep.subr.mxu0 0.0
    %2355 = vmatpush1.msra.mxu0 %v2352
    %2356 = vmatprep.subr.mxu0 0.0
    %2357 = vmatpush1.msra.mxu0 %v2353
    %2358 = vmatprep.subr.mxu0 0.0
    %2359 = vmatpush1.msra.mxu0 0.0
    %2360 = vmatprep.subr.mxu0 0.0
    %2361 = vmatpush1.msra.mxu0 0.0
    %2362 = vmatprep.subr.mxu0 0.0
    %2363 = vmatpush1.msra.mxu0 0.0
    %2364 = vmatprep.subr.mxu0 0.0
    %2365 = vmatpush1.msra.mxu0 0.0
    %2366 = vmatprep.subr.mxu0 0.0
    %2367 = vmatpush1.msra.mxu0 0.0
    %2368 = vmatprep.subr.mxu0 0.0
    %2369 = vmatpush1.msra.mxu0 0.0
    %2370 = vmatprep.subr.mxu0 0.0
    %2371 = vmatpush1.msra.mxu0 0.0
    %2372 = vmatprep.subr.mxu0 0.0
    %2373 = vmatpush1.msra.mxu0 0.0
    %2374 = vmatprep.subr.mxu0 0.0
    %2375 = vmatpush1.msra.mxu0 0.0
    %2376 = vmatprep.subr.mxu0 0.0
    %2377 = vmatpush1.msra.mxu0 0.0
    %2378 = vmatprep.subr.mxu0 0.0
    %2379 = vmatpush1.msra.mxu0 0.0
    %2380 = vmatprep.subr.mxu0 0.0
    %2381 = vmatpush1.msra.mxu0 0.0
    %2382 = vmatprep.subr.mxu0 0.0
    %2383 = vmatpush1.msra.mxu0 0.0
    %2384 = vmatprep.subr.mxu0 0.0
    %2385 = vmatpush1.msra.mxu0 0.0
    %2386 = vmatprep.subr.mxu0 0.0
    %2387 = vmatpush1.msra.mxu0 0.0
    %2388 = vmatprep.subr.mxu0 0.0
    %2389 = vmatpush1.msra.mxu0 0.0
    %2390 = vmatprep.subr.mxu0 0.0
    %2391 = vmatpush1.msra.mxu0 0.0
    %2392 = vmatprep.subr.mxu0 0.0
    %2393 = vmatpush1.msra.mxu0 0.0
    %2394 = vmatprep.subr.mxu0 0.0
    %2395 = vmatpush1.msra.mxu0 0.0
    %2396 = vmatprep.subr.mxu0 0.0
    %2397 = vmatpush1.msra.mxu0 0.0
    %2398 = vmatprep.subr.mxu0 0.0
    %2399 = vmatpush1.msra.mxu0 0.0
    %2400 = vmatprep.subr.mxu0 0.0
    %2401 = vmatpush1.msra.mxu0 0.0
    %2402 = vmatprep.subr.mxu0 0.0
    %2403 = vmatpush1.msra.mxu0 0.0
    %2404 = vmatprep.subr.mxu0 0.0
    %2405 = vmatpush1.msra.mxu0 0.0
    %2406 = vmatprep.subr.mxu0 0.0
    %2407 = vmatpush1.msra.mxu0 0.0
    %2408 = vmatprep.subr.mxu0 0.0
    %2409 = vmatpush1.msra.mxu0 0.0
    %2410 = vmatprep.subr.mxu0 0.0
    %2411 = vmatpush1.msra.mxu0 0.0
    %2412 = vmatprep.subr.mxu0 0.0
    %2413 = vmatpush1.msra.mxu0 0.0
    %2414 = vmatprep.subr.mxu0 0.0
    %2415 = vmatpush1.msra.mxu0 0.0
    %2416 = vmatprep.subr.mxu0 0.0
    %2417 = vmatpush1.msra.mxu0 0.0
    %2418 = vmatprep.mubr.f32.mxu0 0.0
    %2419 = vmatmul.mubr.f32.gmra.mrb[0].mxu0 %v467
    %v2420 = vpop.f32.mrb[0].mxu0
    %v2421 = vadd.f32 0.0, %v2420
    %v2422 = vpop.f32.mrb[0].mxu0
    %2423 = vdwg.mxu0
    %v2424 = vadd.f32 %v2349, %v2421
    %v2425 = vxor.u32 %v2424, 2147483648
    %v2426 = vmul.f32 %v2425, 1.442695
    %v2427 = vpow.pop %v2426
    %v2428 = vadd.f32 %v2427, 1.0
    %v2429 = vrcp.pop %v2428
    %v2430 = vmul.f32 1.0, %v2429
    %v2431 = vtanh.pop %v2424
    %v2432 = vmul.f32 %v2430, 0.0
    %2434 = vrot.lane.b32.xlu0 %v2431, 96
    %v2435 = vpop.permute.xlu0 %2434
    %v2437 = vmul.f32 %v2430, %v2435
    %2439 = vrot.lane.b32.xlu0 %v2437, 16
    %v2440 = vpop.permute.xlu0 %2439
    %v2442 = vadd.f32 %v2432, %v2440
    %v2443 = vtanh.pop %v2442
    %2445 = vrot.lane.b32.xlu0 %v2443, 32
    %v2446 = vpop.permute.xlu0 %2445
    %v2448 = vmul.f32 %v2430, %v2446
    %2450 = vrot.lane.b32.xlu0 %v2448, 80
    %v2451 = vpop.permute.xlu0 %2450
    %v2452 = vsel %vm390, %v2451, 0
    %2454 = vmatprep.subr.mxu0 0.0
    %2455 = vmatpush1.msra.mxu0 %v2352
    %2456 = vmatprep.subr.mxu0 0.0
    %2457 = vmatpush1.msra.mxu0 %v2353
    %2458 = vmatprep.subr.mxu0 0.0
    %2459 = vmatpush1.msra.mxu0 0.0
    %2460 = vmatprep.subr.mxu0 0.0
    %2461 = vmatpush1.msra.mxu0 0.0
    %2462 = vmatprep.subr.mxu0 0.0
    %2463 = vmatpush1.msra.mxu0 0.0
    %2464 = vmatprep.subr.mxu0 0.0
    %2465 = vmatpush1.msra.mxu0 0.0
    %2466 = vmatprep.subr.mxu0 0.0
    %2467 = vmatpush1.msra.mxu0 0.0
    %2468 = vmatprep.subr.mxu0 0.0
    %2469 = vmatpush1.msra.mxu0 0.0
    %2470 = vmatprep.subr.mxu0 0.0
    %2471 = vmatpush1.msra.mxu0 0.0
    %2472 = vmatprep.subr.mxu0 0.0
    %2473 = vmatpush1.msra.mxu0 0.0
    %2474 = vmatprep.subr.mxu0 0.0
    %2475 = vmatpush1.msra.mxu0 0.0
    %2476 = vmatprep.subr.mxu0 0.0
    %2477 = vmatpush1.msra.mxu0 0.0
    %2478 = vmatprep.subr.mxu0 0.0
    %2479 = vmatpush1.msra.mxu0 0.0
    %2480 = vmatprep.subr.mxu0 0.0
    %2481 = vmatpush1.msra.mxu0 0.0
    %2482 = vmatprep.subr.mxu0 0.0
    %2483 = vmatpush1.msra.mxu0 0.0
    %2484 = vmatprep.subr.mxu0 0.0
    %2485 = vmatpush1.msra.mxu0 0.0
    %2486 = vmatprep.subr.mxu0 0.0
    %2487 = vmatpush1.msra.mxu0 0.0
    %2488 = vmatprep.subr.mxu0 0.0
    %2489 = vmatpush1.msra.mxu0 0.0
    %2490 = vmatprep.subr.mxu0 0.0
    %2491 = vmatpush1.msra.mxu0 0.0
    %2492 = vmatprep.subr.mxu0 0.0
    %2493 = vmatpush1.msra.mxu0 0.0
    %2494 = vmatprep.subr.mxu0 0.0
    %2495 = vmatpush1.msra.mxu0 0.0
    %2496 = vmatprep.subr.mxu0 0.0
    %2497 = vmatpush1.msra.mxu0 0.0
    %2498 = vmatprep.subr.mxu0 0.0
    %2499 = vmatpush1.msra.mxu0 0.0
    %2500 = vmatprep.subr.mxu0 0.0
    %2501 = vmatpush1.msra.mxu0 0.0
    %2502 = vmatprep.subr.mxu0 0.0
    %2503 = vmatpush1.msra.mxu0 0.0
    %2504 = vmatprep.subr.mxu0 0.0
    %2505 = vmatpush1.msra.mxu0 0.0
    %2506 = vmatprep.subr.mxu0 0.0
    %2507 = vmatpush1.msra.mxu0 0.0
    %2508 = vmatprep.subr.mxu0 0.0
    %2509 = vmatpush1.msra.mxu0 0.0
    %2510 = vmatprep.subr.mxu0 0.0
    %2511 = vmatpush1.msra.mxu0 0.0
    %2512 = vmatprep.subr.mxu0 0.0
    %2513 = vmatpush1.msra.mxu0 0.0
    %2514 = vmatprep.subr.mxu0 0.0
    %2515 = vmatpush1.msra.mxu0 0.0
    %2516 = vmatprep.subr.mxu0 0.0
    %2517 = vmatpush1.msra.mxu0 0.0
    %2518 = vmatprep.mubr.f32.mxu0 0.0
    %2519 = vmatmul.mubr.f32.gmra.mrb[0].mxu0 %v2452
    %v2520 = vpop.f32.mrb[0].mxu0
    %v2521 = vadd.f32 0.0, %v2520
    %v2522 = vpop.f32.mrb[0].mxu0
    %2523 = vdwg.mxu0
    %v2525 = vrot.slane %v2521, 7
    %v2527 = vadd.f32 %v2349, %v2525
    %v2528 = vxor.u32 %v2527, 2147483648
    %v2529 = vmul.f32 %v2528, 1.442695
    %v2530 = vpow.pop %v2529
    %v2531 = vadd.f32 %v2530, 1.0
    %v2532 = vrcp.pop %v2531
    %v2533 = vmul.f32 1.0, %v2532
    %v2534 = vtanh.pop %v2527
    %v2536 = vrot.slane %v2442, 7
    %v2538 = vmul.f32 %v2533, %v2536
    %2540 = vrot.lane.b32.xlu0 %v2534, 96
    %v2541 = vpop.permute.xlu0 %2540
    %v2543 = vmul.f32 %v2533, %v2541
    %2545 = vrot.lane.b32.xlu0 %v2543, 16
    %v2546 = vpop.permute.xlu0 %2545
    %v2548 = vadd.f32 %v2538, %v2546
    %v2549 = vtanh.pop %v2548
    %2551 = vrot.lane.b32.xlu0 %v2549, 32
    %v2552 = vpop.permute.xlu0 %2551
    %v2554 = vmul.f32 %v2533, %v2552
    %v2556 = vrot.slane %v2554, 1
    %2557 = vrot.lane.b32.xlu0 %v2556, 80
    %v2558 = vpop.permute.xlu0 %2557
    %v2559 = vsel %vm390, %v2558, 0
    %2561 = vmatprep.subr.mxu0 0.0
    %2562 = vmatpush1.msra.mxu0 %v2352
    %2563 = vmatprep.subr.mxu0 0.0
    %2564 = vmatpush1.msra.mxu0 %v2353
    %2565 = vmatprep.subr.mxu0 0.0
    %2566 = vmatpush1.msra.mxu0 0.0
    %2567 = vmatprep.subr.mxu0 0.0
    %2568 = vmatpush1.msra.mxu0 0.0
    %2569 = vmatprep.subr.mxu0 0.0
    %2570 = vmatpush1.msra.mxu0 0.0
    %2571 = vmatprep.subr.mxu0 0.0
    %2572 = vmatpush1.msra.mxu0 0.0
    %2573 = vmatprep.subr.mxu0 0.0
    %2574 = vmatpush1.msra.mxu0 0.0
    %2575 = vmatprep.subr.mxu0 0.0
    %2576 = vmatpush1.msra.mxu0 0.0
    %2577 = vmatprep.subr.mxu0 0.0
    %2578 = vmatpush1.msra.mxu0 0.0
    %2579 = vmatprep.subr.mxu0 0.0
    %2580 = vmatpush1.msra.mxu0 0.0
    %2581 = vmatprep.subr.mxu0 0.0
    %2582 = vmatpush1.msra.mxu0 0.0
    %2583 = vmatprep.subr.mxu0 0.0
    %2584 = vmatpush1.msra.mxu0 0.0
    %2585 = vmatprep.subr.mxu0 0.0
    %2586 = vmatpush1.msra.mxu0 0.0
    %2587 = vmatprep.subr.mxu0 0.0
    %2588 = vmatpush1.msra.mxu0 0.0
    %2589 = vmatprep.subr.mxu0 0.0
    %2590 = vmatpush1.msra.mxu0 0.0
    %2591 = vmatprep.subr.mxu0 0.0
    %2592 = vmatpush1.msra.mxu0 0.0
    %2593 = vmatprep.subr.mxu0 0.0
    %2594 = vmatpush1.msra.mxu0 0.0
    %2595 = vmatprep.subr.mxu0 0.0
    %2596 = vmatpush1.msra.mxu0 0.0
    %2597 = vmatprep.subr.mxu0 0.0
    %2598 = vmatpush1.msra.mxu0 0.0
    %2599 = vmatprep.subr.mxu0 0.0
    %2600 = vmatpush1.msra.mxu0 0.0
    %2601 = vmatprep.subr.mxu0 0.0
    %2602 = vmatpush1.msra.mxu0 0.0
    %2603 = vmatprep.subr.mxu0 0.0
    %2604 = vmatpush1.msra.mxu0 0.0
    %2605 = vmatprep.subr.mxu0 0.0
    %2606 = vmatpush1.msra.mxu0 0.0
    %2607 = vmatprep.subr.mxu0 0.0
    %2608 = vmatpush1.msra.mxu0 0.0
    %2609 = vmatprep.subr.mxu0 0.0
    %2610 = vmatpush1.msra.mxu0 0.0
    %2611 = vmatprep.subr.mxu0 0.0
    %2612 = vmatpush1.msra.mxu0 0.0
    %2613 = vmatprep.subr.mxu0 0.0
    %2614 = vmatpush1.msra.mxu0 0.0
    %2615 = vmatprep.subr.mxu0 0.0
    %2616 = vmatpush1.msra.mxu0 0.0
    %2617 = vmatprep.subr.mxu0 0.0
    %2618 = vmatpush1.msra.mxu0 0.0
    %2619 = vmatprep.subr.mxu0 0.0
    %2620 = vmatpush1.msra.mxu0 0.0
    %2621 = vmatprep.subr.mxu0 0.0
    %2622 = vmatpush1.msra.mxu0 0.0
    %2623 = vmatprep.subr.mxu0 0.0
    %2624 = vmatpush1.msra.mxu0 0.0
    %2625 = vmatprep.mubr.f32.mxu0 0.0
    %2626 = vmatmul.mubr.f32.gmra.mrb[0].mxu0 %v2559
    %v2627 = vpop.f32.mrb[0].mxu0
    %v2628 = vadd.f32 0.0, %v2627
    %v2629 = vpop.f32.mrb[0].mxu0
    %2630 = vdwg.mxu0
    %v2632 = vrot.slane %v2628, 6
    %v2634 = vadd.f32 %v2349, %v2632
    %v2635 = vxor.u32 %v2634, 2147483648
    %v2636 = vmul.f32 %v2635, 1.442695
    %v2637 = vpow.pop %v2636
    %v2638 = vadd.f32 %v2637, 1.0
    %v2639 = vrcp.pop %v2638
    %v2640 = vmul.f32 1.0, %v2639
    %v2641 = vtanh.pop %v2634
    %v2643 = vrot.slane %v2548, 7
    %v2645 = vmul.f32 %v2640, %v2643
    %2647 = vrot.lane.b32.xlu0 %v2641, 96
    %v2648 = vpop.permute.xlu0 %2647
    %v2650 = vmul.f32 %v2640, %v2648
    %2652 = vrot.lane.b32.xlu0 %v2650, 16
    %v2653 = vpop.permute.xlu0 %2652
    %v2655 = vadd.f32 %v2645, %v2653
    %v2656 = vtanh.pop %v2655
    %2658 = vrot.lane.b32.xlu0 %v2656, 32
    %v2659 = vpop.permute.xlu0 %2658
    %v2661 = vmul.f32 %v2640, %v2659
    %v2663 = vrot.slane %v2661, 2
    %2664 = vrot.lane.b32.xlu0 %v2663, 80
    %v2665 = vpop.permute.xlu0 %2664
    %v2666 = vsel %vm390, %v2665, 0
    %2668 = vmatprep.subr.mxu0 0.0
    %2669 = vmatpush1.msra.mxu0 %v2352
    %2670 = vmatprep.subr.mxu0 0.0
    %2671 = vmatpush1.msra.mxu0 %v2353
    %2672 = vmatprep.subr.mxu0 0.0
    %2673 = vmatpush1.msra.mxu0 0.0
    %2674 = vmatprep.subr.mxu0 0.0
    %2675 = vmatpush1.msra.mxu0 0.0
    %2676 = vmatprep.subr.mxu0 0.0
    %2677 = vmatpush1.msra.mxu0 0.0
    %2678 = vmatprep.subr.mxu0 0.0
    %2679 = vmatpush1.msra.mxu0 0.0
    %2680 = vmatprep.subr.mxu0 0.0
    %2681 = vmatpush1.msra.mxu0 0.0
    %2682 = vmatprep.subr.mxu0 0.0
    %2683 = vmatpush1.msra.mxu0 0.0
    %2684 = vmatprep.subr.mxu0 0.0
    %2685 = vmatpush1.msra.mxu0 0.0
    %2686 = vmatprep.subr.mxu0 0.0
    %2687 = vmatpush1.msra.mxu0 0.0
    %2688 = vmatprep.subr.mxu0 0.0
    %2689 = vmatpush1.msra.mxu0 0.0
    %2690 = vmatprep.subr.mxu0 0.0
    %2691 = vmatpush1.msra.mxu0 0.0
    %2692 = vmatprep.subr.mxu0 0.0
    %2693 = vmatpush1.msra.mxu0 0.0
    %2694 = vmatprep.subr.mxu0 0.0
    %2695 = vmatpush1.msra.mxu0 0.0
    %2696 = vmatprep.subr.mxu0 0.0
    %2697 = vmatpush1.msra.mxu0 0.0
    %2698 = vmatprep.subr.mxu0 0.0
    %2699 = vmatpush1.msra.mxu0 0.0
    %2700 = vmatprep.subr.mxu0 0.0
    %2701 = vmatpush1.msra.mxu0 0.0
    %2702 = vmatprep.subr.mxu0 0.0
    %2703 = vmatpush1.msra.mxu0 0.0
    %2704 = vmatprep.subr.mxu0 0.0
    %2705 = vmatpush1.msra.mxu0 0.0
    %2706 = vmatprep.subr.mxu0 0.0
    %2707 = vmatpush1.msra.mxu0 0.0
    %2708 = vmatprep.subr.mxu0 0.0
    %2709 = vmatpush1.msra.mxu0 0.0
    %2710 = vmatprep.subr.mxu0 0.0
    %2711 = vmatpush1.msra.mxu0 0.0
    %2712 = vmatprep.subr.mxu0 0.0
    %2713 = vmatpush1.msra.mxu0 0.0
    %2714 = vmatprep.subr.mxu0 0.0
    %2715 = vmatpush1.msra.mxu0 0.0
    %2716 = vmatprep.subr.mxu0 0.0
    %2717 = vmatpush1.msra.mxu0 0.0
    %2718 = vmatprep.subr.mxu0 0.0
    %2719 = vmatpush1.msra.mxu0 0.0
    %2720 = vmatprep.subr.mxu0 0.0
    %2721 = vmatpush1.msra.mxu0 0.0
    %2722 = vmatprep.subr.mxu0 0.0
    %2723 = vmatpush1.msra.mxu0 0.0
    %2724 = vmatprep.subr.mxu0 0.0
    %2725 = vmatpush1.msra.mxu0 0.0
    %2726 = vmatprep.subr.mxu0 0.0
    %2727 = vmatpush1.msra.mxu0 0.0
    %2728 = vmatprep.subr.mxu0 0.0
    %2729 = vmatpush1.msra.mxu0 0.0
    %2730 = vmatprep.subr.mxu0 0.0
    %2731 = vmatpush1.msra.mxu0 0.0
    %2732 = vmatprep.mubr.f32.mxu0 0.0
    %2733 = vmatmul.mubr.f32.gmra.mrb[0].mxu0 %v2666
    %v2734 = vpop.f32.mrb[0].mxu0
    %v2735 = vadd.f32 0.0, %v2734
    %v2736 = vpop.f32.mrb[0].mxu0
    %2737 = vdwg.mxu0
    %v2739 = vrot.slane %v2735, 5
    %v2741 = vadd.f32 %v2349, %v2739
    %v2742 = vxor.u32 %v2741, 2147483648
    %v2743 = vmul.f32 %v2742, 1.442695
    %v2744 = vpow.pop %v2743
    %v2745 = vadd.f32 %v2744, 1.0
    %v2746 = vrcp.pop %v2745
    %v2747 = vmul.f32 1.0, %v2746
    %v2748 = vtanh.pop %v2741
    %v2750 = vrot.slane %v2655, 7
    %v2752 = vmul.f32 %v2747, %v2750
    %2754 = vrot.lane.b32.xlu0 %v2748, 96
    %v2755 = vpop.permute.xlu0 %2754
    %v2757 = vmul.f32 %v2747, %v2755
    %2759 = vrot.lane.b32.xlu0 %v2757, 16
    %v2760 = vpop.permute.xlu0 %2759
    %v2762 = vadd.f32 %v2752, %v2760
    %v2763 = vtanh.pop %v2762
    %2765 = vrot.lane.b32.xlu0 %v2763, 32
    %v2766 = vpop.permute.xlu0 %2765
    %v2768 = vmul.f32 %v2747, %v2766
    %v2770 = vrot.slane %v2768, 3
    %2771 = vrot.lane.b32.xlu0 %v2770, 80
    %v2772 = vpop.permute.xlu0 %2771
    %v2773 = vsel %vm390, %v2772, 0
    %2775 = vmatprep.subr.mxu0 0.0
    %2776 = vmatpush1.msra.mxu0 %v2352
    %2777 = vmatprep.subr.mxu0 0.0
    %2778 = vmatpush1.msra.mxu0 %v2353
    %2779 = vmatprep.subr.mxu0 0.0
    %2780 = vmatpush1.msra.mxu0 0.0
    %2781 = vmatprep.subr.mxu0 0.0
    %2782 = vmatpush1.msra.mxu0 0.0
    %2783 = vmatprep.subr.mxu0 0.0
    %2784 = vmatpush1.msra.mxu0 0.0
    %2785 = vmatprep.subr.mxu0 0.0
    %2786 = vmatpush1.msra.mxu0 0.0
    %2787 = vmatprep.subr.mxu0 0.0
    %2788 = vmatpush1.msra.mxu0 0.0
    %2789 = vmatprep.subr.mxu0 0.0
    %2790 = vmatpush1.msra.mxu0 0.0
    %2791 = vmatprep.subr.mxu0 0.0
    %2792 = vmatpush1.msra.mxu0 0.0
    %2793 = vmatprep.subr.mxu0 0.0
    %2794 = vmatpush1.msra.mxu0 0.0
    %2795 = vmatprep.subr.mxu0 0.0
    %2796 = vmatpush1.msra.mxu0 0.0
    %2797 = vmatprep.subr.mxu0 0.0
    %2798 = vmatpush1.msra.mxu0 0.0
    %2799 = vmatprep.subr.mxu0 0.0
    %2800 = vmatpush1.msra.mxu0 0.0
    %2801 = vmatprep.subr.mxu0 0.0
    %2802 = vmatpush1.msra.mxu0 0.0
    %2803 = vmatprep.subr.mxu0 0.0
    %2804 = vmatpush1.msra.mxu0 0.0
    %2805 = vmatprep.subr.mxu0 0.0
    %2806 = vmatpush1.msra.mxu0 0.0
    %2807 = vmatprep.subr.mxu0 0.0
    %2808 = vmatpush1.msra.mxu0 0.0
    %2809 = vmatprep.subr.mxu0 0.0
    %2810 = vmatpush1.msra.mxu0 0.0
    %2811 = vmatprep.subr.mxu0 0.0
    %2812 = vmatpush1.msra.mxu0 0.0
    %2813 = vmatprep.subr.mxu0 0.0
    %2814 = vmatpush1.msra.mxu0 0.0
    %2815 = vmatprep.subr.mxu0 0.0
    %2816 = vmatpush1.msra.mxu0 0.0
    %2817 = vmatprep.subr.mxu0 0.0
    %2818 = vmatpush1.msra.mxu0 0.0
    %2819 = vmatprep.subr.mxu0 0.0
    %2820 = vmatpush1.msra.mxu0 0.0
    %2821 = vmatprep.subr.mxu0 0.0
    %2822 = vmatpush1.msra.mxu0 0.0
    %2823 = vmatprep.subr.mxu0 0.0
    %2824 = vmatpush1.msra.mxu0 0.0
    %2825 = vmatprep.subr.mxu0 0.0
    %2826 = vmatpush1.msra.mxu0 0.0
    %2827 = vmatprep.subr.mxu0 0.0
    %2828 = vmatpush1.msra.mxu0 0.0
    %2829 = vmatprep.subr.mxu0 0.0
    %2830 = vmatpush1.msra.mxu0 0.0
    %2831 = vmatprep.subr.mxu0 0.0
    %2832 = vmatpush1.msra.mxu0 0.0
    %2833 = vmatprep.subr.mxu0 0.0
    %2834 = vmatpush1.msra.mxu0 0.0
    %2835 = vmatprep.subr.mxu0 0.0
    %2836 = vmatpush1.msra.mxu0 0.0
    %2837 = vmatprep.subr.mxu0 0.0
    %2838 = vmatpush1.msra.mxu0 0.0
    %2839 = vmatprep.mubr.f32.mxu0 0.0
    %2840 = vmatmul.mubr.f32.gmra.mrb[0].mxu0 %v2773
    %v2841 = vpop.f32.mrb[0].mxu0
    %v2842 = vadd.f32 0.0, %v2841
    %v2843 = vpop.f32.mrb[0].mxu0
    %2844 = vdwg.mxu0
    %v2846 = vrot.slane %v2842, 4
    %v2848 = vadd.f32 %v2349, %v2846
    %v2849 = vxor.u32 %v2848, 2147483648
    %v2850 = vmul.f32 %v2849, 1.442695
    %v2851 = vpow.pop %v2850
    %v2852 = vadd.f32 %v2851, 1.0
    %v2853 = vrcp.pop %v2852
    %v2854 = vmul.f32 1.0, %v2853
    %v2855 = vtanh.pop %v2848
    %v2857 = vrot.slane %v2762, 7
    %v2859 = vmul.f32 %v2854, %v2857
    %2861 = vrot.lane.b32.xlu0 %v2855, 96
    %v2862 = vpop.permute.xlu0 %2861
    %v2864 = vmul.f32 %v2854, %v2862
    %2866 = vrot.lane.b32.xlu0 %v2864, 16
    %v2867 = vpop.permute.xlu0 %2866
    %v2869 = vadd.f32 %v2859, %v2867
    %v2870 = vtanh.pop %v2869
    %2872 = vrot.lane.b32.xlu0 %v2870, 32
    %v2873 = vpop.permute.xlu0 %2872
    %v2875 = vmul.f32 %v2854, %v2873
    %v2877 = vrot.slane %v2875, 4
    %2878 = vrot.lane.b32.xlu0 %v2877, 80
    %v2879 = vpop.permute.xlu0 %2878
    %v2880 = vsel %vm390, %v2879, 0
    %2882 = vmatprep.subr.mxu0 0.0
    %2883 = vmatpush1.msra.mxu0 %v2352
    %2884 = vmatprep.subr.mxu0 0.0
    %2885 = vmatpush1.msra.mxu0 %v2353
    %2886 = vmatprep.subr.mxu0 0.0
    %2887 = vmatpush1.msra.mxu0 0.0
    %2888 = vmatprep.subr.mxu0 0.0
    %2889 = vmatpush1.msra.mxu0 0.0
    %2890 = vmatprep.subr.mxu0 0.0
    %2891 = vmatpush1.msra.mxu0 0.0
    %2892 = vmatprep.subr.mxu0 0.0
    %2893 = vmatpush1.msra.mxu0 0.0
    %2894 = vmatprep.subr.mxu0 0.0
    %2895 = vmatpush1.msra.mxu0 0.0
    %2896 = vmatprep.subr.mxu0 0.0
    %2897 = vmatpush1.msra.mxu0 0.0
    %2898 = vmatprep.subr.mxu0 0.0
    %2899 = vmatpush1.msra.mxu0 0.0
    %2900 = vmatprep.subr.mxu0 0.0
    %2901 = vmatpush1.msra.mxu0 0.0
    %2902 = vmatprep.subr.mxu0 0.0
    %2903 = vmatpush1.msra.mxu0 0.0
    %2904 = vmatprep.subr.mxu0 0.0
    %2905 = vmatpush1.msra.mxu0 0.0
    %2906 = vmatprep.subr.mxu0 0.0
    %2907 = vmatpush1.msra.mxu0 0.0
    %2908 = vmatprep.subr.mxu0 0.0
    %2909 = vmatpush1.msra.mxu0 0.0
    %2910 = vmatprep.subr.mxu0 0.0
    %2911 = vmatpush1.msra.mxu0 0.0
    %2912 = vmatprep.subr.mxu0 0.0
    %2913 = vmatpush1.msra.mxu0 0.0
    %2914 = vmatprep.subr.mxu0 0.0
    %2915 = vmatpush1.msra.mxu0 0.0
    %2916 = vmatprep.subr.mxu0 0.0
    %2917 = vmatpush1.msra.mxu0 0.0
    %2918 = vmatprep.subr.mxu0 0.0
    %2919 = vmatpush1.msra.mxu0 0.0
    %2920 = vmatprep.subr.mxu0 0.0
    %2921 = vmatpush1.msra.mxu0 0.0
    %2922 = vmatprep.subr.mxu0 0.0
    %2923 = vmatpush1.msra.mxu0 0.0
    %2924 = vmatprep.subr.mxu0 0.0
    %2925 = vmatpush1.msra.mxu0 0.0
    %2926 = vmatprep.subr.mxu0 0.0
    %2927 = vmatpush1.msra.mxu0 0.0
    %2928 = vmatprep.subr.mxu0 0.0
    %2929 = vmatpush1.msra.mxu0 0.0
    %2930 = vmatprep.subr.mxu0 0.0
    %2931 = vmatpush1.msra.mxu0 0.0
    %2932 = vmatprep.subr.mxu0 0.0
    %2933 = vmatpush1.msra.mxu0 0.0
    %2934 = vmatprep.subr.mxu0 0.0
    %2935 = vmatpush1.msra.mxu0 0.0
    %2936 = vmatprep.subr.mxu0 0.0
    %2937 = vmatpush1.msra.mxu0 0.0
    %2938 = vmatprep.subr.mxu0 0.0
    %2939 = vmatpush1.msra.mxu0 0.0
    %2940 = vmatprep.subr.mxu0 0.0
    %2941 = vmatpush1.msra.mxu0 0.0
    %2942 = vmatprep.subr.mxu0 0.0
    %2943 = vmatpush1.msra.mxu0 0.0
    %2944 = vmatprep.subr.mxu0 0.0
    %2945 = vmatpush1.msra.mxu0 0.0
    %2946 = vmatprep.mubr.f32.mxu0 0.0
    %2947 = vmatmul.mubr.f32.gmra.mrb[0].mxu0 %v2880
    %v2948 = vpop.f32.mrb[0].mxu0
    %v2949 = vadd.f32 0.0, %v2948
    %v2950 = vpop.f32.mrb[0].mxu0
    %2951 = vdwg.mxu0
    %v2953 = vrot.slane %v2949, 3
    %v2955 = vadd.f32 %v2349, %v2953
    %v2956 = vxor.u32 %v2955, 2147483648
    %v2957 = vmul.f32 %v2956, 1.442695
    %v2958 = vpow.pop %v2957
    %v2959 = vadd.f32 %v2958, 1.0
    %v2960 = vrcp.pop %v2959
    %v2961 = vmul.f32 1.0, %v2960
    %v2962 = vtanh.pop %v2955
    %v2964 = vrot.slane %v2869, 7
    %v2966 = vmul.f32 %v2961, %v2964
    %2968 = vrot.lane.b32.xlu0 %v2962, 96
    %v2969 = vpop.permute.xlu0 %2968
    %v2971 = vmul.f32 %v2961, %v2969
    %2973 = vrot.lane.b32.xlu0 %v2971, 16
    %v2974 = vpop.permute.xlu0 %2973
    %v2976 = vadd.f32 %v2966, %v2974
    %v2977 = vtanh.pop %v2976
    %2979 = vrot.lane.b32.xlu0 %v2977, 32
    %v2980 = vpop.permute.xlu0 %2979
    %v2982 = vmul.f32 %v2961, %v2980
    %v2984 = vrot.slane %v2982, 5
    %2985 = vrot.lane.b32.xlu0 %v2984, 80
    %v2986 = vpop.permute.xlu0 %2985
    %v2987 = vsel %vm390, %v2986, 0
    %2989 = vmatprep.subr.mxu0 0.0
    %2990 = vmatpush1.msra.mxu0 %v2352
    %2991 = vmatprep.subr.mxu0 0.0
    %2992 = vmatpush1.msra.mxu0 %v2353
    %2993 = vmatprep.subr.mxu0 0.0
    %2994 = vmatpush1.msra.mxu0 0.0
    %2995 = vmatprep.subr.mxu0 0.0
    %2996 = vmatpush1.msra.mxu0 0.0
    %2997 = vmatprep.subr.mxu0 0.0
    %2998 = vmatpush1.msra.mxu0 0.0
    %2999 = vmatprep.subr.mxu0 0.0
    %3000 = vmatpush1.msra.mxu0 0.0
    %3001 = vmatprep.subr.mxu0 0.0
    %3002 = vmatpush1.msra.mxu0 0.0
    %3003 = vmatprep.subr.mxu0 0.0
    %3004 = vmatpush1.msra.mxu0 0.0
    %3005 = vmatprep.subr.mxu0 0.0
    %3006 = vmatpush1.msra.mxu0 0.0
    %3007 = vmatprep.subr.mxu0 0.0
    %3008 = vmatpush1.msra.mxu0 0.0
    %3009 = vmatprep.subr.mxu0 0.0
    %3010 = vmatpush1.msra.mxu0 0.0
    %3011 = vmatprep.subr.mxu0 0.0
    %3012 = vmatpush1.msra.mxu0 0.0
    %3013 = vmatprep.subr.mxu0 0.0
    %3014 = vmatpush1.msra.mxu0 0.0
    %3015 = vmatprep.subr.mxu0 0.0
    %3016 = vmatpush1.msra.mxu0 0.0
    %3017 = vmatprep.subr.mxu0 0.0
    %3018 = vmatpush1.msra.mxu0 0.0
    %3019 = vmatprep.subr.mxu0 0.0
    %3020 = vmatpush1.msra.mxu0 0.0
    %3021 = vmatprep.subr.mxu0 0.0
    %3022 = vmatpush1.msra.mxu0 0.0
    %3023 = vmatprep.subr.mxu0 0.0
    %3024 = vmatpush1.msra.mxu0 0.0
    %3025 = vmatprep.subr.mxu0 0.0
    %3026 = vmatpush1.msra.mxu0 0.0
    %3027 = vmatprep.subr.mxu0 0.0
    %3028 = vmatpush1.msra.mxu0 0.0
    %3029 = vmatprep.subr.mxu0 0.0
    %3030 = vmatpush1.msra.mxu0 0.0
    %3031 = vmatprep.subr.mxu0 0.0
    %3032 = vmatpush1.msra.mxu0 0.0
    %3033 = vmatprep.subr.mxu0 0.0
    %3034 = vmatpush1.msra.mxu0 0.0
    %3035 = vmatprep.subr.mxu0 0.0
    %3036 = vmatpush1.msra.mxu0 0.0
    %3037 = vmatprep.subr.mxu0 0.0
    %3038 = vmatpush1.msra.mxu0 0.0
    %3039 = vmatprep.subr.mxu0 0.0
    %3040 = vmatpush1.msra.mxu0 0.0
    %3041 = vmatprep.subr.mxu0 0.0
    %3042 = vmatpush1.msra.mxu0 0.0
    %3043 = vmatprep.subr.mxu0 0.0
    %3044 = vmatpush1.msra.mxu0 0.0
    %3045 = vmatprep.subr.mxu0 0.0
    %3046 = vmatpush1.msra.mxu0 0.0
    %3047 = vmatprep.subr.mxu0 0.0
    %3048 = vmatpush1.msra.mxu0 0.0
    %3049 = vmatprep.subr.mxu0 0.0
    %3050 = vmatpush1.msra.mxu0 0.0
    %3051 = vmatprep.subr.mxu0 0.0
    %3052 = vmatpush1.msra.mxu0 0.0
    %3053 = vmatprep.mubr.f32.mxu0 0.0
    %3054 = vmatmul.mubr.f32.gmra.mrb[0].mxu0 %v2987
    %v3055 = vpop.f32.mrb[0].mxu0
    %v3056 = vadd.f32 0.0, %v3055
    %v3057 = vpop.f32.mrb[0].mxu0
    %3058 = vdwg.mxu0
    %v3060 = vrot.slane %v3056, 2
    %v3062 = vadd.f32 %v2349, %v3060
    %v3063 = vxor.u32 %v3062, 2147483648
    %v3064 = vmul.f32 %v3063, 1.442695
    %v3065 = vpow.pop %v3064
    %v3066 = vadd.f32 %v3065, 1.0
    %v3067 = vrcp.pop %v3066
    %v3068 = vmul.f32 1.0, %v3067
    %v3069 = vtanh.pop %v3062
    %v3071 = vrot.slane %v2976, 7
    %v3073 = vmul.f32 %v3068, %v3071
    %3075 = vrot.lane.b32.xlu0 %v3069, 96
    %v3076 = vpop.permute.xlu0 %3075
    %v3078 = vmul.f32 %v3068, %v3076
    %3080 = vrot.lane.b32.xlu0 %v3078, 16
    %v3081 = vpop.permute.xlu0 %3080
    %v3083 = vadd.f32 %v3073, %v3081
    %v3084 = vtanh.pop %v3083
    %3086 = vrot.lane.b32.xlu0 %v3084, 32
    %v3087 = vpop.permute.xlu0 %3086
    %v3089 = vmul.f32 %v3068, %v3087
    %v3091 = vrot.slane %v3089, 6
    %3092 = vrot.lane.b32.xlu0 %v3091, 80
    %v3093 = vpop.permute.xlu0 %3092
    %v3094 = vsel %vm390, %v3093, 0
    %3096 = vmatprep.subr.mxu0 0.0
    %3097 = vmatpush1.msra.mxu0 %v2352
    %3098 = vmatprep.subr.mxu0 0.0
    %3099 = vmatpush1.msra.mxu0 %v2353
    %3100 = vmatprep.subr.mxu0 0.0
    %3101 = vmatpush1.msra.mxu0 0.0
    %3102 = vmatprep.subr.mxu0 0.0
    %3103 = vmatpush1.msra.mxu0 0.0
    %3104 = vmatprep.subr.mxu0 0.0
    %3105 = vmatpush1.msra.mxu0 0.0
    %3106 = vmatprep.subr.mxu0 0.0
    %3107 = vmatpush1.msra.mxu0 0.0
    %3108 = vmatprep.subr.mxu0 0.0
    %3109 = vmatpush1.msra.mxu0 0.0
    %3110 = vmatprep.subr.mxu0 0.0
    %3111 = vmatpush1.msra.mxu0 0.0
    %3112 = vmatprep.subr.mxu0 0.0
    %3113 = vmatpush1.msra.mxu0 0.0
    %3114 = vmatprep.subr.mxu0 0.0
    %3115 = vmatpush1.msra.mxu0 0.0
    %3116 = vmatprep.subr.mxu0 0.0
    %3117 = vmatpush1.msra.mxu0 0.0
    %3118 = vmatprep.subr.mxu0 0.0
    %3119 = vmatpush1.msra.mxu0 0.0
    %3120 = vmatprep.subr.mxu0 0.0
    %3121 = vmatpush1.msra.mxu0 0.0
    %3122 = vmatprep.subr.mxu0 0.0
    %3123 = vmatpush1.msra.mxu0 0.0
    %3124 = vmatprep.subr.mxu0 0.0
    %3125 = vmatpush1.msra.mxu0 0.0
    %3126 = vmatprep.subr.mxu0 0.0
    %3127 = vmatpush1.msra.mxu0 0.0
    %3128 = vmatprep.subr.mxu0 0.0
    %3129 = vmatpush1.msra.mxu0 0.0
    %3130 = vmatprep.subr.mxu0 0.0
    %3131 = vmatpush1.msra.mxu0 0.0
    %3132 = vmatprep.subr.mxu0 0.0
    %3133 = vmatpush1.msra.mxu0 0.0
    %3134 = vmatprep.subr.mxu0 0.0
    %3135 = vmatpush1.msra.mxu0 0.0
    %3136 = vmatprep.subr.mxu0 0.0
    %3137 = vmatpush1.msra.mxu0 0.0
    %3138 = vmatprep.subr.mxu0 0.0
    %3139 = vmatpush1.msra.mxu0 0.0
    %3140 = vmatprep.subr.mxu0 0.0
    %3141 = vmatpush1.msra.mxu0 0.0
    %3142 = vmatprep.subr.mxu0 0.0
    %3143 = vmatpush1.msra.mxu0 0.0
    %3144 = vmatprep.subr.mxu0 0.0
    %3145 = vmatpush1.msra.mxu0 0.0
    %3146 = vmatprep.subr.mxu0 0.0
    %3147 = vmatpush1.msra.mxu0 0.0
    %3148 = vmatprep.subr.mxu0 0.0
    %3149 = vmatpush1.msra.mxu0 0.0
    %3150 = vmatprep.subr.mxu0 0.0
    %3151 = vmatpush1.msra.mxu0 0.0
    %3152 = vmatprep.subr.mxu0 0.0
    %3153 = vmatpush1.msra.mxu0 0.0
    %3154 = vmatprep.subr.mxu0 0.0
    %3155 = vmatpush1.msra.mxu0 0.0
    %3156 = vmatprep.subr.mxu0 0.0
    %3157 = vmatpush1.msra.mxu0 0.0
    %3158 = vmatprep.subr.mxu0 0.0
    %3159 = vmatpush1.msra.mxu0 0.0
    %3160 = vmatprep.mubr.f32.mxu0 0.0
    %3161 = vmatmul.mubr.f32.gmra.mrb[0].mxu0 %v3094
    %v3162 = vpop.f32.mrb[0].mxu0
    %v3163 = vadd.f32 0.0, %v3162
    %v3164 = vpop.f32.mrb[0].mxu0
    %3165 = vdwg.mxu0
    %v3167 = vrot.slane %v3163, 1
    %v3169 = vadd.f32 %v2349, %v3167
    %v3170 = vxor.u32 %v3169, 2147483648
    %v3171 = vmul.f32 %v3170, 1.442695
    %v3172 = vpow.pop %v3171
    %v3173 = vadd.f32 %v3172, 1.0
    %v3174 = vrcp.pop %v3173
    %v3175 = vmul.f32 1.0, %v3174
    %v3176 = vtanh.pop %v3169
    %v3178 = vrot.slane %v3083, 7
    %v3180 = vmul.f32 %v3175, %v3178
    %3182 = vrot.lane.b32.xlu0 %v3176, 96
    %v3183 = vpop.permute.xlu0 %3182
    %v3185 = vmul.f32 %v3175, %v3183
    %3187 = vrot.lane.b32.xlu0 %v3185, 16
    %v3188 = vpop.permute.xlu0 %3187
    %v3190 = vadd.f32 %v3180, %v3188
    %v3191 = vtanh.pop %v3190
    %3193 = vrot.lane.b32.xlu0 %v3191, 32
    %v3194 = vpop.permute.xlu0 %3193
    %v3196 = vmul.f32 %v3175, %v3194
    %v3197 = vsel %vm1312, %v2448, %v2554
    %v3198 = vsel %vm1314, %v3197, %v2661
    %v3199 = vsel %vm1316, %v3198, %v2768
    %v3200 = vsel %vm1318, %v3199, %v2875
    %v3201 = vsel %vm1320, %v3200, %v2982
    %v3202 = vsel %vm1322, %v3201, %v3089
    %v3203 = vsel %vm1324, %v3202, %v3196
    %v3204 = vld [vmem:[%s27] sm:$0xff]
    %v3205 = vld [vmem:[%s27 + $0x8] sm:$0xff]
    %v3206 = vld [vmem:[%s27 + $0x10] sm:$0xff]
    %v3207 = vld [vmem:[%s27 + $0x18] sm:$0xff]
    %v3208 = vld [vmem:[#allocation17] sm:$0x1]
    %v3210 = vlaneseq
    %v3211 = vshrl.u32 %v3210, 7
    %v3212 = vsub.s32 0, %v3211
    %v3213 = vrot.slane %v3208, %v3212
    %3215 = vmatprep.subr.mxu0 0.0
    %3216 = vmatpush1.msra.mxu0 %v3204
    %3217 = vmatprep.subr.mxu0 0.0
    %3218 = vmatpush1.msra.mxu0 %v3205
    %3219 = vmatprep.subr.mxu0 0.0
    %3220 = vmatpush1.msra.mxu0 %v3206
    %3221 = vmatprep.subr.mxu0 0.0
    %3222 = vmatpush1.msra.mxu0 %v3207
    %3223 = vmatprep.subr.mxu0 0.0
    %3224 = vmatpush1.msra.mxu0 0.0
    %3225 = vmatprep.subr.mxu0 0.0
    %3226 = vmatpush1.msra.mxu0 0.0
    %3227 = vmatprep.subr.mxu0 0.0
    %3228 = vmatpush1.msra.mxu0 0.0
    %3229 = vmatprep.subr.mxu0 0.0
    %3230 = vmatpush1.msra.mxu0 0.0
    %3231 = vmatprep.subr.mxu0 0.0
    %3232 = vmatpush1.msra.mxu0 0.0
    %3233 = vmatprep.subr.mxu0 0.0
    %3234 = vmatpush1.msra.mxu0 0.0
    %3235 = vmatprep.subr.mxu0 0.0
    %3236 = vmatpush1.msra.mxu0 0.0
    %3237 = vmatprep.subr.mxu0 0.0
    %3238 = vmatpush1.msra.mxu0 0.0
    %3239 = vmatprep.subr.mxu0 0.0
    %3240 = vmatpush1.msra.mxu0 0.0
    %3241 = vmatprep.subr.mxu0 0.0
    %3242 = vmatpush1.msra.mxu0 0.0
    %3243 = vmatprep.subr.mxu0 0.0
    %3244 = vmatpush1.msra.mxu0 0.0
    %3245 = vmatprep.subr.mxu0 0.0
    %3246 = vmatpush1.msra.mxu0 0.0
    %3247 = vmatprep.subr.mxu0 0.0
    %3248 = vmatpush1.msra.mxu0 0.0
    %3249 = vmatprep.subr.mxu0 0.0
    %3250 = vmatpush1.msra.mxu0 0.0
    %3251 = vmatprep.subr.mxu0 0.0
    %3252 = vmatpush1.msra.mxu0 0.0
    %3253 = vmatprep.subr.mxu0 0.0
    %3254 = vmatpush1.msra.mxu0 0.0
    %3255 = vmatprep.subr.mxu0 0.0
    %3256 = vmatpush1.msra.mxu0 0.0
    %3257 = vmatprep.subr.mxu0 0.0
    %3258 = vmatpush1.msra.mxu0 0.0
    %3259 = vmatprep.subr.mxu0 0.0
    %3260 = vmatpush1.msra.mxu0 0.0
    %3261 = vmatprep.subr.mxu0 0.0
    %3262 = vmatpush1.msra.mxu0 0.0
    %3263 = vmatprep.subr.mxu0 0.0
    %3264 = vmatpush1.msra.mxu0 0.0
    %3265 = vmatprep.subr.mxu0 0.0
    %3266 = vmatpush1.msra.mxu0 0.0
    %3267 = vmatprep.subr.mxu0 0.0
    %3268 = vmatpush1.msra.mxu0 0.0
    %3269 = vmatprep.subr.mxu0 0.0
    %3270 = vmatpush1.msra.mxu0 0.0
    %3271 = vmatprep.subr.mxu0 0.0
    %3272 = vmatpush1.msra.mxu0 0.0
    %3273 = vmatprep.subr.mxu0 0.0
    %3274 = vmatpush1.msra.mxu0 0.0
    %3275 = vmatprep.subr.mxu0 0.0
    %3276 = vmatpush1.msra.mxu0 0.0
    %3277 = vmatprep.subr.mxu0 0.0
    %3278 = vmatpush1.msra.mxu0 0.0
    %3279 = vmatprep.mubr.f32.mxu0 0.0
    %3280 = vmatmul.mubr.f32.gmra.mrb[0].mxu0 %v2280
    %v3281 = vpop.f32.mrb[0].mxu0
    %v3282 = vadd.f32 %v3213, %v3281
    %v3283 = vpop.f32.mrb[0].mxu0
    %3284 = vdwg.mxu0
    %v3285 = vld [vmem:[#allocation16] sm:$0xff]
    %v3286 = vld [vmem:[#allocation16 + $0x8] sm:$0xff]
    %3287 = vmatprep.subr.mxu0 0.0
    %3288 = vmatpush1.msra.mxu0 %v3285
    %3289 = vmatprep.subr.mxu0 0.0
    %3290 = vmatpush1.msra.mxu0 %v3286
    %3291 = vmatprep.subr.mxu0 0.0
    %3292 = vmatpush1.msra.mxu0 0.0
    %3293 = vmatprep.subr.mxu0 0.0
    %3294 = vmatpush1.msra.mxu0 0.0
    %3295 = vmatprep.subr.mxu0 0.0
    %3296 = vmatpush1.msra.mxu0 0.0
    %3297 = vmatprep.subr.mxu0 0.0
    %3298 = vmatpush1.msra.mxu0 0.0
    %3299 = vmatprep.subr.mxu0 0.0
    %3300 = vmatpush1.msra.mxu0 0.0
    %3301 = vmatprep.subr.mxu0 0.0
    %3302 = vmatpush1.msra.mxu0 0.0
    %3303 = vmatprep.subr.mxu0 0.0
    %3304 = vmatpush1.msra.mxu0 0.0
    %3305 = vmatprep.subr.mxu0 0.0
    %3306 = vmatpush1.msra.mxu0 0.0
    %3307 = vmatprep.subr.mxu0 0.0
    %3308 = vmatpush1.msra.mxu0 0.0
    %3309 = vmatprep.subr.mxu0 0.0
    %3310 = vmatpush1.msra.mxu0 0.0
    %3311 = vmatprep.subr.mxu0 0.0
    %3312 = vmatpush1.msra.mxu0 0.0
    %3313 = vmatprep.subr.mxu0 0.0
    %3314 = vmatpush1.msra.mxu0 0.0
    %3315 = vmatprep.subr.mxu0 0.0
    %3316 = vmatpush1.msra.mxu0 0.0
    %3317 = vmatprep.subr.mxu0 0.0
    %3318 = vmatpush1.msra.mxu0 0.0
    %3319 = vmatprep.subr.mxu0 0.0
    %3320 = vmatpush1.msra.mxu0 0.0
    %3321 = vmatprep.subr.mxu0 0.0
    %3322 = vmatpush1.msra.mxu0 0.0
    %3323 = vmatprep.subr.mxu0 0.0
    %3324 = vmatpush1.msra.mxu0 0.0
    %3325 = vmatprep.subr.mxu0 0.0
    %3326 = vmatpush1.msra.mxu0 0.0
    %3327 = vmatprep.subr.mxu0 0.0
    %3328 = vmatpush1.msra.mxu0 0.0
    %3329 = vmatprep.subr.mxu0 0.0
    %3330 = vmatpush1.msra.mxu0 0.0
    %3331 = vmatprep.subr.mxu0 0.0
    %3332 = vmatpush1.msra.mxu0 0.0
    %3333 = vmatprep.subr.mxu0 0.0
    %3334 = vmatpush1.msra.mxu0 0.0
    %3335 = vmatprep.subr.mxu0 0.0
    %3336 = vmatpush1.msra.mxu0 0.0
    %3337 = vmatprep.subr.mxu0 0.0
    %3338 = vmatpush1.msra.mxu0 0.0
    %3339 = vmatprep.subr.mxu0 0.0
    %3340 = vmatpush1.msra.mxu0 0.0
    %3341 = vmatprep.subr.mxu0 0.0
    %3342 = vmatpush1.msra.mxu0 0.0
    %3343 = vmatprep.subr.mxu0 0.0
    %3344 = vmatpush1.msra.mxu0 0.0
    %3345 = vmatprep.subr.mxu0 0.0
    %3346 = vmatpush1.msra.mxu0 0.0
    %3347 = vmatprep.subr.mxu0 0.0
    %3348 = vmatpush1.msra.mxu0 0.0
    %3349 = vmatprep.subr.mxu0 0.0
    %3350 = vmatpush1.msra.mxu0 0.0
    %3351 = vmatprep.mubr.f32.mxu0 0.0
    %3352 = vmatmul.mubr.f32.gmra.mrb[0].mxu0 %v467
    %v3353 = vpop.f32.mrb[0].mxu0
    %v3354 = vadd.f32 0.0, %v3353
    %v3355 = vpop.f32.mrb[0].mxu0
    %3356 = vdwg.mxu0
    %v3358 = vrot.slane %v3354, 1
    %v3360 = vadd.f32 %v3282, %v3358
    %v3361 = vxor.u32 %v3360, 2147483648
    %v3362 = vmul.f32 %v3361, 1.442695
    %v3363 = vpow.pop %v3362
    %v3364 = vadd.f32 %v3363, 1.0
    %v3365 = vrcp.pop %v3364
    %v3366 = vmul.f32 1.0, %v3365
    %v3367 = vtanh.pop %v3360
    %v3368 = vmul.f32 %v3366, 0.0
    %3370 = vrot.lane.b32.xlu0 %v3367, 96
    %v3371 = vpop.permute.xlu0 %3370
    %v3373 = vmul.f32 %v3366, %v3371
    %3375 = vrot.lane.b32.xlu0 %v3373, 16
    %v3376 = vpop.permute.xlu0 %3375
    %v3378 = vadd.f32 %v3368, %v3376
    %v3379 = vtanh.pop %v3378
    %3381 = vrot.lane.b32.xlu0 %v3379, 32
    %v3382 = vpop.permute.xlu0 %3381
    %v3384 = vmul.f32 %v3366, %v3382
    %v3386 = vrot.slane %v3384, 7
    %3387 = vrot.lane.b32.xlu0 %v3386, 80
    %v3388 = vpop.permute.xlu0 %3387
    %v3389 = vsel %vm390, %v3388, 0
    %3391 = vmatprep.subr.mxu0 0.0
    %3392 = vmatpush1.msra.mxu0 %v3285
    %3393 = vmatprep.subr.mxu0 0.0
    %3394 = vmatpush1.msra.mxu0 %v3286
    %3395 = vmatprep.subr.mxu0 0.0
    %3396 = vmatpush1.msra.mxu0 0.0
    %3397 = vmatprep.subr.mxu0 0.0
    %3398 = vmatpush1.msra.mxu0 0.0
    %3399 = vmatprep.subr.mxu0 0.0
    %3400 = vmatpush1.msra.mxu0 0.0
    %3401 = vmatprep.subr.mxu0 0.0
    %3402 = vmatpush1.msra.mxu0 0.0
    %3403 = vmatprep.subr.mxu0 0.0
    %3404 = vmatpush1.msra.mxu0 0.0
    %3405 = vmatprep.subr.mxu0 0.0
    %3406 = vmatpush1.msra.mxu0 0.0
    %3407 = vmatprep.subr.mxu0 0.0
    %3408 = vmatpush1.msra.mxu0 0.0
    %3409 = vmatprep.subr.mxu0 0.0
    %3410 = vmatpush1.msra.mxu0 0.0
    %3411 = vmatprep.subr.mxu0 0.0
    %3412 = vmatpush1.msra.mxu0 0.0
    %3413 = vmatprep.subr.mxu0 0.0
    %3414 = vmatpush1.msra.mxu0 0.0
    %3415 = vmatprep.subr.mxu0 0.0
    %3416 = vmatpush1.msra.mxu0 0.0
    %3417 = vmatprep.subr.mxu0 0.0
    %3418 = vmatpush1.msra.mxu0 0.0
    %3419 = vmatprep.subr.mxu0 0.0
    %3420 = vmatpush1.msra.mxu0 0.0
    %3421 = vmatprep.subr.mxu0 0.0
    %3422 = vmatpush1.msra.mxu0 0.0
    %3423 = vmatprep.subr.mxu0 0.0
    %3424 = vmatpush1.msra.mxu0 0.0
    %3425 = vmatprep.subr.mxu0 0.0
    %3426 = vmatpush1.msra.mxu0 0.0
    %3427 = vmatprep.subr.mxu0 0.0
    %3428 = vmatpush1.msra.mxu0 0.0
    %3429 = vmatprep.subr.mxu0 0.0
    %3430 = vmatpush1.msra.mxu0 0.0
    %3431 = vmatprep.subr.mxu0 0.0
    %3432 = vmatpush1.msra.mxu0 0.0
    %3433 = vmatprep.subr.mxu0 0.0
    %3434 = vmatpush1.msra.mxu0 0.0
    %3435 = vmatprep.subr.mxu0 0.0
    %3436 = vmatpush1.msra.mxu0 0.0
    %3437 = vmatprep.subr.mxu0 0.0
    %3438 = vmatpush1.msra.mxu0 0.0
    %3439 = vmatprep.subr.mxu0 0.0
    %3440 = vmatpush1.msra.mxu0 0.0
    %3441 = vmatprep.subr.mxu0 0.0
    %3442 = vmatpush1.msra.mxu0 0.0
    %3443 = vmatprep.subr.mxu0 0.0
    %3444 = vmatpush1.msra.mxu0 0.0
    %3445 = vmatprep.subr.mxu0 0.0
    %3446 = vmatpush1.msra.mxu0 0.0
    %3447 = vmatprep.subr.mxu0 0.0
    %3448 = vmatpush1.msra.mxu0 0.0
    %3449 = vmatprep.subr.mxu0 0.0
    %3450 = vmatpush1.msra.mxu0 0.0
    %3451 = vmatprep.subr.mxu0 0.0
    %3452 = vmatpush1.msra.mxu0 0.0
    %3453 = vmatprep.subr.mxu0 0.0
    %3454 = vmatpush1.msra.mxu0 0.0
    %3455 = vmatprep.mubr.f32.mxu0 0.0
    %3456 = vmatmul.mubr.f32.gmra.mrb[0].mxu0 %v3389
    %v3457 = vpop.f32.mrb[0].mxu0
    %v3458 = vadd.f32 0.0, %v3457
    %v3459 = vpop.f32.mrb[0].mxu0
    %3460 = vdwg.mxu0
    %v3462 = vrot.slane %v3458, 2
    %v3464 = vadd.f32 %v3282, %v3462
    %v3465 = vxor.u32 %v3464, 2147483648
    %v3466 = vmul.f32 %v3465, 1.442695
    %v3467 = vpow.pop %v3466
    %v3468 = vadd.f32 %v3467, 1.0
    %v3469 = vrcp.pop %v3468
    %v3470 = vmul.f32 1.0, %v3469
    %v3471 = vtanh.pop %v3464
    %v3473 = vrot.slane %v3378, 1
    %v3475 = vmul.f32 %v3470, %v3473
    %3477 = vrot.lane.b32.xlu0 %v3471, 96
    %v3478 = vpop.permute.xlu0 %3477
    %v3480 = vmul.f32 %v3470, %v3478
    %3482 = vrot.lane.b32.xlu0 %v3480, 16
    %v3483 = vpop.permute.xlu0 %3482
    %v3485 = vadd.f32 %v3475, %v3483
    %v3486 = vtanh.pop %v3485
    %3488 = vrot.lane.b32.xlu0 %v3486, 32
    %v3489 = vpop.permute.xlu0 %3488
    %v3491 = vmul.f32 %v3470, %v3489
    %v3493 = vrot.slane %v3491, 6
    %3494 = vrot.lane.b32.xlu0 %v3493, 80
    %v3495 = vpop.permute.xlu0 %3494
    %v3496 = vsel %vm390, %v3495, 0
    %3498 = vmatprep.subr.mxu0 0.0
    %3499 = vmatpush1.msra.mxu0 %v3285
    %3500 = vmatprep.subr.mxu0 0.0
    %3501 = vmatpush1.msra.mxu0 %v3286
    %3502 = vmatprep.subr.mxu0 0.0
    %3503 = vmatpush1.msra.mxu0 0.0
    %3504 = vmatprep.subr.mxu0 0.0
    %3505 = vmatpush1.msra.mxu0 0.0
    %3506 = vmatprep.subr.mxu0 0.0
    %3507 = vmatpush1.msra.mxu0 0.0
    %3508 = vmatprep.subr.mxu0 0.0
    %3509 = vmatpush1.msra.mxu0 0.0
    %3510 = vmatprep.subr.mxu0 0.0
    %3511 = vmatpush1.msra.mxu0 0.0
    %3512 = vmatprep.subr.mxu0 0.0
    %3513 = vmatpush1.msra.mxu0 0.0
    %3514 = vmatprep.subr.mxu0 0.0
    %3515 = vmatpush1.msra.mxu0 0.0
    %3516 = vmatprep.subr.mxu0 0.0
    %3517 = vmatpush1.msra.mxu0 0.0
    %3518 = vmatprep.subr.mxu0 0.0
    %3519 = vmatpush1.msra.mxu0 0.0
    %3520 = vmatprep.subr.mxu0 0.0
    %3521 = vmatpush1.msra.mxu0 0.0
    %3522 = vmatprep.subr.mxu0 0.0
    %3523 = vmatpush1.msra.mxu0 0.0
    %3524 = vmatprep.subr.mxu0 0.0
    %3525 = vmatpush1.msra.mxu0 0.0
    %3526 = vmatprep.subr.mxu0 0.0
    %3527 = vmatpush1.msra.mxu0 0.0
    %3528 = vmatprep.subr.mxu0 0.0
    %3529 = vmatpush1.msra.mxu0 0.0
    %3530 = vmatprep.subr.mxu0 0.0
    %3531 = vmatpush1.msra.mxu0 0.0
    %3532 = vmatprep.subr.mxu0 0.0
    %3533 = vmatpush1.msra.mxu0 0.0
    %3534 = vmatprep.subr.mxu0 0.0
    %3535 = vmatpush1.msra.mxu0 0.0
    %3536 = vmatprep.subr.mxu0 0.0
    %3537 = vmatpush1.msra.mxu0 0.0
    %3538 = vmatprep.subr.mxu0 0.0
    %3539 = vmatpush1.msra.mxu0 0.0
    %3540 = vmatprep.subr.mxu0 0.0
    %3541 = vmatpush1.msra.mxu0 0.0
    %3542 = vmatprep.subr.mxu0 0.0
    %3543 = vmatpush1.msra.mxu0 0.0
    %3544 = vmatprep.subr.mxu0 0.0
    %3545 = vmatpush1.msra.mxu0 0.0
    %3546 = vmatprep.subr.mxu0 0.0
    %3547 = vmatpush1.msra.mxu0 0.0
    %3548 = vmatprep.subr.mxu0 0.0
    %3549 = vmatpush1.msra.mxu0 0.0
    %3550 = vmatprep.subr.mxu0 0.0
    %3551 = vmatpush1.msra.mxu0 0.0
    %3552 = vmatprep.subr.mxu0 0.0
    %3553 = vmatpush1.msra.mxu0 0.0
    %3554 = vmatprep.subr.mxu0 0.0
    %3555 = vmatpush1.msra.mxu0 0.0
    %3556 = vmatprep.subr.mxu0 0.0
    %3557 = vmatpush1.msra.mxu0 0.0
    %3558 = vmatprep.subr.mxu0 0.0
    %3559 = vmatpush1.msra.mxu0 0.0
    %3560 = vmatprep.subr.mxu0 0.0
    %3561 = vmatpush1.msra.mxu0 0.0
    %3562 = vmatprep.mubr.f32.mxu0 0.0
    %3563 = vmatmul.mubr.f32.gmra.mrb[0].mxu0 %v3496
    %v3564 = vpop.f32.mrb[0].mxu0
    %v3565 = vadd.f32 0.0, %v3564
    %v3566 = vpop.f32.mrb[0].mxu0
    %3567 = vdwg.mxu0
    %v3569 = vrot.slane %v3565, 3
    %v3571 = vadd.f32 %v3282, %v3569
    %v3572 = vxor.u32 %v3571, 2147483648
    %v3573 = vmul.f32 %v3572, 1.442695
    %v3574 = vpow.pop %v3573
    %v3575 = vadd.f32 %v3574, 1.0
    %v3576 = vrcp.pop %v3575
    %v3577 = vmul.f32 1.0, %v3576
    %v3578 = vtanh.pop %v3571
    %v3580 = vrot.slane %v3485, 1
    %v3582 = vmul.f32 %v3577, %v3580
    %3584 = vrot.lane.b32.xlu0 %v3578, 96
    %v3585 = vpop.permute.xlu0 %3584
    %v3587 = vmul.f32 %v3577, %v3585
    %3589 = vrot.lane.b32.xlu0 %v3587, 16
    %v3590 = vpop.permute.xlu0 %3589
    %v3592 = vadd.f32 %v3582, %v3590
    %v3593 = vtanh.pop %v3592
    %3595 = vrot.lane.b32.xlu0 %v3593, 32
    %v3596 = vpop.permute.xlu0 %3595
    %v3598 = vmul.f32 %v3577, %v3596
    %v3600 = vrot.slane %v3598, 5
    %3601 = vrot.lane.b32.xlu0 %v3600, 80
    %v3602 = vpop.permute.xlu0 %3601
    %v3603 = vsel %vm390, %v3602, 0
    %3605 = vmatprep.subr.mxu0 0.0
    %3606 = vmatpush1.msra.mxu0 %v3285
    %3607 = vmatprep.subr.mxu0 0.0
    %3608 = vmatpush1.msra.mxu0 %v3286
    %3609 = vmatprep.subr.mxu0 0.0
    %3610 = vmatpush1.msra.mxu0 0.0
    %3611 = vmatprep.subr.mxu0 0.0
    %3612 = vmatpush1.msra.mxu0 0.0
    %3613 = vmatprep.subr.mxu0 0.0
    %3614 = vmatpush1.msra.mxu0 0.0
    %3615 = vmatprep.subr.mxu0 0.0
    %3616 = vmatpush1.msra.mxu0 0.0
    %3617 = vmatprep.subr.mxu0 0.0
    %3618 = vmatpush1.msra.mxu0 0.0
    %3619 = vmatprep.subr.mxu0 0.0
    %3620 = vmatpush1.msra.mxu0 0.0
    %3621 = vmatprep.subr.mxu0 0.0
    %3622 = vmatpush1.msra.mxu0 0.0
    %3623 = vmatprep.subr.mxu0 0.0
    %3624 = vmatpush1.msra.mxu0 0.0
    %3625 = vmatprep.subr.mxu0 0.0
    %3626 = vmatpush1.msra.mxu0 0.0
    %3627 = vmatprep.subr.mxu0 0.0
    %3628 = vmatpush1.msra.mxu0 0.0
    %3629 = vmatprep.subr.mxu0 0.0
    %3630 = vmatpush1.msra.mxu0 0.0
    %3631 = vmatprep.subr.mxu0 0.0
    %3632 = vmatpush1.msra.mxu0 0.0
    %3633 = vmatprep.subr.mxu0 0.0
    %3634 = vmatpush1.msra.mxu0 0.0
    %3635 = vmatprep.subr.mxu0 0.0
    %3636 = vmatpush1.msra.mxu0 0.0
    %3637 = vmatprep.subr.mxu0 0.0
    %3638 = vmatpush1.msra.mxu0 0.0
    %3639 = vmatprep.subr.mxu0 0.0
    %3640 = vmatpush1.msra.mxu0 0.0
    %3641 = vmatprep.subr.mxu0 0.0
    %3642 = vmatpush1.msra.mxu0 0.0
    %3643 = vmatprep.subr.mxu0 0.0
    %3644 = vmatpush1.msra.mxu0 0.0
    %3645 = vmatprep.subr.mxu0 0.0
    %3646 = vmatpush1.msra.mxu0 0.0
    %3647 = vmatprep.subr.mxu0 0.0
    %3648 = vmatpush1.msra.mxu0 0.0
    %3649 = vmatprep.subr.mxu0 0.0
    %3650 = vmatpush1.msra.mxu0 0.0
    %3651 = vmatprep.subr.mxu0 0.0
    %3652 = vmatpush1.msra.mxu0 0.0
    %3653 = vmatprep.subr.mxu0 0.0
    %3654 = vmatpush1.msra.mxu0 0.0
    %3655 = vmatprep.subr.mxu0 0.0
    %3656 = vmatpush1.msra.mxu0 0.0
    %3657 = vmatprep.subr.mxu0 0.0
    %3658 = vmatpush1.msra.mxu0 0.0
    %3659 = vmatprep.subr.mxu0 0.0
    %3660 = vmatpush1.msra.mxu0 0.0
    %3661 = vmatprep.subr.mxu0 0.0
    %3662 = vmatpush1.msra.mxu0 0.0
    %3663 = vmatprep.subr.mxu0 0.0
    %3664 = vmatpush1.msra.mxu0 0.0
    %3665 = vmatprep.subr.mxu0 0.0
    %3666 = vmatpush1.msra.mxu0 0.0
    %3667 = vmatprep.subr.mxu0 0.0
    %3668 = vmatpush1.msra.mxu0 0.0
    %3669 = vmatprep.mubr.f32.mxu0 0.0
    %3670 = vmatmul.mubr.f32.gmra.mrb[0].mxu0 %v3603
    %v3671 = vpop.f32.mrb[0].mxu0
    %v3672 = vadd.f32 0.0, %v3671
    %v3673 = vpop.f32.mrb[0].mxu0
    %3674 = vdwg.mxu0
    %v3676 = vrot.slane %v3672, 4
    %v3678 = vadd.f32 %v3282, %v3676
    %v3679 = vxor.u32 %v3678, 2147483648
    %v3680 = vmul.f32 %v3679, 1.442695
    %v3681 = vpow.pop %v3680
    %v3682 = vadd.f32 %v3681, 1.0
    %v3683 = vrcp.pop %v3682
    %v3684 = vmul.f32 1.0, %v3683
    %v3685 = vtanh.pop %v3678
    %v3687 = vrot.slane %v3592, 1
    %v3689 = vmul.f32 %v3684, %v3687
    %3691 = vrot.lane.b32.xlu0 %v3685, 96
    %v3692 = vpop.permute.xlu0 %3691
    %v3694 = vmul.f32 %v3684, %v3692
    %3696 = vrot.lane.b32.xlu0 %v3694, 16
    %v3697 = vpop.permute.xlu0 %3696
    %v3699 = vadd.f32 %v3689, %v3697
    %v3700 = vtanh.pop %v3699
    %3702 = vrot.lane.b32.xlu0 %v3700, 32
    %v3703 = vpop.permute.xlu0 %3702
    %v3705 = vmul.f32 %v3684, %v3703
    %v3707 = vrot.slane %v3705, 4
    %3708 = vrot.lane.b32.xlu0 %v3707, 80
    %v3709 = vpop.permute.xlu0 %3708
    %v3710 = vsel %vm390, %v3709, 0
    %3712 = vmatprep.subr.mxu0 0.0
    %3713 = vmatpush1.msra.mxu0 %v3285
    %3714 = vmatprep.subr.mxu0 0.0
    %3715 = vmatpush1.msra.mxu0 %v3286
    %3716 = vmatprep.subr.mxu0 0.0
    %3717 = vmatpush1.msra.mxu0 0.0
    %3718 = vmatprep.subr.mxu0 0.0
    %3719 = vmatpush1.msra.mxu0 0.0
    %3720 = vmatprep.subr.mxu0 0.0
    %3721 = vmatpush1.msra.mxu0 0.0
    %3722 = vmatprep.subr.mxu0 0.0
    %3723 = vmatpush1.msra.mxu0 0.0
    %3724 = vmatprep.subr.mxu0 0.0
    %3725 = vmatpush1.msra.mxu0 0.0
    %3726 = vmatprep.subr.mxu0 0.0
    %3727 = vmatpush1.msra.mxu0 0.0
    %3728 = vmatprep.subr.mxu0 0.0
    %3729 = vmatpush1.msra.mxu0 0.0
    %3730 = vmatprep.subr.mxu0 0.0
    %3731 = vmatpush1.msra.mxu0 0.0
    %3732 = vmatprep.subr.mxu0 0.0
    %3733 = vmatpush1.msra.mxu0 0.0
    %3734 = vmatprep.subr.mxu0 0.0
    %3735 = vmatpush1.msra.mxu0 0.0
    %3736 = vmatprep.subr.mxu0 0.0
    %3737 = vmatpush1.msra.mxu0 0.0
    %3738 = vmatprep.subr.mxu0 0.0
    %3739 = vmatpush1.msra.mxu0 0.0
    %3740 = vmatprep.subr.mxu0 0.0
    %3741 = vmatpush1.msra.mxu0 0.0
    %3742 = vmatprep.subr.mxu0 0.0
    %3743 = vmatpush1.msra.mxu0 0.0
    %3744 = vmatprep.subr.mxu0 0.0
    %3745 = vmatpush1.msra.mxu0 0.0
    %3746 = vmatprep.subr.mxu0 0.0
    %3747 = vmatpush1.msra.mxu0 0.0
    %3748 = vmatprep.subr.mxu0 0.0
    %3749 = vmatpush1.msra.mxu0 0.0
    %3750 = vmatprep.subr.mxu0 0.0
    %3751 = vmatpush1.msra.mxu0 0.0
    %3752 = vmatprep.subr.mxu0 0.0
    %3753 = vmatpush1.msra.mxu0 0.0
    %3754 = vmatprep.subr.mxu0 0.0
    %3755 = vmatpush1.msra.mxu0 0.0
    %3756 = vmatprep.subr.mxu0 0.0
    %3757 = vmatpush1.msra.mxu0 0.0
    %3758 = vmatprep.subr.mxu0 0.0
    %3759 = vmatpush1.msra.mxu0 0.0
    %3760 = vmatprep.subr.mxu0 0.0
    %3761 = vmatpush1.msra.mxu0 0.0
    %3762 = vmatprep.subr.mxu0 0.0
    %3763 = vmatpush1.msra.mxu0 0.0
    %3764 = vmatprep.subr.mxu0 0.0
    %3765 = vmatpush1.msra.mxu0 0.0
    %3766 = vmatprep.subr.mxu0 0.0
    %3767 = vmatpush1.msra.mxu0 0.0
    %3768 = vmatprep.subr.mxu0 0.0
    %3769 = vmatpush1.msra.mxu0 0.0
    %3770 = vmatprep.subr.mxu0 0.0
    %3771 = vmatpush1.msra.mxu0 0.0
    %3772 = vmatprep.subr.mxu0 0.0
    %3773 = vmatpush1.msra.mxu0 0.0
    %3774 = vmatprep.subr.mxu0 0.0
    %3775 = vmatpush1.msra.mxu0 0.0
    %3776 = vmatprep.mubr.f32.mxu0 0.0
    %3777 = vmatmul.mubr.f32.gmra.mrb[0].mxu0 %v3710
    %v3778 = vpop.f32.mrb[0].mxu0
    %v3779 = vadd.f32 0.0, %v3778
    %v3780 = vpop.f32.mrb[0].mxu0
    %3781 = vdwg.mxu0
    %v3783 = vrot.slane %v3779, 5
    %v3785 = vadd.f32 %v3282, %v3783
    %v3786 = vxor.u32 %v3785, 2147483648
    %v3787 = vmul.f32 %v3786, 1.442695
    %v3788 = vpow.pop %v3787
    %v3789 = vadd.f32 %v3788, 1.0
    %v3790 = vrcp.pop %v3789
    %v3791 = vmul.f32 1.0, %v3790
    %v3792 = vtanh.pop %v3785
    %v3794 = vrot.slane %v3699, 1
    %v3796 = vmul.f32 %v3791, %v3794
    %3798 = vrot.lane.b32.xlu0 %v3792, 96
    %v3799 = vpop.permute.xlu0 %3798
    %v3801 = vmul.f32 %v3791, %v3799
    %3803 = vrot.lane.b32.xlu0 %v3801, 16
    %v3804 = vpop.permute.xlu0 %3803
    %v3806 = vadd.f32 %v3796, %v3804
    %v3807 = vtanh.pop %v3806
    %3809 = vrot.lane.b32.xlu0 %v3807, 32
    %v3810 = vpop.permute.xlu0 %3809
    %v3812 = vmul.f32 %v3791, %v3810
    %v3814 = vrot.slane %v3812, 3
    %3815 = vrot.lane.b32.xlu0 %v3814, 80
    %v3816 = vpop.permute.xlu0 %3815
    %v3817 = vsel %vm390, %v3816, 0
    %3819 = vmatprep.subr.mxu0 0.0
    %3820 = vmatpush1.msra.mxu0 %v3285
    %3821 = vmatprep.subr.mxu0 0.0
    %3822 = vmatpush1.msra.mxu0 %v3286
    %3823 = vmatprep.subr.mxu0 0.0
    %3824 = vmatpush1.msra.mxu0 0.0
    %3825 = vmatprep.subr.mxu0 0.0
    %3826 = vmatpush1.msra.mxu0 0.0
    %3827 = vmatprep.subr.mxu0 0.0
    %3828 = vmatpush1.msra.mxu0 0.0
    %3829 = vmatprep.subr.mxu0 0.0
    %3830 = vmatpush1.msra.mxu0 0.0
    %3831 = vmatprep.subr.mxu0 0.0
    %3832 = vmatpush1.msra.mxu0 0.0
    %3833 = vmatprep.subr.mxu0 0.0
    %3834 = vmatpush1.msra.mxu0 0.0
    %3835 = vmatprep.subr.mxu0 0.0
    %3836 = vmatpush1.msra.mxu0 0.0
    %3837 = vmatprep.subr.mxu0 0.0
    %3838 = vmatpush1.msra.mxu0 0.0
    %3839 = vmatprep.subr.mxu0 0.0
    %3840 = vmatpush1.msra.mxu0 0.0
    %3841 = vmatprep.subr.mxu0 0.0
    %3842 = vmatpush1.msra.mxu0 0.0
    %3843 = vmatprep.subr.mxu0 0.0
    %3844 = vmatpush1.msra.mxu0 0.0
    %3845 = vmatprep.subr.mxu0 0.0
    %3846 = vmatpush1.msra.mxu0 0.0
    %3847 = vmatprep.subr.mxu0 0.0
    %3848 = vmatpush1.msra.mxu0 0.0
    %3849 = vmatprep.subr.mxu0 0.0
    %3850 = vmatpush1.msra.mxu0 0.0
    %3851 = vmatprep.subr.mxu0 0.0
    %3852 = vmatpush1.msra.mxu0 0.0
    %3853 = vmatprep.subr.mxu0 0.0
    %3854 = vmatpush1.msra.mxu0 0.0
    %3855 = vmatprep.subr.mxu0 0.0
    %3856 = vmatpush1.msra.mxu0 0.0
    %3857 = vmatprep.subr.mxu0 0.0
    %3858 = vmatpush1.msra.mxu0 0.0
    %3859 = vmatprep.subr.mxu0 0.0
    %3860 = vmatpush1.msra.mxu0 0.0
    %3861 = vmatprep.subr.mxu0 0.0
    %3862 = vmatpush1.msra.mxu0 0.0
    %3863 = vmatprep.subr.mxu0 0.0
    %3864 = vmatpush1.msra.mxu0 0.0
    %3865 = vmatprep.subr.mxu0 0.0
    %3866 = vmatpush1.msra.mxu0 0.0
    %3867 = vmatprep.subr.mxu0 0.0
    %3868 = vmatpush1.msra.mxu0 0.0
    %3869 = vmatprep.subr.mxu0 0.0
    %3870 = vmatpush1.msra.mxu0 0.0
    %3871 = vmatprep.subr.mxu0 0.0
    %3872 = vmatpush1.msra.mxu0 0.0
    %3873 = vmatprep.subr.mxu0 0.0
    %3874 = vmatpush1.msra.mxu0 0.0
    %3875 = vmatprep.subr.mxu0 0.0
    %3876 = vmatpush1.msra.mxu0 0.0
    %3877 = vmatprep.subr.mxu0 0.0
    %3878 = vmatpush1.msra.mxu0 0.0
    %3879 = vmatprep.subr.mxu0 0.0
    %3880 = vmatpush1.msra.mxu0 0.0
    %3881 = vmatprep.subr.mxu0 0.0
    %3882 = vmatpush1.msra.mxu0 0.0
    %3883 = vmatprep.mubr.f32.mxu0 0.0
    %3884 = vmatmul.mubr.f32.gmra.mrb[0].mxu0 %v3817
    %v3885 = vpop.f32.mrb[0].mxu0
    %v3886 = vadd.f32 0.0, %v3885
    %v3887 = vpop.f32.mrb[0].mxu0
    %3888 = vdwg.mxu0
    %v3890 = vrot.slane %v3886, 6
    %v3892 = vadd.f32 %v3282, %v3890
    %v3893 = vxor.u32 %v3892, 2147483648
    %v3894 = vmul.f32 %v3893, 1.442695
    %v3895 = vpow.pop %v3894
    %v3896 = vadd.f32 %v3895, 1.0
    %v3897 = vrcp.pop %v3896
    %v3898 = vmul.f32 1.0, %v3897
    %v3899 = vtanh.pop %v3892
    %v3901 = vrot.slane %v3806, 1
    %v3903 = vmul.f32 %v3898, %v3901
    %3905 = vrot.lane.b32.xlu0 %v3899, 96
    %v3906 = vpop.permute.xlu0 %3905
    %v3908 = vmul.f32 %v3898, %v3906
    %3910 = vrot.lane.b32.xlu0 %v3908, 16
    %v3911 = vpop.permute.xlu0 %3910
    %v3913 = vadd.f32 %v3903, %v3911
    %v3914 = vtanh.pop %v3913
    %3916 = vrot.lane.b32.xlu0 %v3914, 32
    %v3917 = vpop.permute.xlu0 %3916
    %v3919 = vmul.f32 %v3898, %v3917
    %v3921 = vrot.slane %v3919, 2
    %3922 = vrot.lane.b32.xlu0 %v3921, 80
    %v3923 = vpop.permute.xlu0 %3922
    %v3924 = vsel %vm390, %v3923, 0
    %3926 = vmatprep.subr.mxu0 0.0
    %3927 = vmatpush1.msra.mxu0 %v3285
    %3928 = vmatprep.subr.mxu0 0.0
    %3929 = vmatpush1.msra.mxu0 %v3286
    %3930 = vmatprep.subr.mxu0 0.0
    %3931 = vmatpush1.msra.mxu0 0.0
    %3932 = vmatprep.subr.mxu0 0.0
    %3933 = vmatpush1.msra.mxu0 0.0
    %3934 = vmatprep.subr.mxu0 0.0
    %3935 = vmatpush1.msra.mxu0 0.0
    %3936 = vmatprep.subr.mxu0 0.0
    %3937 = vmatpush1.msra.mxu0 0.0
    %3938 = vmatprep.subr.mxu0 0.0
    %3939 = vmatpush1.msra.mxu0 0.0
    %3940 = vmatprep.subr.mxu0 0.0
    %3941 = vmatpush1.msra.mxu0 0.0
    %3942 = vmatprep.subr.mxu0 0.0
    %3943 = vmatpush1.msra.mxu0 0.0
    %3944 = vmatprep.subr.mxu0 0.0
    %3945 = vmatpush1.msra.mxu0 0.0
    %3946 = vmatprep.subr.mxu0 0.0
    %3947 = vmatpush1.msra.mxu0 0.0
    %3948 = vmatprep.subr.mxu0 0.0
    %3949 = vmatpush1.msra.mxu0 0.0
    %3950 = vmatprep.subr.mxu0 0.0
    %3951 = vmatpush1.msra.mxu0 0.0
    %3952 = vmatprep.subr.mxu0 0.0
    %3953 = vmatpush1.msra.mxu0 0.0
    %3954 = vmatprep.subr.mxu0 0.0
    %3955 = vmatpush1.msra.mxu0 0.0
    %3956 = vmatprep.subr.mxu0 0.0
    %3957 = vmatpush1.msra.mxu0 0.0
    %3958 = vmatprep.subr.mxu0 0.0
    %3959 = vmatpush1.msra.mxu0 0.0
    %3960 = vmatprep.subr.mxu0 0.0
    %3961 = vmatpush1.msra.mxu0 0.0
    %3962 = vmatprep.subr.mxu0 0.0
    %3963 = vmatpush1.msra.mxu0 0.0
    %3964 = vmatprep.subr.mxu0 0.0
    %3965 = vmatpush1.msra.mxu0 0.0
    %3966 = vmatprep.subr.mxu0 0.0
    %3967 = vmatpush1.msra.mxu0 0.0
    %3968 = vmatprep.subr.mxu0 0.0
    %3969 = vmatpush1.msra.mxu0 0.0
    %3970 = vmatprep.subr.mxu0 0.0
    %3971 = vmatpush1.msra.mxu0 0.0
    %3972 = vmatprep.subr.mxu0 0.0
    %3973 = vmatpush1.msra.mxu0 0.0
    %3974 = vmatprep.subr.mxu0 0.0
    %3975 = vmatpush1.msra.mxu0 0.0
    %3976 = vmatprep.subr.mxu0 0.0
    %3977 = vmatpush1.msra.mxu0 0.0
    %3978 = vmatprep.subr.mxu0 0.0
    %3979 = vmatpush1.msra.mxu0 0.0
    %3980 = vmatprep.subr.mxu0 0.0
    %3981 = vmatpush1.msra.mxu0 0.0
    %3982 = vmatprep.subr.mxu0 0.0
    %3983 = vmatpush1.msra.mxu0 0.0
    %3984 = vmatprep.subr.mxu0 0.0
    %3985 = vmatpush1.msra.mxu0 0.0
    %3986 = vmatprep.subr.mxu0 0.0
    %3987 = vmatpush1.msra.mxu0 0.0
    %3988 = vmatprep.subr.mxu0 0.0
    %3989 = vmatpush1.msra.mxu0 0.0
    %3990 = vmatprep.mubr.f32.mxu0 0.0
    %3991 = vmatmul.mubr.f32.gmra.mrb[0].mxu0 %v3924
    %v3992 = vpop.f32.mrb[0].mxu0
    %v3993 = vadd.f32 0.0, %v3992
    %v3994 = vpop.f32.mrb[0].mxu0
    %3995 = vdwg.mxu0
    %v3997 = vrot.slane %v3993, 7
    %v3999 = vadd.f32 %v3282, %v3997
    %v4000 = vxor.u32 %v3999, 2147483648
    %v4001 = vmul.f32 %v4000, 1.442695
    %v4002 = vpow.pop %v4001
    %v4003 = vadd.f32 %v4002, 1.0
    %v4004 = vrcp.pop %v4003
    %v4005 = vmul.f32 1.0, %v4004
    %v4006 = vtanh.pop %v3999
    %v4008 = vrot.slane %v3913, 1
    %v4010 = vmul.f32 %v4005, %v4008
    %4012 = vrot.lane.b32.xlu0 %v4006, 96
    %v4013 = vpop.permute.xlu0 %4012
    %v4015 = vmul.f32 %v4005, %v4013
    %4017 = vrot.lane.b32.xlu0 %v4015, 16
    %v4018 = vpop.permute.xlu0 %4017
    %v4020 = vadd.f32 %v4010, %v4018
    %v4021 = vtanh.pop %v4020
    %4023 = vrot.lane.b32.xlu0 %v4021, 32
    %v4024 = vpop.permute.xlu0 %4023
    %v4026 = vmul.f32 %v4005, %v4024
    %v4028 = vrot.slane %v4026, 1
    %4029 = vrot.lane.b32.xlu0 %v4028, 80
    %v4030 = vpop.permute.xlu0 %4029
    %v4031 = vsel %vm390, %v4030, 0
    %4033 = vmatprep.subr.mxu0 0.0
    %4034 = vmatpush1.msra.mxu0 %v3285
    %4035 = vmatprep.subr.mxu0 0.0
    %4036 = vmatpush1.msra.mxu0 %v3286
    %4037 = vmatprep.subr.mxu0 0.0
    %4038 = vmatpush1.msra.mxu0 0.0
    %4039 = vmatprep.subr.mxu0 0.0
    %4040 = vmatpush1.msra.mxu0 0.0
    %4041 = vmatprep.subr.mxu0 0.0
    %4042 = vmatpush1.msra.mxu0 0.0
    %4043 = vmatprep.subr.mxu0 0.0
    %4044 = vmatpush1.msra.mxu0 0.0
    %4045 = vmatprep.subr.mxu0 0.0
    %4046 = vmatpush1.msra.mxu0 0.0
    %4047 = vmatprep.subr.mxu0 0.0
    %4048 = vmatpush1.msra.mxu0 0.0
    %4049 = vmatprep.subr.mxu0 0.0
    %4050 = vmatpush1.msra.mxu0 0.0
    %4051 = vmatprep.subr.mxu0 0.0
    %4052 = vmatpush1.msra.mxu0 0.0
    %4053 = vmatprep.subr.mxu0 0.0
    %4054 = vmatpush1.msra.mxu0 0.0
    %4055 = vmatprep.subr.mxu0 0.0
    %4056 = vmatpush1.msra.mxu0 0.0
    %4057 = vmatprep.subr.mxu0 0.0
    %4058 = vmatpush1.msra.mxu0 0.0
    %4059 = vmatprep.subr.mxu0 0.0
    %4060 = vmatpush1.msra.mxu0 0.0
    %4061 = vmatprep.subr.mxu0 0.0
    %4062 = vmatpush1.msra.mxu0 0.0
    %4063 = vmatprep.subr.mxu0 0.0
    %4064 = vmatpush1.msra.mxu0 0.0
    %4065 = vmatprep.subr.mxu0 0.0
    %4066 = vmatpush1.msra.mxu0 0.0
    %4067 = vmatprep.subr.mxu0 0.0
    %4068 = vmatpush1.msra.mxu0 0.0
    %4069 = vmatprep.subr.mxu0 0.0
    %4070 = vmatpush1.msra.mxu0 0.0
    %4071 = vmatprep.subr.mxu0 0.0
    %4072 = vmatpush1.msra.mxu0 0.0
    %4073 = vmatprep.subr.mxu0 0.0
    %4074 = vmatpush1.msra.mxu0 0.0
    %4075 = vmatprep.subr.mxu0 0.0
    %4076 = vmatpush1.msra.mxu0 0.0
    %4077 = vmatprep.subr.mxu0 0.0
    %4078 = vmatpush1.msra.mxu0 0.0
    %4079 = vmatprep.subr.mxu0 0.0
    %4080 = vmatpush1.msra.mxu0 0.0
    %4081 = vmatprep.subr.mxu0 0.0
    %4082 = vmatpush1.msra.mxu0 0.0
    %4083 = vmatprep.subr.mxu0 0.0
    %4084 = vmatpush1.msra.mxu0 0.0
    %4085 = vmatprep.subr.mxu0 0.0
    %4086 = vmatpush1.msra.mxu0 0.0
    %4087 = vmatprep.subr.mxu0 0.0
    %4088 = vmatpush1.msra.mxu0 0.0
    %4089 = vmatprep.subr.mxu0 0.0
    %4090 = vmatpush1.msra.mxu0 0.0
    %4091 = vmatprep.subr.mxu0 0.0
    %4092 = vmatpush1.msra.mxu0 0.0
    %4093 = vmatprep.subr.mxu0 0.0
    %4094 = vmatpush1.msra.mxu0 0.0
    %4095 = vmatprep.subr.mxu0 0.0
    %4096 = vmatpush1.msra.mxu0 0.0
    %4097 = vmatprep.mubr.f32.mxu0 0.0
    %4098 = vmatmul.mubr.f32.gmra.mrb[0].mxu0 %v4031
    %v4099 = vpop.f32.mrb[0].mxu0
    %v4100 = vadd.f32 0.0, %v4099
    %v4101 = vpop.f32.mrb[0].mxu0
    %4102 = vdwg.mxu0
    %v4103 = vadd.f32 %v3282, %v4100
    %v4104 = vxor.u32 %v4103, 2147483648
    %v4105 = vmul.f32 %v4104, 1.442695
    %v4106 = vpow.pop %v4105
    %v4107 = vadd.f32 %v4106, 1.0
    %v4108 = vrcp.pop %v4107
    %v4109 = vmul.f32 1.0, %v4108
    %v4110 = vtanh.pop %v4103
    %v4112 = vrot.slane %v4020, 1
    %v4114 = vmul.f32 %v4109, %v4112
    %4116 = vrot.lane.b32.xlu0 %v4110, 96
    %v4117 = vpop.permute.xlu0 %4116
    %v4119 = vmul.f32 %v4109, %v4117
    %4121 = vrot.lane.b32.xlu0 %v4119, 16
    %v4122 = vpop.permute.xlu0 %4121
    %v4124 = vadd.f32 %v4114, %v4122
    %v4125 = vtanh.pop %v4124
    %4127 = vrot.lane.b32.xlu0 %v4125, 32
    %v4128 = vpop.permute.xlu0 %4127
    %v4130 = vmul.f32 %v4109, %v4128
    %v4131 = vsel %vm1312, %v4130, %v4026
    %v4132 = vsel %vm1314, %v4131, %v3919
    %v4133 = vsel %vm1316, %v4132, %v3812
    %v4134 = vsel %vm1318, %v4133, %v3705
    %v4135 = vsel %vm1320, %v4134, %v3598
    %v4136 = vsel %vm1322, %v4135, %v3491
    %v4137 = vsel %vm1324, %v4136, %v3384
    %4139 = vrot.lane.b32.xlu0 %v3203, 80
    %v4140 = vpop.permute.xlu0 %4139
    %4143 = vrot.lane.b32.xlu0 %v4137, 96
    %v4144 = vpop.permute.xlu0 %4143
    %v4146 = vsel %vm390, %v4140, %v4144
    %v4147 = vlaneseq
    %v4148 = vand.u32 %v4147, 127
    %4149 = vset.pattern.permute.xlu0 0
    %4150 = vperm.xlu0 %4149, %v380
    %v4151 = vpop.permute.xlu0 %4150
    %vm4152 = vcmp.eq.s32.totalorder %v4148, %v4151
    %v4153 = vsel %vm4152, 1, 0
    %v4154 = vcvt.s32.f32 %v4153
    %4155 = vset.pattern.permute.xlu0 1
    %4156 = vperm.xlu0 %4155, %v380
    %v4157 = vpop.permute.xlu0 %4156
    %vm4158 = vcmp.eq.s32.totalorder %v4148, %v4157
    %v4159 = vsel %vm4158, 1, 0
    %v4160 = vcvt.s32.f32 %v4159
    %v4161 = vld [vmem:[#allocation19] sm:$0xff]
    %v4162 = vld [vmem:[#allocation19 + $0x8] sm:$0xff]
    %v4163 = vld [vmem:[#allocation20] sm:$0x1]
    %v4165 = vlaneseq
    %v4166 = vshrl.u32 %v4165, 7
    %v4167 = vsub.s32 0, %v4166
    %v4168 = vrot.slane %v4163, %v4167
    %4170 = vmatprep.subr.mxu0 0.0
    %4171 = vmatpush1.msra.mxu0 %v4161
    %4172 = vmatprep.subr.mxu0 0.0
    %4173 = vmatpush1.msra.mxu0 %v4162
    %4174 = vmatprep.subr.mxu0 0.0
    %4175 = vmatpush1.msra.mxu0 0.0
    %4176 = vmatprep.subr.mxu0 0.0
    %4177 = vmatpush1.msra.mxu0 0.0
    %4178 = vmatprep.subr.mxu0 0.0
    %4179 = vmatpush1.msra.mxu0 0.0
    %4180 = vmatprep.subr.mxu0 0.0
    %4181 = vmatpush1.msra.mxu0 0.0
    %4182 = vmatprep.subr.mxu0 0.0
    %4183 = vmatpush1.msra.mxu0 0.0
    %4184 = vmatprep.subr.mxu0 0.0
    %4185 = vmatpush1.msra.mxu0 0.0
    %4186 = vmatprep.subr.mxu0 0.0
    %4187 = vmatpush1.msra.mxu0 0.0
    %4188 = vmatprep.subr.mxu0 0.0
    %4189 = vmatpush1.msra.mxu0 0.0
    %4190 = vmatprep.subr.mxu0 0.0
    %4191 = vmatpush1.msra.mxu0 0.0
    %4192 = vmatprep.subr.mxu0 0.0
    %4193 = vmatpush1.msra.mxu0 0.0
    %4194 = vmatprep.subr.mxu0 0.0
    %4195 = vmatpush1.msra.mxu0 0.0
    %4196 = vmatprep.subr.mxu0 0.0
    %4197 = vmatpush1.msra.mxu0 0.0
    %4198 = vmatprep.subr.mxu0 0.0
    %4199 = vmatpush1.msra.mxu0 0.0
    %4200 = vmatprep.subr.mxu0 0.0
    %4201 = vmatpush1.msra.mxu0 0.0
    %4202 = vmatprep.subr.mxu0 0.0
    %4203 = vmatpush1.msra.mxu0 0.0
    %4204 = vmatprep.subr.mxu0 0.0
    %4205 = vmatpush1.msra.mxu0 0.0
    %4206 = vmatprep.subr.mxu0 0.0
    %4207 = vmatpush1.msra.mxu0 0.0
    %4208 = vmatprep.subr.mxu0 0.0
    %4209 = vmatpush1.msra.mxu0 0.0
    %4210 = vmatprep.subr.mxu0 0.0
    %4211 = vmatpush1.msra.mxu0 0.0
    %4212 = vmatprep.subr.mxu0 0.0
    %4213 = vmatpush1.msra.mxu0 0.0
    %4214 = vmatprep.subr.mxu0 0.0
    %4215 = vmatpush1.msra.mxu0 0.0
    %4216 = vmatprep.subr.mxu0 0.0
    %4217 = vmatpush1.msra.mxu0 0.0
    %4218 = vmatprep.subr.mxu0 0.0
    %4219 = vmatpush1.msra.mxu0 0.0
    %4220 = vmatprep.subr.mxu0 0.0
    %4221 = vmatpush1.msra.mxu0 0.0
    %4222 = vmatprep.subr.mxu0 0.0
    %4223 = vmatpush1.msra.mxu0 0.0
    %4224 = vmatprep.subr.mxu0 0.0
    %4225 = vmatpush1.msra.mxu0 0.0
    %4226 = vmatprep.subr.mxu0 0.0
    %4227 = vmatpush1.msra.mxu0 0.0
    %4228 = vmatprep.subr.mxu0 0.0
    %4229 = vmatpush1.msra.mxu0 0.0
    %4230 = vmatprep.subr.mxu0 0.0
    %4231 = vmatpush1.msra.mxu0 0.0
    %4232 = vmatprep.subr.mxu0 0.0
    %4233 = vmatpush1.msra.mxu0 0.0
    %4234 = vmatprep.mubr.f32.mxu0 0.0
    %4235 = vmatmul.mubr.f32.gmra.mrb[0].mxu0 %v392
    %v4236 = vpop.f32.mrb[0].mxu0
    %v4237 = vadd.f32 %v4168, %v4236
    %v4238 = vpop.f32.mrb[0].mxu0
    %4239 = vdwg.mxu0
    %vm4240 = vcmask 64512
    %v4242 = vsel %vm4240, %v4154, 0
    %4244 = vmatprep.subr.mxu0 0.0
    %4245 = vmatpush1.msra.mxu0 %v4237
    %4246 = vmatprep.subr.mxu0 0.0
    %4247 = vmatpush1.msra.mxu0 0.0
    %4248 = vmatprep.subr.mxu0 0.0
    %4249 = vmatpush1.msra.mxu0 0.0
    %4250 = vmatprep.subr.mxu0 0.0
    %4251 = vmatpush1.msra.mxu0 0.0
    %4252 = vmatprep.subr.mxu0 0.0
    %4253 = vmatpush1.msra.mxu0 0.0
    %4254 = vmatprep.subr.mxu0 0.0
    %4255 = vmatpush1.msra.mxu0 0.0
    %4256 = vmatprep.subr.mxu0 0.0
    %4257 = vmatpush1.msra.mxu0 0.0
    %4258 = vmatprep.subr.mxu0 0.0
    %4259 = vmatpush1.msra.mxu0 0.0
    %4260 = vmatprep.subr.mxu0 0.0
    %4261 = vmatpush1.msra.mxu0 0.0
    %4262 = vmatprep.subr.mxu0 0.0
    %4263 = vmatpush1.msra.mxu0 0.0
    %4264 = vmatprep.subr.mxu0 0.0
    %4265 = vmatpush1.msra.mxu0 0.0
    %4266 = vmatprep.subr.mxu0 0.0
    %4267 = vmatpush1.msra.mxu0 0.0
    %4268 = vmatprep.subr.mxu0 0.0
    %4269 = vmatpush1.msra.mxu0 0.0
    %4270 = vmatprep.subr.mxu0 0.0
    %4271 = vmatpush1.msra.mxu0 0.0
    %4272 = vmatprep.subr.mxu0 0.0
    %4273 = vmatpush1.msra.mxu0 0.0
    %4274 = vmatprep.subr.mxu0 0.0
    %4275 = vmatpush1.msra.mxu0 0.0
    %4276 = vmatprep.subr.mxu0 0.0
    %4277 = vmatpush1.msra.mxu0 0.0
    %4278 = vmatprep.subr.mxu0 0.0
    %4279 = vmatpush1.msra.mxu0 0.0
    %4280 = vmatprep.subr.mxu0 0.0
    %4281 = vmatpush1.msra.mxu0 0.0
    %4282 = vmatprep.subr.mxu0 0.0
    %4283 = vmatpush1.msra.mxu0 0.0
    %4284 = vmatprep.subr.mxu0 0.0
    %4285 = vmatpush1.msra.mxu0 0.0
    %4286 = vmatprep.subr.mxu0 0.0
    %4287 = vmatpush1.msra.mxu0 0.0
    %4288 = vmatprep.subr.mxu0 0.0
    %4289 = vmatpush1.msra.mxu0 0.0
    %4290 = vmatprep.subr.mxu0 0.0
    %4291 = vmatpush1.msra.mxu0 0.0
    %4292 = vmatprep.subr.mxu0 0.0
    %4293 = vmatpush1.msra.mxu0 0.0
    %4294 = vmatprep.subr.mxu0 0.0
    %4295 = vmatpush1.msra.mxu0 0.0
    %4296 = vmatprep.subr.mxu0 0.0
    %4297 = vmatpush1.msra.mxu0 0.0
    %4298 = vmatprep.subr.mxu0 0.0
    %4299 = vmatpush1.msra.mxu0 0.0
    %4300 = vmatprep.subr.mxu0 0.0
    %4301 = vmatpush1.msra.mxu0 0.0
    %4302 = vmatprep.subr.mxu0 0.0
    %4303 = vmatpush1.msra.mxu0 0.0
    %4304 = vmatprep.subr.mxu0 0.0
    %4305 = vmatpush1.msra.mxu0 0.0
    %4306 = vmatprep.subr.mxu0 0.0
    %4307 = vmatpush1.msra.mxu0 0.0
    %4308 = vmatprep.mubr.f32.mxu0 0.0
    %4309 = vmatmul.mubr.f32.gmra.mrb[0].mxu0 %v4242
    %v4310 = vpop.f32.mrb[0].mxu0
    %v4311 = vadd.f32 0.0, %v4310
    %v4312 = vpop.f32.mrb[0].mxu0
    %4313 = vdwg.mxu0
    %v4315 = vsel %vm4240, %v4160, 0
    %4317 = vmatprep.subr.mxu0 0.0
    %4318 = vmatpush1.msra.mxu0 %v4237
    %4319 = vmatprep.subr.mxu0 0.0
    %4320 = vmatpush1.msra.mxu0 0.0
    %4321 = vmatprep.subr.mxu0 0.0
    %4322 = vmatpush1.msra.mxu0 0.0
    %4323 = vmatprep.subr.mxu0 0.0
    %4324 = vmatpush1.msra.mxu0 0.0
    %4325 = vmatprep.subr.mxu0 0.0
    %4326 = vmatpush1.msra.mxu0 0.0
    %4327 = vmatprep.subr.mxu0 0.0
    %4328 = vmatpush1.msra.mxu0 0.0
    %4329 = vmatprep.subr.mxu0 0.0
    %4330 = vmatpush1.msra.mxu0 0.0
    %4331 = vmatprep.subr.mxu0 0.0
    %4332 = vmatpush1.msra.mxu0 0.0
    %4333 = vmatprep.subr.mxu0 0.0
    %4334 = vmatpush1.msra.mxu0 0.0
    %4335 = vmatprep.subr.mxu0 0.0
    %4336 = vmatpush1.msra.mxu0 0.0
    %4337 = vmatprep.subr.mxu0 0.0
    %4338 = vmatpush1.msra.mxu0 0.0
    %4339 = vmatprep.subr.mxu0 0.0
    %4340 = vmatpush1.msra.mxu0 0.0
    %4341 = vmatprep.subr.mxu0 0.0
    %4342 = vmatpush1.msra.mxu0 0.0
    %4343 = vmatprep.subr.mxu0 0.0
    %4344 = vmatpush1.msra.mxu0 0.0
    %4345 = vmatprep.subr.mxu0 0.0
    %4346 = vmatpush1.msra.mxu0 0.0
    %4347 = vmatprep.subr.mxu0 0.0
    %4348 = vmatpush1.msra.mxu0 0.0
    %4349 = vmatprep.subr.mxu0 0.0
    %4350 = vmatpush1.msra.mxu0 0.0
    %4351 = vmatprep.subr.mxu0 0.0
    %4352 = vmatpush1.msra.mxu0 0.0
    %4353 = vmatprep.subr.mxu0 0.0
    %4354 = vmatpush1.msra.mxu0 0.0
    %4355 = vmatprep.subr.mxu0 0.0
    %4356 = vmatpush1.msra.mxu0 0.0
    %4357 = vmatprep.subr.mxu0 0.0
    %4358 = vmatpush1.msra.mxu0 0.0
    %4359 = vmatprep.subr.mxu0 0.0
    %4360 = vmatpush1.msra.mxu0 0.0
    %4361 = vmatprep.subr.mxu0 0.0
    %4362 = vmatpush1.msra.mxu0 0.0
    %4363 = vmatprep.subr.mxu0 0.0
    %4364 = vmatpush1.msra.mxu0 0.0
    %4365 = vmatprep.subr.mxu0 0.0
    %4366 = vmatpush1.msra.mxu0 0.0
    %4367 = vmatprep.subr.mxu0 0.0
    %4368 = vmatpush1.msra.mxu0 0.0
    %4369 = vmatprep.subr.mxu0 0.0
    %4370 = vmatpush1.msra.mxu0 0.0
    %4371 = vmatprep.subr.mxu0 0.0
    %4372 = vmatpush1.msra.mxu0 0.0
    %4373 = vmatprep.subr.mxu0 0.0
    %4374 = vmatpush1.msra.mxu0 0.0
    %4375 = vmatprep.subr.mxu0 0.0
    %4376 = vmatpush1.msra.mxu0 0.0
    %4377 = vmatprep.subr.mxu0 0.0
    %4378 = vmatpush1.msra.mxu0 0.0
    %4379 = vmatprep.subr.mxu0 0.0
    %4380 = vmatpush1.msra.mxu0 0.0
    %4381 = vmatprep.mubr.f32.mxu0 0.0
    %4382 = vmatmul.mubr.f32.gmra.mrb[0].mxu0 %v4315
    %v4383 = vpop.f32.mrb[0].mxu0
    %v4384 = vadd.f32 0.0, %v4383
    %v4385 = vpop.f32.mrb[0].mxu0
    %4386 = vdwg.mxu0
    %4388 = vrot.lane.b32.xlu0 %v4384, 16
    %v4389 = vpop.permute.xlu0 %4388
    %v4391 = vsel %vm390, %v4311, %v4389
    %v4392 = vld [vmem:[%s13] sm:$0xff]
    %v4393 = vld [vmem:[%s13 + $0x8] sm:$0xff]
    %v4394 = vld [vmem:[%s13 + $0x10] sm:$0xff]
    %v4395 = vld [vmem:[%s13 + $0x18] sm:$0xff]
    %v4396 = vld [vmem:[#allocation10] sm:$0x1]
    %v4398 = vlaneseq
    %v4399 = vshrl.u32 %v4398, 7
    %v4400 = vsub.s32 0, %v4399
    %v4401 = vrot.slane %v4396, %v4400
    %v4404 = vsel %vm2278, %v4391, 0
    %4406 = vmatprep.subr.mxu0 0.0
    %4407 = vmatpush1.msra.mxu0 %v4392
    %4408 = vmatprep.subr.mxu0 0.0
    %4409 = vmatpush1.msra.mxu0 %v4393
    %4410 = vmatprep.subr.mxu0 0.0
    %4411 = vmatpush1.msra.mxu0 %v4394
    %4412 = vmatprep.subr.mxu0 0.0
    %4413 = vmatpush1.msra.mxu0 %v4395
    %4414 = vmatprep.subr.mxu0 0.0
    %4415 = vmatpush1.msra.mxu0 0.0
    %4416 = vmatprep.subr.mxu0 0.0
    %4417 = vmatpush1.msra.mxu0 0.0
    %4418 = vmatprep.subr.mxu0 0.0
    %4419 = vmatpush1.msra.mxu0 0.0
    %4420 = vmatprep.subr.mxu0 0.0
    %4421 = vmatpush1.msra.mxu0 0.0
    %4422 = vmatprep.subr.mxu0 0.0
    %4423 = vmatpush1.msra.mxu0 0.0
    %4424 = vmatprep.subr.mxu0 0.0
    %4425 = vmatpush1.msra.mxu0 0.0
    %4426 = vmatprep.subr.mxu0 0.0
    %4427 = vmatpush1.msra.mxu0 0.0
    %4428 = vmatprep.subr.mxu0 0.0
    %4429 = vmatpush1.msra.mxu0 0.0
    %4430 = vmatprep.subr.mxu0 0.0
    %4431 = vmatpush1.msra.mxu0 0.0
    %4432 = vmatprep.subr.mxu0 0.0
    %4433 = vmatpush1.msra.mxu0 0.0
    %4434 = vmatprep.subr.mxu0 0.0
    %4435 = vmatpush1.msra.mxu0 0.0
    %4436 = vmatprep.subr.mxu0 0.0
    %4437 = vmatpush1.msra.mxu0 0.0
    %4438 = vmatprep.subr.mxu0 0.0
    %4439 = vmatpush1.msra.mxu0 0.0
    %4440 = vmatprep.subr.mxu0 0.0
    %4441 = vmatpush1.msra.mxu0 0.0
    %4442 = vmatprep.subr.mxu0 0.0
    %4443 = vmatpush1.msra.mxu0 0.0
    %4444 = vmatprep.subr.mxu0 0.0
    %4445 = vmatpush1.msra.mxu0 0.0
    %4446 = vmatprep.subr.mxu0 0.0
    %4447 = vmatpush1.msra.mxu0 0.0
    %4448 = vmatprep.subr.mxu0 0.0
    %4449 = vmatpush1.msra.mxu0 0.0
    %4450 = vmatprep.subr.mxu0 0.0
    %4451 = vmatpush1.msra.mxu0 0.0
    %4452 = vmatprep.subr.mxu0 0.0
    %4453 = vmatpush1.msra.mxu0 0.0
    %4454 = vmatprep.subr.mxu0 0.0
    %4455 = vmatpush1.msra.mxu0 0.0
    %4456 = vmatprep.subr.mxu0 0.0
    %4457 = vmatpush1.msra.mxu0 0.0
    %4458 = vmatprep.subr.mxu0 0.0
    %4459 = vmatpush1.msra.mxu0 0.0
    %4460 = vmatprep.subr.mxu0 0.0
    %4461 = vmatpush1.msra.mxu0 0.0
    %4462 = vmatprep.subr.mxu0 0.0
    %4463 = vmatpush1.msra.mxu0 0.0
    %4464 = vmatprep.subr.mxu0 0.0
    %4465 = vmatpush1.msra.mxu0 0.0
    %4466 = vmatprep.subr.mxu0 0.0
    %4467 = vmatpush1.msra.mxu0 0.0
    %4468 = vmatprep.subr.mxu0 0.0
    %4469 = vmatpush1.msra.mxu0 0.0
    %4470 = vmatprep.mubr.f32.mxu0 0.0
    %4471 = vmatmul.mubr.f32.gmra.mrb[0].mxu0 %v4404
    %v4472 = vpop.f32.mrb[0].mxu0
    %v4473 = vadd.f32 %v4401, %v4472
    %v4474 = vpop.f32.mrb[0].mxu0
    %4475 = vdwg.mxu0
    %4477 = vrot.lane.b32.xlu0 %v4473, 16
    %v4478 = vpop.permute.xlu0 %4477
    %v4480 = vsel %vm390, %v378, %v4478
    %v4481 = vld [vmem:[%s53] sm:$0xff]
    %v4482 = vld [vmem:[%s53 + $0x8] sm:$0xff]
    %v4483 = vld [vmem:[%s53 + $0x10] sm:$0xff]
    %v4484 = vld [vmem:[%s53 + $0x18] sm:$0xff]
    %v4485 = vld [vmem:[%s57] sm:$0x1]
    %v4487 = vlaneseq
    %v4488 = vshrl.u32 %v4487, 7
    %v4489 = vsub.s32 0, %v4488
    %v4490 = vrot.slane %v4485, %v4489
    %v4493 = vsel %vm2278, %v4480, 0
    %4495 = vmatprep.subr.mxu0 0.0
    %4496 = vmatpush1.msra.mxu0 %v4481
    %4497 = vmatprep.subr.mxu0 0.0
    %4498 = vmatpush1.msra.mxu0 %v4482
    %4499 = vmatprep.subr.mxu0 0.0
    %4500 = vmatpush1.msra.mxu0 %v4483
    %4501 = vmatprep.subr.mxu0 0.0
    %4502 = vmatpush1.msra.mxu0 %v4484
    %4503 = vmatprep.subr.mxu0 0.0
    %4504 = vmatpush1.msra.mxu0 0.0
    %4505 = vmatprep.subr.mxu0 0.0
    %4506 = vmatpush1.msra.mxu0 0.0
    %4507 = vmatprep.subr.mxu0 0.0
    %4508 = vmatpush1.msra.mxu0 0.0
    %4509 = vmatprep.subr.mxu0 0.0
    %4510 = vmatpush1.msra.mxu0 0.0
    %4511 = vmatprep.subr.mxu0 0.0
    %4512 = vmatpush1.msra.mxu0 0.0
    %4513 = vmatprep.subr.mxu0 0.0
    %4514 = vmatpush1.msra.mxu0 0.0
    %4515 = vmatprep.subr.mxu0 0.0
    %4516 = vmatpush1.msra.mxu0 0.0
    %4517 = vmatprep.subr.mxu0 0.0
    %4518 = vmatpush1.msra.mxu0 0.0
    %4519 = vmatprep.subr.mxu0 0.0
    %4520 = vmatpush1.msra.mxu0 0.0
    %4521 = vmatprep.subr.mxu0 0.0
    %4522 = vmatpush1.msra.mxu0 0.0
    %4523 = vmatprep.subr.mxu0 0.0
    %4524 = vmatpush1.msra.mxu0 0.0
    %4525 = vmatprep.subr.mxu0 0.0
    %4526 = vmatpush1.msra.mxu0 0.0
    %4527 = vmatprep.subr.mxu0 0.0
    %4528 = vmatpush1.msra.mxu0 0.0
    %4529 = vmatprep.subr.mxu0 0.0
    %4530 = vmatpush1.msra.mxu0 0.0
    %4531 = vmatprep.subr.mxu0 0.0
    %4532 = vmatpush1.msra.mxu0 0.0
    %4533 = vmatprep.subr.mxu0 0.0
    %4534 = vmatpush1.msra.mxu0 0.0
    %4535 = vmatprep.subr.mxu0 0.0
    %4536 = vmatpush1.msra.mxu0 0.0
    %4537 = vmatprep.subr.mxu0 0.0
    %4538 = vmatpush1.msra.mxu0 0.0
    %4539 = vmatprep.subr.mxu0 0.0
    %4540 = vmatpush1.msra.mxu0 0.0
    %4541 = vmatprep.subr.mxu0 0.0
    %4542 = vmatpush1.msra.mxu0 0.0
    %4543 = vmatprep.subr.mxu0 0.0
    %4544 = vmatpush1.msra.mxu0 0.0
    %4545 = vmatprep.subr.mxu0 0.0
    %4546 = vmatpush1.msra.mxu0 0.0
    %4547 = vmatprep.subr.mxu0 0.0
    %4548 = vmatpush1.msra.mxu0 0.0
    %4549 = vmatprep.subr.mxu0 0.0
    %4550 = vmatpush1.msra.mxu0 0.0
    %4551 = vmatprep.subr.mxu0 0.0
    %4552 = vmatpush1.msra.mxu0 0.0
    %4553 = vmatprep.subr.mxu0 0.0
    %4554 = vmatpush1.msra.mxu0 0.0
    %4555 = vmatprep.subr.mxu0 0.0
    %4556 = vmatpush1.msra.mxu0 0.0
    %4557 = vmatprep.subr.mxu0 0.0
    %4558 = vmatpush1.msra.mxu0 0.0
    %4559 = vmatprep.mubr.f32.mxu0 0.0
    %4560 = vmatmul.mubr.f32.gmra.mrb[0].mxu0 %v4493
    %v4561 = vpop.f32.mrb[0].mxu0
    %v4562 = vadd.f32 %v4490, %v4561
    %v4563 = vpop.f32.mrb[0].mxu0
    %4564 = vdwg.mxu0
    %v4565 = vld [vmem:[%s55] sm:$0xff]
    %v4566 = vld [vmem:[%s55 + $0x8] sm:$0xff]
    %4567 = vmatprep.subr.mxu0 0.0
    %4568 = vmatpush1.msra.mxu0 %v4565
    %4569 = vmatprep.subr.mxu0 0.0
    %4570 = vmatpush1.msra.mxu0 %v4566
    %4571 = vmatprep.subr.mxu0 0.0
    %4572 = vmatpush1.msra.mxu0 0.0
    %4573 = vmatprep.subr.mxu0 0.0
    %4574 = vmatpush1.msra.mxu0 0.0
    %4575 = vmatprep.subr.mxu0 0.0
    %4576 = vmatpush1.msra.mxu0 0.0
    %4577 = vmatprep.subr.mxu0 0.0
    %4578 = vmatpush1.msra.mxu0 0.0
    %4579 = vmatprep.subr.mxu0 0.0
    %4580 = vmatpush1.msra.mxu0 0.0
    %4581 = vmatprep.subr.mxu0 0.0
    %4582 = vmatpush1.msra.mxu0 0.0
    %4583 = vmatprep.subr.mxu0 0.0
    %4584 = vmatpush1.msra.mxu0 0.0
    %4585 = vmatprep.subr.mxu0 0.0
    %4586 = vmatpush1.msra.mxu0 0.0
    %4587 = vmatprep.subr.mxu0 0.0
    %4588 = vmatpush1.msra.mxu0 0.0
    %4589 = vmatprep.subr.mxu0 0.0
    %4590 = vmatpush1.msra.mxu0 0.0
    %4591 = vmatprep.subr.mxu0 0.0
    %4592 = vmatpush1.msra.mxu0 0.0
    %4593 = vmatprep.subr.mxu0 0.0
    %4594 = vmatpush1.msra.mxu0 0.0
    %4595 = vmatprep.subr.mxu0 0.0
    %4596 = vmatpush1.msra.mxu0 0.0
    %4597 = vmatprep.subr.mxu0 0.0
    %4598 = vmatpush1.msra.mxu0 0.0
    %4599 = vmatprep.subr.mxu0 0.0
    %4600 = vmatpush1.msra.mxu0 0.0
    %4601 = vmatprep.subr.mxu0 0.0
    %4602 = vmatpush1.msra.mxu0 0.0
    %4603 = vmatprep.subr.mxu0 0.0
    %4604 = vmatpush1.msra.mxu0 0.0
    %4605 = vmatprep.subr.mxu0 0.0
    %4606 = vmatpush1.msra.mxu0 0.0
    %4607 = vmatprep.subr.mxu0 0.0
    %4608 = vmatpush1.msra.mxu0 0.0
    %4609 = vmatprep.subr.mxu0 0.0
    %4610 = vmatpush1.msra.mxu0 0.0
    %4611 = vmatprep.subr.mxu0 0.0
    %4612 = vmatpush1.msra.mxu0 0.0
    %4613 = vmatprep.subr.mxu0 0.0
    %4614 = vmatpush1.msra.mxu0 0.0
    %4615 = vmatprep.subr.mxu0 0.0
    %4616 = vmatpush1.msra.mxu0 0.0
    %4617 = vmatprep.subr.mxu0 0.0
    %4618 = vmatpush1.msra.mxu0 0.0
    %4619 = vmatprep.subr.mxu0 0.0
    %4620 = vmatpush1.msra.mxu0 0.0
    %4621 = vmatprep.subr.mxu0 0.0
    %4622 = vmatpush1.msra.mxu0 0.0
    %4623 = vmatprep.subr.mxu0 0.0
    %4624 = vmatpush1.msra.mxu0 0.0
    %4625 = vmatprep.subr.mxu0 0.0
    %4626 = vmatpush1.msra.mxu0 0.0
    %4627 = vmatprep.subr.mxu0 0.0
    %4628 = vmatpush1.msra.mxu0 0.0
    %4629 = vmatprep.subr.mxu0 0.0
    %4630 = vmatpush1.msra.mxu0 0.0
    %4631 = vmatprep.mubr.f32.mxu0 0.0
    %4632 = vmatmul.mubr.f32.gmra.mrb[0].mxu0 %v467
    %v4633 = vpop.f32.mrb[0].mxu0
    %v4634 = vadd.f32 0.0, %v4633
    %v4635 = vpop.f32.mrb[0].mxu0
    %4636 = vdwg.mxu0
    %v4637 = vadd.f32 %v4562, %v4634
    %v4638 = vxor.u32 %v4637, 2147483648
    %v4639 = vmul.f32 %v4638, 1.442695
    %v4640 = vpow.pop %v4639
    %v4641 = vadd.f32 %v4640, 1.0
    %v4642 = vrcp.pop %v4641
    %v4643 = vmul.f32 1.0, %v4642
    %v4644 = vtanh.pop %v4637
    %v4645 = vmul.f32 %v4643, 0.0
    %4647 = vrot.lane.b32.xlu0 %v4644, 96
    %v4648 = vpop.permute.xlu0 %4647
    %v4650 = vmul.f32 %v4643, %v4648
    %4652 = vrot.lane.b32.xlu0 %v4650, 16
    %v4653 = vpop.permute.xlu0 %4652
    %v4655 = vadd.f32 %v4645, %v4653
    %v4656 = vtanh.pop %v4655
    %4658 = vrot.lane.b32.xlu0 %v4656, 32
    %v4659 = vpop.permute.xlu0 %4658
    %v4661 = vmul.f32 %v4643, %v4659
    %4663 = vrot.lane.b32.xlu0 %v4661, 80
    %v4664 = vpop.permute.xlu0 %4663
    %v4665 = vsel %vm390, %v4664, 0
    %4667 = vmatprep.subr.mxu0 0.0
    %4668 = vmatpush1.msra.mxu0 %v4565
    %4669 = vmatprep.subr.mxu0 0.0
    %4670 = vmatpush1.msra.mxu0 %v4566
    %4671 = vmatprep.subr.mxu0 0.0
    %4672 = vmatpush1.msra.mxu0 0.0
    %4673 = vmatprep.subr.mxu0 0.0
    %4674 = vmatpush1.msra.mxu0 0.0
    %4675 = vmatprep.subr.mxu0 0.0
    %4676 = vmatpush1.msra.mxu0 0.0
    %4677 = vmatprep.subr.mxu0 0.0
    %4678 = vmatpush1.msra.mxu0 0.0
    %4679 = vmatprep.subr.mxu0 0.0
    %4680 = vmatpush1.msra.mxu0 0.0
    %4681 = vmatprep.subr.mxu0 0.0
    %4682 = vmatpush1.msra.mxu0 0.0
    %4683 = vmatprep.subr.mxu0 0.0
    %4684 = vmatpush1.msra.mxu0 0.0
    %4685 = vmatprep.subr.mxu0 0.0
    %4686 = vmatpush1.msra.mxu0 0.0
    %4687 = vmatprep.subr.mxu0 0.0
    %4688 = vmatpush1.msra.mxu0 0.0
    %4689 = vmatprep.subr.mxu0 0.0
    %4690 = vmatpush1.msra.mxu0 0.0
    %4691 = vmatprep.subr.mxu0 0.0
    %4692 = vmatpush1.msra.mxu0 0.0
    %4693 = vmatprep.subr.mxu0 0.0
    %4694 = vmatpush1.msra.mxu0 0.0
    %4695 = vmatprep.subr.mxu0 0.0
    %4696 = vmatpush1.msra.mxu0 0.0
    %4697 = vmatprep.subr.mxu0 0.0
    %4698 = vmatpush1.msra.mxu0 0.0
    %4699 = vmatprep.subr.mxu0 0.0
    %4700 = vmatpush1.msra.mxu0 0.0
    %4701 = vmatprep.subr.mxu0 0.0
    %4702 = vmatpush1.msra.mxu0 0.0
    %4703 = vmatprep.subr.mxu0 0.0
    %4704 = vmatpush1.msra.mxu0 0.0
    %4705 = vmatprep.subr.mxu0 0.0
    %4706 = vmatpush1.msra.mxu0 0.0
    %4707 = vmatprep.subr.mxu0 0.0
    %4708 = vmatpush1.msra.mxu0 0.0
    %4709 = vmatprep.subr.mxu0 0.0
    %4710 = vmatpush1.msra.mxu0 0.0
    %4711 = vmatprep.subr.mxu0 0.0
    %4712 = vmatpush1.msra.mxu0 0.0
    %4713 = vmatprep.subr.mxu0 0.0
    %4714 = vmatpush1.msra.mxu0 0.0
    %4715 = vmatprep.subr.mxu0 0.0
    %4716 = vmatpush1.msra.mxu0 0.0
    %4717 = vmatprep.subr.mxu0 0.0
    %4718 = vmatpush1.msra.mxu0 0.0
    %4719 = vmatprep.subr.mxu0 0.0
    %4720 = vmatpush1.msra.mxu0 0.0
    %4721 = vmatprep.subr.mxu0 0.0
    %4722 = vmatpush1.msra.mxu0 0.0
    %4723 = vmatprep.subr.mxu0 0.0
    %4724 = vmatpush1.msra.mxu0 0.0
    %4725 = vmatprep.subr.mxu0 0.0
    %4726 = vmatpush1.msra.mxu0 0.0
    %4727 = vmatprep.subr.mxu0 0.0
    %4728 = vmatpush1.msra.mxu0 0.0
    %4729 = vmatprep.subr.mxu0 0.0
    %4730 = vmatpush1.msra.mxu0 0.0
    %4731 = vmatprep.mubr.f32.mxu0 0.0
    %4732 = vmatmul.mubr.f32.gmra.mrb[0].mxu0 %v4665
    %v4733 = vpop.f32.mrb[0].mxu0
    %v4734 = vadd.f32 0.0, %v4733
    %v4735 = vpop.f32.mrb[0].mxu0
    %4736 = vdwg.mxu0
    %v4738 = vrot.slane %v4734, 7
    %v4740 = vadd.f32 %v4562, %v4738
    %v4741 = vxor.u32 %v4740, 2147483648
    %v4742 = vmul.f32 %v4741, 1.442695
    %v4743 = vpow.pop %v4742
    %v4744 = vadd.f32 %v4743, 1.0
    %v4745 = vrcp.pop %v4744
    %v4746 = vmul.f32 1.0, %v4745
    %v4747 = vtanh.pop %v4740
    %v4749 = vrot.slane %v4655, 7
    %v4751 = vmul.f32 %v4746, %v4749
    %4753 = vrot.lane.b32.xlu0 %v4747, 96
    %v4754 = vpop.permute.xlu0 %4753
    %v4756 = vmul.f32 %v4746, %v4754
    %4758 = vrot.lane.b32.xlu0 %v4756, 16
    %v4759 = vpop.permute.xlu0 %4758
    %v4761 = vadd.f32 %v4751, %v4759
    %v4762 = vtanh.pop %v4761
    %4764 = vrot.lane.b32.xlu0 %v4762, 32
    %v4765 = vpop.permute.xlu0 %4764
    %v4767 = vmul.f32 %v4746, %v4765
    %v4769 = vrot.slane %v4767, 1
    %4770 = vrot.lane.b32.xlu0 %v4769, 80
    %v4771 = vpop.permute.xlu0 %4770
    %v4772 = vsel %vm390, %v4771, 0
    %4774 = vmatprep.subr.mxu0 0.0
    %4775 = vmatpush1.msra.mxu0 %v4565
    %4776 = vmatprep.subr.mxu0 0.0
    %4777 = vmatpush1.msra.mxu0 %v4566
    %4778 = vmatprep.subr.mxu0 0.0
    %4779 = vmatpush1.msra.mxu0 0.0
    %4780 = vmatprep.subr.mxu0 0.0
    %4781 = vmatpush1.msra.mxu0 0.0
    %4782 = vmatprep.subr.mxu0 0.0
    %4783 = vmatpush1.msra.mxu0 0.0
    %4784 = vmatprep.subr.mxu0 0.0
    %4785 = vmatpush1.msra.mxu0 0.0
    %4786 = vmatprep.subr.mxu0 0.0
    %4787 = vmatpush1.msra.mxu0 0.0
    %4788 = vmatprep.subr.mxu0 0.0
    %4789 = vmatpush1.msra.mxu0 0.0
    %4790 = vmatprep.subr.mxu0 0.0
    %4791 = vmatpush1.msra.mxu0 0.0
    %4792 = vmatprep.subr.mxu0 0.0
    %4793 = vmatpush1.msra.mxu0 0.0
    %4794 = vmatprep.subr.mxu0 0.0
    %4795 = vmatpush1.msra.mxu0 0.0
    %4796 = vmatprep.subr.mxu0 0.0
    %4797 = vmatpush1.msra.mxu0 0.0
    %4798 = vmatprep.subr.mxu0 0.0
    %4799 = vmatpush1.msra.mxu0 0.0
    %4800 = vmatprep.subr.mxu0 0.0
    %4801 = vmatpush1.msra.mxu0 0.0
    %4802 = vmatprep.subr.mxu0 0.0
    %4803 = vmatpush1.msra.mxu0 0.0
    %4804 = vmatprep.subr.mxu0 0.0
    %4805 = vmatpush1.msra.mxu0 0.0
    %4806 = vmatprep.subr.mxu0 0.0
    %4807 = vmatpush1.msra.mxu0 0.0
    %4808 = vmatprep.subr.mxu0 0.0
    %4809 = vmatpush1.msra.mxu0 0.0
    %4810 = vmatprep.subr.mxu0 0.0
    %4811 = vmatpush1.msra.mxu0 0.0
    %4812 = vmatprep.subr.mxu0 0.0
    %4813 = vmatpush1.msra.mxu0 0.0
    %4814 = vmatprep.subr.mxu0 0.0
    %4815 = vmatpush1.msra.mxu0 0.0
    %4816 = vmatprep.subr.mxu0 0.0
    %4817 = vmatpush1.msra.mxu0 0.0
    %4818 = vmatprep.subr.mxu0 0.0
    %4819 = vmatpush1.msra.mxu0 0.0
    %4820 = vmatprep.subr.mxu0 0.0
    %4821 = vmatpush1.msra.mxu0 0.0
    %4822 = vmatprep.subr.mxu0 0.0
    %4823 = vmatpush1.msra.mxu0 0.0
    %4824 = vmatprep.subr.mxu0 0.0
    %4825 = vmatpush1.msra.mxu0 0.0
    %4826 = vmatprep.subr.mxu0 0.0
    %4827 = vmatpush1.msra.mxu0 0.0
    %4828 = vmatprep.subr.mxu0 0.0
    %4829 = vmatpush1.msra.mxu0 0.0
    %4830 = vmatprep.subr.mxu0 0.0
    %4831 = vmatpush1.msra.mxu0 0.0
    %4832 = vmatprep.subr.mxu0 0.0
    %4833 = vmatpush1.msra.mxu0 0.0
    %4834 = vmatprep.subr.mxu0 0.0
    %4835 = vmatpush1.msra.mxu0 0.0
    %4836 = vmatprep.subr.mxu0 0.0
    %4837 = vmatpush1.msra.mxu0 0.0
    %4838 = vmatprep.mubr.f32.mxu0 0.0
    %4839 = vmatmul.mubr.f32.gmra.mrb[0].mxu0 %v4772
    %v4840 = vpop.f32.mrb[0].mxu0
    %v4841 = vadd.f32 0.0, %v4840
    %v4842 = vpop.f32.mrb[0].mxu0
    %4843 = vdwg.mxu0
    %v4845 = vrot.slane %v4841, 6
    %v4847 = vadd.f32 %v4562, %v4845
    %v4848 = vxor.u32 %v4847, 2147483648
    %v4849 = vmul.f32 %v4848, 1.442695
    %v4850 = vpow.pop %v4849
    %v4851 = vadd.f32 %v4850, 1.0
    %v4852 = vrcp.pop %v4851
    %v4853 = vmul.f32 1.0, %v4852
    %v4854 = vtanh.pop %v4847
    %v4856 = vrot.slane %v4761, 7
    %v4858 = vmul.f32 %v4853, %v4856
    %4860 = vrot.lane.b32.xlu0 %v4854, 96
    %v4861 = vpop.permute.xlu0 %4860
    %v4863 = vmul.f32 %v4853, %v4861
    %4865 = vrot.lane.b32.xlu0 %v4863, 16
    %v4866 = vpop.permute.xlu0 %4865
    %v4868 = vadd.f32 %v4858, %v4866
    %v4869 = vtanh.pop %v4868
    %4871 = vrot.lane.b32.xlu0 %v4869, 32
    %v4872 = vpop.permute.xlu0 %4871
    %v4874 = vmul.f32 %v4853, %v4872
    %v4876 = vrot.slane %v4874, 2
    %4877 = vrot.lane.b32.xlu0 %v4876, 80
    %v4878 = vpop.permute.xlu0 %4877
    %v4879 = vsel %vm390, %v4878, 0
    %4881 = vmatprep.subr.mxu0 0.0
    %4882 = vmatpush1.msra.mxu0 %v4565
    %4883 = vmatprep.subr.mxu0 0.0
    %4884 = vmatpush1.msra.mxu0 %v4566
    %4885 = vmatprep.subr.mxu0 0.0
    %4886 = vmatpush1.msra.mxu0 0.0
    %4887 = vmatprep.subr.mxu0 0.0
    %4888 = vmatpush1.msra.mxu0 0.0
    %4889 = vmatprep.subr.mxu0 0.0
    %4890 = vmatpush1.msra.mxu0 0.0
    %4891 = vmatprep.subr.mxu0 0.0
    %4892 = vmatpush1.msra.mxu0 0.0
    %4893 = vmatprep.subr.mxu0 0.0
    %4894 = vmatpush1.msra.mxu0 0.0
    %4895 = vmatprep.subr.mxu0 0.0
    %4896 = vmatpush1.msra.mxu0 0.0
    %4897 = vmatprep.subr.mxu0 0.0
    %4898 = vmatpush1.msra.mxu0 0.0
    %4899 = vmatprep.subr.mxu0 0.0
    %4900 = vmatpush1.msra.mxu0 0.0
    %4901 = vmatprep.subr.mxu0 0.0
    %4902 = vmatpush1.msra.mxu0 0.0
    %4903 = vmatprep.subr.mxu0 0.0
    %4904 = vmatpush1.msra.mxu0 0.0
    %4905 = vmatprep.subr.mxu0 0.0
    %4906 = vmatpush1.msra.mxu0 0.0
    %4907 = vmatprep.subr.mxu0 0.0
    %4908 = vmatpush1.msra.mxu0 0.0
    %4909 = vmatprep.subr.mxu0 0.0
    %4910 = vmatpush1.msra.mxu0 0.0
    %4911 = vmatprep.subr.mxu0 0.0
    %4912 = vmatpush1.msra.mxu0 0.0
    %4913 = vmatprep.subr.mxu0 0.0
    %4914 = vmatpush1.msra.mxu0 0.0
    %4915 = vmatprep.subr.mxu0 0.0
    %4916 = vmatpush1.msra.mxu0 0.0
    %4917 = vmatprep.subr.mxu0 0.0
    %4918 = vmatpush1.msra.mxu0 0.0
    %4919 = vmatprep.subr.mxu0 0.0
    %4920 = vmatpush1.msra.mxu0 0.0
    %4921 = vmatprep.subr.mxu0 0.0
    %4922 = vmatpush1.msra.mxu0 0.0
    %4923 = vmatprep.subr.mxu0 0.0
    %4924 = vmatpush1.msra.mxu0 0.0
    %4925 = vmatprep.subr.mxu0 0.0
    %4926 = vmatpush1.msra.mxu0 0.0
    %4927 = vmatprep.subr.mxu0 0.0
    %4928 = vmatpush1.msra.mxu0 0.0
    %4929 = vmatprep.subr.mxu0 0.0
    %4930 = vmatpush1.msra.mxu0 0.0
    %4931 = vmatprep.subr.mxu0 0.0
    %4932 = vmatpush1.msra.mxu0 0.0
    %4933 = vmatprep.subr.mxu0 0.0
    %4934 = vmatpush1.msra.mxu0 0.0
    %4935 = vmatprep.subr.mxu0 0.0
    %4936 = vmatpush1.msra.mxu0 0.0
    %4937 = vmatprep.subr.mxu0 0.0
    %4938 = vmatpush1.msra.mxu0 0.0
    %4939 = vmatprep.subr.mxu0 0.0
    %4940 = vmatpush1.msra.mxu0 0.0
    %4941 = vmatprep.subr.mxu0 0.0
    %4942 = vmatpush1.msra.mxu0 0.0
    %4943 = vmatprep.subr.mxu0 0.0
    %4944 = vmatpush1.msra.mxu0 0.0
    %4945 = vmatprep.mubr.f32.mxu0 0.0
    %4946 = vmatmul.mubr.f32.gmra.mrb[0].mxu0 %v4879
    %v4947 = vpop.f32.mrb[0].mxu0
    %v4948 = vadd.f32 0.0, %v4947
    %v4949 = vpop.f32.mrb[0].mxu0
    %4950 = vdwg.mxu0
    %v4952 = vrot.slane %v4948, 5
    %v4954 = vadd.f32 %v4562, %v4952
    %v4955 = vxor.u32 %v4954, 2147483648
    %v4956 = vmul.f32 %v4955, 1.442695
    %v4957 = vpow.pop %v4956
    %v4958 = vadd.f32 %v4957, 1.0
    %v4959 = vrcp.pop %v4958
    %v4960 = vmul.f32 1.0, %v4959
    %v4961 = vtanh.pop %v4954
    %v4963 = vrot.slane %v4868, 7
    %v4965 = vmul.f32 %v4960, %v4963
    %4967 = vrot.lane.b32.xlu0 %v4961, 96
    %v4968 = vpop.permute.xlu0 %4967
    %v4970 = vmul.f32 %v4960, %v4968
    %4972 = vrot.lane.b32.xlu0 %v4970, 16
    %v4973 = vpop.permute.xlu0 %4972
    %v4975 = vadd.f32 %v4965, %v4973
    %v4976 = vtanh.pop %v4975
    %4978 = vrot.lane.b32.xlu0 %v4976, 32
    %v4979 = vpop.permute.xlu0 %4978
    %v4981 = vmul.f32 %v4960, %v4979
    %v4983 = vrot.slane %v4981, 3
    %4984 = vrot.lane.b32.xlu0 %v4983, 80
    %v4985 = vpop.permute.xlu0 %4984
    %v4986 = vsel %vm390, %v4985, 0
    %4988 = vmatprep.subr.mxu0 0.0
    %4989 = vmatpush1.msra.mxu0 %v4565
    %4990 = vmatprep.subr.mxu0 0.0
    %4991 = vmatpush1.msra.mxu0 %v4566
    %4992 = vmatprep.subr.mxu0 0.0
    %4993 = vmatpush1.msra.mxu0 0.0
    %4994 = vmatprep.subr.mxu0 0.0
    %4995 = vmatpush1.msra.mxu0 0.0
    %4996 = vmatprep.subr.mxu0 0.0
    %4997 = vmatpush1.msra.mxu0 0.0
    %4998 = vmatprep.subr.mxu0 0.0
    %4999 = vmatpush1.msra.mxu0 0.0
    %5000 = vmatprep.subr.mxu0 0.0
    %5001 = vmatpush1.msra.mxu0 0.0
    %5002 = vmatprep.subr.mxu0 0.0
    %5003 = vmatpush1.msra.mxu0 0.0
    %5004 = vmatprep.subr.mxu0 0.0
    %5005 = vmatpush1.msra.mxu0 0.0
    %5006 = vmatprep.subr.mxu0 0.0
    %5007 = vmatpush1.msra.mxu0 0.0
    %5008 = vmatprep.subr.mxu0 0.0
    %5009 = vmatpush1.msra.mxu0 0.0
    %5010 = vmatprep.subr.mxu0 0.0
    %5011 = vmatpush1.msra.mxu0 0.0
    %5012 = vmatprep.subr.mxu0 0.0
    %5013 = vmatpush1.msra.mxu0 0.0
    %5014 = vmatprep.subr.mxu0 0.0
    %5015 = vmatpush1.msra.mxu0 0.0
    %5016 = vmatprep.subr.mxu0 0.0
    %5017 = vmatpush1.msra.mxu0 0.0
    %5018 = vmatprep.subr.mxu0 0.0
    %5019 = vmatpush1.msra.mxu0 0.0
    %5020 = vmatprep.subr.mxu0 0.0
    %5021 = vmatpush1.msra.mxu0 0.0
    %5022 = vmatprep.subr.mxu0 0.0
    %5023 = vmatpush1.msra.mxu0 0.0
    %5024 = vmatprep.subr.mxu0 0.0
    %5025 = vmatpush1.msra.mxu0 0.0
    %5026 = vmatprep.subr.mxu0 0.0
    %5027 = vmatpush1.msra.mxu0 0.0
    %5028 = vmatprep.subr.mxu0 0.0
    %5029 = vmatpush1.msra.mxu0 0.0
    %5030 = vmatprep.subr.mxu0 0.0
    %5031 = vmatpush1.msra.mxu0 0.0
    %5032 = vmatprep.subr.mxu0 0.0
    %5033 = vmatpush1.msra.mxu0 0.0
    %5034 = vmatprep.subr.mxu0 0.0
    %5035 = vmatpush1.msra.mxu0 0.0
    %5036 = vmatprep.subr.mxu0 0.0
    %5037 = vmatpush1.msra.mxu0 0.0
    %5038 = vmatprep.subr.mxu0 0.0
    %5039 = vmatpush1.msra.mxu0 0.0
    %5040 = vmatprep.subr.mxu0 0.0
    %5041 = vmatpush1.msra.mxu0 0.0
    %5042 = vmatprep.subr.mxu0 0.0
    %5043 = vmatpush1.msra.mxu0 0.0
    %5044 = vmatprep.subr.mxu0 0.0
    %5045 = vmatpush1.msra.mxu0 0.0
    %5046 = vmatprep.subr.mxu0 0.0
    %5047 = vmatpush1.msra.mxu0 0.0
    %5048 = vmatprep.subr.mxu0 0.0
    %5049 = vmatpush1.msra.mxu0 0.0
    %5050 = vmatprep.subr.mxu0 0.0
    %5051 = vmatpush1.msra.mxu0 0.0
    %5052 = vmatprep.mubr.f32.mxu0 0.0
    %5053 = vmatmul.mubr.f32.gmra.mrb[0].mxu0 %v4986
    %v5054 = vpop.f32.mrb[0].mxu0
    %v5055 = vadd.f32 0.0, %v5054
    %v5056 = vpop.f32.mrb[0].mxu0
    %5057 = vdwg.mxu0
    %v5059 = vrot.slane %v5055, 4
    %v5061 = vadd.f32 %v4562, %v5059
    %v5062 = vxor.u32 %v5061, 2147483648
    %v5063 = vmul.f32 %v5062, 1.442695
    %v5064 = vpow.pop %v5063
    %v5065 = vadd.f32 %v5064, 1.0
    %v5066 = vrcp.pop %v5065
    %v5067 = vmul.f32 1.0, %v5066
    %v5068 = vtanh.pop %v5061
    %v5070 = vrot.slane %v4975, 7
    %v5072 = vmul.f32 %v5067, %v5070
    %5074 = vrot.lane.b32.xlu0 %v5068, 96
    %v5075 = vpop.permute.xlu0 %5074
    %v5077 = vmul.f32 %v5067, %v5075
    %5079 = vrot.lane.b32.xlu0 %v5077, 16
    %v5080 = vpop.permute.xlu0 %5079
    %v5082 = vadd.f32 %v5072, %v5080
    %v5083 = vtanh.pop %v5082
    %5085 = vrot.lane.b32.xlu0 %v5083, 32
    %v5086 = vpop.permute.xlu0 %5085
    %v5088 = vmul.f32 %v5067, %v5086
    %v5090 = vrot.slane %v5088, 4
    %5091 = vrot.lane.b32.xlu0 %v5090, 80
    %v5092 = vpop.permute.xlu0 %5091
    %v5093 = vsel %vm390, %v5092, 0
    %5095 = vmatprep.subr.mxu0 0.0
    %5096 = vmatpush1.msra.mxu0 %v4565
    %5097 = vmatprep.subr.mxu0 0.0
    %5098 = vmatpush1.msra.mxu0 %v4566
    %5099 = vmatprep.subr.mxu0 0.0
    %5100 = vmatpush1.msra.mxu0 0.0
    %5101 = vmatprep.subr.mxu0 0.0
    %5102 = vmatpush1.msra.mxu0 0.0
    %5103 = vmatprep.subr.mxu0 0.0
    %5104 = vmatpush1.msra.mxu0 0.0
    %5105 = vmatprep.subr.mxu0 0.0
    %5106 = vmatpush1.msra.mxu0 0.0
    %5107 = vmatprep.subr.mxu0 0.0
    %5108 = vmatpush1.msra.mxu0 0.0
    %5109 = vmatprep.subr.mxu0 0.0
    %5110 = vmatpush1.msra.mxu0 0.0
    %5111 = vmatprep.subr.mxu0 0.0
    %5112 = vmatpush1.msra.mxu0 0.0
    %5113 = vmatprep.subr.mxu0 0.0
    %5114 = vmatpush1.msra.mxu0 0.0
    %5115 = vmatprep.subr.mxu0 0.0
    %5116 = vmatpush1.msra.mxu0 0.0
    %5117 = vmatprep.subr.mxu0 0.0
    %5118 = vmatpush1.msra.mxu0 0.0
    %5119 = vmatprep.subr.mxu0 0.0
    %5120 = vmatpush1.msra.mxu0 0.0
    %5121 = vmatprep.subr.mxu0 0.0
    %5122 = vmatpush1.msra.mxu0 0.0
    %5123 = vmatprep.subr.mxu0 0.0
    %5124 = vmatpush1.msra.mxu0 0.0
    %5125 = vmatprep.subr.mxu0 0.0
    %5126 = vmatpush1.msra.mxu0 0.0
    %5127 = vmatprep.subr.mxu0 0.0
    %5128 = vmatpush1.msra.mxu0 0.0
    %5129 = vmatprep.subr.mxu0 0.0
    %5130 = vmatpush1.msra.mxu0 0.0
    %5131 = vmatprep.subr.mxu0 0.0
    %5132 = vmatpush1.msra.mxu0 0.0
    %5133 = vmatprep.subr.mxu0 0.0
    %5134 = vmatpush1.msra.mxu0 0.0
    %5135 = vmatprep.subr.mxu0 0.0
    %5136 = vmatpush1.msra.mxu0 0.0
    %5137 = vmatprep.subr.mxu0 0.0
    %5138 = vmatpush1.msra.mxu0 0.0
    %5139 = vmatprep.subr.mxu0 0.0
    %5140 = vmatpush1.msra.mxu0 0.0
    %5141 = vmatprep.subr.mxu0 0.0
    %5142 = vmatpush1.msra.mxu0 0.0
    %5143 = vmatprep.subr.mxu0 0.0
    %5144 = vmatpush1.msra.mxu0 0.0
    %5145 = vmatprep.subr.mxu0 0.0
    %5146 = vmatpush1.msra.mxu0 0.0
    %5147 = vmatprep.subr.mxu0 0.0
    %5148 = vmatpush1.msra.mxu0 0.0
    %5149 = vmatprep.subr.mxu0 0.0
    %5150 = vmatpush1.msra.mxu0 0.0
    %5151 = vmatprep.subr.mxu0 0.0
    %5152 = vmatpush1.msra.mxu0 0.0
    %5153 = vmatprep.subr.mxu0 0.0
    %5154 = vmatpush1.msra.mxu0 0.0
    %5155 = vmatprep.subr.mxu0 0.0
    %5156 = vmatpush1.msra.mxu0 0.0
    %5157 = vmatprep.subr.mxu0 0.0
    %5158 = vmatpush1.msra.mxu0 0.0
    %5159 = vmatprep.mubr.f32.mxu0 0.0
    %5160 = vmatmul.mubr.f32.gmra.mrb[0].mxu0 %v5093
    %v5161 = vpop.f32.mrb[0].mxu0
    %v5162 = vadd.f32 0.0, %v5161
    %v5163 = vpop.f32.mrb[0].mxu0
    %5164 = vdwg.mxu0
    %v5166 = vrot.slane %v5162, 3
    %v5168 = vadd.f32 %v4562, %v5166
    %v5169 = vxor.u32 %v5168, 2147483648
    %v5170 = vmul.f32 %v5169, 1.442695
    %v5171 = vpow.pop %v5170
    %v5172 = vadd.f32 %v5171, 1.0
    %v5173 = vrcp.pop %v5172
    %v5174 = vmul.f32 1.0, %v5173
    %v5175 = vtanh.pop %v5168
    %v5177 = vrot.slane %v5082, 7
    %v5179 = vmul.f32 %v5174, %v5177
    %5181 = vrot.lane.b32.xlu0 %v5175, 96
    %v5182 = vpop.permute.xlu0 %5181
    %v5184 = vmul.f32 %v5174, %v5182
    %5186 = vrot.lane.b32.xlu0 %v5184, 16
    %v5187 = vpop.permute.xlu0 %5186
    %v5189 = vadd.f32 %v5179, %v5187
    %v5190 = vtanh.pop %v5189
    %5192 = vrot.lane.b32.xlu0 %v5190, 32
    %v5193 = vpop.permute.xlu0 %5192
    %v5195 = vmul.f32 %v5174, %v5193
    %v5197 = vrot.slane %v5195, 5
    %5198 = vrot.lane.b32.xlu0 %v5197, 80
    %v5199 = vpop.permute.xlu0 %5198
    %v5200 = vsel %vm390, %v5199, 0
    %5202 = vmatprep.subr.mxu0 0.0
    %5203 = vmatpush1.msra.mxu0 %v4565
    %5204 = vmatprep.subr.mxu0 0.0
    %5205 = vmatpush1.msra.mxu0 %v4566
    %5206 = vmatprep.subr.mxu0 0.0
    %5207 = vmatpush1.msra.mxu0 0.0
    %5208 = vmatprep.subr.mxu0 0.0
    %5209 = vmatpush1.msra.mxu0 0.0
    %5210 = vmatprep.subr.mxu0 0.0
    %5211 = vmatpush1.msra.mxu0 0.0
    %5212 = vmatprep.subr.mxu0 0.0
    %5213 = vmatpush1.msra.mxu0 0.0
    %5214 = vmatprep.subr.mxu0 0.0
    %5215 = vmatpush1.msra.mxu0 0.0
    %5216 = vmatprep.subr.mxu0 0.0
    %5217 = vmatpush1.msra.mxu0 0.0
    %5218 = vmatprep.subr.mxu0 0.0
    %5219 = vmatpush1.msra.mxu0 0.0
    %5220 = vmatprep.subr.mxu0 0.0
    %5221 = vmatpush1.msra.mxu0 0.0
    %5222 = vmatprep.subr.mxu0 0.0
    %5223 = vmatpush1.msra.mxu0 0.0
    %5224 = vmatprep.subr.mxu0 0.0
    %5225 = vmatpush1.msra.mxu0 0.0
    %5226 = vmatprep.subr.mxu0 0.0
    %5227 = vmatpush1.msra.mxu0 0.0
    %5228 = vmatprep.subr.mxu0 0.0
    %5229 = vmatpush1.msra.mxu0 0.0
    %5230 = vmatprep.subr.mxu0 0.0
    %5231 = vmatpush1.msra.mxu0 0.0
    %5232 = vmatprep.subr.mxu0 0.0
    %5233 = vmatpush1.msra.mxu0 0.0
    %5234 = vmatprep.subr.mxu0 0.0
    %5235 = vmatpush1.msra.mxu0 0.0
    %5236 = vmatprep.subr.mxu0 0.0
    %5237 = vmatpush1.msra.mxu0 0.0
    %5238 = vmatprep.subr.mxu0 0.0
    %5239 = vmatpush1.msra.mxu0 0.0
    %5240 = vmatprep.subr.mxu0 0.0
    %5241 = vmatpush1.msra.mxu0 0.0
    %5242 = vmatprep.subr.mxu0 0.0
    %5243 = vmatpush1.msra.mxu0 0.0
    %5244 = vmatprep.subr.mxu0 0.0
    %5245 = vmatpush1.msra.mxu0 0.0
    %5246 = vmatprep.subr.mxu0 0.0
    %5247 = vmatpush1.msra.mxu0 0.0
    %5248 = vmatprep.subr.mxu0 0.0
    %5249 = vmatpush1.msra.mxu0 0.0
    %5250 = vmatprep.subr.mxu0 0.0
    %5251 = vmatpush1.msra.mxu0 0.0
    %5252 = vmatprep.subr.mxu0 0.0
    %5253 = vmatpush1.msra.mxu0 0.0
    %5254 = vmatprep.subr.mxu0 0.0
    %5255 = vmatpush1.msra.mxu0 0.0
    %5256 = vmatprep.subr.mxu0 0.0
    %5257 = vmatpush1.msra.mxu0 0.0
    %5258 = vmatprep.subr.mxu0 0.0
    %5259 = vmatpush1.msra.mxu0 0.0
    %5260 = vmatprep.subr.mxu0 0.0
    %5261 = vmatpush1.msra.mxu0 0.0
    %5262 = vmatprep.subr.mxu0 0.0
    %5263 = vmatpush1.msra.mxu0 0.0
    %5264 = vmatprep.subr.mxu0 0.0
    %5265 = vmatpush1.msra.mxu0 0.0
    %5266 = vmatprep.mubr.f32.mxu0 0.0
    %5267 = vmatmul.mubr.f32.gmra.mrb[0].mxu0 %v5200
    %v5268 = vpop.f32.mrb[0].mxu0
    %v5269 = vadd.f32 0.0, %v5268
    %v5270 = vpop.f32.mrb[0].mxu0
    %5271 = vdwg.mxu0
    %v5273 = vrot.slane %v5269, 2
    %v5275 = vadd.f32 %v4562, %v5273
    %v5276 = vxor.u32 %v5275, 2147483648
    %v5277 = vmul.f32 %v5276, 1.442695
    %v5278 = vpow.pop %v5277
    %v5279 = vadd.f32 %v5278, 1.0
    %v5280 = vrcp.pop %v5279
    %v5281 = vmul.f32 1.0, %v5280
    %v5282 = vtanh.pop %v5275
    %v5284 = vrot.slane %v5189, 7
    %v5286 = vmul.f32 %v5281, %v5284
    %5288 = vrot.lane.b32.xlu0 %v5282, 96
    %v5289 = vpop.permute.xlu0 %5288
    %v5291 = vmul.f32 %v5281, %v5289
    %5293 = vrot.lane.b32.xlu0 %v5291, 16
    %v5294 = vpop.permute.xlu0 %5293
    %v5296 = vadd.f32 %v5286, %v5294
    %v5297 = vtanh.pop %v5296
    %5299 = vrot.lane.b32.xlu0 %v5297, 32
    %v5300 = vpop.permute.xlu0 %5299
    %v5302 = vmul.f32 %v5281, %v5300
    %v5304 = vrot.slane %v5302, 6
    %5305 = vrot.lane.b32.xlu0 %v5304, 80
    %v5306 = vpop.permute.xlu0 %5305
    %v5307 = vsel %vm390, %v5306, 0
    %5309 = vmatprep.subr.mxu0 0.0
    %5310 = vmatpush1.msra.mxu0 %v4565
    %5311 = vmatprep.subr.mxu0 0.0
    %5312 = vmatpush1.msra.mxu0 %v4566
    %5313 = vmatprep.subr.mxu0 0.0
    %5314 = vmatpush1.msra.mxu0 0.0
    %5315 = vmatprep.subr.mxu0 0.0
    %5316 = vmatpush1.msra.mxu0 0.0
    %5317 = vmatprep.subr.mxu0 0.0
    %5318 = vmatpush1.msra.mxu0 0.0
    %5319 = vmatprep.subr.mxu0 0.0
    %5320 = vmatpush1.msra.mxu0 0.0
    %5321 = vmatprep.subr.mxu0 0.0
    %5322 = vmatpush1.msra.mxu0 0.0
    %5323 = vmatprep.subr.mxu0 0.0
    %5324 = vmatpush1.msra.mxu0 0.0
    %5325 = vmatprep.subr.mxu0 0.0
    %5326 = vmatpush1.msra.mxu0 0.0
    %5327 = vmatprep.subr.mxu0 0.0
    %5328 = vmatpush1.msra.mxu0 0.0
    %5329 = vmatprep.subr.mxu0 0.0
    %5330 = vmatpush1.msra.mxu0 0.0
    %5331 = vmatprep.subr.mxu0 0.0
    %5332 = vmatpush1.msra.mxu0 0.0
    %5333 = vmatprep.subr.mxu0 0.0
    %5334 = vmatpush1.msra.mxu0 0.0
    %5335 = vmatprep.subr.mxu0 0.0
    %5336 = vmatpush1.msra.mxu0 0.0
    %5337 = vmatprep.subr.mxu0 0.0
    %5338 = vmatpush1.msra.mxu0 0.0
    %5339 = vmatprep.subr.mxu0 0.0
    %5340 = vmatpush1.msra.mxu0 0.0
    %5341 = vmatprep.subr.mxu0 0.0
    %5342 = vmatpush1.msra.mxu0 0.0
    %5343 = vmatprep.subr.mxu0 0.0
    %5344 = vmatpush1.msra.mxu0 0.0
    %5345 = vmatprep.subr.mxu0 0.0
    %5346 = vmatpush1.msra.mxu0 0.0
    %5347 = vmatprep.subr.mxu0 0.0
    %5348 = vmatpush1.msra.mxu0 0.0
    %5349 = vmatprep.subr.mxu0 0.0
    %5350 = vmatpush1.msra.mxu0 0.0
    %5351 = vmatprep.subr.mxu0 0.0
    %5352 = vmatpush1.msra.mxu0 0.0
    %5353 = vmatprep.subr.mxu0 0.0
    %5354 = vmatpush1.msra.mxu0 0.0
    %5355 = vmatprep.subr.mxu0 0.0
    %5356 = vmatpush1.msra.mxu0 0.0
    %5357 = vmatprep.subr.mxu0 0.0
    %5358 = vmatpush1.msra.mxu0 0.0
    %5359 = vmatprep.subr.mxu0 0.0
    %5360 = vmatpush1.msra.mxu0 0.0
    %5361 = vmatprep.subr.mxu0 0.0
    %5362 = vmatpush1.msra.mxu0 0.0
    %5363 = vmatprep.subr.mxu0 0.0
    %5364 = vmatpush1.msra.mxu0 0.0
    %5365 = vmatprep.subr.mxu0 0.0
    %5366 = vmatpush1.msra.mxu0 0.0
    %5367 = vmatprep.subr.mxu0 0.0
    %5368 = vmatpush1.msra.mxu0 0.0
    %5369 = vmatprep.subr.mxu0 0.0
    %5370 = vmatpush1.msra.mxu0 0.0
    %5371 = vmatprep.subr.mxu0 0.0
    %5372 = vmatpush1.msra.mxu0 0.0
    %5373 = vmatprep.mubr.f32.mxu0 0.0
    %5374 = vmatmul.mubr.f32.gmra.mrb[0].mxu0 %v5307
    %v5375 = vpop.f32.mrb[0].mxu0
    %v5376 = vadd.f32 0.0, %v5375
    %v5377 = vpop.f32.mrb[0].mxu0
    %5378 = vdwg.mxu0
    %v5380 = vrot.slane %v5376, 1
    %v5382 = vadd.f32 %v4562, %v5380
    %v5383 = vxor.u32 %v5382, 2147483648
    %v5384 = vmul.f32 %v5383, 1.442695
    %v5385 = vpow.pop %v5384
    %v5386 = vadd.f32 %v5385, 1.0
    %v5387 = vrcp.pop %v5386
    %v5388 = vmul.f32 1.0, %v5387
    %v5389 = vtanh.pop %v5382
    %v5391 = vrot.slane %v5296, 7
    %v5393 = vmul.f32 %v5388, %v5391
    %5395 = vrot.lane.b32.xlu0 %v5389, 96
    %v5396 = vpop.permute.xlu0 %5395
    %v5398 = vmul.f32 %v5388, %v5396
    %5400 = vrot.lane.b32.xlu0 %v5398, 16
    %v5401 = vpop.permute.xlu0 %5400
    %v5403 = vadd.f32 %v5393, %v5401
    %v5404 = vtanh.pop %v5403
    %5406 = vrot.lane.b32.xlu0 %v5404, 32
    %v5407 = vpop.permute.xlu0 %5406
    %v5409 = vmul.f32 %v5388, %v5407
    %v5410 = vsel %vm1312, %v4661, %v4767
    %v5411 = vsel %vm1314, %v5410, %v4874
    %v5412 = vsel %vm1316, %v5411, %v4981
    %v5413 = vsel %vm1318, %v5412, %v5088
    %v5414 = vsel %vm1320, %v5413, %v5195
    %v5415 = vsel %vm1322, %v5414, %v5302
    %v5416 = vsel %vm1324, %v5415, %v5409
    %5418 = vrot.lane.b32.xlu0 %v5416, 80
    %v5419 = vpop.permute.xlu0 %5418
    %5421 = vmatprep.subr.mxu0 0.0
    %5422 = vmatpush1.msra.mxu0 %v5419
    %5423 = vmatprep.subr.mxu0 0.0
    %5424 = vmatpush1.msra.mxu0 0.0
    %5425 = vmatprep.subr.mxu0 0.0
    %5426 = vmatpush1.msra.mxu0 0.0
    %5427 = vmatprep.subr.mxu0 0.0
    %5428 = vmatpush1.msra.mxu0 0.0
    %5429 = vmatprep.subr.mxu0 0.0
    %5430 = vmatpush1.msra.mxu0 0.0
    %5431 = vmatprep.subr.mxu0 0.0
    %5432 = vmatpush1.msra.mxu0 0.0
    %5433 = vmatprep.subr.mxu0 0.0
    %5434 = vmatpush1.msra.mxu0 0.0
    %5435 = vmatprep.subr.mxu0 0.0
    %5436 = vmatpush1.msra.mxu0 0.0
    %5437 = vmatprep.subr.mxu0 0.0
    %5438 = vmatpush1.msra.mxu0 0.0
    %5439 = vmatprep.subr.mxu0 0.0
    %5440 = vmatpush1.msra.mxu0 0.0
    %5441 = vmatprep.subr.mxu0 0.0
    %5442 = vmatpush1.msra.mxu0 0.0
    %5443 = vmatprep.subr.mxu0 0.0
    %5444 = vmatpush1.msra.mxu0 0.0
    %5445 = vmatprep.subr.mxu0 0.0
    %5446 = vmatpush1.msra.mxu0 0.0
    %5447 = vmatprep.subr.mxu0 0.0
    %5448 = vmatpush1.msra.mxu0 0.0
    %5449 = vmatprep.subr.mxu0 0.0
    %5450 = vmatpush1.msra.mxu0 0.0
    %5451 = vmatprep.subr.mxu0 0.0
    %5452 = vmatpush1.msra.mxu0 0.0
    %5453 = vmatprep.subr.mxu0 0.0
    %5454 = vmatpush1.msra.mxu0 0.0
    %5455 = vmatprep.subr.mxu0 0.0
    %5456 = vmatpush1.msra.mxu0 0.0
    %5457 = vmatprep.subr.mxu0 0.0
    %5458 = vmatpush1.msra.mxu0 0.0
    %5459 = vmatprep.subr.mxu0 0.0
    %5460 = vmatpush1.msra.mxu0 0.0
    %5461 = vmatprep.subr.mxu0 0.0
    %5462 = vmatpush1.msra.mxu0 0.0
    %5463 = vmatprep.subr.mxu0 0.0
    %5464 = vmatpush1.msra.mxu0 0.0
    %5465 = vmatprep.subr.mxu0 0.0
    %5466 = vmatpush1.msra.mxu0 0.0
    %5467 = vmatprep.subr.mxu0 0.0
    %5468 = vmatpush1.msra.mxu0 0.0
    %5469 = vmatprep.subr.mxu0 0.0
    %5470 = vmatpush1.msra.mxu0 0.0
    %5471 = vmatprep.subr.mxu0 0.0
    %5472 = vmatpush1.msra.mxu0 0.0
    %5473 = vmatprep.subr.mxu0 0.0
    %5474 = vmatpush1.msra.mxu0 0.0
    %5475 = vmatprep.subr.mxu0 0.0
    %5476 = vmatpush1.msra.mxu0 0.0
    %5477 = vmatprep.subr.mxu0 0.0
    %5478 = vmatpush1.msra.mxu0 0.0
    %5479 = vmatprep.subr.mxu0 0.0
    %5480 = vmatpush1.msra.mxu0 0.0
    %5481 = vmatprep.subr.mxu0 0.0
    %5482 = vmatpush1.msra.mxu0 0.0
    %5483 = vmatprep.subr.mxu0 0.0
    %5484 = vmatpush1.msra.mxu0 0.0
    %5485 = vmatprep.mubr.f32.mxu0 0.0
    %5486 = vmatmul.mubr.f32.gmra.mrb[0].mxu0 %v4242
    %v5487 = vpop.f32.mrb[0].mxu0
    %v5488 = vadd.f32 0.0, %v5487
    %v5489 = vpop.f32.mrb[0].mxu0
    %5490 = vdwg.mxu0
    %5491 = vmatprep.subr.mxu0 0.0
    %5492 = vmatpush1.msra.mxu0 %v5419
    %5493 = vmatprep.subr.mxu0 0.0
    %5494 = vmatpush1.msra.mxu0 0.0
    %5495 = vmatprep.subr.mxu0 0.0
    %5496 = vmatpush1.msra.mxu0 0.0
    %5497 = vmatprep.subr.mxu0 0.0
    %5498 = vmatpush1.msra.mxu0 0.0
    %5499 = vmatprep.subr.mxu0 0.0
    %5500 = vmatpush1.msra.mxu0 0.0
    %5501 = vmatprep.subr.mxu0 0.0
    %5502 = vmatpush1.msra.mxu0 0.0
    %5503 = vmatprep.subr.mxu0 0.0
    %5504 = vmatpush1.msra.mxu0 0.0
    %5505 = vmatprep.subr.mxu0 0.0
    %5506 = vmatpush1.msra.mxu0 0.0
    %5507 = vmatprep.subr.mxu0 0.0
    %5508 = vmatpush1.msra.mxu0 0.0
    %5509 = vmatprep.subr.mxu0 0.0
    %5510 = vmatpush1.msra.mxu0 0.0
    %5511 = vmatprep.subr.mxu0 0.0
    %5512 = vmatpush1.msra.mxu0 0.0
    %5513 = vmatprep.subr.mxu0 0.0
    %5514 = vmatpush1.msra.mxu0 0.0
    %5515 = vmatprep.subr.mxu0 0.0
    %5516 = vmatpush1.msra.mxu0 0.0
    %5517 = vmatprep.subr.mxu0 0.0
    %5518 = vmatpush1.msra.mxu0 0.0
    %5519 = vmatprep.subr.mxu0 0.0
    %5520 = vmatpush1.msra.mxu0 0.0
    %5521 = vmatprep.subr.mxu0 0.0
    %5522 = vmatpush1.msra.mxu0 0.0
    %5523 = vmatprep.subr.mxu0 0.0
    %5524 = vmatpush1.msra.mxu0 0.0
    %5525 = vmatprep.subr.mxu0 0.0
    %5526 = vmatpush1.msra.mxu0 0.0
    %5527 = vmatprep.subr.mxu0 0.0
    %5528 = vmatpush1.msra.mxu0 0.0
    %5529 = vmatprep.subr.mxu0 0.0
    %5530 = vmatpush1.msra.mxu0 0.0
    %5531 = vmatprep.subr.mxu0 0.0
    %5532 = vmatpush1.msra.mxu0 0.0
    %5533 = vmatprep.subr.mxu0 0.0
    %5534 = vmatpush1.msra.mxu0 0.0
    %5535 = vmatprep.subr.mxu0 0.0
    %5536 = vmatpush1.msra.mxu0 0.0
    %5537 = vmatprep.subr.mxu0 0.0
    %5538 = vmatpush1.msra.mxu0 0.0
    %5539 = vmatprep.subr.mxu0 0.0
    %5540 = vmatpush1.msra.mxu0 0.0
    %5541 = vmatprep.subr.mxu0 0.0
    %5542 = vmatpush1.msra.mxu0 0.0
    %5543 = vmatprep.subr.mxu0 0.0
    %5544 = vmatpush1.msra.mxu0 0.0
    %5545 = vmatprep.subr.mxu0 0.0
    %5546 = vmatpush1.msra.mxu0 0.0
    %5547 = vmatprep.subr.mxu0 0.0
    %5548 = vmatpush1.msra.mxu0 0.0
    %5549 = vmatprep.subr.mxu0 0.0
    %5550 = vmatpush1.msra.mxu0 0.0
    %5551 = vmatprep.subr.mxu0 0.0
    %5552 = vmatpush1.msra.mxu0 0.0
    %5553 = vmatprep.subr.mxu0 0.0
    %5554 = vmatpush1.msra.mxu0 0.0
    %5555 = vmatprep.mubr.f32.mxu0 0.0
    %5556 = vmatmul.mubr.f32.gmra.mrb[0].mxu0 %v4315
    %v5557 = vpop.f32.mrb[0].mxu0
    %v5558 = vadd.f32 0.0, %v5557
    %v5559 = vpop.f32.mrb[0].mxu0
    %5560 = vdwg.mxu0
    %5562 = vrot.lane.b32.xlu0 %v5558, 16
    %v5563 = vpop.permute.xlu0 %5562
    %v5565 = vsel %vm390, %v5488, %v5563
    %v5566 = vld [vmem:[%s17] sm:$0xff]
    %v5567 = vld [vmem:[%s17 + $0x8] sm:$0xff]
    %v5568 = vld [vmem:[%s17 + $0x10] sm:$0xff]
    %v5569 = vld [vmem:[%s17 + $0x18] sm:$0xff]
    %v5570 = vld [vmem:[#allocation11] sm:$0x1]
    %v5572 = vlaneseq
    %v5573 = vshrl.u32 %v5572, 7
    %v5574 = vsub.s32 0, %v5573
    %v5575 = vrot.slane %v5570, %v5574
    %v5578 = vsel %vm2278, %v5565, 0
    %5580 = vmatprep.subr.mxu0 0.0
    %5581 = vmatpush1.msra.mxu0 %v5566
    %5582 = vmatprep.subr.mxu0 0.0
    %5583 = vmatpush1.msra.mxu0 %v5567
    %5584 = vmatprep.subr.mxu0 0.0
    %5585 = vmatpush1.msra.mxu0 %v5568
    %5586 = vmatprep.subr.mxu0 0.0
    %5587 = vmatpush1.msra.mxu0 %v5569
    %5588 = vmatprep.subr.mxu0 0.0
    %5589 = vmatpush1.msra.mxu0 0.0
    %5590 = vmatprep.subr.mxu0 0.0
    %5591 = vmatpush1.msra.mxu0 0.0
    %5592 = vmatprep.subr.mxu0 0.0
    %5593 = vmatpush1.msra.mxu0 0.0
    %5594 = vmatprep.subr.mxu0 0.0
    %5595 = vmatpush1.msra.mxu0 0.0
    %5596 = vmatprep.subr.mxu0 0.0
    %5597 = vmatpush1.msra.mxu0 0.0
    %5598 = vmatprep.subr.mxu0 0.0
    %5599 = vmatpush1.msra.mxu0 0.0
    %5600 = vmatprep.subr.mxu0 0.0
    %5601 = vmatpush1.msra.mxu0 0.0
    %5602 = vmatprep.subr.mxu0 0.0
    %5603 = vmatpush1.msra.mxu0 0.0
    %5604 = vmatprep.subr.mxu0 0.0
    %5605 = vmatpush1.msra.mxu0 0.0
    %5606 = vmatprep.subr.mxu0 0.0
    %5607 = vmatpush1.msra.mxu0 0.0
    %5608 = vmatprep.subr.mxu0 0.0
    %5609 = vmatpush1.msra.mxu0 0.0
    %5610 = vmatprep.subr.mxu0 0.0
    %5611 = vmatpush1.msra.mxu0 0.0
    %5612 = vmatprep.subr.mxu0 0.0
    %5613 = vmatpush1.msra.mxu0 0.0
    %5614 = vmatprep.subr.mxu0 0.0
    %5615 = vmatpush1.msra.mxu0 0.0
    %5616 = vmatprep.subr.mxu0 0.0
    %5617 = vmatpush1.msra.mxu0 0.0
    %5618 = vmatprep.subr.mxu0 0.0
    %5619 = vmatpush1.msra.mxu0 0.0
    %5620 = vmatprep.subr.mxu0 0.0
    %5621 = vmatpush1.msra.mxu0 0.0
    %5622 = vmatprep.subr.mxu0 0.0
    %5623 = vmatpush1.msra.mxu0 0.0
    %5624 = vmatprep.subr.mxu0 0.0
    %5625 = vmatpush1.msra.mxu0 0.0
    %5626 = vmatprep.subr.mxu0 0.0
    %5627 = vmatpush1.msra.mxu0 0.0
    %5628 = vmatprep.subr.mxu0 0.0
    %5629 = vmatpush1.msra.mxu0 0.0
    %5630 = vmatprep.subr.mxu0 0.0
    %5631 = vmatpush1.msra.mxu0 0.0
    %5632 = vmatprep.subr.mxu0 0.0
    %5633 = vmatpush1.msra.mxu0 0.0
    %5634 = vmatprep.subr.mxu0 0.0
    %5635 = vmatpush1.msra.mxu0 0.0
    %5636 = vmatprep.subr.mxu0 0.0
    %5637 = vmatpush1.msra.mxu0 0.0
    %5638 = vmatprep.subr.mxu0 0.0
    %5639 = vmatpush1.msra.mxu0 0.0
    %5640 = vmatprep.subr.mxu0 0.0
    %5641 = vmatpush1.msra.mxu0 0.0
    %5642 = vmatprep.subr.mxu0 0.0
    %5643 = vmatpush1.msra.mxu0 0.0
    %5644 = vmatprep.mubr.f32.mxu0 0.0
    %5645 = vmatmul.mubr.f32.gmra.mrb[0].mxu0 %v5578
    %v5646 = vpop.f32.mrb[0].mxu0
    %v5647 = vadd.f32 %v5575, %v5646
    %v5648 = vpop.f32.mrb[0].mxu0
    %5649 = vdwg.mxu0
    %5651 = vrot.lane.b32.xlu0 %v5647, 16
    %v5652 = vpop.permute.xlu0 %5651
    %v5654 = vsel %vm390, %v378, %v5652
    %v5655 = vld [vmem:[%s59] sm:$0xff]
    %v5656 = vld [vmem:[%s59 + $0x8] sm:$0xff]
    %v5657 = vld [vmem:[%s59 + $0x10] sm:$0xff]
    %v5658 = vld [vmem:[%s59 + $0x18] sm:$0xff]
    %v5659 = vld [vmem:[%s63] sm:$0x1]
    %v5661 = vlaneseq
    %v5662 = vshrl.u32 %v5661, 7
    %v5663 = vsub.s32 0, %v5662
    %v5664 = vrot.slane %v5659, %v5663
    %v5667 = vsel %vm2278, %v5654, 0
    %5669 = vmatprep.subr.mxu0 0.0
    %5670 = vmatpush1.msra.mxu0 %v5655
    %5671 = vmatprep.subr.mxu0 0.0
    %5672 = vmatpush1.msra.mxu0 %v5656
    %5673 = vmatprep.subr.mxu0 0.0
    %5674 = vmatpush1.msra.mxu0 %v5657
    %5675 = vmatprep.subr.mxu0 0.0
    %5676 = vmatpush1.msra.mxu0 %v5658
    %5677 = vmatprep.subr.mxu0 0.0
    %5678 = vmatpush1.msra.mxu0 0.0
    %5679 = vmatprep.subr.mxu0 0.0
    %5680 = vmatpush1.msra.mxu0 0.0
    %5681 = vmatprep.subr.mxu0 0.0
    %5682 = vmatpush1.msra.mxu0 0.0
    %5683 = vmatprep.subr.mxu0 0.0
    %5684 = vmatpush1.msra.mxu0 0.0
    %5685 = vmatprep.subr.mxu0 0.0
    %5686 = vmatpush1.msra.mxu0 0.0
    %5687 = vmatprep.subr.mxu0 0.0
    %5688 = vmatpush1.msra.mxu0 0.0
    %5689 = vmatprep.subr.mxu0 0.0
    %5690 = vmatpush1.msra.mxu0 0.0
    %5691 = vmatprep.subr.mxu0 0.0
    %5692 = vmatpush1.msra.mxu0 0.0
    %5693 = vmatprep.subr.mxu0 0.0
    %5694 = vmatpush1.msra.mxu0 0.0
    %5695 = vmatprep.subr.mxu0 0.0
    %5696 = vmatpush1.msra.mxu0 0.0
    %5697 = vmatprep.subr.mxu0 0.0
    %5698 = vmatpush1.msra.mxu0 0.0
    %5699 = vmatprep.subr.mxu0 0.0
    %5700 = vmatpush1.msra.mxu0 0.0
    %5701 = vmatprep.subr.mxu0 0.0
    %5702 = vmatpush1.msra.mxu0 0.0
    %5703 = vmatprep.subr.mxu0 0.0
    %5704 = vmatpush1.msra.mxu0 0.0
    %5705 = vmatprep.subr.mxu0 0.0
    %5706 = vmatpush1.msra.mxu0 0.0
    %5707 = vmatprep.subr.mxu0 0.0
    %5708 = vmatpush1.msra.mxu0 0.0
    %5709 = vmatprep.subr.mxu0 0.0
    %5710 = vmatpush1.msra.mxu0 0.0
    %5711 = vmatprep.subr.mxu0 0.0
    %5712 = vmatpush1.msra.mxu0 0.0
    %5713 = vmatprep.subr.mxu0 0.0
    %5714 = vmatpush1.msra.mxu0 0.0
    %5715 = vmatprep.subr.mxu0 0.0
    %5716 = vmatpush1.msra.mxu0 0.0
    %5717 = vmatprep.subr.mxu0 0.0
    %5718 = vmatpush1.msra.mxu0 0.0
    %5719 = vmatprep.subr.mxu0 0.0
    %5720 = vmatpush1.msra.mxu0 0.0
    %5721 = vmatprep.subr.mxu0 0.0
    %5722 = vmatpush1.msra.mxu0 0.0
    %5723 = vmatprep.subr.mxu0 0.0
    %5724 = vmatpush1.msra.mxu0 0.0
    %5725 = vmatprep.subr.mxu0 0.0
    %5726 = vmatpush1.msra.mxu0 0.0
    %5727 = vmatprep.subr.mxu0 0.0
    %5728 = vmatpush1.msra.mxu0 0.0
    %5729 = vmatprep.subr.mxu0 0.0
    %5730 = vmatpush1.msra.mxu0 0.0
    %5731 = vmatprep.subr.mxu0 0.0
    %5732 = vmatpush1.msra.mxu0 0.0
    %5733 = vmatprep.mubr.f32.mxu0 0.0
    %5734 = vmatmul.mubr.f32.gmra.mrb[0].mxu0 %v5667
    %v5735 = vpop.f32.mrb[0].mxu0
    %v5736 = vadd.f32 %v5664, %v5735
    %v5737 = vpop.f32.mrb[0].mxu0
    %5738 = vdwg.mxu0
    %v5739 = vld [vmem:[%s61] sm:$0xff]
    %v5740 = vld [vmem:[%s61 + $0x8] sm:$0xff]
    %5741 = vmatprep.subr.mxu0 0.0
    %5742 = vmatpush1.msra.mxu0 %v5739
    %5743 = vmatprep.subr.mxu0 0.0
    %5744 = vmatpush1.msra.mxu0 %v5740
    %5745 = vmatprep.subr.mxu0 0.0
    %5746 = vmatpush1.msra.mxu0 0.0
    %5747 = vmatprep.subr.mxu0 0.0
    %5748 = vmatpush1.msra.mxu0 0.0
    %5749 = vmatprep.subr.mxu0 0.0
    %5750 = vmatpush1.msra.mxu0 0.0
    %5751 = vmatprep.subr.mxu0 0.0
    %5752 = vmatpush1.msra.mxu0 0.0
    %5753 = vmatprep.subr.mxu0 0.0
    %5754 = vmatpush1.msra.mxu0 0.0
    %5755 = vmatprep.subr.mxu0 0.0
    %5756 = vmatpush1.msra.mxu0 0.0
    %5757 = vmatprep.subr.mxu0 0.0
    %5758 = vmatpush1.msra.mxu0 0.0
    %5759 = vmatprep.subr.mxu0 0.0
    %5760 = vmatpush1.msra.mxu0 0.0
    %5761 = vmatprep.subr.mxu0 0.0
    %5762 = vmatpush1.msra.mxu0 0.0
    %5763 = vmatprep.subr.mxu0 0.0
    %5764 = vmatpush1.msra.mxu0 0.0
    %5765 = vmatprep.subr.mxu0 0.0
    %5766 = vmatpush1.msra.mxu0 0.0
    %5767 = vmatprep.subr.mxu0 0.0
    %5768 = vmatpush1.msra.mxu0 0.0
    %5769 = vmatprep.subr.mxu0 0.0
    %5770 = vmatpush1.msra.mxu0 0.0
    %5771 = vmatprep.subr.mxu0 0.0
    %5772 = vmatpush1.msra.mxu0 0.0
    %5773 = vmatprep.subr.mxu0 0.0
    %5774 = vmatpush1.msra.mxu0 0.0
    %5775 = vmatprep.subr.mxu0 0.0
    %5776 = vmatpush1.msra.mxu0 0.0
    %5777 = vmatprep.subr.mxu0 0.0
    %5778 = vmatpush1.msra.mxu0 0.0
    %5779 = vmatprep.subr.mxu0 0.0
    %5780 = vmatpush1.msra.mxu0 0.0
    %5781 = vmatprep.subr.mxu0 0.0
    %5782 = vmatpush1.msra.mxu0 0.0
    %5783 = vmatprep.subr.mxu0 0.0
    %5784 = vmatpush1.msra.mxu0 0.0
    %5785 = vmatprep.subr.mxu0 0.0
    %5786 = vmatpush1.msra.mxu0 0.0
    %5787 = vmatprep.subr.mxu0 0.0
    %5788 = vmatpush1.msra.mxu0 0.0
    %5789 = vmatprep.subr.mxu0 0.0
    %5790 = vmatpush1.msra.mxu0 0.0
    %5791 = vmatprep.subr.mxu0 0.0
    %5792 = vmatpush1.msra.mxu0 0.0
    %5793 = vmatprep.subr.mxu0 0.0
    %5794 = vmatpush1.msra.mxu0 0.0
    %5795 = vmatprep.subr.mxu0 0.0
    %5796 = vmatpush1.msra.mxu0 0.0
    %5797 = vmatprep.subr.mxu0 0.0
    %5798 = vmatpush1.msra.mxu0 0.0
    %5799 = vmatprep.subr.mxu0 0.0
    %5800 = vmatpush1.msra.mxu0 0.0
    %5801 = vmatprep.subr.mxu0 0.0
    %5802 = vmatpush1.msra.mxu0 0.0
    %5803 = vmatprep.subr.mxu0 0.0
    %5804 = vmatpush1.msra.mxu0 0.0
    %5805 = vmatprep.mubr.f32.mxu0 0.0
    %5806 = vmatmul.mubr.f32.gmra.mrb[0].mxu0 %v467
    %v5807 = vpop.f32.mrb[0].mxu0
    %v5808 = vadd.f32 0.0, %v5807
    %v5809 = vpop.f32.mrb[0].mxu0
    %5810 = vdwg.mxu0
    %v5811 = vadd.f32 %v5736, %v5808
    %v5812 = vxor.u32 %v5811, 2147483648
    %v5813 = vmul.f32 %v5812, 1.442695
    %v5814 = vpow.pop %v5813
    %v5815 = vadd.f32 %v5814, 1.0
    %v5816 = vrcp.pop %v5815
    %v5817 = vmul.f32 1.0, %v5816
    %v5818 = vtanh.pop %v5811
    %v5819 = vmul.f32 %v5817, 0.0
    %5821 = vrot.lane.b32.xlu0 %v5818, 96
    %v5822 = vpop.permute.xlu0 %5821
    %v5824 = vmul.f32 %v5817, %v5822
    %5826 = vrot.lane.b32.xlu0 %v5824, 16
    %v5827 = vpop.permute.xlu0 %5826
    %v5829 = vadd.f32 %v5819, %v5827
    %v5830 = vtanh.pop %v5829
    %5832 = vrot.lane.b32.xlu0 %v5830, 32
    %v5833 = vpop.permute.xlu0 %5832
    %v5835 = vmul.f32 %v5817, %v5833
    %5837 = vrot.lane.b32.xlu0 %v5835, 80
    %v5838 = vpop.permute.xlu0 %5837
    %v5839 = vsel %vm390, %v5838, 0
    %5841 = vmatprep.subr.mxu0 0.0
    %5842 = vmatpush1.msra.mxu0 %v5739
    %5843 = vmatprep.subr.mxu0 0.0
    %5844 = vmatpush1.msra.mxu0 %v5740
    %5845 = vmatprep.subr.mxu0 0.0
    %5846 = vmatpush1.msra.mxu0 0.0
    %5847 = vmatprep.subr.mxu0 0.0
    %5848 = vmatpush1.msra.mxu0 0.0
    %5849 = vmatprep.subr.mxu0 0.0
    %5850 = vmatpush1.msra.mxu0 0.0
    %5851 = vmatprep.subr.mxu0 0.0
    %5852 = vmatpush1.msra.mxu0 0.0
    %5853 = vmatprep.subr.mxu0 0.0
    %5854 = vmatpush1.msra.mxu0 0.0
    %5855 = vmatprep.subr.mxu0 0.0
    %5856 = vmatpush1.msra.mxu0 0.0
    %5857 = vmatprep.subr.mxu0 0.0
    %5858 = vmatpush1.msra.mxu0 0.0
    %5859 = vmatprep.subr.mxu0 0.0
    %5860 = vmatpush1.msra.mxu0 0.0
    %5861 = vmatprep.subr.mxu0 0.0
    %5862 = vmatpush1.msra.mxu0 0.0
    %5863 = vmatprep.subr.mxu0 0.0
    %5864 = vmatpush1.msra.mxu0 0.0
    %5865 = vmatprep.subr.mxu0 0.0
    %5866 = vmatpush1.msra.mxu0 0.0
    %5867 = vmatprep.subr.mxu0 0.0
    %5868 = vmatpush1.msra.mxu0 0.0
    %5869 = vmatprep.subr.mxu0 0.0
    %5870 = vmatpush1.msra.mxu0 0.0
    %5871 = vmatprep.subr.mxu0 0.0
    %5872 = vmatpush1.msra.mxu0 0.0
    %5873 = vmatprep.subr.mxu0 0.0
    %5874 = vmatpush1.msra.mxu0 0.0
    %5875 = vmatprep.subr.mxu0 0.0
    %5876 = vmatpush1.msra.mxu0 0.0
    %5877 = vmatprep.subr.mxu0 0.0
    %5878 = vmatpush1.msra.mxu0 0.0
    %5879 = vmatprep.subr.mxu0 0.0
    %5880 = vmatpush1.msra.mxu0 0.0
    %5881 = vmatprep.subr.mxu0 0.0
    %5882 = vmatpush1.msra.mxu0 0.0
    %5883 = vmatprep.subr.mxu0 0.0
    %5884 = vmatpush1.msra.mxu0 0.0
    %5885 = vmatprep.subr.mxu0 0.0
    %5886 = vmatpush1.msra.mxu0 0.0
    %5887 = vmatprep.subr.mxu0 0.0
    %5888 = vmatpush1.msra.mxu0 0.0
    %5889 = vmatprep.subr.mxu0 0.0
    %5890 = vmatpush1.msra.mxu0 0.0
    %5891 = vmatprep.subr.mxu0 0.0
    %5892 = vmatpush1.msra.mxu0 0.0
    %5893 = vmatprep.subr.mxu0 0.0
    %5894 = vmatpush1.msra.mxu0 0.0
    %5895 = vmatprep.subr.mxu0 0.0
    %5896 = vmatpush1.msra.mxu0 0.0
    %5897 = vmatprep.subr.mxu0 0.0
    %5898 = vmatpush1.msra.mxu0 0.0
    %5899 = vmatprep.subr.mxu0 0.0
    %5900 = vmatpush1.msra.mxu0 0.0
    %5901 = vmatprep.subr.mxu0 0.0
    %5902 = vmatpush1.msra.mxu0 0.0
    %5903 = vmatprep.subr.mxu0 0.0
    %5904 = vmatpush1.msra.mxu0 0.0
    %5905 = vmatprep.mubr.f32.mxu0 0.0
    %5906 = vmatmul.mubr.f32.gmra.mrb[0].mxu0 %v5839
    %v5907 = vpop.f32.mrb[0].mxu0
    %v5908 = vadd.f32 0.0, %v5907
    %v5909 = vpop.f32.mrb[0].mxu0
    %5910 = vdwg.mxu0
    %v5912 = vrot.slane %v5908, 7
    %v5914 = vadd.f32 %v5736, %v5912
    %v5915 = vxor.u32 %v5914, 2147483648
    %v5916 = vmul.f32 %v5915, 1.442695
    %v5917 = vpow.pop %v5916
    %v5918 = vadd.f32 %v5917, 1.0
    %v5919 = vrcp.pop %v5918
    %v5920 = vmul.f32 1.0, %v5919
    %v5921 = vtanh.pop %v5914
    %v5923 = vrot.slane %v5829, 7
    %v5925 = vmul.f32 %v5920, %v5923
    %5927 = vrot.lane.b32.xlu0 %v5921, 96
    %v5928 = vpop.permute.xlu0 %5927
    %v5930 = vmul.f32 %v5920, %v5928
    %5932 = vrot.lane.b32.xlu0 %v5930, 16
    %v5933 = vpop.permute.xlu0 %5932
    %v5935 = vadd.f32 %v5925, %v5933
    %v5936 = vtanh.pop %v5935
    %5938 = vrot.lane.b32.xlu0 %v5936, 32
    %v5939 = vpop.permute.xlu0 %5938
    %v5941 = vmul.f32 %v5920, %v5939
    %v5943 = vrot.slane %v5941, 1
    %5944 = vrot.lane.b32.xlu0 %v5943, 80
    %v5945 = vpop.permute.xlu0 %5944
    %v5946 = vsel %vm390, %v5945, 0
    %5948 = vmatprep.subr.mxu0 0.0
    %5949 = vmatpush1.msra.mxu0 %v5739
    %5950 = vmatprep.subr.mxu0 0.0
    %5951 = vmatpush1.msra.mxu0 %v5740
    %5952 = vmatprep.subr.mxu0 0.0
    %5953 = vmatpush1.msra.mxu0 0.0
    %5954 = vmatprep.subr.mxu0 0.0
    %5955 = vmatpush1.msra.mxu0 0.0
    %5956 = vmatprep.subr.mxu0 0.0
    %5957 = vmatpush1.msra.mxu0 0.0
    %5958 = vmatprep.subr.mxu0 0.0
    %5959 = vmatpush1.msra.mxu0 0.0
    %5960 = vmatprep.subr.mxu0 0.0
    %5961 = vmatpush1.msra.mxu0 0.0
    %5962 = vmatprep.subr.mxu0 0.0
    %5963 = vmatpush1.msra.mxu0 0.0
    %5964 = vmatprep.subr.mxu0 0.0
    %5965 = vmatpush1.msra.mxu0 0.0
    %5966 = vmatprep.subr.mxu0 0.0
    %5967 = vmatpush1.msra.mxu0 0.0
    %5968 = vmatprep.subr.mxu0 0.0
    %5969 = vmatpush1.msra.mxu0 0.0
    %5970 = vmatprep.subr.mxu0 0.0
    %5971 = vmatpush1.msra.mxu0 0.0
    %5972 = vmatprep.subr.mxu0 0.0
    %5973 = vmatpush1.msra.mxu0 0.0
    %5974 = vmatprep.subr.mxu0 0.0
    %5975 = vmatpush1.msra.mxu0 0.0
    %5976 = vmatprep.subr.mxu0 0.0
    %5977 = vmatpush1.msra.mxu0 0.0
    %5978 = vmatprep.subr.mxu0 0.0
    %5979 = vmatpush1.msra.mxu0 0.0
    %5980 = vmatprep.subr.mxu0 0.0
    %5981 = vmatpush1.msra.mxu0 0.0
    %5982 = vmatprep.subr.mxu0 0.0
    %5983 = vmatpush1.msra.mxu0 0.0
    %5984 = vmatprep.subr.mxu0 0.0
    %5985 = vmatpush1.msra.mxu0 0.0
    %5986 = vmatprep.subr.mxu0 0.0
    %5987 = vmatpush1.msra.mxu0 0.0
    %5988 = vmatprep.subr.mxu0 0.0
    %5989 = vmatpush1.msra.mxu0 0.0
    %5990 = vmatprep.subr.mxu0 0.0
    %5991 = vmatpush1.msra.mxu0 0.0
    %5992 = vmatprep.subr.mxu0 0.0
    %5993 = vmatpush1.msra.mxu0 0.0
    %5994 = vmatprep.subr.mxu0 0.0
    %5995 = vmatpush1.msra.mxu0 0.0
    %5996 = vmatprep.subr.mxu0 0.0
    %5997 = vmatpush1.msra.mxu0 0.0
    %5998 = vmatprep.subr.mxu0 0.0
    %5999 = vmatpush1.msra.mxu0 0.0
    %6000 = vmatprep.subr.mxu0 0.0
    %6001 = vmatpush1.msra.mxu0 0.0
    %6002 = vmatprep.subr.mxu0 0.0
    %6003 = vmatpush1.msra.mxu0 0.0
    %6004 = vmatprep.subr.mxu0 0.0
    %6005 = vmatpush1.msra.mxu0 0.0
    %6006 = vmatprep.subr.mxu0 0.0
    %6007 = vmatpush1.msra.mxu0 0.0
    %6008 = vmatprep.subr.mxu0 0.0
    %6009 = vmatpush1.msra.mxu0 0.0
    %6010 = vmatprep.subr.mxu0 0.0
    %6011 = vmatpush1.msra.mxu0 0.0
    %6012 = vmatprep.mubr.f32.mxu0 0.0
    %6013 = vmatmul.mubr.f32.gmra.mrb[0].mxu0 %v5946
    %v6014 = vpop.f32.mrb[0].mxu0
    %v6015 = vadd.f32 0.0, %v6014
    %v6016 = vpop.f32.mrb[0].mxu0
    %6017 = vdwg.mxu0
    %v6019 = vrot.slane %v6015, 6
    %v6021 = vadd.f32 %v5736, %v6019
    %v6022 = vxor.u32 %v6021, 2147483648
    %v6023 = vmul.f32 %v6022, 1.442695
    %v6024 = vpow.pop %v6023
    %v6025 = vadd.f32 %v6024, 1.0
    %v6026 = vrcp.pop %v6025
    %v6027 = vmul.f32 1.0, %v6026
    %v6028 = vtanh.pop %v6021
    %v6030 = vrot.slane %v5935, 7
    %v6032 = vmul.f32 %v6027, %v6030
    %6034 = vrot.lane.b32.xlu0 %v6028, 96
    %v6035 = vpop.permute.xlu0 %6034
    %v6037 = vmul.f32 %v6027, %v6035
    %6039 = vrot.lane.b32.xlu0 %v6037, 16
    %v6040 = vpop.permute.xlu0 %6039
    %v6042 = vadd.f32 %v6032, %v6040
    %v6043 = vtanh.pop %v6042
    %6045 = vrot.lane.b32.xlu0 %v6043, 32
    %v6046 = vpop.permute.xlu0 %6045
    %v6048 = vmul.f32 %v6027, %v6046
    %v6050 = vrot.slane %v6048, 2
    %6051 = vrot.lane.b32.xlu0 %v6050, 80
    %v6052 = vpop.permute.xlu0 %6051
    %v6053 = vsel %vm390, %v6052, 0
    %6055 = vmatprep.subr.mxu0 0.0
    %6056 = vmatpush1.msra.mxu0 %v5739
    %6057 = vmatprep.subr.mxu0 0.0
    %6058 = vmatpush1.msra.mxu0 %v5740
    %6059 = vmatprep.subr.mxu0 0.0
    %6060 = vmatpush1.msra.mxu0 0.0
    %6061 = vmatprep.subr.mxu0 0.0
    %6062 = vmatpush1.msra.mxu0 0.0
    %6063 = vmatprep.subr.mxu0 0.0
    %6064 = vmatpush1.msra.mxu0 0.0
    %6065 = vmatprep.subr.mxu0 0.0
    %6066 = vmatpush1.msra.mxu0 0.0
    %6067 = vmatprep.subr.mxu0 0.0
    %6068 = vmatpush1.msra.mxu0 0.0
    %6069 = vmatprep.subr.mxu0 0.0
    %6070 = vmatpush1.msra.mxu0 0.0
    %6071 = vmatprep.subr.mxu0 0.0
    %6072 = vmatpush1.msra.mxu0 0.0
    %6073 = vmatprep.subr.mxu0 0.0
    %6074 = vmatpush1.msra.mxu0 0.0
    %6075 = vmatprep.subr.mxu0 0.0
    %6076 = vmatpush1.msra.mxu0 0.0
    %6077 = vmatprep.subr.mxu0 0.0
    %6078 = vmatpush1.msra.mxu0 0.0
    %6079 = vmatprep.subr.mxu0 0.0
    %6080 = vmatpush1.msra.mxu0 0.0
    %6081 = vmatprep.subr.mxu0 0.0
    %6082 = vmatpush1.msra.mxu0 0.0
    %6083 = vmatprep.subr.mxu0 0.0
    %6084 = vmatpush1.msra.mxu0 0.0
    %6085 = vmatprep.subr.mxu0 0.0
    %6086 = vmatpush1.msra.mxu0 0.0
    %6087 = vmatprep.subr.mxu0 0.0
    %6088 = vmatpush1.msra.mxu0 0.0
    %6089 = vmatprep.subr.mxu0 0.0
    %6090 = vmatpush1.msra.mxu0 0.0
    %6091 = vmatprep.subr.mxu0 0.0
    %6092 = vmatpush1.msra.mxu0 0.0
    %6093 = vmatprep.subr.mxu0 0.0
    %6094 = vmatpush1.msra.mxu0 0.0
    %6095 = vmatprep.subr.mxu0 0.0
    %6096 = vmatpush1.msra.mxu0 0.0
    %6097 = vmatprep.subr.mxu0 0.0
    %6098 = vmatpush1.msra.mxu0 0.0
    %6099 = vmatprep.subr.mxu0 0.0
    %6100 = vmatpush1.msra.mxu0 0.0
    %6101 = vmatprep.subr.mxu0 0.0
    %6102 = vmatpush1.msra.mxu0 0.0
    %6103 = vmatprep.subr.mxu0 0.0
    %6104 = vmatpush1.msra.mxu0 0.0
    %6105 = vmatprep.subr.mxu0 0.0
    %6106 = vmatpush1.msra.mxu0 0.0
    %6107 = vmatprep.subr.mxu0 0.0
    %6108 = vmatpush1.msra.mxu0 0.0
    %6109 = vmatprep.subr.mxu0 0.0
    %6110 = vmatpush1.msra.mxu0 0.0
    %6111 = vmatprep.subr.mxu0 0.0
    %6112 = vmatpush1.msra.mxu0 0.0
    %6113 = vmatprep.subr.mxu0 0.0
    %6114 = vmatpush1.msra.mxu0 0.0
    %6115 = vmatprep.subr.mxu0 0.0
    %6116 = vmatpush1.msra.mxu0 0.0
    %6117 = vmatprep.subr.mxu0 0.0
    %6118 = vmatpush1.msra.mxu0 0.0
    %6119 = vmatprep.mubr.f32.mxu0 0.0
    %6120 = vmatmul.mubr.f32.gmra.mrb[0].mxu0 %v6053
    %v6121 = vpop.f32.mrb[0].mxu0
    %v6122 = vadd.f32 0.0, %v6121
    %v6123 = vpop.f32.mrb[0].mxu0
    %6124 = vdwg.mxu0
    %v6126 = vrot.slane %v6122, 5
    %v6128 = vadd.f32 %v5736, %v6126
    %v6129 = vxor.u32 %v6128, 2147483648
    %v6130 = vmul.f32 %v6129, 1.442695
    %v6131 = vpow.pop %v6130
    %v6132 = vadd.f32 %v6131, 1.0
    %v6133 = vrcp.pop %v6132
    %v6134 = vmul.f32 1.0, %v6133
    %v6135 = vtanh.pop %v6128
    %v6137 = vrot.slane %v6042, 7
    %v6139 = vmul.f32 %v6134, %v6137
    %6141 = vrot.lane.b32.xlu0 %v6135, 96
    %v6142 = vpop.permute.xlu0 %6141
    %v6144 = vmul.f32 %v6134, %v6142
    %6146 = vrot.lane.b32.xlu0 %v6144, 16
    %v6147 = vpop.permute.xlu0 %6146
    %v6149 = vadd.f32 %v6139, %v6147
    %v6150 = vtanh.pop %v6149
    %6152 = vrot.lane.b32.xlu0 %v6150, 32
    %v6153 = vpop.permute.xlu0 %6152
    %v6155 = vmul.f32 %v6134, %v6153
    %v6157 = vrot.slane %v6155, 3
    %6158 = vrot.lane.b32.xlu0 %v6157, 80
    %v6159 = vpop.permute.xlu0 %6158
    %v6160 = vsel %vm390, %v6159, 0
    %6162 = vmatprep.subr.mxu0 0.0
    %6163 = vmatpush1.msra.mxu0 %v5739
    %6164 = vmatprep.subr.mxu0 0.0
    %6165 = vmatpush1.msra.mxu0 %v5740
    %6166 = vmatprep.subr.mxu0 0.0
    %6167 = vmatpush1.msra.mxu0 0.0
    %6168 = vmatprep.subr.mxu0 0.0
    %6169 = vmatpush1.msra.mxu0 0.0
    %6170 = vmatprep.subr.mxu0 0.0
    %6171 = vmatpush1.msra.mxu0 0.0
    %6172 = vmatprep.subr.mxu0 0.0
    %6173 = vmatpush1.msra.mxu0 0.0
    %6174 = vmatprep.subr.mxu0 0.0
    %6175 = vmatpush1.msra.mxu0 0.0
    %6176 = vmatprep.subr.mxu0 0.0
    %6177 = vmatpush1.msra.mxu0 0.0
    %6178 = vmatprep.subr.mxu0 0.0
    %6179 = vmatpush1.msra.mxu0 0.0
    %6180 = vmatprep.subr.mxu0 0.0
    %6181 = vmatpush1.msra.mxu0 0.0
    %6182 = vmatprep.subr.mxu0 0.0
    %6183 = vmatpush1.msra.mxu0 0.0
    %6184 = vmatprep.subr.mxu0 0.0
    %6185 = vmatpush1.msra.mxu0 0.0
    %6186 = vmatprep.subr.mxu0 0.0
    %6187 = vmatpush1.msra.mxu0 0.0
    %6188 = vmatprep.subr.mxu0 0.0
    %6189 = vmatpush1.msra.mxu0 0.0
    %6190 = vmatprep.subr.mxu0 0.0
    %6191 = vmatpush1.msra.mxu0 0.0
    %6192 = vmatprep.subr.mxu0 0.0
    %6193 = vmatpush1.msra.mxu0 0.0
    %6194 = vmatprep.subr.mxu0 0.0
    %6195 = vmatpush1.msra.mxu0 0.0
    %6196 = vmatprep.subr.mxu0 0.0
    %6197 = vmatpush1.msra.mxu0 0.0
    %6198 = vmatprep.subr.mxu0 0.0
    %6199 = vmatpush1.msra.mxu0 0.0
    %6200 = vmatprep.subr.mxu0 0.0
    %6201 = vmatpush1.msra.mxu0 0.0
    %6202 = vmatprep.subr.mxu0 0.0
    %6203 = vmatpush1.msra.mxu0 0.0
    %6204 = vmatprep.subr.mxu0 0.0
    %6205 = vmatpush1.msra.mxu0 0.0
    %6206 = vmatprep.subr.mxu0 0.0
    %6207 = vmatpush1.msra.mxu0 0.0
    %6208 = vmatprep.subr.mxu0 0.0
    %6209 = vmatpush1.msra.mxu0 0.0
    %6210 = vmatprep.subr.mxu0 0.0
    %6211 = vmatpush1.msra.mxu0 0.0
    %6212 = vmatprep.subr.mxu0 0.0
    %6213 = vmatpush1.msra.mxu0 0.0
    %6214 = vmatprep.subr.mxu0 0.0
    %6215 = vmatpush1.msra.mxu0 0.0
    %6216 = vmatprep.subr.mxu0 0.0
    %6217 = vmatpush1.msra.mxu0 0.0
    %6218 = vmatprep.subr.mxu0 0.0
    %6219 = vmatpush1.msra.mxu0 0.0
    %6220 = vmatprep.subr.mxu0 0.0
    %6221 = vmatpush1.msra.mxu0 0.0
    %6222 = vmatprep.subr.mxu0 0.0
    %6223 = vmatpush1.msra.mxu0 0.0
    %6224 = vmatprep.subr.mxu0 0.0
    %6225 = vmatpush1.msra.mxu0 0.0
    %6226 = vmatprep.mubr.f32.mxu0 0.0
    %6227 = vmatmul.mubr.f32.gmra.mrb[0].mxu0 %v6160
    %v6228 = vpop.f32.mrb[0].mxu0
    %v6229 = vadd.f32 0.0, %v6228
    %v6230 = vpop.f32.mrb[0].mxu0
    %6231 = vdwg.mxu0
    %v6233 = vrot.slane %v6229, 4
    %v6235 = vadd.f32 %v5736, %v6233
    %v6236 = vxor.u32 %v6235, 2147483648
    %v6237 = vmul.f32 %v6236, 1.442695
    %v6238 = vpow.pop %v6237
    %v6239 = vadd.f32 %v6238, 1.0
    %v6240 = vrcp.pop %v6239
    %v6241 = vmul.f32 1.0, %v6240
    %v6242 = vtanh.pop %v6235
    %v6244 = vrot.slane %v6149, 7
    %v6246 = vmul.f32 %v6241, %v6244
    %6248 = vrot.lane.b32.xlu0 %v6242, 96
    %v6249 = vpop.permute.xlu0 %6248
    %v6251 = vmul.f32 %v6241, %v6249
    %6253 = vrot.lane.b32.xlu0 %v6251, 16
    %v6254 = vpop.permute.xlu0 %6253
    %v6256 = vadd.f32 %v6246, %v6254
    %v6257 = vtanh.pop %v6256
    %6259 = vrot.lane.b32.xlu0 %v6257, 32
    %v6260 = vpop.permute.xlu0 %6259
    %v6262 = vmul.f32 %v6241, %v6260
    %v6264 = vrot.slane %v6262, 4
    %6265 = vrot.lane.b32.xlu0 %v6264, 80
    %v6266 = vpop.permute.xlu0 %6265
    %v6267 = vsel %vm390, %v6266, 0
    %6269 = vmatprep.subr.mxu0 0.0
    %6270 = vmatpush1.msra.mxu0 %v5739
    %6271 = vmatprep.subr.mxu0 0.0
    %6272 = vmatpush1.msra.mxu0 %v5740
    %6273 = vmatprep.subr.mxu0 0.0
    %6274 = vmatpush1.msra.mxu0 0.0
    %6275 = vmatprep.subr.mxu0 0.0
    %6276 = vmatpush1.msra.mxu0 0.0
    %6277 = vmatprep.subr.mxu0 0.0
    %6278 = vmatpush1.msra.mxu0 0.0
    %6279 = vmatprep.subr.mxu0 0.0
    %6280 = vmatpush1.msra.mxu0 0.0
    %6281 = vmatprep.subr.mxu0 0.0
    %6282 = vmatpush1.msra.mxu0 0.0
    %6283 = vmatprep.subr.mxu0 0.0
    %6284 = vmatpush1.msra.mxu0 0.0
    %6285 = vmatprep.subr.mxu0 0.0
    %6286 = vmatpush1.msra.mxu0 0.0
    %6287 = vmatprep.subr.mxu0 0.0
    %6288 = vmatpush1.msra.mxu0 0.0
    %6289 = vmatprep.subr.mxu0 0.0
    %6290 = vmatpush1.msra.mxu0 0.0
    %6291 = vmatprep.subr.mxu0 0.0
    %6292 = vmatpush1.msra.mxu0 0.0
    %6293 = vmatprep.subr.mxu0 0.0
    %6294 = vmatpush1.msra.mxu0 0.0
    %6295 = vmatprep.subr.mxu0 0.0
    %6296 = vmatpush1.msra.mxu0 0.0
    %6297 = vmatprep.subr.mxu0 0.0
    %6298 = vmatpush1.msra.mxu0 0.0
    %6299 = vmatprep.subr.mxu0 0.0
    %6300 = vmatpush1.msra.mxu0 0.0
    %6301 = vmatprep.subr.mxu0 0.0
    %6302 = vmatpush1.msra.mxu0 0.0
    %6303 = vmatprep.subr.mxu0 0.0
    %6304 = vmatpush1.msra.mxu0 0.0
    %6305 = vmatprep.subr.mxu0 0.0
    %6306 = vmatpush1.msra.mxu0 0.0
    %6307 = vmatprep.subr.mxu0 0.0
    %6308 = vmatpush1.msra.mxu0 0.0
    %6309 = vmatprep.subr.mxu0 0.0
    %6310 = vmatpush1.msra.mxu0 0.0
    %6311 = vmatprep.subr.mxu0 0.0
    %6312 = vmatpush1.msra.mxu0 0.0
    %6313 = vmatprep.subr.mxu0 0.0
    %6314 = vmatpush1.msra.mxu0 0.0
    %6315 = vmatprep.subr.mxu0 0.0
    %6316 = vmatpush1.msra.mxu0 0.0
    %6317 = vmatprep.subr.mxu0 0.0
    %6318 = vmatpush1.msra.mxu0 0.0
    %6319 = vmatprep.subr.mxu0 0.0
    %6320 = vmatpush1.msra.mxu0 0.0
    %6321 = vmatprep.subr.mxu0 0.0
    %6322 = vmatpush1.msra.mxu0 0.0
    %6323 = vmatprep.subr.mxu0 0.0
    %6324 = vmatpush1.msra.mxu0 0.0
    %6325 = vmatprep.subr.mxu0 0.0
    %6326 = vmatpush1.msra.mxu0 0.0
    %6327 = vmatprep.subr.mxu0 0.0
    %6328 = vmatpush1.msra.mxu0 0.0
    %6329 = vmatprep.subr.mxu0 0.0
    %6330 = vmatpush1.msra.mxu0 0.0
    %6331 = vmatprep.subr.mxu0 0.0
    %6332 = vmatpush1.msra.mxu0 0.0
    %6333 = vmatprep.mubr.f32.mxu0 0.0
    %6334 = vmatmul.mubr.f32.gmra.mrb[0].mxu0 %v6267
    %v6335 = vpop.f32.mrb[0].mxu0
    %v6336 = vadd.f32 0.0, %v6335
    %v6337 = vpop.f32.mrb[0].mxu0
    %6338 = vdwg.mxu0
    %v6340 = vrot.slane %v6336, 3
    %v6342 = vadd.f32 %v5736, %v6340
    %v6343 = vxor.u32 %v6342, 2147483648
    %v6344 = vmul.f32 %v6343, 1.442695
    %v6345 = vpow.pop %v6344
    %v6346 = vadd.f32 %v6345, 1.0
    %v6347 = vrcp.pop %v6346
    %v6348 = vmul.f32 1.0, %v6347
    %v6349 = vtanh.pop %v6342
    %v6351 = vrot.slane %v6256, 7
    %v6353 = vmul.f32 %v6348, %v6351
    %6355 = vrot.lane.b32.xlu0 %v6349, 96
    %v6356 = vpop.permute.xlu0 %6355
    %v6358 = vmul.f32 %v6348, %v6356
    %6360 = vrot.lane.b32.xlu0 %v6358, 16
    %v6361 = vpop.permute.xlu0 %6360
    %v6363 = vadd.f32 %v6353, %v6361
    %v6364 = vtanh.pop %v6363
    %6366 = vrot.lane.b32.xlu0 %v6364, 32
    %v6367 = vpop.permute.xlu0 %6366
    %v6369 = vmul.f32 %v6348, %v6367
    %v6371 = vrot.slane %v6369, 5
    %6372 = vrot.lane.b32.xlu0 %v6371, 80
    %v6373 = vpop.permute.xlu0 %6372
    %v6374 = vsel %vm390, %v6373, 0
    %6376 = vmatprep.subr.mxu0 0.0
    %6377 = vmatpush1.msra.mxu0 %v5739
    %6378 = vmatprep.subr.mxu0 0.0
    %6379 = vmatpush1.msra.mxu0 %v5740
    %6380 = vmatprep.subr.mxu0 0.0
    %6381 = vmatpush1.msra.mxu0 0.0
    %6382 = vmatprep.subr.mxu0 0.0
    %6383 = vmatpush1.msra.mxu0 0.0
    %6384 = vmatprep.subr.mxu0 0.0
    %6385 = vmatpush1.msra.mxu0 0.0
    %6386 = vmatprep.subr.mxu0 0.0
    %6387 = vmatpush1.msra.mxu0 0.0
    %6388 = vmatprep.subr.mxu0 0.0
    %6389 = vmatpush1.msra.mxu0 0.0
    %6390 = vmatprep.subr.mxu0 0.0
    %6391 = vmatpush1.msra.mxu0 0.0
    %6392 = vmatprep.subr.mxu0 0.0
    %6393 = vmatpush1.msra.mxu0 0.0
    %6394 = vmatprep.subr.mxu0 0.0
    %6395 = vmatpush1.msra.mxu0 0.0
    %6396 = vmatprep.subr.mxu0 0.0
    %6397 = vmatpush1.msra.mxu0 0.0
    %6398 = vmatprep.subr.mxu0 0.0
    %6399 = vmatpush1.msra.mxu0 0.0
    %6400 = vmatprep.subr.mxu0 0.0
    %6401 = vmatpush1.msra.mxu0 0.0
    %6402 = vmatprep.subr.mxu0 0.0
    %6403 = vmatpush1.msra.mxu0 0.0
    %6404 = vmatprep.subr.mxu0 0.0
    %6405 = vmatpush1.msra.mxu0 0.0
    %6406 = vmatprep.subr.mxu0 0.0
    %6407 = vmatpush1.msra.mxu0 0.0
    %6408 = vmatprep.subr.mxu0 0.0
    %6409 = vmatpush1.msra.mxu0 0.0
    %6410 = vmatprep.subr.mxu0 0.0
    %6411 = vmatpush1.msra.mxu0 0.0
    %6412 = vmatprep.subr.mxu0 0.0
    %6413 = vmatpush1.msra.mxu0 0.0
    %6414 = vmatprep.subr.mxu0 0.0
    %6415 = vmatpush1.msra.mxu0 0.0
    %6416 = vmatprep.subr.mxu0 0.0
    %6417 = vmatpush1.msra.mxu0 0.0
    %6418 = vmatprep.subr.mxu0 0.0
    %6419 = vmatpush1.msra.mxu0 0.0
    %6420 = vmatprep.subr.mxu0 0.0
    %6421 = vmatpush1.msra.mxu0 0.0
    %6422 = vmatprep.subr.mxu0 0.0
    %6423 = vmatpush1.msra.mxu0 0.0
    %6424 = vmatprep.subr.mxu0 0.0
    %6425 = vmatpush1.msra.mxu0 0.0
    %6426 = vmatprep.subr.mxu0 0.0
    %6427 = vmatpush1.msra.mxu0 0.0
    %6428 = vmatprep.subr.mxu0 0.0
    %6429 = vmatpush1.msra.mxu0 0.0
    %6430 = vmatprep.subr.mxu0 0.0
    %6431 = vmatpush1.msra.mxu0 0.0
    %6432 = vmatprep.subr.mxu0 0.0
    %6433 = vmatpush1.msra.mxu0 0.0
    %6434 = vmatprep.subr.mxu0 0.0
    %6435 = vmatpush1.msra.mxu0 0.0
    %6436 = vmatprep.subr.mxu0 0.0
    %6437 = vmatpush1.msra.mxu0 0.0
    %6438 = vmatprep.subr.mxu0 0.0
    %6439 = vmatpush1.msra.mxu0 0.0
    %6440 = vmatprep.mubr.f32.mxu0 0.0
    %6441 = vmatmul.mubr.f32.gmra.mrb[0].mxu0 %v6374
    %v6442 = vpop.f32.mrb[0].mxu0
    %v6443 = vadd.f32 0.0, %v6442
    %v6444 = vpop.f32.mrb[0].mxu0
    %6445 = vdwg.mxu0
    %v6447 = vrot.slane %v6443, 2
    %v6449 = vadd.f32 %v5736, %v6447
    %v6450 = vxor.u32 %v6449, 2147483648
    %v6451 = vmul.f32 %v6450, 1.442695
    %v6452 = vpow.pop %v6451
    %v6453 = vadd.f32 %v6452, 1.0
    %v6454 = vrcp.pop %v6453
    %v6455 = vmul.f32 1.0, %v6454
    %v6456 = vtanh.pop %v6449
    %v6458 = vrot.slane %v6363, 7
    %v6460 = vmul.f32 %v6455, %v6458
    %6462 = vrot.lane.b32.xlu0 %v6456, 96
    %v6463 = vpop.permute.xlu0 %6462
    %v6465 = vmul.f32 %v6455, %v6463
    %6467 = vrot.lane.b32.xlu0 %v6465, 16
    %v6468 = vpop.permute.xlu0 %6467
    %v6470 = vadd.f32 %v6460, %v6468
    %v6471 = vtanh.pop %v6470
    %6473 = vrot.lane.b32.xlu0 %v6471, 32
    %v6474 = vpop.permute.xlu0 %6473
    %v6476 = vmul.f32 %v6455, %v6474
    %v6478 = vrot.slane %v6476, 6
    %6479 = vrot.lane.b32.xlu0 %v6478, 80
    %v6480 = vpop.permute.xlu0 %6479
    %v6481 = vsel %vm390, %v6480, 0
    %6483 = vmatprep.subr.mxu0 0.0
    %6484 = vmatpush1.msra.mxu0 %v5739
    %6485 = vmatprep.subr.mxu0 0.0
    %6486 = vmatpush1.msra.mxu0 %v5740
    %6487 = vmatprep.subr.mxu0 0.0
    %6488 = vmatpush1.msra.mxu0 0.0
    %6489 = vmatprep.subr.mxu0 0.0
    %6490 = vmatpush1.msra.mxu0 0.0
    %6491 = vmatprep.subr.mxu0 0.0
    %6492 = vmatpush1.msra.mxu0 0.0
    %6493 = vmatprep.subr.mxu0 0.0
    %6494 = vmatpush1.msra.mxu0 0.0
    %6495 = vmatprep.subr.mxu0 0.0
    %6496 = vmatpush1.msra.mxu0 0.0
    %6497 = vmatprep.subr.mxu0 0.0
    %6498 = vmatpush1.msra.mxu0 0.0
    %6499 = vmatprep.subr.mxu0 0.0
    %6500 = vmatpush1.msra.mxu0 0.0
    %6501 = vmatprep.subr.mxu0 0.0
    %6502 = vmatpush1.msra.mxu0 0.0
    %6503 = vmatprep.subr.mxu0 0.0
    %6504 = vmatpush1.msra.mxu0 0.0
    %6505 = vmatprep.subr.mxu0 0.0
    %6506 = vmatpush1.msra.mxu0 0.0
    %6507 = vmatprep.subr.mxu0 0.0
    %6508 = vmatpush1.msra.mxu0 0.0
    %6509 = vmatprep.subr.mxu0 0.0
    %6510 = vmatpush1.msra.mxu0 0.0
    %6511 = vmatprep.subr.mxu0 0.0
    %6512 = vmatpush1.msra.mxu0 0.0
    %6513 = vmatprep.subr.mxu0 0.0
    %6514 = vmatpush1.msra.mxu0 0.0
    %6515 = vmatprep.subr.mxu0 0.0
    %6516 = vmatpush1.msra.mxu0 0.0
    %6517 = vmatprep.subr.mxu0 0.0
    %6518 = vmatpush1.msra.mxu0 0.0
    %6519 = vmatprep.subr.mxu0 0.0
    %6520 = vmatpush1.msra.mxu0 0.0
    %6521 = vmatprep.subr.mxu0 0.0
    %6522 = vmatpush1.msra.mxu0 0.0
    %6523 = vmatprep.subr.mxu0 0.0
    %6524 = vmatpush1.msra.mxu0 0.0
    %6525 = vmatprep.subr.mxu0 0.0
    %6526 = vmatpush1.msra.mxu0 0.0
    %6527 = vmatprep.subr.mxu0 0.0
    %6528 = vmatpush1.msra.mxu0 0.0
    %6529 = vmatprep.subr.mxu0 0.0
    %6530 = vmatpush1.msra.mxu0 0.0
    %6531 = vmatprep.subr.mxu0 0.0
    %6532 = vmatpush1.msra.mxu0 0.0
    %6533 = vmatprep.subr.mxu0 0.0
    %6534 = vmatpush1.msra.mxu0 0.0
    %6535 = vmatprep.subr.mxu0 0.0
    %6536 = vmatpush1.msra.mxu0 0.0
    %6537 = vmatprep.subr.mxu0 0.0
    %6538 = vmatpush1.msra.mxu0 0.0
    %6539 = vmatprep.subr.mxu0 0.0
    %6540 = vmatpush1.msra.mxu0 0.0
    %6541 = vmatprep.subr.mxu0 0.0
    %6542 = vmatpush1.msra.mxu0 0.0
    %6543 = vmatprep.subr.mxu0 0.0
    %6544 = vmatpush1.msra.mxu0 0.0
    %6545 = vmatprep.subr.mxu0 0.0
    %6546 = vmatpush1.msra.mxu0 0.0
    %6547 = vmatprep.mubr.f32.mxu0 0.0
    %6548 = vmatmul.mubr.f32.gmra.mrb[0].mxu0 %v6481
    %v6549 = vpop.f32.mrb[0].mxu0
    %v6550 = vadd.f32 0.0, %v6549
    %v6551 = vpop.f32.mrb[0].mxu0
    %6552 = vdwg.mxu0
    %v6554 = vrot.slane %v6550, 1
    %v6556 = vadd.f32 %v5736, %v6554
    %v6557 = vxor.u32 %v6556, 2147483648
    %v6558 = vmul.f32 %v6557, 1.442695
    %v6559 = vpow.pop %v6558
    %v6560 = vadd.f32 %v6559, 1.0
    %v6561 = vrcp.pop %v6560
    %v6562 = vmul.f32 1.0, %v6561
    %v6563 = vtanh.pop %v6556
    %v6565 = vrot.slane %v6470, 7
    %v6567 = vmul.f32 %v6562, %v6565
    %6569 = vrot.lane.b32.xlu0 %v6563, 96
    %v6570 = vpop.permute.xlu0 %6569
    %v6572 = vmul.f32 %v6562, %v6570
    %6574 = vrot.lane.b32.xlu0 %v6572, 16
    %v6575 = vpop.permute.xlu0 %6574
    %v6577 = vadd.f32 %v6567, %v6575
    %v6578 = vtanh.pop %v6577
    %6580 = vrot.lane.b32.xlu0 %v6578, 32
    %v6581 = vpop.permute.xlu0 %6580
    %v6583 = vmul.f32 %v6562, %v6581
    %v6584 = vsel %vm1312, %v5835, %v5941
    %v6585 = vsel %vm1314, %v6584, %v6048
    %v6586 = vsel %vm1316, %v6585, %v6155
    %v6587 = vsel %vm1318, %v6586, %v6262
    %v6588 = vsel %vm1320, %v6587, %v6369
    %v6589 = vsel %vm1322, %v6588, %v6476
    %v6590 = vsel %vm1324, %v6589, %v6583
    %v6591 = vld [vmem:[#allocation29] sm:$0xff]
    %v6592 = vld [vmem:[#allocation29 + $0x8] sm:$0xff]
    %v6593 = vld [vmem:[#allocation31] sm:$0x1]
    %v6595 = vlaneseq
    %v6596 = vshrl.u32 %v6595, 7
    %v6597 = vsub.s32 0, %v6596
    %v6598 = vrot.slane %v6593, %v6597
    %6601 = vrot.lane.b32.xlu0 %v6590, 80
    %v6602 = vpop.permute.xlu0 %6601
    %v6603 = vsel %vm390, %v6602, 0
    %6605 = vmatprep.subr.mxu0 0.0
    %6606 = vmatpush1.msra.mxu0 %v6591
    %6607 = vmatprep.subr.mxu0 0.0
    %6608 = vmatpush1.msra.mxu0 %v6592
    %6609 = vmatprep.subr.mxu0 0.0
    %6610 = vmatpush1.msra.mxu0 0.0
    %6611 = vmatprep.subr.mxu0 0.0
    %6612 = vmatpush1.msra.mxu0 0.0
    %6613 = vmatprep.subr.mxu0 0.0
    %6614 = vmatpush1.msra.mxu0 0.0
    %6615 = vmatprep.subr.mxu0 0.0
    %6616 = vmatpush1.msra.mxu0 0.0
    %6617 = vmatprep.subr.mxu0 0.0
    %6618 = vmatpush1.msra.mxu0 0.0
    %6619 = vmatprep.subr.mxu0 0.0
    %6620 = vmatpush1.msra.mxu0 0.0
    %6621 = vmatprep.subr.mxu0 0.0
    %6622 = vmatpush1.msra.mxu0 0.0
    %6623 = vmatprep.subr.mxu0 0.0
    %6624 = vmatpush1.msra.mxu0 0.0
    %6625 = vmatprep.subr.mxu0 0.0
    %6626 = vmatpush1.msra.mxu0 0.0
    %6627 = vmatprep.subr.mxu0 0.0
    %6628 = vmatpush1.msra.mxu0 0.0
    %6629 = vmatprep.subr.mxu0 0.0
    %6630 = vmatpush1.msra.mxu0 0.0
    %6631 = vmatprep.subr.mxu0 0.0
    %6632 = vmatpush1.msra.mxu0 0.0
    %6633 = vmatprep.subr.mxu0 0.0
    %6634 = vmatpush1.msra.mxu0 0.0
    %6635 = vmatprep.subr.mxu0 0.0
    %6636 = vmatpush1.msra.mxu0 0.0
    %6637 = vmatprep.subr.mxu0 0.0
    %6638 = vmatpush1.msra.mxu0 0.0
    %6639 = vmatprep.subr.mxu0 0.0
    %6640 = vmatpush1.msra.mxu0 0.0
    %6641 = vmatprep.subr.mxu0 0.0
    %6642 = vmatpush1.msra.mxu0 0.0
    %6643 = vmatprep.subr.mxu0 0.0
    %6644 = vmatpush1.msra.mxu0 0.0
    %6645 = vmatprep.subr.mxu0 0.0
    %6646 = vmatpush1.msra.mxu0 0.0
    %6647 = vmatprep.subr.mxu0 0.0
    %6648 = vmatpush1.msra.mxu0 0.0
    %6649 = vmatprep.subr.mxu0 0.0
    %6650 = vmatpush1.msra.mxu0 0.0
    %6651 = vmatprep.subr.mxu0 0.0
    %6652 = vmatpush1.msra.mxu0 0.0
    %6653 = vmatprep.subr.mxu0 0.0
    %6654 = vmatpush1.msra.mxu0 0.0
    %6655 = vmatprep.subr.mxu0 0.0
    %6656 = vmatpush1.msra.mxu0 0.0
    %6657 = vmatprep.subr.mxu0 0.0
    %6658 = vmatpush1.msra.mxu0 0.0
    %6659 = vmatprep.subr.mxu0 0.0
    %6660 = vmatpush1.msra.mxu0 0.0
    %6661 = vmatprep.subr.mxu0 0.0
    %6662 = vmatpush1.msra.mxu0 0.0
    %6663 = vmatprep.subr.mxu0 0.0
    %6664 = vmatpush1.msra.mxu0 0.0
    %6665 = vmatprep.subr.mxu0 0.0
    %6666 = vmatpush1.msra.mxu0 0.0
    %6667 = vmatprep.subr.mxu0 0.0
    %6668 = vmatpush1.msra.mxu0 0.0
    %6669 = vmatprep.mubr.f32.mxu0 0.0
    %6670 = vmatmul.mubr.f32.gmra.mrb[0].mxu0 %v6603
    %v6671 = vpop.f32.mrb[0].mxu0
    %v6672 = vadd.f32 %v6598, %v6671
    %v6673 = vpop.f32.mrb[0].mxu0
    %6674 = vdwg.mxu0
    %6676 = vrot.lane.b32.xlu0 %v4146, 16
    %v6677 = vpop.permute.xlu0 %6676
    %6680 = vrot.lane.b32.xlu0 %v379, 48
    %v6681 = vpop.permute.xlu0 %6680
    %v6683 = vsel %vm390, %v378, %v6677
    %vm6684 = vcmask 392192
    %v6685 = vsel %vm6684, %v6683, %v6681
    %v6686 = vld [vmem:[%s7] sm:$0xff]
    %v6687 = vld [vmem:[%s7 + $0x8] sm:$0xff]
    %v6688 = vld [vmem:[%s7 + $0x10] sm:$0xff]
    %v6689 = vld [vmem:[%s7 + $0x18] sm:$0xff]
    %v6690 = vld [vmem:[%s7 + $0x20] sm:$0xff]
    %v6691 = vld [vmem:[%s7 + $0x28] sm:$0xff]
    %v6692 = vld [vmem:[%s7 + $0x30] sm:$0xff]
    %v6693 = vld [vmem:[%s7 + $0x38] sm:$0x3]
    %v6694 = vld [vmem:[#allocation8] sm:$0x1]
    %v6696 = vlaneseq
    %v6697 = vshrl.u32 %v6696, 7
    %v6698 = vsub.s32 0, %v6697
    %v6699 = vrot.slane %v6694, %v6698
    %vm6701 = vcmask 474112
    %v6703 = vsel %vm6701, %v6685, 0
    %v6706 = vsel %vm1314, %v6693, 0
    %6708 = vmatprep.subr.mxu0 0.0
    %6709 = vmatpush1.msra.mxu0 %v6686
    %6710 = vmatprep.subr.mxu0 0.0
    %6711 = vmatpush1.msra.mxu0 %v6687
    %6712 = vmatprep.subr.mxu0 0.0
    %6713 = vmatpush1.msra.mxu0 %v6688
    %6714 = vmatprep.subr.mxu0 0.0
    %6715 = vmatpush1.msra.mxu0 %v6689
    %6716 = vmatprep.subr.mxu0 0.0
    %6717 = vmatpush1.msra.mxu0 %v6690
    %6718 = vmatprep.subr.mxu0 0.0
    %6719 = vmatpush1.msra.mxu0 %v6691
    %6720 = vmatprep.subr.mxu0 0.0
    %6721 = vmatpush1.msra.mxu0 %v6692
    %6722 = vmatprep.subr.mxu0 0.0
    %6723 = vmatpush1.msra.mxu0 %v6706
    %6724 = vmatprep.subr.mxu0 0.0
    %6725 = vmatpush1.msra.mxu0 0.0
    %6726 = vmatprep.subr.mxu0 0.0
    %6727 = vmatpush1.msra.mxu0 0.0
    %6728 = vmatprep.subr.mxu0 0.0
    %6729 = vmatpush1.msra.mxu0 0.0
    %6730 = vmatprep.subr.mxu0 0.0
    %6731 = vmatpush1.msra.mxu0 0.0
    %6732 = vmatprep.subr.mxu0 0.0
    %6733 = vmatpush1.msra.mxu0 0.0
    %6734 = vmatprep.subr.mxu0 0.0
    %6735 = vmatpush1.msra.mxu0 0.0
    %6736 = vmatprep.subr.mxu0 0.0
    %6737 = vmatpush1.msra.mxu0 0.0
    %6738 = vmatprep.subr.mxu0 0.0
    %6739 = vmatpush1.msra.mxu0 0.0
    %6740 = vmatprep.subr.mxu0 0.0
    %6741 = vmatpush1.msra.mxu0 0.0
    %6742 = vmatprep.subr.mxu0 0.0
    %6743 = vmatpush1.msra.mxu0 0.0
    %6744 = vmatprep.subr.mxu0 0.0
    %6745 = vmatpush1.msra.mxu0 0.0
    %6746 = vmatprep.subr.mxu0 0.0
    %6747 = vmatpush1.msra.mxu0 0.0
    %6748 = vmatprep.subr.mxu0 0.0
    %6749 = vmatpush1.msra.mxu0 0.0
    %6750 = vmatprep.subr.mxu0 0.0
    %6751 = vmatpush1.msra.mxu0 0.0
    %6752 = vmatprep.subr.mxu0 0.0
    %6753 = vmatpush1.msra.mxu0 0.0
    %6754 = vmatprep.subr.mxu0 0.0
    %6755 = vmatpush1.msra.mxu0 0.0
    %6756 = vmatprep.subr.mxu0 0.0
    %6757 = vmatpush1.msra.mxu0 0.0
    %6758 = vmatprep.subr.mxu0 0.0
    %6759 = vmatpush1.msra.mxu0 0.0
    %6760 = vmatprep.subr.mxu0 0.0
    %6761 = vmatpush1.msra.mxu0 0.0
    %6762 = vmatprep.subr.mxu0 0.0
    %6763 = vmatpush1.msra.mxu0 0.0
    %6764 = vmatprep.subr.mxu0 0.0
    %6765 = vmatpush1.msra.mxu0 0.0
    %6766 = vmatprep.subr.mxu0 0.0
    %6767 = vmatpush1.msra.mxu0 0.0
    %6768 = vmatprep.subr.mxu0 0.0
    %6769 = vmatpush1.msra.mxu0 0.0
    %6770 = vmatprep.subr.mxu0 0.0
    %6771 = vmatpush1.msra.mxu0 0.0
    %6772 = vmatprep.mubr.f32.mxu0 0.0
    %6773 = vmatmul.mubr.f32.gmra.mrb[0].mxu0 %v6703
    %v6774 = vpop.f32.mrb[0].mxu0
    %v6775 = vadd.f32 %v6699, %v6774
    %v6776 = vpop.f32.mrb[0].mxu0
    %6777 = vdwg.mxu0
    %v6778 = vld [vmem:[#allocation7] sm:$0xff]
    %v6779 = vld [vmem:[#allocation7 + $0x8] sm:$0xff]
    %6780 = vmatprep.subr.mxu0 0.0
    %6781 = vmatpush1.msra.mxu0 %v6778
    %6782 = vmatprep.subr.mxu0 0.0
    %6783 = vmatpush1.msra.mxu0 %v6779
    %6784 = vmatprep.subr.mxu0 0.0
    %6785 = vmatpush1.msra.mxu0 0.0
    %6786 = vmatprep.subr.mxu0 0.0
    %6787 = vmatpush1.msra.mxu0 0.0
    %6788 = vmatprep.subr.mxu0 0.0
    %6789 = vmatpush1.msra.mxu0 0.0
    %6790 = vmatprep.subr.mxu0 0.0
    %6791 = vmatpush1.msra.mxu0 0.0
    %6792 = vmatprep.subr.mxu0 0.0
    %6793 = vmatpush1.msra.mxu0 0.0
    %6794 = vmatprep.subr.mxu0 0.0
    %6795 = vmatpush1.msra.mxu0 0.0
    %6796 = vmatprep.subr.mxu0 0.0
    %6797 = vmatpush1.msra.mxu0 0.0
    %6798 = vmatprep.subr.mxu0 0.0
    %6799 = vmatpush1.msra.mxu0 0.0
    %6800 = vmatprep.subr.mxu0 0.0
    %6801 = vmatpush1.msra.mxu0 0.0
    %6802 = vmatprep.subr.mxu0 0.0
    %6803 = vmatpush1.msra.mxu0 0.0
    %6804 = vmatprep.subr.mxu0 0.0
    %6805 = vmatpush1.msra.mxu0 0.0
    %6806 = vmatprep.subr.mxu0 0.0
    %6807 = vmatpush1.msra.mxu0 0.0
    %6808 = vmatprep.subr.mxu0 0.0
    %6809 = vmatpush1.msra.mxu0 0.0
    %6810 = vmatprep.subr.mxu0 0.0
    %6811 = vmatpush1.msra.mxu0 0.0
    %6812 = vmatprep.subr.mxu0 0.0
    %6813 = vmatpush1.msra.mxu0 0.0
    %6814 = vmatprep.subr.mxu0 0.0
    %6815 = vmatpush1.msra.mxu0 0.0
    %6816 = vmatprep.subr.mxu0 0.0
    %6817 = vmatpush1.msra.mxu0 0.0
    %6818 = vmatprep.subr.mxu0 0.0
    %6819 = vmatpush1.msra.mxu0 0.0
    %6820 = vmatprep.subr.mxu0 0.0
    %6821 = vmatpush1.msra.mxu0 0.0
    %6822 = vmatprep.subr.mxu0 0.0
    %6823 = vmatpush1.msra.mxu0 0.0
    %6824 = vmatprep.subr.mxu0 0.0
    %6825 = vmatpush1.msra.mxu0 0.0
    %6826 = vmatprep.subr.mxu0 0.0
    %6827 = vmatpush1.msra.mxu0 0.0
    %6828 = vmatprep.subr.mxu0 0.0
    %6829 = vmatpush1.msra.mxu0 0.0
    %6830 = vmatprep.subr.mxu0 0.0
    %6831 = vmatpush1.msra.mxu0 0.0
    %6832 = vmatprep.subr.mxu0 0.0
    %6833 = vmatpush1.msra.mxu0 0.0
    %6834 = vmatprep.subr.mxu0 0.0
    %6835 = vmatpush1.msra.mxu0 0.0
    %6836 = vmatprep.subr.mxu0 0.0
    %6837 = vmatpush1.msra.mxu0 0.0
    %6838 = vmatprep.subr.mxu0 0.0
    %6839 = vmatpush1.msra.mxu0 0.0
    %6840 = vmatprep.subr.mxu0 0.0
    %6841 = vmatpush1.msra.mxu0 0.0
    %6842 = vmatprep.subr.mxu0 0.0
    %6843 = vmatpush1.msra.mxu0 0.0
    %6844 = vmatprep.mubr.f32.mxu0 0.0
    %6845 = vmatmul.mubr.f32.gmra.mrb[0].mxu0 %v467
    %v6846 = vpop.f32.mrb[0].mxu0
    %v6847 = vadd.f32 0.0, %v6846
    %v6848 = vpop.f32.mrb[0].mxu0
    %6849 = vdwg.mxu0
    %v6850 = vadd.f32 %v6775, %v6847
    %v6851 = vxor.u32 %v6850, 2147483648
    %v6852 = vmul.f32 %v6851, 1.442695
    %v6853 = vpow.pop %v6852
    %v6854 = vadd.f32 %v6853, 1.0
    %v6855 = vrcp.pop %v6854
    %v6856 = vmul.f32 1.0, %v6855
    %v6857 = vtanh.pop %v6850
    %v6858 = vmul.f32 %v6856, 0.0
    %6860 = vrot.lane.b32.xlu0 %v6857, 96
    %v6861 = vpop.permute.xlu0 %6860
    %v6863 = vmul.f32 %v6856, %v6861
    %6865 = vrot.lane.b32.xlu0 %v6863, 16
    %v6866 = vpop.permute.xlu0 %6865
    %v6868 = vadd.f32 %v6858, %v6866
    %v6869 = vtanh.pop %v6868
    %6871 = vrot.lane.b32.xlu0 %v6869, 32
    %v6872 = vpop.permute.xlu0 %6871
    %v6874 = vmul.f32 %v6856, %v6872
    %6876 = vrot.lane.b32.xlu0 %v6874, 80
    %v6877 = vpop.permute.xlu0 %6876
    %v6878 = vsel %vm390, %v6877, 0
    %6880 = vmatprep.subr.mxu0 0.0
    %6881 = vmatpush1.msra.mxu0 %v6778
    %6882 = vmatprep.subr.mxu0 0.0
    %6883 = vmatpush1.msra.mxu0 %v6779
    %6884 = vmatprep.subr.mxu0 0.0
    %6885 = vmatpush1.msra.mxu0 0.0
    %6886 = vmatprep.subr.mxu0 0.0
    %6887 = vmatpush1.msra.mxu0 0.0
    %6888 = vmatprep.subr.mxu0 0.0
    %6889 = vmatpush1.msra.mxu0 0.0
    %6890 = vmatprep.subr.mxu0 0.0
    %6891 = vmatpush1.msra.mxu0 0.0
    %6892 = vmatprep.subr.mxu0 0.0
    %6893 = vmatpush1.msra.mxu0 0.0
    %6894 = vmatprep.subr.mxu0 0.0
    %6895 = vmatpush1.msra.mxu0 0.0
    %6896 = vmatprep.subr.mxu0 0.0
    %6897 = vmatpush1.msra.mxu0 0.0
    %6898 = vmatprep.subr.mxu0 0.0
    %6899 = vmatpush1.msra.mxu0 0.0
    %6900 = vmatprep.subr.mxu0 0.0
    %6901 = vmatpush1.msra.mxu0 0.0
    %6902 = vmatprep.subr.mxu0 0.0
    %6903 = vmatpush1.msra.mxu0 0.0
    %6904 = vmatprep.subr.mxu0 0.0
    %6905 = vmatpush1.msra.mxu0 0.0
    %6906 = vmatprep.subr.mxu0 0.0
    %6907 = vmatpush1.msra.mxu0 0.0
    %6908 = vmatprep.subr.mxu0 0.0
    %6909 = vmatpush1.msra.mxu0 0.0
    %6910 = vmatprep.subr.mxu0 0.0
    %6911 = vmatpush1.msra.mxu0 0.0
    %6912 = vmatprep.subr.mxu0 0.0
    %6913 = vmatpush1.msra.mxu0 0.0
    %6914 = vmatprep.subr.mxu0 0.0
    %6915 = vmatpush1.msra.mxu0 0.0
    %6916 = vmatprep.subr.mxu0 0.0
    %6917 = vmatpush1.msra.mxu0 0.0
    %6918 = vmatprep.subr.mxu0 0.0
    %6919 = vmatpush1.msra.mxu0 0.0
    %6920 = vmatprep.subr.mxu0 0.0
    %6921 = vmatpush1.msra.mxu0 0.0
    %6922 = vmatprep.subr.mxu0 0.0
    %6923 = vmatpush1.msra.mxu0 0.0
    %6924 = vmatprep.subr.mxu0 0.0
    %6925 = vmatpush1.msra.mxu0 0.0
    %6926 = vmatprep.subr.mxu0 0.0
    %6927 = vmatpush1.msra.mxu0 0.0
    %6928 = vmatprep.subr.mxu0 0.0
    %6929 = vmatpush1.msra.mxu0 0.0
    %6930 = vmatprep.subr.mxu0 0.0
    %6931 = vmatpush1.msra.mxu0 0.0
    %6932 = vmatprep.subr.mxu0 0.0
    %6933 = vmatpush1.msra.mxu0 0.0
    %6934 = vmatprep.subr.mxu0 0.0
    %6935 = vmatpush1.msra.mxu0 0.0
    %6936 = vmatprep.subr.mxu0 0.0
    %6937 = vmatpush1.msra.mxu0 0.0
    %6938 = vmatprep.subr.mxu0 0.0
    %6939 = vmatpush1.msra.mxu0 0.0
    %6940 = vmatprep.subr.mxu0 0.0
    %6941 = vmatpush1.msra.mxu0 0.0
    %6942 = vmatprep.subr.mxu0 0.0
    %6943 = vmatpush1.msra.mxu0 0.0
    %6944 = vmatprep.mubr.f32.mxu0 0.0
    %6945 = vmatmul.mubr.f32.gmra.mrb[0].mxu0 %v6878
    %v6946 = vpop.f32.mrb[0].mxu0
    %v6947 = vadd.f32 0.0, %v6946
    %v6948 = vpop.f32.mrb[0].mxu0
    %6949 = vdwg.mxu0
    %v6951 = vrot.slane %v6947, 7
    %v6953 = vadd.f32 %v6775, %v6951
    %v6954 = vxor.u32 %v6953, 2147483648
    %v6955 = vmul.f32 %v6954, 1.442695
    %v6956 = vpow.pop %v6955
    %v6957 = vadd.f32 %v6956, 1.0
    %v6958 = vrcp.pop %v6957
    %v6959 = vmul.f32 1.0, %v6958
    %v6960 = vtanh.pop %v6953
    %v6962 = vrot.slane %v6868, 7
    %v6964 = vmul.f32 %v6959, %v6962
    %6966 = vrot.lane.b32.xlu0 %v6960, 96
    %v6967 = vpop.permute.xlu0 %6966
    %v6969 = vmul.f32 %v6959, %v6967
    %6971 = vrot.lane.b32.xlu0 %v6969, 16
    %v6972 = vpop.permute.xlu0 %6971
    %v6974 = vadd.f32 %v6964, %v6972
    %v6975 = vtanh.pop %v6974
    %6977 = vrot.lane.b32.xlu0 %v6975, 32
    %v6978 = vpop.permute.xlu0 %6977
    %v6980 = vmul.f32 %v6959, %v6978
    %v6982 = vrot.slane %v6980, 1
    %6983 = vrot.lane.b32.xlu0 %v6982, 80
    %v6984 = vpop.permute.xlu0 %6983
    %v6985 = vsel %vm390, %v6984, 0
    %6987 = vmatprep.subr.mxu0 0.0
    %6988 = vmatpush1.msra.mxu0 %v6778
    %6989 = vmatprep.subr.mxu0 0.0
    %6990 = vmatpush1.msra.mxu0 %v6779
    %6991 = vmatprep.subr.mxu0 0.0
    %6992 = vmatpush1.msra.mxu0 0.0
    %6993 = vmatprep.subr.mxu0 0.0
    %6994 = vmatpush1.msra.mxu0 0.0
    %6995 = vmatprep.subr.mxu0 0.0
    %6996 = vmatpush1.msra.mxu0 0.0
    %6997 = vmatprep.subr.mxu0 0.0
    %6998 = vmatpush1.msra.mxu0 0.0
    %6999 = vmatprep.subr.mxu0 0.0
    %7000 = vmatpush1.msra.mxu0 0.0
    %7001 = vmatprep.subr.mxu0 0.0
    %7002 = vmatpush1.msra.mxu0 0.0
    %7003 = vmatprep.subr.mxu0 0.0
    %7004 = vmatpush1.msra.mxu0 0.0
    %7005 = vmatprep.subr.mxu0 0.0
    %7006 = vmatpush1.msra.mxu0 0.0
    %7007 = vmatprep.subr.mxu0 0.0
    %7008 = vmatpush1.msra.mxu0 0.0
    %7009 = vmatprep.subr.mxu0 0.0
    %7010 = vmatpush1.msra.mxu0 0.0
    %7011 = vmatprep.subr.mxu0 0.0
    %7012 = vmatpush1.msra.mxu0 0.0
    %7013 = vmatprep.subr.mxu0 0.0
    %7014 = vmatpush1.msra.mxu0 0.0
    %7015 = vmatprep.subr.mxu0 0.0
    %7016 = vmatpush1.msra.mxu0 0.0
    %7017 = vmatprep.subr.mxu0 0.0
    %7018 = vmatpush1.msra.mxu0 0.0
    %7019 = vmatprep.subr.mxu0 0.0
    %7020 = vmatpush1.msra.mxu0 0.0
    %7021 = vmatprep.subr.mxu0 0.0
    %7022 = vmatpush1.msra.mxu0 0.0
    %7023 = vmatprep.subr.mxu0 0.0
    %7024 = vmatpush1.msra.mxu0 0.0
    %7025 = vmatprep.subr.mxu0 0.0
    %7026 = vmatpush1.msra.mxu0 0.0
    %7027 = vmatprep.subr.mxu0 0.0
    %7028 = vmatpush1.msra.mxu0 0.0
    %7029 = vmatprep.subr.mxu0 0.0
    %7030 = vmatpush1.msra.mxu0 0.0
    %7031 = vmatprep.subr.mxu0 0.0
    %7032 = vmatpush1.msra.mxu0 0.0
    %7033 = vmatprep.subr.mxu0 0.0
    %7034 = vmatpush1.msra.mxu0 0.0
    %7035 = vmatprep.subr.mxu0 0.0
    %7036 = vmatpush1.msra.mxu0 0.0
    %7037 = vmatprep.subr.mxu0 0.0
    %7038 = vmatpush1.msra.mxu0 0.0
    %7039 = vmatprep.subr.mxu0 0.0
    %7040 = vmatpush1.msra.mxu0 0.0
    %7041 = vmatprep.subr.mxu0 0.0
    %7042 = vmatpush1.msra.mxu0 0.0
    %7043 = vmatprep.subr.mxu0 0.0
    %7044 = vmatpush1.msra.mxu0 0.0
    %7045 = vmatprep.subr.mxu0 0.0
    %7046 = vmatpush1.msra.mxu0 0.0
    %7047 = vmatprep.subr.mxu0 0.0
    %7048 = vmatpush1.msra.mxu0 0.0
    %7049 = vmatprep.subr.mxu0 0.0
    %7050 = vmatpush1.msra.mxu0 0.0
    %7051 = vmatprep.mubr.f32.mxu0 0.0
    %7052 = vmatmul.mubr.f32.gmra.mrb[0].mxu0 %v6985
    %v7053 = vpop.f32.mrb[0].mxu0
    %v7054 = vadd.f32 0.0, %v7053
    %v7055 = vpop.f32.mrb[0].mxu0
    %7056 = vdwg.mxu0
    %v7058 = vrot.slane %v7054, 6
    %v7060 = vadd.f32 %v6775, %v7058
    %v7061 = vxor.u32 %v7060, 2147483648
    %v7062 = vmul.f32 %v7061, 1.442695
    %v7063 = vpow.pop %v7062
    %v7064 = vadd.f32 %v7063, 1.0
    %v7065 = vrcp.pop %v7064
    %v7066 = vmul.f32 1.0, %v7065
    %v7067 = vtanh.pop %v7060
    %v7069 = vrot.slane %v6974, 7
    %v7071 = vmul.f32 %v7066, %v7069
    %7073 = vrot.lane.b32.xlu0 %v7067, 96
    %v7074 = vpop.permute.xlu0 %7073
    %v7076 = vmul.f32 %v7066, %v7074
    %7078 = vrot.lane.b32.xlu0 %v7076, 16
    %v7079 = vpop.permute.xlu0 %7078
    %v7081 = vadd.f32 %v7071, %v7079
    %v7082 = vtanh.pop %v7081
    %7084 = vrot.lane.b32.xlu0 %v7082, 32
    %v7085 = vpop.permute.xlu0 %7084
    %v7087 = vmul.f32 %v7066, %v7085
    %v7089 = vrot.slane %v7087, 2
    %7090 = vrot.lane.b32.xlu0 %v7089, 80
    %v7091 = vpop.permute.xlu0 %7090
    %v7092 = vsel %vm390, %v7091, 0
    %7094 = vmatprep.subr.mxu0 0.0
    %7095 = vmatpush1.msra.mxu0 %v6778
    %7096 = vmatprep.subr.mxu0 0.0
    %7097 = vmatpush1.msra.mxu0 %v6779
    %7098 = vmatprep.subr.mxu0 0.0
    %7099 = vmatpush1.msra.mxu0 0.0
    %7100 = vmatprep.subr.mxu0 0.0
    %7101 = vmatpush1.msra.mxu0 0.0
    %7102 = vmatprep.subr.mxu0 0.0
    %7103 = vmatpush1.msra.mxu0 0.0
    %7104 = vmatprep.subr.mxu0 0.0
    %7105 = vmatpush1.msra.mxu0 0.0
    %7106 = vmatprep.subr.mxu0 0.0
    %7107 = vmatpush1.msra.mxu0 0.0
    %7108 = vmatprep.subr.mxu0 0.0
    %7109 = vmatpush1.msra.mxu0 0.0
    %7110 = vmatprep.subr.mxu0 0.0
    %7111 = vmatpush1.msra.mxu0 0.0
    %7112 = vmatprep.subr.mxu0 0.0
    %7113 = vmatpush1.msra.mxu0 0.0
    %7114 = vmatprep.subr.mxu0 0.0
    %7115 = vmatpush1.msra.mxu0 0.0
    %7116 = vmatprep.subr.mxu0 0.0
    %7117 = vmatpush1.msra.mxu0 0.0
    %7118 = vmatprep.subr.mxu0 0.0
    %7119 = vmatpush1.msra.mxu0 0.0
    %7120 = vmatprep.subr.mxu0 0.0
    %7121 = vmatpush1.msra.mxu0 0.0
    %7122 = vmatprep.subr.mxu0 0.0
    %7123 = vmatpush1.msra.mxu0 0.0
    %7124 = vmatprep.subr.mxu0 0.0
    %7125 = vmatpush1.msra.mxu0 0.0
    %7126 = vmatprep.subr.mxu0 0.0
    %7127 = vmatpush1.msra.mxu0 0.0
    %7128 = vmatprep.subr.mxu0 0.0
    %7129 = vmatpush1.msra.mxu0 0.0
    %7130 = vmatprep.subr.mxu0 0.0
    %7131 = vmatpush1.msra.mxu0 0.0
    %7132 = vmatprep.subr.mxu0 0.0
    %7133 = vmatpush1.msra.mxu0 0.0
    %7134 = vmatprep.subr.mxu0 0.0
    %7135 = vmatpush1.msra.mxu0 0.0
    %7136 = vmatprep.subr.mxu0 0.0
    %7137 = vmatpush1.msra.mxu0 0.0
    %7138 = vmatprep.subr.mxu0 0.0
    %7139 = vmatpush1.msra.mxu0 0.0
    %7140 = vmatprep.subr.mxu0 0.0
    %7141 = vmatpush1.msra.mxu0 0.0
    %7142 = vmatprep.subr.mxu0 0.0
    %7143 = vmatpush1.msra.mxu0 0.0
    %7144 = vmatprep.subr.mxu0 0.0
    %7145 = vmatpush1.msra.mxu0 0.0
    %7146 = vmatprep.subr.mxu0 0.0
    %7147 = vmatpush1.msra.mxu0 0.0
    %7148 = vmatprep.subr.mxu0 0.0
    %7149 = vmatpush1.msra.mxu0 0.0
    %7150 = vmatprep.subr.mxu0 0.0
    %7151 = vmatpush1.msra.mxu0 0.0
    %7152 = vmatprep.subr.mxu0 0.0
    %7153 = vmatpush1.msra.mxu0 0.0
    %7154 = vmatprep.subr.mxu0 0.0
    %7155 = vmatpush1.msra.mxu0 0.0
    %7156 = vmatprep.subr.mxu0 0.0
    %7157 = vmatpush1.msra.mxu0 0.0
    %7158 = vmatprep.mubr.f32.mxu0 0.0
    %7159 = vmatmul.mubr.f32.gmra.mrb[0].mxu0 %v7092
    %v7160 = vpop.f32.mrb[0].mxu0
    %v7161 = vadd.f32 0.0, %v7160
    %v7162 = vpop.f32.mrb[0].mxu0
    %7163 = vdwg.mxu0
    %v7165 = vrot.slane %v7161, 5
    %v7167 = vadd.f32 %v6775, %v7165
    %v7168 = vxor.u32 %v7167, 2147483648
    %v7169 = vmul.f32 %v7168, 1.442695
    %v7170 = vpow.pop %v7169
    %v7171 = vadd.f32 %v7170, 1.0
    %v7172 = vrcp.pop %v7171
    %v7173 = vmul.f32 1.0, %v7172
    %v7174 = vtanh.pop %v7167
    %v7176 = vrot.slane %v7081, 7
    %v7178 = vmul.f32 %v7173, %v7176
    %7180 = vrot.lane.b32.xlu0 %v7174, 96
    %v7181 = vpop.permute.xlu0 %7180
    %v7183 = vmul.f32 %v7173, %v7181
    %7185 = vrot.lane.b32.xlu0 %v7183, 16
    %v7186 = vpop.permute.xlu0 %7185
    %v7188 = vadd.f32 %v7178, %v7186
    %v7189 = vtanh.pop %v7188
    %7191 = vrot.lane.b32.xlu0 %v7189, 32
    %v7192 = vpop.permute.xlu0 %7191
    %v7194 = vmul.f32 %v7173, %v7192
    %v7196 = vrot.slane %v7194, 3
    %7197 = vrot.lane.b32.xlu0 %v7196, 80
    %v7198 = vpop.permute.xlu0 %7197
    %v7199 = vsel %vm390, %v7198, 0
    %7201 = vmatprep.subr.mxu0 0.0
    %7202 = vmatpush1.msra.mxu0 %v6778
    %7203 = vmatprep.subr.mxu0 0.0
    %7204 = vmatpush1.msra.mxu0 %v6779
    %7205 = vmatprep.subr.mxu0 0.0
    %7206 = vmatpush1.msra.mxu0 0.0
    %7207 = vmatprep.subr.mxu0 0.0
    %7208 = vmatpush1.msra.mxu0 0.0
    %7209 = vmatprep.subr.mxu0 0.0
    %7210 = vmatpush1.msra.mxu0 0.0
    %7211 = vmatprep.subr.mxu0 0.0
    %7212 = vmatpush1.msra.mxu0 0.0
    %7213 = vmatprep.subr.mxu0 0.0
    %7214 = vmatpush1.msra.mxu0 0.0
    %7215 = vmatprep.subr.mxu0 0.0
    %7216 = vmatpush1.msra.mxu0 0.0
    %7217 = vmatprep.subr.mxu0 0.0
    %7218 = vmatpush1.msra.mxu0 0.0
    %7219 = vmatprep.subr.mxu0 0.0
    %7220 = vmatpush1.msra.mxu0 0.0
    %7221 = vmatprep.subr.mxu0 0.0
    %7222 = vmatpush1.msra.mxu0 0.0
    %7223 = vmatprep.subr.mxu0 0.0
    %7224 = vmatpush1.msra.mxu0 0.0
    %7225 = vmatprep.subr.mxu0 0.0
    %7226 = vmatpush1.msra.mxu0 0.0
    %7227 = vmatprep.subr.mxu0 0.0
    %7228 = vmatpush1.msra.mxu0 0.0
    %7229 = vmatprep.subr.mxu0 0.0
    %7230 = vmatpush1.msra.mxu0 0.0
    %7231 = vmatprep.subr.mxu0 0.0
    %7232 = vmatpush1.msra.mxu0 0.0
    %7233 = vmatprep.subr.mxu0 0.0
    %7234 = vmatpush1.msra.mxu0 0.0
    %7235 = vmatprep.subr.mxu0 0.0
    %7236 = vmatpush1.msra.mxu0 0.0
    %7237 = vmatprep.subr.mxu0 0.0
    %7238 = vmatpush1.msra.mxu0 0.0
    %7239 = vmatprep.subr.mxu0 0.0
    %7240 = vmatpush1.msra.mxu0 0.0
    %7241 = vmatprep.subr.mxu0 0.0
    %7242 = vmatpush1.msra.mxu0 0.0
    %7243 = vmatprep.subr.mxu0 0.0
    %7244 = vmatpush1.msra.mxu0 0.0
    %7245 = vmatprep.subr.mxu0 0.0
    %7246 = vmatpush1.msra.mxu0 0.0
    %7247 = vmatprep.subr.mxu0 0.0
    %7248 = vmatpush1.msra.mxu0 0.0
    %7249 = vmatprep.subr.mxu0 0.0
    %7250 = vmatpush1.msra.mxu0 0.0
    %7251 = vmatprep.subr.mxu0 0.0
    %7252 = vmatpush1.msra.mxu0 0.0
    %7253 = vmatprep.subr.mxu0 0.0
    %7254 = vmatpush1.msra.mxu0 0.0
    %7255 = vmatprep.subr.mxu0 0.0
    %7256 = vmatpush1.msra.mxu0 0.0
    %7257 = vmatprep.subr.mxu0 0.0
    %7258 = vmatpush1.msra.mxu0 0.0
    %7259 = vmatprep.subr.mxu0 0.0
    %7260 = vmatpush1.msra.mxu0 0.0
    %7261 = vmatprep.subr.mxu0 0.0
    %7262 = vmatpush1.msra.mxu0 0.0
    %7263 = vmatprep.subr.mxu0 0.0
    %7264 = vmatpush1.msra.mxu0 0.0
    %7265 = vmatprep.mubr.f32.mxu0 0.0
    %7266 = vmatmul.mubr.f32.gmra.mrb[0].mxu0 %v7199
    %v7267 = vpop.f32.mrb[0].mxu0
    %v7268 = vadd.f32 0.0, %v7267
    %v7269 = vpop.f32.mrb[0].mxu0
    %7270 = vdwg.mxu0
    %v7272 = vrot.slane %v7268, 4
    %v7274 = vadd.f32 %v6775, %v7272
    %v7275 = vxor.u32 %v7274, 2147483648
    %v7276 = vmul.f32 %v7275, 1.442695
    %v7277 = vpow.pop %v7276
    %v7278 = vadd.f32 %v7277, 1.0
    %v7279 = vrcp.pop %v7278
    %v7280 = vmul.f32 1.0, %v7279
    %v7281 = vtanh.pop %v7274
    %v7283 = vrot.slane %v7188, 7
    %v7285 = vmul.f32 %v7280, %v7283
    %7287 = vrot.lane.b32.xlu0 %v7281, 96
    %v7288 = vpop.permute.xlu0 %7287
    %v7290 = vmul.f32 %v7280, %v7288
    %7292 = vrot.lane.b32.xlu0 %v7290, 16
    %v7293 = vpop.permute.xlu0 %7292
    %v7295 = vadd.f32 %v7285, %v7293
    %v7296 = vtanh.pop %v7295
    %7298 = vrot.lane.b32.xlu0 %v7296, 32
    %v7299 = vpop.permute.xlu0 %7298
    %v7301 = vmul.f32 %v7280, %v7299
    %v7303 = vrot.slane %v7301, 4
    %7304 = vrot.lane.b32.xlu0 %v7303, 80
    %v7305 = vpop.permute.xlu0 %7304
    %v7306 = vsel %vm390, %v7305, 0
    %7308 = vmatprep.subr.mxu0 0.0
    %7309 = vmatpush1.msra.mxu0 %v6778
    %7310 = vmatprep.subr.mxu0 0.0
    %7311 = vmatpush1.msra.mxu0 %v6779
    %7312 = vmatprep.subr.mxu0 0.0
    %7313 = vmatpush1.msra.mxu0 0.0
    %7314 = vmatprep.subr.mxu0 0.0
    %7315 = vmatpush1.msra.mxu0 0.0
    %7316 = vmatprep.subr.mxu0 0.0
    %7317 = vmatpush1.msra.mxu0 0.0
    %7318 = vmatprep.subr.mxu0 0.0
    %7319 = vmatpush1.msra.mxu0 0.0
    %7320 = vmatprep.subr.mxu0 0.0
    %7321 = vmatpush1.msra.mxu0 0.0
    %7322 = vmatprep.subr.mxu0 0.0
    %7323 = vmatpush1.msra.mxu0 0.0
    %7324 = vmatprep.subr.mxu0 0.0
    %7325 = vmatpush1.msra.mxu0 0.0
    %7326 = vmatprep.subr.mxu0 0.0
    %7327 = vmatpush1.msra.mxu0 0.0
    %7328 = vmatprep.subr.mxu0 0.0
    %7329 = vmatpush1.msra.mxu0 0.0
    %7330 = vmatprep.subr.mxu0 0.0
    %7331 = vmatpush1.msra.mxu0 0.0
    %7332 = vmatprep.subr.mxu0 0.0
    %7333 = vmatpush1.msra.mxu0 0.0
    %7334 = vmatprep.subr.mxu0 0.0
    %7335 = vmatpush1.msra.mxu0 0.0
    %7336 = vmatprep.subr.mxu0 0.0
    %7337 = vmatpush1.msra.mxu0 0.0
    %7338 = vmatprep.subr.mxu0 0.0
    %7339 = vmatpush1.msra.mxu0 0.0
    %7340 = vmatprep.subr.mxu0 0.0
    %7341 = vmatpush1.msra.mxu0 0.0
    %7342 = vmatprep.subr.mxu0 0.0
    %7343 = vmatpush1.msra.mxu0 0.0
    %7344 = vmatprep.subr.mxu0 0.0
    %7345 = vmatpush1.msra.mxu0 0.0
    %7346 = vmatprep.subr.mxu0 0.0
    %7347 = vmatpush1.msra.mxu0 0.0
    %7348 = vmatprep.subr.mxu0 0.0
    %7349 = vmatpush1.msra.mxu0 0.0
    %7350 = vmatprep.subr.mxu0 0.0
    %7351 = vmatpush1.msra.mxu0 0.0
    %7352 = vmatprep.subr.mxu0 0.0
    %7353 = vmatpush1.msra.mxu0 0.0
    %7354 = vmatprep.subr.mxu0 0.0
    %7355 = vmatpush1.msra.mxu0 0.0
    %7356 = vmatprep.subr.mxu0 0.0
    %7357 = vmatpush1.msra.mxu0 0.0
    %7358 = vmatprep.subr.mxu0 0.0
    %7359 = vmatpush1.msra.mxu0 0.0
    %7360 = vmatprep.subr.mxu0 0.0
    %7361 = vmatpush1.msra.mxu0 0.0
    %7362 = vmatprep.subr.mxu0 0.0
    %7363 = vmatpush1.msra.mxu0 0.0
    %7364 = vmatprep.subr.mxu0 0.0
    %7365 = vmatpush1.msra.mxu0 0.0
    %7366 = vmatprep.subr.mxu0 0.0
    %7367 = vmatpush1.msra.mxu0 0.0
    %7368 = vmatprep.subr.mxu0 0.0
    %7369 = vmatpush1.msra.mxu0 0.0
    %7370 = vmatprep.subr.mxu0 0.0
    %7371 = vmatpush1.msra.mxu0 0.0
    %7372 = vmatprep.mubr.f32.mxu0 0.0
    %7373 = vmatmul.mubr.f32.gmra.mrb[0].mxu0 %v7306
    %v7374 = vpop.f32.mrb[0].mxu0
    %v7375 = vadd.f32 0.0, %v7374
    %v7376 = vpop.f32.mrb[0].mxu0
    %7377 = vdwg.mxu0
    %v7379 = vrot.slane %v7375, 3
    %v7381 = vadd.f32 %v6775, %v7379
    %v7382 = vxor.u32 %v7381, 2147483648
    %v7383 = vmul.f32 %v7382, 1.442695
    %v7384 = vpow.pop %v7383
    %v7385 = vadd.f32 %v7384, 1.0
    %v7386 = vrcp.pop %v7385
    %v7387 = vmul.f32 1.0, %v7386
    %v7388 = vtanh.pop %v7381
    %v7390 = vrot.slane %v7295, 7
    %v7392 = vmul.f32 %v7387, %v7390
    %7394 = vrot.lane.b32.xlu0 %v7388, 96
    %v7395 = vpop.permute.xlu0 %7394
    %v7397 = vmul.f32 %v7387, %v7395
    %7399 = vrot.lane.b32.xlu0 %v7397, 16
    %v7400 = vpop.permute.xlu0 %7399
    %v7402 = vadd.f32 %v7392, %v7400
    %v7403 = vtanh.pop %v7402
    %7405 = vrot.lane.b32.xlu0 %v7403, 32
    %v7406 = vpop.permute.xlu0 %7405
    %v7408 = vmul.f32 %v7387, %v7406
    %v7410 = vrot.slane %v7408, 5
    %7411 = vrot.lane.b32.xlu0 %v7410, 80
    %v7412 = vpop.permute.xlu0 %7411
    %v7413 = vsel %vm390, %v7412, 0
    %7415 = vmatprep.subr.mxu0 0.0
    %7416 = vmatpush1.msra.mxu0 %v6778
    %7417 = vmatprep.subr.mxu0 0.0
    %7418 = vmatpush1.msra.mxu0 %v6779
    %7419 = vmatprep.subr.mxu0 0.0
    %7420 = vmatpush1.msra.mxu0 0.0
    %7421 = vmatprep.subr.mxu0 0.0
    %7422 = vmatpush1.msra.mxu0 0.0
    %7423 = vmatprep.subr.mxu0 0.0
    %7424 = vmatpush1.msra.mxu0 0.0
    %7425 = vmatprep.subr.mxu0 0.0
    %7426 = vmatpush1.msra.mxu0 0.0
    %7427 = vmatprep.subr.mxu0 0.0
    %7428 = vmatpush1.msra.mxu0 0.0
    %7429 = vmatprep.subr.mxu0 0.0
    %7430 = vmatpush1.msra.mxu0 0.0
    %7431 = vmatprep.subr.mxu0 0.0
    %7432 = vmatpush1.msra.mxu0 0.0
    %7433 = vmatprep.subr.mxu0 0.0
    %7434 = vmatpush1.msra.mxu0 0.0
    %7435 = vmatprep.subr.mxu0 0.0
    %7436 = vmatpush1.msra.mxu0 0.0
    %7437 = vmatprep.subr.mxu0 0.0
    %7438 = vmatpush1.msra.mxu0 0.0
    %7439 = vmatprep.subr.mxu0 0.0
    %7440 = vmatpush1.msra.mxu0 0.0
    %7441 = vmatprep.subr.mxu0 0.0
    %7442 = vmatpush1.msra.mxu0 0.0
    %7443 = vmatprep.subr.mxu0 0.0
    %7444 = vmatpush1.msra.mxu0 0.0
    %7445 = vmatprep.subr.mxu0 0.0
    %7446 = vmatpush1.msra.mxu0 0.0
    %7447 = vmatprep.subr.mxu0 0.0
    %7448 = vmatpush1.msra.mxu0 0.0
    %7449 = vmatprep.subr.mxu0 0.0
    %7450 = vmatpush1.msra.mxu0 0.0
    %7451 = vmatprep.subr.mxu0 0.0
    %7452 = vmatpush1.msra.mxu0 0.0
    %7453 = vmatprep.subr.mxu0 0.0
    %7454 = vmatpush1.msra.mxu0 0.0
    %7455 = vmatprep.subr.mxu0 0.0
    %7456 = vmatpush1.msra.mxu0 0.0
    %7457 = vmatprep.subr.mxu0 0.0
    %7458 = vmatpush1.msra.mxu0 0.0
    %7459 = vmatprep.subr.mxu0 0.0
    %7460 = vmatpush1.msra.mxu0 0.0
    %7461 = vmatprep.subr.mxu0 0.0
    %7462 = vmatpush1.msra.mxu0 0.0
    %7463 = vmatprep.subr.mxu0 0.0
    %7464 = vmatpush1.msra.mxu0 0.0
    %7465 = vmatprep.subr.mxu0 0.0
    %7466 = vmatpush1.msra.mxu0 0.0
    %7467 = vmatprep.subr.mxu0 0.0
    %7468 = vmatpush1.msra.mxu0 0.0
    %7469 = vmatprep.subr.mxu0 0.0
    %7470 = vmatpush1.msra.mxu0 0.0
    %7471 = vmatprep.subr.mxu0 0.0
    %7472 = vmatpush1.msra.mxu0 0.0
    %7473 = vmatprep.subr.mxu0 0.0
    %7474 = vmatpush1.msra.mxu0 0.0
    %7475 = vmatprep.subr.mxu0 0.0
    %7476 = vmatpush1.msra.mxu0 0.0
    %7477 = vmatprep.subr.mxu0 0.0
    %7478 = vmatpush1.msra.mxu0 0.0
    %7479 = vmatprep.mubr.f32.mxu0 0.0
    %7480 = vmatmul.mubr.f32.gmra.mrb[0].mxu0 %v7413
    %v7481 = vpop.f32.mrb[0].mxu0
    %v7482 = vadd.f32 0.0, %v7481
    %v7483 = vpop.f32.mrb[0].mxu0
    %7484 = vdwg.mxu0
    %v7486 = vrot.slane %v7482, 2
    %v7488 = vadd.f32 %v6775, %v7486
    %v7489 = vxor.u32 %v7488, 2147483648
    %v7490 = vmul.f32 %v7489, 1.442695
    %v7491 = vpow.pop %v7490
    %v7492 = vadd.f32 %v7491, 1.0
    %v7493 = vrcp.pop %v7492
    %v7494 = vmul.f32 1.0, %v7493
    %v7495 = vtanh.pop %v7488
    %v7497 = vrot.slane %v7402, 7
    %v7499 = vmul.f32 %v7494, %v7497
    %7501 = vrot.lane.b32.xlu0 %v7495, 96
    %v7502 = vpop.permute.xlu0 %7501
    %v7504 = vmul.f32 %v7494, %v7502
    %7506 = vrot.lane.b32.xlu0 %v7504, 16
    %v7507 = vpop.permute.xlu0 %7506
    %v7509 = vadd.f32 %v7499, %v7507
    %v7510 = vtanh.pop %v7509
    %7512 = vrot.lane.b32.xlu0 %v7510, 32
    %v7513 = vpop.permute.xlu0 %7512
    %v7515 = vmul.f32 %v7494, %v7513
    %v7517 = vrot.slane %v7515, 6
    %7518 = vrot.lane.b32.xlu0 %v7517, 80
    %v7519 = vpop.permute.xlu0 %7518
    %v7520 = vsel %vm390, %v7519, 0
    %7522 = vmatprep.subr.mxu0 0.0
    %7523 = vmatpush1.msra.mxu0 %v6778
    %7524 = vmatprep.subr.mxu0 0.0
    %7525 = vmatpush1.msra.mxu0 %v6779
    %7526 = vmatprep.subr.mxu0 0.0
    %7527 = vmatpush1.msra.mxu0 0.0
    %7528 = vmatprep.subr.mxu0 0.0
    %7529 = vmatpush1.msra.mxu0 0.0
    %7530 = vmatprep.subr.mxu0 0.0
    %7531 = vmatpush1.msra.mxu0 0.0
    %7532 = vmatprep.subr.mxu0 0.0
    %7533 = vmatpush1.msra.mxu0 0.0
    %7534 = vmatprep.subr.mxu0 0.0
    %7535 = vmatpush1.msra.mxu0 0.0
    %7536 = vmatprep.subr.mxu0 0.0
    %7537 = vmatpush1.msra.mxu0 0.0
    %7538 = vmatprep.subr.mxu0 0.0
    %7539 = vmatpush1.msra.mxu0 0.0
    %7540 = vmatprep.subr.mxu0 0.0
    %7541 = vmatpush1.msra.mxu0 0.0
    %7542 = vmatprep.subr.mxu0 0.0
    %7543 = vmatpush1.msra.mxu0 0.0
    %7544 = vmatprep.subr.mxu0 0.0
    %7545 = vmatpush1.msra.mxu0 0.0
    %7546 = vmatprep.subr.mxu0 0.0
    %7547 = vmatpush1.msra.mxu0 0.0
    %7548 = vmatprep.subr.mxu0 0.0
    %7549 = vmatpush1.msra.mxu0 0.0
    %7550 = vmatprep.subr.mxu0 0.0
    %7551 = vmatpush1.msra.mxu0 0.0
    %7552 = vmatprep.subr.mxu0 0.0
    %7553 = vmatpush1.msra.mxu0 0.0
    %7554 = vmatprep.subr.mxu0 0.0
    %7555 = vmatpush1.msra.mxu0 0.0
    %7556 = vmatprep.subr.mxu0 0.0
    %7557 = vmatpush1.msra.mxu0 0.0
    %7558 = vmatprep.subr.mxu0 0.0
    %7559 = vmatpush1.msra.mxu0 0.0
    %7560 = vmatprep.subr.mxu0 0.0
    %7561 = vmatpush1.msra.mxu0 0.0
    %7562 = vmatprep.subr.mxu0 0.0
    %7563 = vmatpush1.msra.mxu0 0.0
    %7564 = vmatprep.subr.mxu0 0.0
    %7565 = vmatpush1.msra.mxu0 0.0
    %7566 = vmatprep.subr.mxu0 0.0
    %7567 = vmatpush1.msra.mxu0 0.0
    %7568 = vmatprep.subr.mxu0 0.0
    %7569 = vmatpush1.msra.mxu0 0.0
    %7570 = vmatprep.subr.mxu0 0.0
    %7571 = vmatpush1.msra.mxu0 0.0
    %7572 = vmatprep.subr.mxu0 0.0
    %7573 = vmatpush1.msra.mxu0 0.0
    %7574 = vmatprep.subr.mxu0 0.0
    %7575 = vmatpush1.msra.mxu0 0.0
    %7576 = vmatprep.subr.mxu0 0.0
    %7577 = vmatpush1.msra.mxu0 0.0
    %7578 = vmatprep.subr.mxu0 0.0
    %7579 = vmatpush1.msra.mxu0 0.0
    %7580 = vmatprep.subr.mxu0 0.0
    %7581 = vmatpush1.msra.mxu0 0.0
    %7582 = vmatprep.subr.mxu0 0.0
    %7583 = vmatpush1.msra.mxu0 0.0
    %7584 = vmatprep.subr.mxu0 0.0
    %7585 = vmatpush1.msra.mxu0 0.0
    %7586 = vmatprep.mubr.f32.mxu0 0.0
    %7587 = vmatmul.mubr.f32.gmra.mrb[0].mxu0 %v7520
    %v7588 = vpop.f32.mrb[0].mxu0
    %v7589 = vadd.f32 0.0, %v7588
    %v7590 = vpop.f32.mrb[0].mxu0
    %7591 = vdwg.mxu0
    %v7593 = vrot.slane %v7589, 1
    %v7595 = vadd.f32 %v6775, %v7593
    %v7596 = vxor.u32 %v7595, 2147483648
    %v7597 = vmul.f32 %v7596, 1.442695
    %v7598 = vpow.pop %v7597
    %v7599 = vadd.f32 %v7598, 1.0
    %v7600 = vrcp.pop %v7599
    %v7601 = vmul.f32 1.0, %v7600
    %v7602 = vtanh.pop %v7595
    %v7604 = vrot.slane %v7509, 7
    %v7606 = vmul.f32 %v7601, %v7604
    %7608 = vrot.lane.b32.xlu0 %v7602, 96
    %v7609 = vpop.permute.xlu0 %7608
    %v7611 = vmul.f32 %v7601, %v7609
    %7613 = vrot.lane.b32.xlu0 %v7611, 16
    %v7614 = vpop.permute.xlu0 %7613
    %v7616 = vadd.f32 %v7606, %v7614
    %v7617 = vtanh.pop %v7616
    %7619 = vrot.lane.b32.xlu0 %v7617, 32
    %v7620 = vpop.permute.xlu0 %7619
    %v7622 = vmul.f32 %v7601, %v7620
    %v7623 = vsel %vm1312, %v6874, %v6980
    %v7624 = vsel %vm1314, %v7623, %v7087
    %v7625 = vsel %vm1316, %v7624, %v7194
    %v7626 = vsel %vm1318, %v7625, %v7301
    %v7627 = vsel %vm1320, %v7626, %v7408
    %v7628 = vsel %vm1322, %v7627, %v7515
    %v7629 = vsel %vm1324, %v7628, %v7622
    %v7630 = vld [vmem:[%s65] sm:$0xff]
    %v7631 = vld [vmem:[%s65 + $0x8] sm:$0xff]
    %v7632 = vld [vmem:[%s67] sm:$0x1]
    %v7634 = vlaneseq
    %v7635 = vshrl.u32 %v7634, 7
    %v7636 = vsub.s32 0, %v7635
    %v7637 = vrot.slane %v7632, %v7636
    %7640 = vrot.lane.b32.xlu0 %v7629, 80
    %v7641 = vpop.permute.xlu0 %7640
    %v7642 = vsel %vm390, %v7641, 0
    %7644 = vmatprep.subr.mxu0 0.0
    %7645 = vmatpush1.msra.mxu0 %v7630
    %7646 = vmatprep.subr.mxu0 0.0
    %7647 = vmatpush1.msra.mxu0 %v7631
    %7648 = vmatprep.subr.mxu0 0.0
    %7649 = vmatpush1.msra.mxu0 0.0
    %7650 = vmatprep.subr.mxu0 0.0
    %7651 = vmatpush1.msra.mxu0 0.0
    %7652 = vmatprep.subr.mxu0 0.0
    %7653 = vmatpush1.msra.mxu0 0.0
    %7654 = vmatprep.subr.mxu0 0.0
    %7655 = vmatpush1.msra.mxu0 0.0
    %7656 = vmatprep.subr.mxu0 0.0
    %7657 = vmatpush1.msra.mxu0 0.0
    %7658 = vmatprep.subr.mxu0 0.0
    %7659 = vmatpush1.msra.mxu0 0.0
    %7660 = vmatprep.subr.mxu0 0.0
    %7661 = vmatpush1.msra.mxu0 0.0
    %7662 = vmatprep.subr.mxu0 0.0
    %7663 = vmatpush1.msra.mxu0 0.0
    %7664 = vmatprep.subr.mxu0 0.0
    %7665 = vmatpush1.msra.mxu0 0.0
    %7666 = vmatprep.subr.mxu0 0.0
    %7667 = vmatpush1.msra.mxu0 0.0
    %7668 = vmatprep.subr.mxu0 0.0
    %7669 = vmatpush1.msra.mxu0 0.0
    %7670 = vmatprep.subr.mxu0 0.0
    %7671 = vmatpush1.msra.mxu0 0.0
    %7672 = vmatprep.subr.mxu0 0.0
    %7673 = vmatpush1.msra.mxu0 0.0
    %7674 = vmatprep.subr.mxu0 0.0
    %7675 = vmatpush1.msra.mxu0 0.0
    %7676 = vmatprep.subr.mxu0 0.0
    %7677 = vmatpush1.msra.mxu0 0.0
    %7678 = vmatprep.subr.mxu0 0.0
    %7679 = vmatpush1.msra.mxu0 0.0
    %7680 = vmatprep.subr.mxu0 0.0
    %7681 = vmatpush1.msra.mxu0 0.0
    %7682 = vmatprep.subr.mxu0 0.0
    %7683 = vmatpush1.msra.mxu0 0.0
    %7684 = vmatprep.subr.mxu0 0.0
    %7685 = vmatpush1.msra.mxu0 0.0
    %7686 = vmatprep.subr.mxu0 0.0
    %7687 = vmatpush1.msra.mxu0 0.0
    %7688 = vmatprep.subr.mxu0 0.0
    %7689 = vmatpush1.msra.mxu0 0.0
    %7690 = vmatprep.subr.mxu0 0.0
    %7691 = vmatpush1.msra.mxu0 0.0
    %7692 = vmatprep.subr.mxu0 0.0
    %7693 = vmatpush1.msra.mxu0 0.0
    %7694 = vmatprep.subr.mxu0 0.0
    %7695 = vmatpush1.msra.mxu0 0.0
    %7696 = vmatprep.subr.mxu0 0.0
    %7697 = vmatpush1.msra.mxu0 0.0
    %7698 = vmatprep.subr.mxu0 0.0
    %7699 = vmatpush1.msra.mxu0 0.0
    %7700 = vmatprep.subr.mxu0 0.0
    %7701 = vmatpush1.msra.mxu0 0.0
    %7702 = vmatprep.subr.mxu0 0.0
    %7703 = vmatpush1.msra.mxu0 0.0
    %7704 = vmatprep.subr.mxu0 0.0
    %7705 = vmatpush1.msra.mxu0 0.0
    %7706 = vmatprep.subr.mxu0 0.0
    %7707 = vmatpush1.msra.mxu0 0.0
    %7708 = vmatprep.mubr.f32.mxu0 0.0
    %7709 = vmatmul.mubr.f32.gmra.mrb[0].mxu0 %v7642
    %v7710 = vpop.f32.mrb[0].mxu0
    %v7711 = vadd.f32 %v7637, %v7710
    %v7712 = vpop.f32.mrb[0].mxu0
    %7713 = vdwg.mxu0
    %7715 = vrot.lane.b32.xlu0 %v6672, 8
    %v7716 = vpop.permute.xlu0 %7715
    %v7718 = vsel %vm4240, %v7711, %v7716
    %vm7719 = vcmask 162816
    %7720 = vst.msk [vmem:[#allocation32] sm:$0xff] %vm7719, %v7718
    // Predicated region
    $region214: #{tpu_custom_call.1} parent=1 // pred_check
      _
    $region215: #{tpu_custom_call.1} parent=1 // pred_check_branch
      %7722 = sbr.rel (0) target = $region217
    $region216: #{tpu_custom_call.1} parent=1 // pred_region
      %s7724 = ssub.s32 128, 128
      %7725 = vsyncadd [#allocation4], %s7724
      %s7727 = sshll.u32 [#allocation32], 4
      %s7728 = int_to_ptr.vmem [resolvable:$true] %s7727
      %7730 = dma.vmem_to_hbm [thread:$0]  %s7728, 128, %s69, [#allocation4]
    $region217: #{tpu_custom_call.1} parent=1 // pred_fallthru
      _
    // Predicated region
    $region218: #{tpu_custom_call.1} parent=1 // pred_check
      _
    $region219: #{tpu_custom_call.1} parent=1 // pred_check_branch
      %7732 = sbr.rel (0) target = $region221
    $region220: #{tpu_custom_call.1} parent=1 // pred_region
      %7733 = dma.done [#allocation4], 128
    $region221: #{tpu_custom_call.1} parent=1 // pred_fallthru
      _
    %7734 = vsyncpa [#allocation3], 1
    %7735 = vsyncpa [#allocation6], 1
    %7736 = vsyncpa [#allocation9], 1
    %7737 = vsyncpa [#allocation12], 1
    %7738 = vsyncpa [#allocation15], 1
    %7739 = vsyncpa [#allocation18], 1
    %7740 = vsyncpa [#allocation21], 1
    %7741 = vsyncpa [#allocation24], 1
    %7742 = vsyncpa [#allocation27], 1
    %7743 = vsyncpa [#allocation30], 1
    %7744 = vsyncpa [#allocation4], 1

</llo_original>
